<compile_context>
chip_gen: v7x
topology: tpu7x:2x2x1
jax: 0.10.0
libtpu: 0.0.40
codegen_flags: <defaults>
</compile_context>

<pallas_src>
import functools
import math

import jax
import jax.numpy as jnp
from jax.experimental import pallas as pl
from jax.experimental.pallas import tpu as pltpu


_TM_MAX = 512           # row-tile cap for wide-channel matmuls
_TM_MAX_NARROW = 1024   # narrow-channel blocks amortize per-step overhead better
_VMEM_CAP = 48 << 20    # never request more than ~48 MiB (v7x physical = 64 MiB)
_VMEM_FLOOR = 16 << 20


# ----------------------------------------------------------------------------
# Small policy helpers
# ----------------------------------------------------------------------------
def _pick_tm(m, tm_max=_TM_MAX):
    """Row tile: multiple of 16 (bf16 sublane packing), >= 2 grid steps when
    possible (v7x 2-TensorCore sharding + I/O pipelining), capped at tm_max."""
    if m < 32:
        return m
    target = min(tm_max, m // 2)          # guarantees >= 2 grid steps
    target = max(16, (target // 16) * 16)
    for tm in range(target, 15, -16):     # multiples of 16 first
        if m % tm == 0:
            return tm
    for tm in range(min(tm_max, m // 2), 7, -8):   # relax to %8 if necessary
        if m % tm == 0:
            return tm
    # TODO(synk): masked-tail / padded-row path for awkward M (single block today).
    return m


def _tm_max_for(*channel_widths):
    """Narrow-channel kernels (c4-width blocks, head) can take bigger row tiles."""
    return _TM_MAX_NARROW if max(channel_widths) <= 192 else _TM_MAX


def _vmem_limit(*tile_bytes):
    """Per-call VMEM cap from the tiles this call actually streams.  Assume 2x
    buffering for everything (safe even if Buffered(1) falls back) plus
    headroom for Mosaic internal scratch; capped well below v7x's 64 MiB."""
    need = 2 * int(sum(tile_bytes)) + (4 << 20)
    return int(min(_VMEM_CAP, max(need, _VMEM_FLOOR)))


def _params(vmem_bytes):
    return pltpu.CompilerParams(
        dimension_semantics=("parallel",),
        vmem_limit_bytes=int(vmem_bytes),
    )


def _const_spec(shape):
    """BlockSpec for a grid-invariant operand (weight / bias): same block every
    grid step, single-buffered so it does not burn 2x VMEM."""
    assert len(shape) == 2
    index_map = lambda i: (0, 0)
    try:
        return pl.BlockSpec(shape, index_map, pipeline_mode=pl.Buffered(1))
    except (TypeError, AttributeError):   # older jax: fall back to default buffering
        return pl.BlockSpec(shape, index_map)


def _gelu(x):
    # tanh-approx GELU in f32 (torch nn.GELU defaults to erf; ~1e-3 deviation).
    c = math.sqrt(2.0 / math.pi)
    return 0.5 * x * (1.0 + jnp.tanh(c * (x + 0.044715 * x * x * x)))


# ----------------------------------------------------------------------------
# Pallas kernels
# ----------------------------------------------------------------------------
def _pw_kernel(x_ref, w_ref, b_ref, o_ref, *, act):
    """Pointwise (1x1 conv): (tm, Cin)bf16 @ (Cin, Cout)bf16 + bias [+ GELU]."""
    y = jnp.dot(x_ref[...], w_ref[...], preferred_element_type=jnp.float32)
    y = y + b_ref[...]
    if act:
        y = _gelu(y)
    o_ref[...] = y.astype(o_ref.dtype)


def _mlp_body(x_ref, w1_ref, b1_ref, w2_ref, b2_ref, r_ref, o_ref, *, g, w_sp):
    """Fused block: [optional zero-padded 4-direction spatial shift of the
    first 4*g channels] -> fc1 -> GELU -> fc2 -> + x [+ extra residual]."""
    x = x_ref[...]                                     # (rows, C) bf16
    if g > 0:
        # Block == one whole frame (rows = h*w): shifts never wrap across
        # frames or tile boundaries; masks emulate ShiftViT zero padding.
        n = x.shape[0]
        s = 4 * g
        slab = x[:, :s].astype(jnp.float32)            # only the shifted channels
        row = jax.lax.broadcasted_iota(jnp.int32, (n, s), 0)
        col = jax.lax.broadcasted_iota(jnp.int32, (n, s), 1)
        zero = jnp.zeros_like(slab)
        r_dn = jnp.where(row < w_sp, zero, pltpu.roll(slab, shift=w_sp, axis=0))
        r_up = jnp.where(row >= n - w_sp, zero,
                         pltpu.roll(slab, shift=n - w_sp, axis=0))
        r_rt = jnp.where(row % w_sp == 0, zero, pltpu.roll(slab, shift=1, axis=0))
        r_lt = jnp.where(row % w_sp == w_sp - 1, zero,
                         pltpu.roll(slab, shift=n - 1, axis=0))
        shifted = jnp.where(col < g, r_dn,
                  jnp.where(col < 2 * g, r_up,
                  jnp.where(col < 3 * g, r_rt, r_lt))).astype(x.dtype)
        xs = jnp.concatenate([shifted, x[:, s:]], axis=1)
    else:
        xs = x
    h = jnp.dot(xs, w1_ref[...], preferred_element_type=jnp.float32) + b1_ref[...]
    h = _gelu(h).astype(x.dtype)
    y = jnp.dot(h, w2_ref[...], preferred_element_type=jnp.float32) + b2_ref[...]
    y = y + x.astype(jnp.float32)                      # fused block residual
    if r_ref is not None:
        y = y + r_ref[...].astype(jnp.float32)         # fused OUTER residual (+x)
    o_ref[...] = y.astype(o_ref.dtype)


def _mlp_kernel(x_ref, w1_ref, b1_ref, w2_ref, b2_ref, o_ref, *, g, w_sp):
    _mlp_body(x_ref, w1_ref, b1_ref, w2_ref, b2_ref, None, o_ref, g=g, w_sp=w_sp)


def _mlp_res_kernel(x_ref, w1_ref, b1_ref, w2_ref, b2_ref, r_ref, o_ref, *, g, w_sp):
    _mlp_body(x_ref, w1_ref, b1_ref, w2_ref, b2_ref, r_ref, o_ref, g=g, w_sp=w_sp)


def _head_kernel(xd_ref, xf_ref, wd_ref, wf_ref, b1_ref, w2_ref, b2_ref,
                 w3t_ref, b3_ref, o_ref):
    """Fused DDCM output layer:
    cat([xd, xf], C) -> 1x1 -> GELU -> 1x1 -> GELU -> 1x1(->1).
    Channel concat realized as xd @ Wd + xf @ Wf (exact)."""
    h = (jnp.dot(xd_ref[...], wd_ref[...], preferred_element_type=jnp.float32)
         + jnp.dot(xf_ref[...], wf_ref[...], preferred_element_type=jnp.float32)
         + b1_ref[...])
    h = _gelu(h).astype(xd_ref.dtype)
    h = jnp.dot(h, w2_ref[...], preferred_element_type=jnp.float32) + b2_ref[...]
    h = _gelu(h).astype(xd_ref.dtype)
    # Final C2 -> 1 projection computed transposed: (1, C2) x (tm, C2)^T so the
    # result (1, tm) is lane-dense (rows on the 128-lane axis, unmasked stores).
    yt = jax.lax.dot_general(w3t_ref[...], h, (((1,), (1,)), ((), ())),
                             preferred_element_type=jnp.float32)     # (1, tm)
    o_ref[...] = (yt + b3_ref[...])[None].astype(o_ref.dtype)        # (1, 1, tm)


# ----------------------------------------------------------------------------
# Pallas wrappers (all operate on flat channels-last (M, C) tensors)
# ----------------------------------------------------------------------------
def pointwise(x2d, w, b, *, act=False):
    M, Cin = x2d.shape
    Cout = w.shape[1]
    tm = _pick_tm(M, _tm_max_for(Cin, Cout))
    cost = pl.CostEstimate(
        flops=2 * M * Cin * Cout,
        transcendentals=(M * Cout) if act else 0,
        bytes_accessed=M * Cin * 2 + Cin * Cout * 2 + M * Cout * 2)
    vmem = _vmem_limit(tm * Cin * 2, Cin * Cout * 2, Cout * 4, tm * Cout * 2)
    return pl.pallas_call(
        functools.partial(_pw_kernel, act=act),
        out_shape=jax.ShapeDtypeStruct((M, Cout), x2d.dtype),
        grid_spec=pltpu.PrefetchScalarGridSpec(
            num_scalar_prefetch=0,
            grid=(M // tm,),
            in_specs=[
                pl.BlockSpec((tm, Cin), lambda i: (i, 0)),
                _const_spec((Cin, Cout)),
                _const_spec((1, Cout)),
            ],
            out_specs=pl.BlockSpec((tm, Cout), lambda i: (i, 0)),
        ),
        compiler_params=_params(vmem),
        cost_estimate=cost,
    )(x2d, w, b)


def mlp_res_block(x2d, p, *, spatial=None, shift_g=0, residual=None):
    """One fused [shift?]-fc1-GELU-fc2-residual[-residual] block."""
    M, C = x2d.shape
    Ch = p["w1"].shape[1]
    if shift_g > 0:
        _, h, w_sp = spatial
        tm = h * w_sp                 # one whole frame per grid step (shift-safe)
        # TODO(synk): halo-tiled variant for frames too large to fit VMEM.
    else:
        w_sp = 0
        tm = _pick_tm(M, _tm_max_for(C, Ch))
    has_res = residual is not None
    in_specs = [
        pl.BlockSpec((tm, C), lambda i: (i, 0)),
        _const_spec((C, Ch)),
        _const_spec((1, Ch)),
        _const_spec((Ch, C)),
        _const_spec((1, C)),
    ]
    args = [x2d, p["w1"], p["b1"], p["w2"], p["b2"]]
    if has_res:
        in_specs.append(pl.BlockSpec((tm, C), lambda i: (i, 0)))
        args.append(residual)
        kernel = functools.partial(_mlp_res_kernel, g=shift_g, w_sp=w_sp)
    else:
        kernel = functools.partial(_mlp_kernel, g=shift_g, w_sp=w_sp)
    cost = pl.CostEstimate(
        flops=4 * M * C * Ch + (2 if has_res else 1) * M * C,
        transcendentals=M * Ch,
        bytes_accessed=(3 if has_res else 2) * M * C * 2 + 2 * C * Ch * 2 + M * C * 2)
    vmem = _vmem_limit(tm * C * 2 * (3 if has_res else 2),
                       2 * C * Ch * 2, (C + Ch) * 4)
    return pl.pallas_call(
        kernel,
        out_shape=jax.ShapeDtypeStruct((M, C), x2d.dtype),
        grid_spec=pltpu.PrefetchScalarGridSpec(
            num_scalar_prefetch=0,
            grid=(M // tm,),
            in_specs=in_specs,
            out_specs=pl.BlockSpec((tm, C), lambda i: (i, 0)),
        ),
        compiler_params=_params(vmem),
        cost_estimate=cost,
    )(*args)


def output_head(xd2, xf2, p, spatial):
    t, h, w = spatial
    M, C = xd2.shape
    C1 = p["wd"].shape[1]
    C2 = p["w2"].shape[1]
    tm = _pick_tm(M, _TM_MAX_NARROW)
    cost = pl.CostEstimate(
        flops=2 * M * (2 * C * C1 + C1 * C2 + C2),
        transcendentals=M * (C1 + C2),
        bytes_accessed=2 * M * C * 2 + M * 4 + 2 * C * C1 * 2 + C1 * C2 * 2)
    vmem = _vmem_limit(2 * tm * C * 2, 2 * C * C1 * 2, C1 * C2 * 2,
                       C2 * 2, (C1 + C2 + 1) * 4, tm * 4)
    out3 = pl.pallas_call(
        _head_kernel,
        out_shape=jax.ShapeDtypeStruct((M // tm, 1, tm), jnp.float32),
        grid_spec=pltpu.PrefetchScalarGridSpec(
            num_scalar_prefetch=0,
            grid=(M // tm,),
            in_specs=[
                pl.BlockSpec((tm, C), lambda i: (i, 0)),
                pl.BlockSpec((tm, C), lambda i: (i, 0)),
                _const_spec((C, C1)),
                _const_spec((C, C1)),
                _const_spec((1, C1)),
                _const_spec((C1, C2)),
                _const_spec((1, C2)),
                _const_spec((1, C2)),
                _const_spec((1, 1)),
            ],
            out_specs=pl.BlockSpec((1, 1, tm), lambda i: (i, 0, 0)),
        ),
        compiler_params=_params(vmem),
        cost_estimate=cost,
    )(xd2, xf2, p["wd"], p["wf"], p["b1"], p["w2"], p["b2"], p["w3t"], p["b3"])
    return out3.reshape(t, 1, h, w)                       # (T, 1, H/8, W/8) f32


# ----------------------------------------------------------------------------
# Sub-module stand-ins (channel/spatial contracts follow DDCM.forward)
# ----------------------------------------------------------------------------
def shiftvit_stub(x_nchw, p, *, patch=32):
    # TODO(synk): ShiftVitCount backbone not provided; stand-in = ViT-style
    # patch embed (space-to-depth + Pallas 1x1 projection) at 1/32 resolution.
    # TODO(synk): fold the space-to-depth into the Pallas input index_map and
    # K-tile the (patch*patch*C, fm) matmul for fm=768 on v7x.
    n, c, h, w = x_nchw.shape
    hp, wp = h // patch, w // patch
    x = jnp.transpose(x_nchw, (0, 2, 3, 1))               # one-time NCHW -> NHWC
    x = x.reshape(n, hp, patch, wp, patch, c)
    x = jnp.transpose(x, (0, 1, 3, 2, 4, 5)).reshape(n * hp * wp, patch * patch * c)
    y = pointwise(x.astype(jnp.bfloat16), p["w"], p["b"])
    return y, (n, hp, wp)


def upsample_nearest_flat(x2d, spatial, n):
    """Nearest n x n upsample of a flat (t*h*w, C) tensor (XLA broadcast+reshape).
    TODO(synk): remaining HBM round trip; folding the replication into the
    producing kernel needs an in-kernel sublane reshape, kept out for safety."""
    t, h, w = spatial
    c = x2d.shape[1]
    x = x2d.reshape(t, h, 1, w, 1, c)
    x = jnp.broadcast_to(x, (t, h, n, w, n, c))
    return x.reshape(t * n * h * n * w, c), (t, n * h, n * w)


def fusion_net(x2d, spatial, p, *, shift_frac, residual=None):
    # TODO(synk): FusionNet not provided; stand-in = `depth` residual blocks of
    # [ShiftViT-style zero-padded 4-direction shift of a channel fraction +
    #  MLP(seb_ratio)], each block one fused Pallas kernel over whole frames.
    # The outer `+ residual` from DDCM.forward is fused into the LAST block.
    C = x2d.shape[1]
    g = max(1, int(C * shift_frac) // 4)   # channels per shift direction
    blocks = p["blocks"]
    if not blocks:
        return x2d if residual is None else x2d + residual
    for bi, blk in enumerate(blocks):
        res = residual if bi == len(blocks) - 1 else None
        x2d = mlp_res_block(x2d, blk, spatial=spatial, shift_g=g, residual=res)
    return x2d


# ----------------------------------------------------------------------------
# Parameters (deterministic synthetic init; weights bf16, biases f32)
# ----------------------------------------------------------------------------
def _linear(key, cin, cout):
    kw, kb = jax.random.split(key)
    w = (jax.random.normal(kw, (cin, cout), jnp.float32)
         * (1.0 / math.sqrt(cin))).astype(jnp.bfloat16)
    b = jax.random.normal(kb, (1, cout), jnp.float32) * 0.01
    return {"w": w, "b": b}


def _mlp_params(key, c, c_hidden):
    k1, k2 = jax.random.split(key)
    p1 = _linear(k1, c, c_hidden)
    p2 = _linear(k2, c_hidden, c)
    return {"w1": p1["w"], "b1": p1["b"], "w2": p2["w"], "b2": p2["b"]}


def init_params(key, *, fm=128, in_c=3, patch=32, dstb_ratio=4, seb_ratio=2, depth=6):
    keys = iter(jax.random.split(key, 64))
    c2, c4 = fm // 2, fm // 4
    params = {
        "shiftvit": _linear(next(keys), patch * patch * in_c, fm),
        "up1": _linear(next(keys), fm, c2),
        "up2": _linear(next(keys), c2, c4),               # shared by both branches
        "dstb1": _mlp_params(next(keys), c2, c2 // dstb_ratio),
        "dstb2": _mlp_params(next(keys), c4, c4 // dstb_ratio),
        "fus1": {"blocks": [_mlp_params(next(keys), c2, c2 * seb_ratio)
                            for _ in range(depth)]},
        "fus2": {"blocks": [_mlp_params(next(keys), c4, c4 * seb_ratio)
                            for _ in range(depth)]},
    }
    # Output head: Conv2d(2*c4, c4, 1) -> GELU -> Conv2d(c4, c4//2, 1) -> GELU
    #              -> Conv2d(c4//2, 1, 1)   (exactly as in the PyTorch module)
    w1 = _linear(next(keys), 2 * c4, c4)
    w2 = _linear(next(keys), c4, c4 // 2)
    w3 = _linear(next(keys), c4 // 2, 1)
    params["head"] = {
        "wd": w1["w"][:c4], "wf": w1["w"][c4:], "b1": w1["b"],
        "w2": w2["w"], "b2": w2["b"],
        "w3t": jnp.transpose(w3["w"]),                    # (1, c4//2) bf16
        "b3": w3["b"].reshape(1, 1),                      # (1, 1) f32
    }
    return params


# ----------------------------------------------------------------------------
# DDCM forward
# ----------------------------------------------------------------------------
def ddcm_forward(images, params, *, shift_c=1.0 / 3.0, patch=32):
    # images: (B, T, C, H, W); PyTorch does images.squeeze(0) -> (T, C, H, W).
    x = images[0]
    d32, sp32 = shiftvit_stub(x, params["shiftvit"], patch=patch)     # (M32, fm)

    # up_1: 1x1 conv at LOW resolution (exact: nearest-2x and 1x1 commute).
    d16_lo = pointwise(d32, params["up1"]["w"], params["up1"]["b"])   # (M32, fm/2)
    d16, sp16 = upsample_nearest_flat(d16_lo, sp32, 2)                # (M16, fm/2)

    # Dense (dstb) branch: every op is pointwise, so run the whole branch at
    # 1/32 resolution and replicate 4x4 only where it feeds the head (exact
    # for nearest upsample + 1x1/elementwise ops; ~16x fewer rows & bytes).
    dstb = mlp_res_block(d16_lo, params["dstb1"])                     # dstb_1(.)+. fused
    d8d_lo = pointwise(dstb, params["up2"]["w"], params["up2"]["b"])  # up_2 conv (upsample deferred)
    d8d_lo = mlp_res_block(d8d_lo, params["dstb2"])                   # dstb_2(.)+. fused
    d8_d, sp8 = upsample_nearest_flat(d8d_lo, sp32, 4)                # (M8, fm/4)

    # Fusion branch: needs true spatial resolution for the (zero-padded) shifts.
    fus16 = fusion_net(d16, sp16, params["fus1"], shift_frac=shift_c,
                       residual=d16)                                  # outer +d16 fused in-kernel
    d8f_16 = pointwise(fus16, params["up2"]["w"], params["up2"]["b"]) # shared up_2 conv at 1/16
    d8_f, _ = upsample_nearest_flat(d8f_16, sp16, 2)
    d8_f = fusion_net(d8_f, sp8, params["fus2"], shift_frac=shift_c,
                      residual=d8_f)                                  # outer +x fused in-kernel

    return output_head(d8_d, d8_f, params["head"], sp8)               # (T, 1, H/8, W/8)


# ----------------------------------------------------------------------------
if __name__ == "__main__":
    key = jax.random.PRNGKey(0)
    kimg, kparam = jax.random.split(key)

    # Small shapes consistent with DDCM.forward: (b, t, c, h, w), b squeezed.
    B, T, C, H, W = 1, 2, 3, 64, 64
    FM = 128  # scaled-down fm_channel (default 768) to keep the example small

    images = jax.random.normal(kimg, (B, T, C, H, W), jnp.float32)
    params = init_params(kparam, fm=FM, in_c=C, patch=32)

    fwd = jax.jit(lambda im: ddcm_forward(im, params))
    out = jax.block_until_ready(fwd(images))

    assert out.shape == (T, 1, H // 8, W // 8), out.shape
    assert out.dtype == jnp.float32
    print("KERNEL_OK")
</pallas_src>

<mosaic_0001>
module attributes {stable_mosaic.version = 11 : i64} {
  func.func @_pw_kernel(%arg0: i32, %arg1: memref<8x3072xbf16, #tpu.memory_space<vmem>>, %arg2: memref<3072x128xbf16, #tpu.memory_space<vmem>>, %arg3: memref<1x128xf32, #tpu.memory_space<vmem>>, %arg4: memref<8x128xbf16, #tpu.memory_space<vmem>>) attributes {dimension_semantics = [#tpu.dimension_semantics<parallel>], iteration_bounds = array<i64: 1>, scalar_prefetch = 0 : i64, scratch_operands = 0 : i64, tpu.core_type = #tpu.core_type<tc>, window_params = [{transform_indices = @transform_0, window_bounds = array<i64: 8, 3072>}, {pipeline_mode = #tpu.pipeline_mode<synchronous>, transform_indices = @transform_1, window_bounds = array<i64: 3072, 128>}, {pipeline_mode = #tpu.pipeline_mode<synchronous>, transform_indices = @transform_2, window_bounds = array<i64: 1, 128>}, {transform_indices = @transform_3, window_bounds = array<i64: 8, 128>}]} {
    %c0 = arith.constant 0 : index
    %c0_0 = arith.constant 0 : index
    %0 = vector.load %arg1[%c0, %c0_0] : memref<8x3072xbf16, #tpu.memory_space<vmem>>, vector<8x3072xbf16>
    %c0_1 = arith.constant 0 : index
    %c0_2 = arith.constant 0 : index
    %1 = vector.load %arg2[%c0_1, %c0_2] : memref<3072x128xbf16, #tpu.memory_space<vmem>>, vector<3072x128xbf16>
    %cst = arith.constant dense<0.000000e+00> : vector<8x128xf32>
    %2 = tpu.matmul %0, %1, %cst {dimension_numbers = #tpu.dot_dimension_numbers<[1], [0], [0], [1], [0, 0, 1, 1], [], []>} : vector<8x3072xbf16>, vector<3072x128xbf16>, vector<8x128xf32> -> vector<8x128xf32>
    %c0_3 = arith.constant 0 : index
    %c0_4 = arith.constant 0 : index
    %3 = vector.load %arg3[%c0_3, %c0_4] : memref<1x128xf32, #tpu.memory_space<vmem>>, vector<1x128xf32>
    %4 = vector.broadcast %3 : vector<1x128xf32> to vector<8x128xf32>
    %5 = arith.addf %2, %4 : vector<8x128xf32>
    %6 = arith.truncf %5 : vector<8x128xf32> to vector<8x128xbf16>
    %c0_5 = arith.constant 0 : index
    %c0_6 = arith.constant 0 : index
    %7 = vector.load %arg4[%c0_5, %c0_6] : memref<8x128xbf16, #tpu.memory_space<vmem>>, vector<8x128xbf16>
    tpu.vector_store %arg4[%c0_5, %c0_6], %6 {strides = array<i32>} : memref<8x128xbf16, #tpu.memory_space<vmem>>, vector<8x128xbf16>,
    return
  }
  func.func @transform_0(%arg0: i32) -> (i32, i32) {
    %c0_i32 = arith.constant 0 : i32
    %c0_i32_0 = arith.constant 0 : i32
    return %arg0, %c0_i32 : i32, i32
  }
  func.func @transform_1(%arg0: i32) -> (i32, i32) {
    %c0_i32 = arith.constant 0 : i32
    %c0_i32_0 = arith.constant 0 : i32
    %c0_i32_1 = arith.constant 0 : i32
    return %c0_i32, %c0_i32_0 : i32, i32
  }
  func.func @transform_2(%arg0: i32) -> (i32, i32) {
    %c0_i32 = arith.constant 0 : i32
    %c0_i32_0 = arith.constant 0 : i32
    %c0_i32_1 = arith.constant 0 : i32
    return %c0_i32, %c0_i32_0 : i32, i32
  }
  func.func @transform_3(%arg0: i32) -> (i32, i32) {
    %c0_i32 = arith.constant 0 : i32
    %c0_i32_0 = arith.constant 0 : i32
    return %arg0, %c0_i32 : i32, i32
  }
}

module attributes {stable_mosaic.version = 11 : i64} {
  func.func @_pw_kernel(%arg0: i32, %arg1: memref<8x128xbf16, #tpu.memory_space<vmem>>, %arg2: memref<128x64xbf16, #tpu.memory_space<vmem>>, %arg3: memref<1x64xf32, #tpu.memory_space<vmem>>, %arg4: memref<8x64xbf16, #tpu.memory_space<vmem>>) attributes {dimension_semantics = [#tpu.dimension_semantics<parallel>], iteration_bounds = array<i64: 1>, scalar_prefetch = 0 : i64, scratch_operands = 0 : i64, tpu.core_type = #tpu.core_type<tc>, window_params = [{transform_indices = @transform_0, window_bounds = array<i64: 8, 128>}, {pipeline_mode = #tpu.pipeline_mode<synchronous>, transform_indices = @transform_1, window_bounds = array<i64: 128, 64>}, {pipeline_mode = #tpu.pipeline_mode<synchronous>, transform_indices = @transform_2, window_bounds = array<i64: 1, 64>}, {transform_indices = @transform_3, window_bounds = array<i64: 8, 64>}]} {
    %c0 = arith.constant 0 : index
    %c0_0 = arith.constant 0 : index
    %0 = vector.load %arg1[%c0, %c0_0] : memref<8x128xbf16, #tpu.memory_space<vmem>>, vector<8x128xbf16>
    %c0_1 = arith.constant 0 : index
    %c0_2 = arith.constant 0 : index
    %1 = vector.load %arg2[%c0_1, %c0_2] : memref<128x64xbf16, #tpu.memory_space<vmem>>, vector<128x64xbf16>
    %cst = arith.constant dense<0.000000e+00> : vector<8x64xf32>
    %2 = tpu.matmul %0, %1, %cst {dimension_numbers = #tpu.dot_dimension_numbers<[1], [0], [0], [1], [0, 0, 1, 1], [], []>} : vector<8x128xbf16>, vector<128x64xbf16>, vector<8x64xf32> -> vector<8x64xf32>
    %c0_3 = arith.constant 0 : index
    %c0_4 = arith.constant 0 : index
    %3 = vector.load %arg3[%c0_3, %c0_4] : memref<1x64xf32, #tpu.memory_space<vmem>>, vector<1x64xf32>
    %4 = vector.broadcast %3 : vector<1x64xf32> to vector<8x64xf32>
    %5 = arith.addf %2, %4 : vector<8x64xf32>
    %6 = arith.truncf %5 : vector<8x64xf32> to vector<8x64xbf16>
    %c0_5 = arith.constant 0 : index
    %c0_6 = arith.constant 0 : index
    %7 = vector.load %arg4[%c0_5, %c0_6] : memref<8x64xbf16, #tpu.memory_space<vmem>>, vector<8x64xbf16>
    tpu.vector_store %arg4[%c0_5, %c0_6], %6 {strides = array<i32>} : memref<8x64xbf16, #tpu.memory_space<vmem>>, vector<8x64xbf16>,
    return
  }
  func.func @transform_0(%arg0: i32) -> (i32, i32) {
    %c0_i32 = arith.constant 0 : i32
    %c0_i32_0 = arith.constant 0 : i32
    return %arg0, %c0_i32 : i32, i32
  }
  func.func @transform_1(%arg0: i32) -> (i32, i32) {
    %c0_i32 = arith.constant 0 : i32
    %c0_i32_0 = arith.constant 0 : i32
    %c0_i32_1 = arith.constant 0 : i32
    return %c0_i32, %c0_i32_0 : i32, i32
  }
  func.func @transform_2(%arg0: i32) -> (i32, i32) {
    %c0_i32 = arith.constant 0 : i32
    %c0_i32_0 = arith.constant 0 : i32
    %c0_i32_1 = arith.constant 0 : i32
    return %c0_i32, %c0_i32_0 : i32, i32
  }
  func.func @transform_3(%arg0: i32) -> (i32, i32) {
    %c0_i32 = arith.constant 0 : i32
    %c0_i32_0 = arith.constant 0 : i32
    return %arg0, %c0_i32 : i32, i32
  }
}

module attributes {stable_mosaic.version = 11 : i64} {
  func.func @_mlp_kernel(%arg0: i32, %arg1: memref<16x64xbf16, #tpu.memory_space<vmem>>, %arg2: memref<64x128xbf16, #tpu.memory_space<vmem>>, %arg3: memref<1x128xf32, #tpu.memory_space<vmem>>, %arg4: memref<128x64xbf16, #tpu.memory_space<vmem>>, %arg5: memref<1x64xf32, #tpu.memory_space<vmem>>, %arg6: memref<16x64xbf16, #tpu.memory_space<vmem>>) attributes {dimension_semantics = [#tpu.dimension_semantics<parallel>], iteration_bounds = array<i64: 2>, scalar_prefetch = 0 : i64, scratch_operands = 0 : i64, tpu.core_type = #tpu.core_type<tc>, window_params = [{transform_indices = @transform_0, window_bounds = array<i64: 16, 64>}, {pipeline_mode = #tpu.pipeline_mode<synchronous>, transform_indices = @transform_1, window_bounds = array<i64: 64, 128>}, {pipeline_mode = #tpu.pipeline_mode<synchronous>, transform_indices = @transform_2, window_bounds = array<i64: 1, 128>}, {pipeline_mode = #tpu.pipeline_mode<synchronous>, transform_indices = @transform_3, window_bounds = array<i64: 128, 64>}, {pipeline_mode = #tpu.pipeline_mode<synchronous>, transform_indices = @transform_4, window_bounds = array<i64: 1, 64>}, {transform_indices = @transform_5, window_bounds = array<i64: 16, 64>}]} {
    %c0 = arith.constant 0 : index
    %c0_0 = arith.constant 0 : index
    %0 = vector.load %arg1[%c0, %c0_0] : memref<16x64xbf16, #tpu.memory_space<vmem>>, vector<16x64xbf16>
    %1 = vector.extract_strided_slice %0 {offsets = [0, 0], sizes = [16, 20], strides = [1, 1]} : vector<16x64xbf16> to vector<16x20xbf16>
    %2 = arith.extf %1 : vector<16x20xbf16> to vector<16x20xf32>
    %3 = tpu.iota {dimensions = array<i32: 0>} : vector<16x20xi32>
    %4 = tpu.iota {dimensions = array<i32: 1>} : vector<16x20xi32>
    %cst = arith.constant 0.000000e+00 : f32
    %5 = vector.broadcast %cst : f32 to vector<16x20xf32>
    %c4_i32 = arith.constant 4 : i32
    %6 = vector.broadcast %c4_i32 : i32 to vector<16x20xi32>
    %7 = arith.cmpi slt, %3, %6 : vector<16x20xi32>
    %c4_i32_1 = arith.constant 4 : i32
    %8 = tpu.dynamic_rotate %2 by %c4_i32_1 dim 0 : vector<16x20xf32>, i32 -> vector<16x20xf32>
    %9 = arith.select %7, %5, %8 : vector<16x20xi1>, vector<16x20xf32>
    %c12_i32 = arith.constant 12 : i32
    %10 = vector.broadcast %c12_i32 : i32 to vector<16x20xi32>
    %11 = arith.cmpi sge, %3, %10 : vector<16x20xi32>
    %c12_i32_2 = arith.constant 12 : i32
    %12 = tpu.dynamic_rotate %2 by %c12_i32_2 dim 0 : vector<16x20xf32>, i32 -> vector<16x20xf32>
    %13 = arith.select %11, %5, %12 : vector<16x20xi1>, vector<16x20xf32>
    %c4_i32_3 = arith.constant 4 : i32
    %c0_i32 = arith.constant 0 : i32
    %14 = arith.cmpi eq, %c4_i32_3, %c0_i32 : i32
    %c1_i32 = arith.constant 1 : i32
    %15 = arith.select %14, %c1_i32, %c4_i32_3 : i32
    %16 = vector.broadcast %15 : i32 to vector<16x20xi32>
    %17 = arith.remsi %3, %16 : vector<16x20xi32>
    %c0_i32_4 = arith.constant 0 : i32
    %18 = vector.broadcast %c0_i32_4 : i32 to vector<16x20xi32>
    %19 = arith.cmpi ne, %17, %18 : vector<16x20xi32>
    %c0_i32_5 = arith.constant 0 : i32
    %20 = vector.broadcast %c0_i32_5 : i32 to vector<16x20xi32>
    %21 = arith.cmpi slt, %17, %20 : vector<16x20xi32>
    %c0_i32_6 = arith.constant 0 : i32
    %22 = arith.cmpi slt, %15, %c0_i32_6 : i32
    %23 = vector.broadcast %22 : i1 to vector<16x20xi1>
    %24 = vector.broadcast %23 : vector<16x20xi1> to vector<16x20xi1>
    %25 = arith.xori %21, %24 : vector<16x20xi1>
    %26 = arith.andi %25, %19 : vector<16x20xi1>
    %27 = vector.broadcast %15 : i32 to vector<16x20xi32>
    %28 = arith.addi %17, %27 : vector<16x20xi32>
    %29 = arith.select %26, %28, %17 : vector<16x20xi1>, vector<16x20xi32>
    %c0_i32_7 = arith.constant 0 : i32
    %30 = vector.broadcast %c0_i32_7 : i32 to vector<16x20xi32>
    %31 = arith.cmpi eq, %29, %30 : vector<16x20xi32>
    %c1_i32_8 = arith.constant 1 : i32
    %32 = tpu.dynamic_rotate %2 by %c1_i32_8 dim 0 : vector<16x20xf32>, i32 -> vector<16x20xf32>
    %33 = arith.select %31, %5, %32 : vector<16x20xi1>, vector<16x20xf32>
    %c4_i32_9 = arith.constant 4 : i32
    %c0_i32_10 = arith.constant 0 : i32
    %34 = arith.cmpi eq, %c4_i32_9, %c0_i32_10 : i32
    %c1_i32_11 = arith.constant 1 : i32
    %35 = arith.select %34, %c1_i32_11, %c4_i32_9 : i32
    %36 = vector.broadcast %35 : i32 to vector<16x20xi32>
    %37 = arith.remsi %3, %36 : vector<16x20xi32>
    %c0_i32_12 = arith.constant 0 : i32
    %38 = vector.broadcast %c0_i32_12 : i32 to vector<16x20xi32>
    %39 = arith.cmpi ne, %37, %38 : vector<16x20xi32>
    %c0_i32_13 = arith.constant 0 : i32
    %40 = vector.broadcast %c0_i32_13 : i32 to vector<16x20xi32>
    %41 = arith.cmpi slt, %37, %40 : vector<16x20xi32>
    %c0_i32_14 = arith.constant 0 : i32
    %42 = arith.cmpi slt, %35, %c0_i32_14 : i32
    %43 = vector.broadcast %42 : i1 to vector<16x20xi1>
    %44 = vector.broadcast %43 : vector<16x20xi1> to vector<16x20xi1>
    %45 = arith.xori %41, %44 : vector<16x20xi1>
    %46 = arith.andi %45, %39 : vector<16x20xi1>
    %47 = vector.broadcast %35 : i32 to vector<16x20xi32>
    %48 = arith.addi %37, %47 : vector<16x20xi32>
    %49 = arith.select %46, %48, %37 : vector<16x20xi1>, vector<16x20xi32>
    %c3_i32 = arith.constant 3 : i32
    %50 = vector.broadcast %c3_i32 : i32 to vector<16x20xi32>
    %51 = arith.cmpi eq, %49, %50 : vector<16x20xi32>
    %c15_i32 = arith.constant 15 : i32
    %52 = tpu.dynamic_rotate %2 by %c15_i32 dim 0 : vector<16x20xf32>, i32 -> vector<16x20xf32>
    %53 = arith.select %51, %5, %52 : vector<16x20xi1>, vector<16x20xf32>
    %c5_i32 = arith.constant 5 : i32
    %54 = vector.broadcast %c5_i32 : i32 to vector<16x20xi32>
    %55 = arith.cmpi slt, %4, %54 : vector<16x20xi32>
    %c10_i32 = arith.constant 10 : i32
    %56 = vector.broadcast %c10_i32 : i32 to vector<16x20xi32>
    %57 = arith.cmpi slt, %4, %56 : vector<16x20xi32>
    %c15_i32_15 = arith.constant 15 : i32
    %58 = vector.broadcast %c15_i32_15 : i32 to vector<16x20xi32>
    %59 = arith.cmpi slt, %4, %58 : vector<16x20xi32>
    %60 = arith.select %59, %33, %53 : vector<16x20xi1>, vector<16x20xf32>
    %61 = arith.select %57, %13, %60 : vector<16x20xi1>, vector<16x20xf32>
    %62 = arith.select %55, %9, %61 : vector<16x20xi1>, vector<16x20xf32>
    %63 = arith.truncf %62 : vector<16x20xf32> to vector<16x20xbf16>
    %64 = vector.extract_strided_slice %0 {offsets = [0, 20], sizes = [16, 44], strides = [1, 1]} : vector<16x64xbf16> to vector<16x44xbf16>
    %65 = tpu.concatenate %63, %64 in 1 : vector<16x20xbf16>, vector<16x44xbf16> -> vector<16x64xbf16>
    %c0_16 = arith.constant 0 : index
    %c0_17 = arith.constant 0 : index
    %66 = vector.load %arg2[%c0_16, %c0_17] : memref<64x128xbf16, #tpu.memory_space<vmem>>, vector<64x128xbf16>
    %cst_18 = arith.constant dense<0.000000e+00> : vector<16x128xf32>
    %67 = tpu.matmul %65, %66, %cst_18 {dimension_numbers = #tpu.dot_dimension_numbers<[1], [0], [0], [1], [0, 0, 1, 1], [], []>} : vector<16x64xbf16>, vector<64x128xbf16>, vector<16x128xf32> -> vector<16x128xf32>
    %c0_19 = arith.constant 0 : index
    %c0_20 = arith.constant 0 : index
    %68 = vector.load %arg3[%c0_19, %c0_20] : memref<1x128xf32, #tpu.memory_space<vmem>>, vector<1x128xf32>
    %69 = vector.broadcast %68 : vector<1x128xf32> to vector<16x128xf32>
    %70 = arith.addf %67, %69 : vector<16x128xf32>
    %cst_21 = arith.constant 5.000000e-01 : f32
    %71 = vector.broadcast %cst_21 : f32 to vector<16x128xf32>
    %72 = arith.mulf %71, %70 : vector<16x128xf32>
    %cst_22 = arith.constant 4.471500e-02 : f32
    %73 = vector.broadcast %cst_22 : f32 to vector<16x128xf32>
    %74 = arith.mulf %73, %70 : vector<16x128xf32>
    %75 = arith.mulf %74, %70 : vector<16x128xf32>
    %76 = arith.mulf %75, %70 : vector<16x128xf32>
    %77 = arith.addf %70, %76 : vector<16x128xf32>
    %cst_23 = arith.constant 0.797884583 : f32
    %78 = vector.broadcast %cst_23 : f32 to vector<16x128xf32>
    %79 = arith.mulf %78, %77 : vector<16x128xf32>
    %80 = math.tanh %79 : vector<16x128xf32>
    %cst_24 = arith.constant 1.000000e+00 : f32
    %81 = vector.broadcast %cst_24 : f32 to vector<16x128xf32>
    %82 = arith.addf %81, %80 : vector<16x128xf32>
    %83 = arith.mulf %72, %82 : vector<16x128xf32>
    %84 = arith.truncf %83 : vector<16x128xf32> to vector<16x128xbf16>
    %c0_25 = arith.constant 0 : index
    %c0_26 = arith.constant 0 : index
    %85 = vector.load %arg4[%c0_25, %c0_26] : memref<128x64xbf16, #tpu.memory_space<vmem>>, vector<128x64xbf16>
    %cst_27 = arith.constant dense<0.000000e+00> : vector<16x64xf32>
    %86 = tpu.matmul %84, %85, %cst_27 {dimension_numbers = #tpu.dot_dimension_numbers<[1], [0], [0], [1], [0, 0, 1, 1], [], []>} : vector<16x128xbf16>, vector<128x64xbf16>, vector<16x64xf32> -> vector<16x64xf32>
    %c0_28 = arith.constant 0 : index
    %c0_29 = arith.constant 0 : index
    %87 = vector.load %arg5[%c0_28, %c0_29] : memref<1x64xf32, #tpu.memory_space<vmem>>, vector<1x64xf32>
    %88 = vector.broadcast %87 : vector<1x64xf32> to vector<16x64xf32>
    %89 = arith.addf %86, %88 : vector<16x64xf32>
    %90 = arith.extf %0 : vector<16x64xbf16> to vector<16x64xf32>
    %91 = arith.addf %89, %90 : vector<16x64xf32>
    %92 = arith.truncf %91 : vector<16x64xf32> to vector<16x64xbf16>
    %c0_30 = arith.constant 0 : index
    %c0_31 = arith.constant 0 : index
    %93 = vector.load %arg6[%c0_30, %c0_31] : memref<16x64xbf16, #tpu.memory_space<vmem>>, vector<16x64xbf16>
    tpu.vector_store %arg6[%c0_30, %c0_31], %92 {strides = array<i32>} : memref<16x64xbf16, #tpu.memory_space<vmem>>, vector<16x64xbf16>,
    return
  }
  func.func @transform_0(%arg0: i32) -> (i32, i32) {
    %c0_i32 = arith.constant 0 : i32
    %c0_i32_0 = arith.constant 0 : i32
    return %arg0, %c0_i32 : i32, i32
  }
  func.func @transform_1(%arg0: i32) -> (i32, i32) {
    %c0_i32 = arith.constant 0 : i32
    %c0_i32_0 = arith.constant 0 : i32
    %c0_i32_1 = arith.constant 0 : i32
    return %c0_i32, %c0_i32_0 : i32, i32
  }
  func.func @transform_2(%arg0: i32) -> (i32, i32) {
    %c0_i32 = arith.constant 0 : i32
    %c0_i32_0 = arith.constant 0 : i32
    %c0_i32_1 = arith.constant 0 : i32
    return %c0_i32, %c0_i32_0 : i32, i32
  }
  func.func @transform_3(%arg0: i32) -> (i32, i32) {
    %c0_i32 = arith.constant 0 : i32
    %c0_i32_0 = arith.constant 0 : i32
    %c0_i32_1 = arith.constant 0 : i32
    return %c0_i32, %c0_i32_0 : i32, i32
  }
  func.func @transform_4(%arg0: i32) -> (i32, i32) {
    %c0_i32 = arith.constant 0 : i32
    %c0_i32_0 = arith.constant 0 : i32
    %c0_i32_1 = arith.constant 0 : i32
    return %c0_i32, %c0_i32_0 : i32, i32
  }
  func.func @transform_5(%arg0: i32) -> (i32, i32) {
    %c0_i32 = arith.constant 0 : i32
    %c0_i32_0 = arith.constant 0 : i32
    return %arg0, %c0_i32 : i32, i32
  }
}

module attributes {stable_mosaic.version = 11 : i64} {
  func.func @_pw_kernel(%arg0: i32, %arg1: memref<16x64xbf16, #tpu.memory_space<vmem>>, %arg2: memref<64x32xbf16, #tpu.memory_space<vmem>>, %arg3: memref<1x32xf32, #tpu.memory_space<vmem>>, %arg4: memref<16x32xbf16, #tpu.memory_space<vmem>>) attributes {dimension_semantics = [#tpu.dimension_semantics<parallel>], iteration_bounds = array<i64: 2>, scalar_prefetch = 0 : i64, scratch_operands = 0 : i64, tpu.core_type = #tpu.core_type<tc>, window_params = [{transform_indices = @transform_0, window_bounds = array<i64: 16, 64>}, {pipeline_mode = #tpu.pipeline_mode<synchronous>, transform_indices = @transform_1, window_bounds = array<i64: 64, 32>}, {pipeline_mode = #tpu.pipeline_mode<synchronous>, transform_indices = @transform_2, window_bounds = array<i64: 1, 32>}, {transform_indices = @transform_3, window_bounds = array<i64: 16, 32>}]} {
    %c0 = arith.constant 0 : index
    %c0_0 = arith.constant 0 : index
    %0 = vector.load %arg1[%c0, %c0_0] : memref<16x64xbf16, #tpu.memory_space<vmem>>, vector<16x64xbf16>
    %c0_1 = arith.constant 0 : index
    %c0_2 = arith.constant 0 : index
    %1 = vector.load %arg2[%c0_1, %c0_2] : memref<64x32xbf16, #tpu.memory_space<vmem>>, vector<64x32xbf16>
    %cst = arith.constant dense<0.000000e+00> : vector<16x32xf32>
    %2 = tpu.matmul %0, %1, %cst {dimension_numbers = #tpu.dot_dimension_numbers<[1], [0], [0], [1], [0, 0, 1, 1], [], []>} : vector<16x64xbf16>, vector<64x32xbf16>, vector<16x32xf32> -> vector<16x32xf32>
    %c0_3 = arith.constant 0 : index
    %c0_4 = arith.constant 0 : index
    %3 = vector.load %arg3[%c0_3, %c0_4] : memref<1x32xf32, #tpu.memory_space<vmem>>, vector<1x32xf32>
    %4 = vector.broadcast %3 : vector<1x32xf32> to vector<16x32xf32>
    %5 = arith.addf %2, %4 : vector<16x32xf32>
    %6 = arith.truncf %5 : vector<16x32xf32> to vector<16x32xbf16>
    %c0_5 = arith.constant 0 : index
    %c0_6 = arith.constant 0 : index
    %7 = vector.load %arg4[%c0_5, %c0_6] : memref<16x32xbf16, #tpu.memory_space<vmem>>, vector<16x32xbf16>
    tpu.vector_store %arg4[%c0_5, %c0_6], %6 {strides = array<i32>} : memref<16x32xbf16, #tpu.memory_space<vmem>>, vector<16x32xbf16>,
    return
  }
  func.func @transform_0(%arg0: i32) -> (i32, i32) {
    %c0_i32 = arith.constant 0 : i32
    %c0_i32_0 = arith.constant 0 : i32
    return %arg0, %c0_i32 : i32, i32
  }
  func.func @transform_1(%arg0: i32) -> (i32, i32) {
    %c0_i32 = arith.constant 0 : i32
    %c0_i32_0 = arith.constant 0 : i32
    %c0_i32_1 = arith.constant 0 : i32
    return %c0_i32, %c0_i32_0 : i32, i32
  }
  func.func @transform_2(%arg0: i32) -> (i32, i32) {
    %c0_i32 = arith.constant 0 : i32
    %c0_i32_0 = arith.constant 0 : i32
    %c0_i32_1 = arith.constant 0 : i32
    return %c0_i32, %c0_i32_0 : i32, i32
  }
  func.func @transform_3(%arg0: i32) -> (i32, i32) {
    %c0_i32 = arith.constant 0 : i32
    %c0_i32_0 = arith.constant 0 : i32
    return %arg0, %c0_i32 : i32, i32
  }
}

module attributes {stable_mosaic.version = 11 : i64} {
  func.func @_mlp_res_kernel(%arg0: i32, %arg1: memref<16x64xbf16, #tpu.memory_space<vmem>>, %arg2: memref<64x128xbf16, #tpu.memory_space<vmem>>, %arg3: memref<1x128xf32, #tpu.memory_space<vmem>>, %arg4: memref<128x64xbf16, #tpu.memory_space<vmem>>, %arg5: memref<1x64xf32, #tpu.memory_space<vmem>>, %arg6: memref<16x64xbf16, #tpu.memory_space<vmem>>, %arg7: memref<16x64xbf16, #tpu.memory_space<vmem>>) attributes {dimension_semantics = [#tpu.dimension_semantics<parallel>], iteration_bounds = array<i64: 2>, scalar_prefetch = 0 : i64, scratch_operands = 0 : i64, tpu.core_type = #tpu.core_type<tc>, window_params = [{transform_indices = @transform_0, window_bounds = array<i64: 16, 64>}, {pipeline_mode = #tpu.pipeline_mode<synchronous>, transform_indices = @transform_1, window_bounds = array<i64: 64, 128>}, {pipeline_mode = #tpu.pipeline_mode<synchronous>, transform_indices = @transform_2, window_bounds = array<i64: 1, 128>}, {pipeline_mode = #tpu.pipeline_mode<synchronous>, transform_indices = @transform_3, window_bounds = array<i64: 128, 64>}, {pipeline_mode = #tpu.pipeline_mode<synchronous>, transform_indices = @transform_4, window_bounds = array<i64: 1, 64>}, {transform_indices = @transform_5, window_bounds = array<i64: 16, 64>}, {transform_indices = @transform_6, window_bounds = array<i64: 16, 64>}]} {
    %c0 = arith.constant 0 : index
    %c0_0 = arith.constant 0 : index
    %0 = vector.load %arg1[%c0, %c0_0] : memref<16x64xbf16, #tpu.memory_space<vmem>>, vector<16x64xbf16>
    %1 = vector.extract_strided_slice %0 {offsets = [0, 0], sizes = [16, 20], strides = [1, 1]} : vector<16x64xbf16> to vector<16x20xbf16>
    %2 = arith.extf %1 : vector<16x20xbf16> to vector<16x20xf32>
    %3 = tpu.iota {dimensions = array<i32: 0>} : vector<16x20xi32>
    %4 = tpu.iota {dimensions = array<i32: 1>} : vector<16x20xi32>
    %cst = arith.constant 0.000000e+00 : f32
    %5 = vector.broadcast %cst : f32 to vector<16x20xf32>
    %c4_i32 = arith.constant 4 : i32
    %6 = vector.broadcast %c4_i32 : i32 to vector<16x20xi32>
    %7 = arith.cmpi slt, %3, %6 : vector<16x20xi32>
    %c4_i32_1 = arith.constant 4 : i32
    %8 = tpu.dynamic_rotate %2 by %c4_i32_1 dim 0 : vector<16x20xf32>, i32 -> vector<16x20xf32>
    %9 = arith.select %7, %5, %8 : vector<16x20xi1>, vector<16x20xf32>
    %c12_i32 = arith.constant 12 : i32
    %10 = vector.broadcast %c12_i32 : i32 to vector<16x20xi32>
    %11 = arith.cmpi sge, %3, %10 : vector<16x20xi32>
    %c12_i32_2 = arith.constant 12 : i32
    %12 = tpu.dynamic_rotate %2 by %c12_i32_2 dim 0 : vector<16x20xf32>, i32 -> vector<16x20xf32>
    %13 = arith.select %11, %5, %12 : vector<16x20xi1>, vector<16x20xf32>
    %c4_i32_3 = arith.constant 4 : i32
    %c0_i32 = arith.constant 0 : i32
    %14 = arith.cmpi eq, %c4_i32_3, %c0_i32 : i32
    %c1_i32 = arith.constant 1 : i32
    %15 = arith.select %14, %c1_i32, %c4_i32_3 : i32
    %16 = vector.broadcast %15 : i32 to vector<16x20xi32>
    %17 = arith.remsi %3, %16 : vector<16x20xi32>
    %c0_i32_4 = arith.constant 0 : i32
    %18 = vector.broadcast %c0_i32_4 : i32 to vector<16x20xi32>
    %19 = arith.cmpi ne, %17, %18 : vector<16x20xi32>
    %c0_i32_5 = arith.constant 0 : i32
    %20 = vector.broadcast %c0_i32_5 : i32 to vector<16x20xi32>
    %21 = arith.cmpi slt, %17, %20 : vector<16x20xi32>
    %c0_i32_6 = arith.constant 0 : i32
    %22 = arith.cmpi slt, %15, %c0_i32_6 : i32
    %23 = vector.broadcast %22 : i1 to vector<16x20xi1>
    %24 = vector.broadcast %23 : vector<16x20xi1> to vector<16x20xi1>
    %25 = arith.xori %21, %24 : vector<16x20xi1>
    %26 = arith.andi %25, %19 : vector<16x20xi1>
    %27 = vector.broadcast %15 : i32 to vector<16x20xi32>
    %28 = arith.addi %17, %27 : vector<16x20xi32>
    %29 = arith.select %26, %28, %17 : vector<16x20xi1>, vector<16x20xi32>
    %c0_i32_7 = arith.constant 0 : i32
    %30 = vector.broadcast %c0_i32_7 : i32 to vector<16x20xi32>
    %31 = arith.cmpi eq, %29, %30 : vector<16x20xi32>
    %c1_i32_8 = arith.constant 1 : i32
    %32 = tpu.dynamic_rotate %2 by %c1_i32_8 dim 0 : vector<16x20xf32>, i32 -> vector<16x20xf32>
    %33 = arith.select %31, %5, %32 : vector<16x20xi1>, vector<16x20xf32>
    %c4_i32_9 = arith.constant 4 : i32
    %c0_i32_10 = arith.constant 0 : i32
    %34 = arith.cmpi eq, %c4_i32_9, %c0_i32_10 : i32
    %c1_i32_11 = arith.constant 1 : i32
    %35 = arith.select %34, %c1_i32_11, %c4_i32_9 : i32
    %36 = vector.broadcast %35 : i32 to vector<16x20xi32>
    %37 = arith.remsi %3, %36 : vector<16x20xi32>
    %c0_i32_12 = arith.constant 0 : i32
    %38 = vector.broadcast %c0_i32_12 : i32 to vector<16x20xi32>
    %39 = arith.cmpi ne, %37, %38 : vector<16x20xi32>
    %c0_i32_13 = arith.constant 0 : i32
    %40 = vector.broadcast %c0_i32_13 : i32 to vector<16x20xi32>
    %41 = arith.cmpi slt, %37, %40 : vector<16x20xi32>
    %c0_i32_14 = arith.constant 0 : i32
    %42 = arith.cmpi slt, %35, %c0_i32_14 : i32
    %43 = vector.broadcast %42 : i1 to vector<16x20xi1>
    %44 = vector.broadcast %43 : vector<16x20xi1> to vector<16x20xi1>
    %45 = arith.xori %41, %44 : vector<16x20xi1>
    %46 = arith.andi %45, %39 : vector<16x20xi1>
    %47 = vector.broadcast %35 : i32 to vector<16x20xi32>
    %48 = arith.addi %37, %47 : vector<16x20xi32>
    %49 = arith.select %46, %48, %37 : vector<16x20xi1>, vector<16x20xi32>
    %c3_i32 = arith.constant 3 : i32
    %50 = vector.broadcast %c3_i32 : i32 to vector<16x20xi32>
    %51 = arith.cmpi eq, %49, %50 : vector<16x20xi32>
    %c15_i32 = arith.constant 15 : i32
    %52 = tpu.dynamic_rotate %2 by %c15_i32 dim 0 : vector<16x20xf32>, i32 -> vector<16x20xf32>
    %53 = arith.select %51, %5, %52 : vector<16x20xi1>, vector<16x20xf32>
    %c5_i32 = arith.constant 5 : i32
    %54 = vector.broadcast %c5_i32 : i32 to vector<16x20xi32>
    %55 = arith.cmpi slt, %4, %54 : vector<16x20xi32>
    %c10_i32 = arith.constant 10 : i32
    %56 = vector.broadcast %c10_i32 : i32 to vector<16x20xi32>
    %57 = arith.cmpi slt, %4, %56 : vector<16x20xi32>
    %c15_i32_15 = arith.constant 15 : i32
    %58 = vector.broadcast %c15_i32_15 : i32 to vector<16x20xi32>
    %59 = arith.cmpi slt, %4, %58 : vector<16x20xi32>
    %60 = arith.select %59, %33, %53 : vector<16x20xi1>, vector<16x20xf32>
    %61 = arith.select %57, %13, %60 : vector<16x20xi1>, vector<16x20xf32>
    %62 = arith.select %55, %9, %61 : vector<16x20xi1>, vector<16x20xf32>
    %63 = arith.truncf %62 : vector<16x20xf32> to vector<16x20xbf16>
    %64 = vector.extract_strided_slice %0 {offsets = [0, 20], sizes = [16, 44], strides = [1, 1]} : vector<16x64xbf16> to vector<16x44xbf16>
    %65 = tpu.concatenate %63, %64 in 1 : vector<16x20xbf16>, vector<16x44xbf16> -> vector<16x64xbf16>
    %c0_16 = arith.constant 0 : index
    %c0_17 = arith.constant 0 : index
    %66 = vector.load %arg2[%c0_16, %c0_17] : memref<64x128xbf16, #tpu.memory_space<vmem>>, vector<64x128xbf16>
    %cst_18 = arith.constant dense<0.000000e+00> : vector<16x128xf32>
    %67 = tpu.matmul %65, %66, %cst_18 {dimension_numbers = #tpu.dot_dimension_numbers<[1], [0], [0], [1], [0, 0, 1, 1], [], []>} : vector<16x64xbf16>, vector<64x128xbf16>, vector<16x128xf32> -> vector<16x128xf32>
    %c0_19 = arith.constant 0 : index
    %c0_20 = arith.constant 0 : index
    %68 = vector.load %arg3[%c0_19, %c0_20] : memref<1x128xf32, #tpu.memory_space<vmem>>, vector<1x128xf32>
    %69 = vector.broadcast %68 : vector<1x128xf32> to vector<16x128xf32>
    %70 = arith.addf %67, %69 : vector<16x128xf32>
    %cst_21 = arith.constant 5.000000e-01 : f32
    %71 = vector.broadcast %cst_21 : f32 to vector<16x128xf32>
    %72 = arith.mulf %71, %70 : vector<16x128xf32>
    %cst_22 = arith.constant 4.471500e-02 : f32
    %73 = vector.broadcast %cst_22 : f32 to vector<16x128xf32>
    %74 = arith.mulf %73, %70 : vector<16x128xf32>
    %75 = arith.mulf %74, %70 : vector<16x128xf32>
    %76 = arith.mulf %75, %70 : vector<16x128xf32>
    %77 = arith.addf %70, %76 : vector<16x128xf32>
    %cst_23 = arith.constant 0.797884583 : f32
    %78 = vector.broadcast %cst_23 : f32 to vector<16x128xf32>
    %79 = arith.mulf %78, %77 : vector<16x128xf32>
    %80 = math.tanh %79 : vector<16x128xf32>
    %cst_24 = arith.constant 1.000000e+00 : f32
    %81 = vector.broadcast %cst_24 : f32 to vector<16x128xf32>
    %82 = arith.addf %81, %80 : vector<16x128xf32>
    %83 = arith.mulf %72, %82 : vector<16x128xf32>
    %84 = arith.truncf %83 : vector<16x128xf32> to vector<16x128xbf16>
    %c0_25 = arith.constant 0 : index
    %c0_26 = arith.constant 0 : index
    %85 = vector.load %arg4[%c0_25, %c0_26] : memref<128x64xbf16, #tpu.memory_space<vmem>>, vector<128x64xbf16>
    %cst_27 = arith.constant dense<0.000000e+00> : vector<16x64xf32>
    %86 = tpu.matmul %84, %85, %cst_27 {dimension_numbers = #tpu.dot_dimension_numbers<[1], [0], [0], [1], [0, 0, 1, 1], [], []>} : vector<16x128xbf16>, vector<128x64xbf16>, vector<16x64xf32> -> vector<16x64xf32>
    %c0_28 = arith.constant 0 : index
    %c0_29 = arith.constant 0 : index
    %87 = vector.load %arg5[%c0_28, %c0_29] : memref<1x64xf32, #tpu.memory_space<vmem>>, vector<1x64xf32>
    %88 = vector.broadcast %87 : vector<1x64xf32> to vector<16x64xf32>
    %89 = arith.addf %86, %88 : vector<16x64xf32>
    %90 = arith.extf %0 : vector<16x64xbf16> to vector<16x64xf32>
    %91 = arith.addf %89, %90 : vector<16x64xf32>
    %c0_30 = arith.constant 0 : index
    %c0_31 = arith.constant 0 : index
    %92 = vector.load %arg6[%c0_30, %c0_31] : memref<16x64xbf16, #tpu.memory_space<vmem>>, vector<16x64xbf16>
    %93 = arith.extf %92 : vector<16x64xbf16> to vector<16x64xf32>
    %94 = arith.addf %91, %93 : vector<16x64xf32>
    %95 = arith.truncf %94 : vector<16x64xf32> to vector<16x64xbf16>
    %c0_32 = arith.constant 0 : index
    %c0_33 = arith.constant 0 : index
    %96 = vector.load %arg7[%c0_32, %c0_33] : memref<16x64xbf16, #tpu.memory_space<vmem>>, vector<16x64xbf16>
    tpu.vector_store %arg7[%c0_32, %c0_33], %95 {strides = array<i32>} : memref<16x64xbf16, #tpu.memory_space<vmem>>, vector<16x64xbf16>,
    return
  }
  func.func @transform_0(%arg0: i32) -> (i32, i32) {
    %c0_i32 = arith.constant 0 : i32
    %c0_i32_0 = arith.constant 0 : i32
    return %arg0, %c0_i32 : i32, i32
  }
  func.func @transform_1(%arg0: i32) -> (i32, i32) {
    %c0_i32 = arith.constant 0 : i32
    %c0_i32_0 = arith.constant 0 : i32
    %c0_i32_1 = arith.constant 0 : i32
    return %c0_i32, %c0_i32_0 : i32, i32
  }
  func.func @transform_2(%arg0: i32) -> (i32, i32) {
    %c0_i32 = arith.constant 0 : i32
    %c0_i32_0 = arith.constant 0 : i32
    %c0_i32_1 = arith.constant 0 : i32
    return %c0_i32, %c0_i32_0 : i32, i32
  }
  func.func @transform_3(%arg0: i32) -> (i32, i32) {
    %c0_i32 = arith.constant 0 : i32
    %c0_i32_0 = arith.constant 0 : i32
    %c0_i32_1 = arith.constant 0 : i32
    return %c0_i32, %c0_i32_0 : i32, i32
  }
  func.func @transform_4(%arg0: i32) -> (i32, i32) {
    %c0_i32 = arith.constant 0 : i32
    %c0_i32_0 = arith.constant 0 : i32
    %c0_i32_1 = arith.constant 0 : i32
    return %c0_i32, %c0_i32_0 : i32, i32
  }
  func.func @transform_5(%arg0: i32) -> (i32, i32) {
    %c0_i32 = arith.constant 0 : i32
    %c0_i32_0 = arith.constant 0 : i32
    return %arg0, %c0_i32 : i32, i32
  }
  func.func @transform_6(%arg0: i32) -> (i32, i32) {
    %c0_i32 = arith.constant 0 : i32
    %c0_i32_0 = arith.constant 0 : i32
    return %arg0, %c0_i32 : i32, i32
  }
}

module attributes {stable_mosaic.version = 11 : i64} {
  func.func @_mlp_kernel(%arg0: i32, %arg1: memref<64x32xbf16, #tpu.memory_space<vmem>>, %arg2: memref<32x64xbf16, #tpu.memory_space<vmem>>, %arg3: memref<1x64xf32, #tpu.memory_space<vmem>>, %arg4: memref<64x32xbf16, #tpu.memory_space<vmem>>, %arg5: memref<1x32xf32, #tpu.memory_space<vmem>>, %arg6: memref<64x32xbf16, #tpu.memory_space<vmem>>) attributes {dimension_semantics = [#tpu.dimension_semantics<parallel>], iteration_bounds = array<i64: 2>, scalar_prefetch = 0 : i64, scratch_operands = 0 : i64, tpu.core_type = #tpu.core_type<tc>, window_params = [{transform_indices = @transform_0, window_bounds = array<i64: 64, 32>}, {pipeline_mode = #tpu.pipeline_mode<synchronous>, transform_indices = @transform_1, window_bounds = array<i64: 32, 64>}, {pipeline_mode = #tpu.pipeline_mode<synchronous>, transform_indices = @transform_2, window_bounds = array<i64: 1, 64>}, {pipeline_mode = #tpu.pipeline_mode<synchronous>, transform_indices = @transform_3, window_bounds = array<i64: 64, 32>}, {pipeline_mode = #tpu.pipeline_mode<synchronous>, transform_indices = @transform_4, window_bounds = array<i64: 1, 32>}, {transform_indices = @transform_5, window_bounds = array<i64: 64, 32>}]} {
    %c0 = arith.constant 0 : index
    %c0_0 = arith.constant 0 : index
    %0 = vector.load %arg1[%c0, %c0_0] : memref<64x32xbf16, #tpu.memory_space<vmem>>, vector<64x32xbf16>
    %1 = vector.extract_strided_slice %0 {offsets = [0, 0], sizes = [64, 8], strides = [1, 1]} : vector<64x32xbf16> to vector<64x8xbf16>
    %2 = arith.extf %1 : vector<64x8xbf16> to vector<64x8xf32>
    %3 = tpu.iota {dimensions = array<i32: 0>} : vector<64x8xi32>
    %4 = tpu.iota {dimensions = array<i32: 1>} : vector<64x8xi32>
    %cst = arith.constant 0.000000e+00 : f32
    %5 = vector.broadcast %cst : f32 to vector<64x8xf32>
    %c8_i32 = arith.constant 8 : i32
    %6 = vector.broadcast %c8_i32 : i32 to vector<64x8xi32>
    %7 = arith.cmpi slt, %3, %6 : vector<64x8xi32>
    %c8_i32_1 = arith.constant 8 : i32
    %8 = tpu.dynamic_rotate %2 by %c8_i32_1 dim 0 : vector<64x8xf32>, i32 -> vector<64x8xf32>
    %9 = arith.select %7, %5, %8 : vector<64x8xi1>, vector<64x8xf32>
    %c56_i32 = arith.constant 56 : i32
    %10 = vector.broadcast %c56_i32 : i32 to vector<64x8xi32>
    %11 = arith.cmpi sge, %3, %10 : vector<64x8xi32>
    %c56_i32_2 = arith.constant 56 : i32
    %12 = tpu.dynamic_rotate %2 by %c56_i32_2 dim 0 : vector<64x8xf32>, i32 -> vector<64x8xf32>
    %13 = arith.select %11, %5, %12 : vector<64x8xi1>, vector<64x8xf32>
    %c8_i32_3 = arith.constant 8 : i32
    %c0_i32 = arith.constant 0 : i32
    %14 = arith.cmpi eq, %c8_i32_3, %c0_i32 : i32
    %c1_i32 = arith.constant 1 : i32
    %15 = arith.select %14, %c1_i32, %c8_i32_3 : i32
    %16 = vector.broadcast %15 : i32 to vector<64x8xi32>
    %17 = arith.remsi %3, %16 : vector<64x8xi32>
    %c0_i32_4 = arith.constant 0 : i32
    %18 = vector.broadcast %c0_i32_4 : i32 to vector<64x8xi32>
    %19 = arith.cmpi ne, %17, %18 : vector<64x8xi32>
    %c0_i32_5 = arith.constant 0 : i32
    %20 = vector.broadcast %c0_i32_5 : i32 to vector<64x8xi32>
    %21 = arith.cmpi slt, %17, %20 : vector<64x8xi32>
    %c0_i32_6 = arith.constant 0 : i32
    %22 = arith.cmpi slt, %15, %c0_i32_6 : i32
    %23 = vector.broadcast %22 : i1 to vector<64x8xi1>
    %24 = vector.broadcast %23 : vector<64x8xi1> to vector<64x8xi1>
    %25 = arith.xori %21, %24 : vector<64x8xi1>
    %26 = arith.andi %25, %19 : vector<64x8xi1>
    %27 = vector.broadcast %15 : i32 to vector<64x8xi32>
    %28 = arith.addi %17, %27 : vector<64x8xi32>
    %29 = arith.select %26, %28, %17 : vector<64x8xi1>, vector<64x8xi32>
    %c0_i32_7 = arith.constant 0 : i32
    %30 = vector.broadcast %c0_i32_7 : i32 to vector<64x8xi32>
    %31 = arith.cmpi eq, %29, %30 : vector<64x8xi32>
    %c1_i32_8 = arith.constant 1 : i32
    %32 = tpu.dynamic_rotate %2 by %c1_i32_8 dim 0 : vector<64x8xf32>, i32 -> vector<64x8xf32>
    %33 = arith.select %31, %5, %32 : vector<64x8xi1>, vector<64x8xf32>
    %c8_i32_9 = arith.constant 8 : i32
    %c0_i32_10 = arith.constant 0 : i32
    %34 = arith.cmpi eq, %c8_i32_9, %c0_i32_10 : i32
    %c1_i32_11 = arith.constant 1 : i32
    %35 = arith.select %34, %c1_i32_11, %c8_i32_9 : i32
    %36 = vector.broadcast %35 : i32 to vector<64x8xi32>
    %37 = arith.remsi %3, %36 : vector<64x8xi32>
    %c0_i32_12 = arith.constant 0 : i32
    %38 = vector.broadcast %c0_i32_12 : i32 to vector<64x8xi32>
    %39 = arith.cmpi ne, %37, %38 : vector<64x8xi32>
    %c0_i32_13 = arith.constant 0 : i32
    %40 = vector.broadcast %c0_i32_13 : i32 to vector<64x8xi32>
    %41 = arith.cmpi slt, %37, %40 : vector<64x8xi32>
    %c0_i32_14 = arith.constant 0 : i32
    %42 = arith.cmpi slt, %35, %c0_i32_14 : i32
    %43 = vector.broadcast %42 : i1 to vector<64x8xi1>
    %44 = vector.broadcast %43 : vector<64x8xi1> to vector<64x8xi1>
    %45 = arith.xori %41, %44 : vector<64x8xi1>
    %46 = arith.andi %45, %39 : vector<64x8xi1>
    %47 = vector.broadcast %35 : i32 to vector<64x8xi32>
    %48 = arith.addi %37, %47 : vector<64x8xi32>
    %49 = arith.select %46, %48, %37 : vector<64x8xi1>, vector<64x8xi32>
    %c7_i32 = arith.constant 7 : i32
    %50 = vector.broadcast %c7_i32 : i32 to vector<64x8xi32>
    %51 = arith.cmpi eq, %49, %50 : vector<64x8xi32>
    %c63_i32 = arith.constant 63 : i32
    %52 = tpu.dynamic_rotate %2 by %c63_i32 dim 0 : vector<64x8xf32>, i32 -> vector<64x8xf32>
    %53 = arith.select %51, %5, %52 : vector<64x8xi1>, vector<64x8xf32>
    %c2_i32 = arith.constant 2 : i32
    %54 = vector.broadcast %c2_i32 : i32 to vector<64x8xi32>
    %55 = arith.cmpi slt, %4, %54 : vector<64x8xi32>
    %c4_i32 = arith.constant 4 : i32
    %56 = vector.broadcast %c4_i32 : i32 to vector<64x8xi32>
    %57 = arith.cmpi slt, %4, %56 : vector<64x8xi32>
    %c6_i32 = arith.constant 6 : i32
    %58 = vector.broadcast %c6_i32 : i32 to vector<64x8xi32>
    %59 = arith.cmpi slt, %4, %58 : vector<64x8xi32>
    %60 = arith.select %59, %33, %53 : vector<64x8xi1>, vector<64x8xf32>
    %61 = arith.select %57, %13, %60 : vector<64x8xi1>, vector<64x8xf32>
    %62 = arith.select %55, %9, %61 : vector<64x8xi1>, vector<64x8xf32>
    %63 = arith.truncf %62 : vector<64x8xf32> to vector<64x8xbf16>
    %64 = vector.extract_strided_slice %0 {offsets = [0, 8], sizes = [64, 24], strides = [1, 1]} : vector<64x32xbf16> to vector<64x24xbf16>
    %65 = tpu.concatenate %63, %64 in 1 : vector<64x8xbf16>, vector<64x24xbf16> -> vector<64x32xbf16>
    %c0_15 = arith.constant 0 : index
    %c0_16 = arith.constant 0 : index
    %66 = vector.load %arg2[%c0_15, %c0_16] : memref<32x64xbf16, #tpu.memory_space<vmem>>, vector<32x64xbf16>
    %cst_17 = arith.constant dense<0.000000e+00> : vector<64x64xf32>
    %67 = tpu.matmul %65, %66, %cst_17 {dimension_numbers = #tpu.dot_dimension_numbers<[1], [0], [0], [1], [0, 0, 1, 1], [], []>} : vector<64x32xbf16>, vector<32x64xbf16>, vector<64x64xf32> -> vector<64x64xf32>
    %c0_18 = arith.constant 0 : index
    %c0_19 = arith.constant 0 : index
    %68 = vector.load %arg3[%c0_18, %c0_19] : memref<1x64xf32, #tpu.memory_space<vmem>>, vector<1x64xf32>
    %69 = vector.broadcast %68 : vector<1x64xf32> to vector<64x64xf32>
    %70 = arith.addf %67, %69 : vector<64x64xf32>
    %cst_20 = arith.constant 5.000000e-01 : f32
    %71 = vector.broadcast %cst_20 : f32 to vector<64x64xf32>
    %72 = arith.mulf %71, %70 : vector<64x64xf32>
    %cst_21 = arith.constant 4.471500e-02 : f32
    %73 = vector.broadcast %cst_21 : f32 to vector<64x64xf32>
    %74 = arith.mulf %73, %70 : vector<64x64xf32>
    %75 = arith.mulf %74, %70 : vector<64x64xf32>
    %76 = arith.mulf %75, %70 : vector<64x64xf32>
    %77 = arith.addf %70, %76 : vector<64x64xf32>
    %cst_22 = arith.constant 0.797884583 : f32
    %78 = vector.broadcast %cst_22 : f32 to vector<64x64xf32>
    %79 = arith.mulf %78, %77 : vector<64x64xf32>
    %80 = math.tanh %79 : vector<64x64xf32>
    %cst_23 = arith.constant 1.000000e+00 : f32
    %81 = vector.broadcast %cst_23 : f32 to vector<64x64xf32>
    %82 = arith.addf %81, %80 : vector<64x64xf32>
    %83 = arith.mulf %72, %82 : vector<64x64xf32>
    %84 = arith.truncf %83 : vector<64x64xf32> to vector<64x64xbf16>
    %c0_24 = arith.constant 0 : index
    %c0_25 = arith.constant 0 : index
    %85 = vector.load %arg4[%c0_24, %c0_25] : memref<64x32xbf16, #tpu.memory_space<vmem>>, vector<64x32xbf16>
    %cst_26 = arith.constant dense<0.000000e+00> : vector<64x32xf32>
    %86 = tpu.matmul %84, %85, %cst_26 {dimension_numbers = #tpu.dot_dimension_numbers<[1], [0], [0], [1], [0, 0, 1, 1], [], []>} : vector<64x64xbf16>, vector<64x32xbf16>, vector<64x32xf32> -> vector<64x32xf32>
    %c0_27 = arith.constant 0 : index
    %c0_28 = arith.constant 0 : index
    %87 = vector.load %arg5[%c0_27, %c0_28] : memref<1x32xf32, #tpu.memory_space<vmem>>, vector<1x32xf32>
    %88 = vector.broadcast %87 : vector<1x32xf32> to vector<64x32xf32>
    %89 = arith.addf %86, %88 : vector<64x32xf32>
    %90 = arith.extf %0 : vector<64x32xbf16> to vector<64x32xf32>
    %91 = arith.addf %89, %90 : vector<64x32xf32>
    %92 = arith.truncf %91 : vector<64x32xf32> to vector<64x32xbf16>
    %c0_29 = arith.constant 0 : index
    %c0_30 = arith.constant 0 : index
    %93 = vector.load %arg6[%c0_29, %c0_30] : memref<64x32xbf16, #tpu.memory_space<vmem>>, vector<64x32xbf16>
    tpu.vector_store %arg6[%c0_29, %c0_30], %92 {strides = array<i32>} : memref<64x32xbf16, #tpu.memory_space<vmem>>, vector<64x32xbf16>,
    return
  }
  func.func @transform_0(%arg0: i32) -> (i32, i32) {
    %c0_i32 = arith.constant 0 : i32
    %c0_i32_0 = arith.constant 0 : i32
    return %arg0, %c0_i32 : i32, i32
  }
  func.func @transform_1(%arg0: i32) -> (i32, i32) {
    %c0_i32 = arith.constant 0 : i32
    %c0_i32_0 = arith.constant 0 : i32
    %c0_i32_1 = arith.constant 0 : i32
    return %c0_i32, %c0_i32_0 : i32, i32
  }
  func.func @transform_2(%arg0: i32) -> (i32, i32) {
    %c0_i32 = arith.constant 0 : i32
    %c0_i32_0 = arith.constant 0 : i32
    %c0_i32_1 = arith.constant 0 : i32
    return %c0_i32, %c0_i32_0 : i32, i32
  }
  func.func @transform_3(%arg0: i32) -> (i32, i32) {
    %c0_i32 = arith.constant 0 : i32
    %c0_i32_0 = arith.constant 0 : i32
    %c0_i32_1 = arith.constant 0 : i32
    return %c0_i32, %c0_i32_0 : i32, i32
  }
  func.func @transform_4(%arg0: i32) -> (i32, i32) {
    %c0_i32 = arith.constant 0 : i32
    %c0_i32_0 = arith.constant 0 : i32
    %c0_i32_1 = arith.constant 0 : i32
    return %c0_i32, %c0_i32_0 : i32, i32
  }
  func.func @transform_5(%arg0: i32) -> (i32, i32) {
    %c0_i32 = arith.constant 0 : i32
    %c0_i32_0 = arith.constant 0 : i32
    return %arg0, %c0_i32 : i32, i32
  }
}

module attributes {stable_mosaic.version = 11 : i64} {
  func.func @_mlp_res_kernel(%arg0: i32, %arg1: memref<64x32xbf16, #tpu.memory_space<vmem>>, %arg2: memref<32x64xbf16, #tpu.memory_space<vmem>>, %arg3: memref<1x64xf32, #tpu.memory_space<vmem>>, %arg4: memref<64x32xbf16, #tpu.memory_space<vmem>>, %arg5: memref<1x32xf32, #tpu.memory_space<vmem>>, %arg6: memref<64x32xbf16, #tpu.memory_space<vmem>>, %arg7: memref<64x32xbf16, #tpu.memory_space<vmem>>) attributes {dimension_semantics = [#tpu.dimension_semantics<parallel>], iteration_bounds = array<i64: 2>, scalar_prefetch = 0 : i64, scratch_operands = 0 : i64, tpu.core_type = #tpu.core_type<tc>, window_params = [{transform_indices = @transform_0, window_bounds = array<i64: 64, 32>}, {pipeline_mode = #tpu.pipeline_mode<synchronous>, transform_indices = @transform_1, window_bounds = array<i64: 32, 64>}, {pipeline_mode = #tpu.pipeline_mode<synchronous>, transform_indices = @transform_2, window_bounds = array<i64: 1, 64>}, {pipeline_mode = #tpu.pipeline_mode<synchronous>, transform_indices = @transform_3, window_bounds = array<i64: 64, 32>}, {pipeline_mode = #tpu.pipeline_mode<synchronous>, transform_indices = @transform_4, window_bounds = array<i64: 1, 32>}, {transform_indices = @transform_5, window_bounds = array<i64: 64, 32>}, {transform_indices = @transform_6, window_bounds = array<i64: 64, 32>}]} {
    %c0 = arith.constant 0 : index
    %c0_0 = arith.constant 0 : index
    %0 = vector.load %arg1[%c0, %c0_0] : memref<64x32xbf16, #tpu.memory_space<vmem>>, vector<64x32xbf16>
    %1 = vector.extract_strided_slice %0 {offsets = [0, 0], sizes = [64, 8], strides = [1, 1]} : vector<64x32xbf16> to vector<64x8xbf16>
    %2 = arith.extf %1 : vector<64x8xbf16> to vector<64x8xf32>
    %3 = tpu.iota {dimensions = array<i32: 0>} : vector<64x8xi32>
    %4 = tpu.iota {dimensions = array<i32: 1>} : vector<64x8xi32>
    %cst = arith.constant 0.000000e+00 : f32
    %5 = vector.broadcast %cst : f32 to vector<64x8xf32>
    %c8_i32 = arith.constant 8 : i32
    %6 = vector.broadcast %c8_i32 : i32 to vector<64x8xi32>
    %7 = arith.cmpi slt, %3, %6 : vector<64x8xi32>
    %c8_i32_1 = arith.constant 8 : i32
    %8 = tpu.dynamic_rotate %2 by %c8_i32_1 dim 0 : vector<64x8xf32>, i32 -> vector<64x8xf32>
    %9 = arith.select %7, %5, %8 : vector<64x8xi1>, vector<64x8xf32>
    %c56_i32 = arith.constant 56 : i32
    %10 = vector.broadcast %c56_i32 : i32 to vector<64x8xi32>
    %11 = arith.cmpi sge, %3, %10 : vector<64x8xi32>
    %c56_i32_2 = arith.constant 56 : i32
    %12 = tpu.dynamic_rotate %2 by %c56_i32_2 dim 0 : vector<64x8xf32>, i32 -> vector<64x8xf32>
    %13 = arith.select %11, %5, %12 : vector<64x8xi1>, vector<64x8xf32>
    %c8_i32_3 = arith.constant 8 : i32
    %c0_i32 = arith.constant 0 : i32
    %14 = arith.cmpi eq, %c8_i32_3, %c0_i32 : i32
    %c1_i32 = arith.constant 1 : i32
    %15 = arith.select %14, %c1_i32, %c8_i32_3 : i32
    %16 = vector.broadcast %15 : i32 to vector<64x8xi32>
    %17 = arith.remsi %3, %16 : vector<64x8xi32>
    %c0_i32_4 = arith.constant 0 : i32
    %18 = vector.broadcast %c0_i32_4 : i32 to vector<64x8xi32>
    %19 = arith.cmpi ne, %17, %18 : vector<64x8xi32>
    %c0_i32_5 = arith.constant 0 : i32
    %20 = vector.broadcast %c0_i32_5 : i32 to vector<64x8xi32>
    %21 = arith.cmpi slt, %17, %20 : vector<64x8xi32>
    %c0_i32_6 = arith.constant 0 : i32
    %22 = arith.cmpi slt, %15, %c0_i32_6 : i32
    %23 = vector.broadcast %22 : i1 to vector<64x8xi1>
    %24 = vector.broadcast %23 : vector<64x8xi1> to vector<64x8xi1>
    %25 = arith.xori %21, %24 : vector<64x8xi1>
    %26 = arith.andi %25, %19 : vector<64x8xi1>
    %27 = vector.broadcast %15 : i32 to vector<64x8xi32>
    %28 = arith.addi %17, %27 : vector<64x8xi32>
    %29 = arith.select %26, %28, %17 : vector<64x8xi1>, vector<64x8xi32>
    %c0_i32_7 = arith.constant 0 : i32
    %30 = vector.broadcast %c0_i32_7 : i32 to vector<64x8xi32>
    %31 = arith.cmpi eq, %29, %30 : vector<64x8xi32>
    %c1_i32_8 = arith.constant 1 : i32
    %32 = tpu.dynamic_rotate %2 by %c1_i32_8 dim 0 : vector<64x8xf32>, i32 -> vector<64x8xf32>
    %33 = arith.select %31, %5, %32 : vector<64x8xi1>, vector<64x8xf32>
    %c8_i32_9 = arith.constant 8 : i32
    %c0_i32_10 = arith.constant 0 : i32
    %34 = arith.cmpi eq, %c8_i32_9, %c0_i32_10 : i32
    %c1_i32_11 = arith.constant 1 : i32
    %35 = arith.select %34, %c1_i32_11, %c8_i32_9 : i32
    %36 = vector.broadcast %35 : i32 to vector<64x8xi32>
    %37 = arith.remsi %3, %36 : vector<64x8xi32>
    %c0_i32_12 = arith.constant 0 : i32
    %38 = vector.broadcast %c0_i32_12 : i32 to vector<64x8xi32>
    %39 = arith.cmpi ne, %37, %38 : vector<64x8xi32>
    %c0_i32_13 = arith.constant 0 : i32
    %40 = vector.broadcast %c0_i32_13 : i32 to vector<64x8xi32>
    %41 = arith.cmpi slt, %37, %40 : vector<64x8xi32>
    %c0_i32_14 = arith.constant 0 : i32
    %42 = arith.cmpi slt, %35, %c0_i32_14 : i32
    %43 = vector.broadcast %42 : i1 to vector<64x8xi1>
    %44 = vector.broadcast %43 : vector<64x8xi1> to vector<64x8xi1>
    %45 = arith.xori %41, %44 : vector<64x8xi1>
    %46 = arith.andi %45, %39 : vector<64x8xi1>
    %47 = vector.broadcast %35 : i32 to vector<64x8xi32>
    %48 = arith.addi %37, %47 : vector<64x8xi32>
    %49 = arith.select %46, %48, %37 : vector<64x8xi1>, vector<64x8xi32>
    %c7_i32 = arith.constant 7 : i32
    %50 = vector.broadcast %c7_i32 : i32 to vector<64x8xi32>
    %51 = arith.cmpi eq, %49, %50 : vector<64x8xi32>
    %c63_i32 = arith.constant 63 : i32
    %52 = tpu.dynamic_rotate %2 by %c63_i32 dim 0 : vector<64x8xf32>, i32 -> vector<64x8xf32>
    %53 = arith.select %51, %5, %52 : vector<64x8xi1>, vector<64x8xf32>
    %c2_i32 = arith.constant 2 : i32
    %54 = vector.broadcast %c2_i32 : i32 to vector<64x8xi32>
    %55 = arith.cmpi slt, %4, %54 : vector<64x8xi32>
    %c4_i32 = arith.constant 4 : i32
    %56 = vector.broadcast %c4_i32 : i32 to vector<64x8xi32>
    %57 = arith.cmpi slt, %4, %56 : vector<64x8xi32>
    %c6_i32 = arith.constant 6 : i32
    %58 = vector.broadcast %c6_i32 : i32 to vector<64x8xi32>
    %59 = arith.cmpi slt, %4, %58 : vector<64x8xi32>
    %60 = arith.select %59, %33, %53 : vector<64x8xi1>, vector<64x8xf32>
    %61 = arith.select %57, %13, %60 : vector<64x8xi1>, vector<64x8xf32>
    %62 = arith.select %55, %9, %61 : vector<64x8xi1>, vector<64x8xf32>
    %63 = arith.truncf %62 : vector<64x8xf32> to vector<64x8xbf16>
    %64 = vector.extract_strided_slice %0 {offsets = [0, 8], sizes = [64, 24], strides = [1, 1]} : vector<64x32xbf16> to vector<64x24xbf16>
    %65 = tpu.concatenate %63, %64 in 1 : vector<64x8xbf16>, vector<64x24xbf16> -> vector<64x32xbf16>
    %c0_15 = arith.constant 0 : index
    %c0_16 = arith.constant 0 : index
    %66 = vector.load %arg2[%c0_15, %c0_16] : memref<32x64xbf16, #tpu.memory_space<vmem>>, vector<32x64xbf16>
    %cst_17 = arith.constant dense<0.000000e+00> : vector<64x64xf32>
    %67 = tpu.matmul %65, %66, %cst_17 {dimension_numbers = #tpu.dot_dimension_numbers<[1], [0], [0], [1], [0, 0, 1, 1], [], []>} : vector<64x32xbf16>, vector<32x64xbf16>, vector<64x64xf32> -> vector<64x64xf32>
    %c0_18 = arith.constant 0 : index
    %c0_19 = arith.constant 0 : index
    %68 = vector.load %arg3[%c0_18, %c0_19] : memref<1x64xf32, #tpu.memory_space<vmem>>, vector<1x64xf32>
    %69 = vector.broadcast %68 : vector<1x64xf32> to vector<64x64xf32>
    %70 = arith.addf %67, %69 : vector<64x64xf32>
    %cst_20 = arith.constant 5.000000e-01 : f32
    %71 = vector.broadcast %cst_20 : f32 to vector<64x64xf32>
    %72 = arith.mulf %71, %70 : vector<64x64xf32>
    %cst_21 = arith.constant 4.471500e-02 : f32
    %73 = vector.broadcast %cst_21 : f32 to vector<64x64xf32>
    %74 = arith.mulf %73, %70 : vector<64x64xf32>
    %75 = arith.mulf %74, %70 : vector<64x64xf32>
    %76 = arith.mulf %75, %70 : vector<64x64xf32>
    %77 = arith.addf %70, %76 : vector<64x64xf32>
    %cst_22 = arith.constant 0.797884583 : f32
    %78 = vector.broadcast %cst_22 : f32 to vector<64x64xf32>
    %79 = arith.mulf %78, %77 : vector<64x64xf32>
    %80 = math.tanh %79 : vector<64x64xf32>
    %cst_23 = arith.constant 1.000000e+00 : f32
    %81 = vector.broadcast %cst_23 : f32 to vector<64x64xf32>
    %82 = arith.addf %81, %80 : vector<64x64xf32>
    %83 = arith.mulf %72, %82 : vector<64x64xf32>
    %84 = arith.truncf %83 : vector<64x64xf32> to vector<64x64xbf16>
    %c0_24 = arith.constant 0 : index
    %c0_25 = arith.constant 0 : index
    %85 = vector.load %arg4[%c0_24, %c0_25] : memref<64x32xbf16, #tpu.memory_space<vmem>>, vector<64x32xbf16>
    %cst_26 = arith.constant dense<0.000000e+00> : vector<64x32xf32>
    %86 = tpu.matmul %84, %85, %cst_26 {dimension_numbers = #tpu.dot_dimension_numbers<[1], [0], [0], [1], [0, 0, 1, 1], [], []>} : vector<64x64xbf16>, vector<64x32xbf16>, vector<64x32xf32> -> vector<64x32xf32>
    %c0_27 = arith.constant 0 : index
    %c0_28 = arith.constant 0 : index
    %87 = vector.load %arg5[%c0_27, %c0_28] : memref<1x32xf32, #tpu.memory_space<vmem>>, vector<1x32xf32>
    %88 = vector.broadcast %87 : vector<1x32xf32> to vector<64x32xf32>
    %89 = arith.addf %86, %88 : vector<64x32xf32>
    %90 = arith.extf %0 : vector<64x32xbf16> to vector<64x32xf32>
    %91 = arith.addf %89, %90 : vector<64x32xf32>
    %c0_29 = arith.constant 0 : index
    %c0_30 = arith.constant 0 : index
    %92 = vector.load %arg6[%c0_29, %c0_30] : memref<64x32xbf16, #tpu.memory_space<vmem>>, vector<64x32xbf16>
    %93 = arith.extf %92 : vector<64x32xbf16> to vector<64x32xf32>
    %94 = arith.addf %91, %93 : vector<64x32xf32>
    %95 = arith.truncf %94 : vector<64x32xf32> to vector<64x32xbf16>
    %c0_31 = arith.constant 0 : index
    %c0_32 = arith.constant 0 : index
    %96 = vector.load %arg7[%c0_31, %c0_32] : memref<64x32xbf16, #tpu.memory_space<vmem>>, vector<64x32xbf16>
    tpu.vector_store %arg7[%c0_31, %c0_32], %95 {strides = array<i32>} : memref<64x32xbf16, #tpu.memory_space<vmem>>, vector<64x32xbf16>,
    return
  }
  func.func @transform_0(%arg0: i32) -> (i32, i32) {
    %c0_i32 = arith.constant 0 : i32
    %c0_i32_0 = arith.constant 0 : i32
    return %arg0, %c0_i32 : i32, i32
  }
  func.func @transform_1(%arg0: i32) -> (i32, i32) {
    %c0_i32 = arith.constant 0 : i32
    %c0_i32_0 = arith.constant 0 : i32
    %c0_i32_1 = arith.constant 0 : i32
    return %c0_i32, %c0_i32_0 : i32, i32
  }
  func.func @transform_2(%arg0: i32) -> (i32, i32) {
    %c0_i32 = arith.constant 0 : i32
    %c0_i32_0 = arith.constant 0 : i32
    %c0_i32_1 = arith.constant 0 : i32
    return %c0_i32, %c0_i32_0 : i32, i32
  }
  func.func @transform_3(%arg0: i32) -> (i32, i32) {
    %c0_i32 = arith.constant 0 : i32
    %c0_i32_0 = arith.constant 0 : i32
    %c0_i32_1 = arith.constant 0 : i32
    return %c0_i32, %c0_i32_0 : i32, i32
  }
  func.func @transform_4(%arg0: i32) -> (i32, i32) {
    %c0_i32 = arith.constant 0 : i32
    %c0_i32_0 = arith.constant 0 : i32
    %c0_i32_1 = arith.constant 0 : i32
    return %c0_i32, %c0_i32_0 : i32, i32
  }
  func.func @transform_5(%arg0: i32) -> (i32, i32) {
    %c0_i32 = arith.constant 0 : i32
    %c0_i32_0 = arith.constant 0 : i32
    return %arg0, %c0_i32 : i32, i32
  }
  func.func @transform_6(%arg0: i32) -> (i32, i32) {
    %c0_i32 = arith.constant 0 : i32
    %c0_i32_0 = arith.constant 0 : i32
    return %arg0, %c0_i32 : i32, i32
  }
}

module attributes {stable_mosaic.version = 11 : i64} {
  func.func @_mlp_kernel(%arg0: i32, %arg1: memref<8x64xbf16, #tpu.memory_space<vmem>>, %arg2: memref<64x16xbf16, #tpu.memory_space<vmem>>, %arg3: memref<1x16xf32, #tpu.memory_space<vmem>>, %arg4: memref<16x64xbf16, #tpu.memory_space<vmem>>, %arg5: memref<1x64xf32, #tpu.memory_space<vmem>>, %arg6: memref<8x64xbf16, #tpu.memory_space<vmem>>) attributes {dimension_semantics = [#tpu.dimension_semantics<parallel>], iteration_bounds = array<i64: 1>, scalar_prefetch = 0 : i64, scratch_operands = 0 : i64, tpu.core_type = #tpu.core_type<tc>, window_params = [{transform_indices = @transform_0, window_bounds = array<i64: 8, 64>}, {pipeline_mode = #tpu.pipeline_mode<synchronous>, transform_indices = @transform_1, window_bounds = array<i64: 64, 16>}, {pipeline_mode = #tpu.pipeline_mode<synchronous>, transform_indices = @transform_2, window_bounds = array<i64: 1, 16>}, {pipeline_mode = #tpu.pipeline_mode<synchronous>, transform_indices = @transform_3, window_bounds = array<i64: 16, 64>}, {pipeline_mode = #tpu.pipeline_mode<synchronous>, transform_indices = @transform_4, window_bounds = array<i64: 1, 64>}, {transform_indices = @transform_5, window_bounds = array<i64: 8, 64>}]} {
    %c0 = arith.constant 0 : index
    %c0_0 = arith.constant 0 : index
    %0 = vector.load %arg1[%c0, %c0_0] : memref<8x64xbf16, #tpu.memory_space<vmem>>, vector<8x64xbf16>
    %c0_1 = arith.constant 0 : index
    %c0_2 = arith.constant 0 : index
    %1 = vector.load %arg2[%c0_1, %c0_2] : memref<64x16xbf16, #tpu.memory_space<vmem>>, vector<64x16xbf16>
    %cst = arith.constant dense<0.000000e+00> : vector<8x16xf32>
    %2 = tpu.matmul %0, %1, %cst {dimension_numbers = #tpu.dot_dimension_numbers<[1], [0], [0], [1], [0, 0, 1, 1], [], []>} : vector<8x64xbf16>, vector<64x16xbf16>, vector<8x16xf32> -> vector<8x16xf32>
    %c0_3 = arith.constant 0 : index
    %c0_4 = arith.constant 0 : index
    %3 = vector.load %arg3[%c0_3, %c0_4] : memref<1x16xf32, #tpu.memory_space<vmem>>, vector<1x16xf32>
    %4 = vector.broadcast %3 : vector<1x16xf32> to vector<8x16xf32>
    %5 = arith.addf %2, %4 : vector<8x16xf32>
    %cst_5 = arith.constant 5.000000e-01 : f32
    %6 = vector.broadcast %cst_5 : f32 to vector<8x16xf32>
    %7 = arith.mulf %6, %5 : vector<8x16xf32>
    %cst_6 = arith.constant 4.471500e-02 : f32
    %8 = vector.broadcast %cst_6 : f32 to vector<8x16xf32>
    %9 = arith.mulf %8, %5 : vector<8x16xf32>
    %10 = arith.mulf %9, %5 : vector<8x16xf32>
    %11 = arith.mulf %10, %5 : vector<8x16xf32>
    %12 = arith.addf %5, %11 : vector<8x16xf32>
    %cst_7 = arith.constant 0.797884583 : f32
    %13 = vector.broadcast %cst_7 : f32 to vector<8x16xf32>
    %14 = arith.mulf %13, %12 : vector<8x16xf32>
    %15 = math.tanh %14 : vector<8x16xf32>
    %cst_8 = arith.constant 1.000000e+00 : f32
    %16 = vector.broadcast %cst_8 : f32 to vector<8x16xf32>
    %17 = arith.addf %16, %15 : vector<8x16xf32>
    %18 = arith.mulf %7, %17 : vector<8x16xf32>
    %19 = arith.truncf %18 : vector<8x16xf32> to vector<8x16xbf16>
    %c0_9 = arith.constant 0 : index
    %c0_10 = arith.constant 0 : index
    %20 = vector.load %arg4[%c0_9, %c0_10] : memref<16x64xbf16, #tpu.memory_space<vmem>>, vector<16x64xbf16>
    %cst_11 = arith.constant dense<0.000000e+00> : vector<8x64xf32>
    %21 = tpu.matmul %19, %20, %cst_11 {dimension_numbers = #tpu.dot_dimension_numbers<[1], [0], [0], [1], [0, 0, 1, 1], [], []>} : vector<8x16xbf16>, vector<16x64xbf16>, vector<8x64xf32> -> vector<8x64xf32>
    %c0_12 = arith.constant 0 : index
    %c0_13 = arith.constant 0 : index
    %22 = vector.load %arg5[%c0_12, %c0_13] : memref<1x64xf32, #tpu.memory_space<vmem>>, vector<1x64xf32>
    %23 = vector.broadcast %22 : vector<1x64xf32> to vector<8x64xf32>
    %24 = arith.addf %21, %23 : vector<8x64xf32>
    %25 = arith.extf %0 : vector<8x64xbf16> to vector<8x64xf32>
    %26 = arith.addf %24, %25 : vector<8x64xf32>
    %27 = arith.truncf %26 : vector<8x64xf32> to vector<8x64xbf16>
    %c0_14 = arith.constant 0 : index
    %c0_15 = arith.constant 0 : index
    %28 = vector.load %arg6[%c0_14, %c0_15] : memref<8x64xbf16, #tpu.memory_space<vmem>>, vector<8x64xbf16>
    tpu.vector_store %arg6[%c0_14, %c0_15], %27 {strides = array<i32>} : memref<8x64xbf16, #tpu.memory_space<vmem>>, vector<8x64xbf16>,
    return
  }
  func.func @transform_0(%arg0: i32) -> (i32, i32) {
    %c0_i32 = arith.constant 0 : i32
    %c0_i32_0 = arith.constant 0 : i32
    return %arg0, %c0_i32 : i32, i32
  }
  func.func @transform_1(%arg0: i32) -> (i32, i32) {
    %c0_i32 = arith.constant 0 : i32
    %c0_i32_0 = arith.constant 0 : i32
    %c0_i32_1 = arith.constant 0 : i32
    return %c0_i32, %c0_i32_0 : i32, i32
  }
  func.func @transform_2(%arg0: i32) -> (i32, i32) {
    %c0_i32 = arith.constant 0 : i32
    %c0_i32_0 = arith.constant 0 : i32
    %c0_i32_1 = arith.constant 0 : i32
    return %c0_i32, %c0_i32_0 : i32, i32
  }
  func.func @transform_3(%arg0: i32) -> (i32, i32) {
    %c0_i32 = arith.constant 0 : i32
    %c0_i32_0 = arith.constant 0 : i32
    %c0_i32_1 = arith.constant 0 : i32
    return %c0_i32, %c0_i32_0 : i32, i32
  }
  func.func @transform_4(%arg0: i32) -> (i32, i32) {
    %c0_i32 = arith.constant 0 : i32
    %c0_i32_0 = arith.constant 0 : i32
    %c0_i32_1 = arith.constant 0 : i32
    return %c0_i32, %c0_i32_0 : i32, i32
  }
  func.func @transform_5(%arg0: i32) -> (i32, i32) {
    %c0_i32 = arith.constant 0 : i32
    %c0_i32_0 = arith.constant 0 : i32
    return %arg0, %c0_i32 : i32, i32
  }
}

module attributes {stable_mosaic.version = 11 : i64} {
  func.func @_mlp_kernel(%arg0: i32, %arg1: memref<8x32xbf16, #tpu.memory_space<vmem>>, %arg2: memref<32x8xbf16, #tpu.memory_space<vmem>>, %arg3: memref<1x8xf32, #tpu.memory_space<vmem>>, %arg4: memref<8x32xbf16, #tpu.memory_space<vmem>>, %arg5: memref<1x32xf32, #tpu.memory_space<vmem>>, %arg6: memref<8x32xbf16, #tpu.memory_space<vmem>>) attributes {dimension_semantics = [#tpu.dimension_semantics<parallel>], iteration_bounds = array<i64: 1>, scalar_prefetch = 0 : i64, scratch_operands = 0 : i64, tpu.core_type = #tpu.core_type<tc>, window_params = [{transform_indices = @transform_0, window_bounds = array<i64: 8, 32>}, {pipeline_mode = #tpu.pipeline_mode<synchronous>, transform_indices = @transform_1, window_bounds = array<i64: 32, 8>}, {pipeline_mode = #tpu.pipeline_mode<synchronous>, transform_indices = @transform_2, window_bounds = array<i64: 1, 8>}, {pipeline_mode = #tpu.pipeline_mode<synchronous>, transform_indices = @transform_3, window_bounds = array<i64: 8, 32>}, {pipeline_mode = #tpu.pipeline_mode<synchronous>, transform_indices = @transform_4, window_bounds = array<i64: 1, 32>}, {transform_indices = @transform_5, window_bounds = array<i64: 8, 32>}]} {
    %c0 = arith.constant 0 : index
    %c0_0 = arith.constant 0 : index
    %0 = vector.load %arg1[%c0, %c0_0] : memref<8x32xbf16, #tpu.memory_space<vmem>>, vector<8x32xbf16>
    %c0_1 = arith.constant 0 : index
    %c0_2 = arith.constant 0 : index
    %1 = vector.load %arg2[%c0_1, %c0_2] : memref<32x8xbf16, #tpu.memory_space<vmem>>, vector<32x8xbf16>
    %cst = arith.constant dense<0.000000e+00> : vector<8x8xf32>
    %2 = tpu.matmul %0, %1, %cst {dimension_numbers = #tpu.dot_dimension_numbers<[1], [0], [0], [1], [0, 0, 1, 1], [], []>} : vector<8x32xbf16>, vector<32x8xbf16>, vector<8x8xf32> -> vector<8x8xf32>
    %c0_3 = arith.constant 0 : index
    %c0_4 = arith.constant 0 : index
    %3 = vector.load %arg3[%c0_3, %c0_4] : memref<1x8xf32, #tpu.memory_space<vmem>>, vector<1x8xf32>
    %4 = vector.broadcast %3 : vector<1x8xf32> to vector<8x8xf32>
    %5 = arith.addf %2, %4 : vector<8x8xf32>
    %cst_5 = arith.constant 5.000000e-01 : f32
    %6 = vector.broadcast %cst_5 : f32 to vector<8x8xf32>
    %7 = arith.mulf %6, %5 : vector<8x8xf32>
    %cst_6 = arith.constant 4.471500e-02 : f32
    %8 = vector.broadcast %cst_6 : f32 to vector<8x8xf32>
    %9 = arith.mulf %8, %5 : vector<8x8xf32>
    %10 = arith.mulf %9, %5 : vector<8x8xf32>
    %11 = arith.mulf %10, %5 : vector<8x8xf32>
    %12 = arith.addf %5, %11 : vector<8x8xf32>
    %cst_7 = arith.constant 0.797884583 : f32
    %13 = vector.broadcast %cst_7 : f32 to vector<8x8xf32>
    %14 = arith.mulf %13, %12 : vector<8x8xf32>
    %15 = math.tanh %14 : vector<8x8xf32>
    %cst_8 = arith.constant 1.000000e+00 : f32
    %16 = vector.broadcast %cst_8 : f32 to vector<8x8xf32>
    %17 = arith.addf %16, %15 : vector<8x8xf32>
    %18 = arith.mulf %7, %17 : vector<8x8xf32>
    %19 = arith.truncf %18 : vector<8x8xf32> to vector<8x8xbf16>
    %c0_9 = arith.constant 0 : index
    %c0_10 = arith.constant 0 : index
    %20 = vector.load %arg4[%c0_9, %c0_10] : memref<8x32xbf16, #tpu.memory_space<vmem>>, vector<8x32xbf16>
    %cst_11 = arith.constant dense<0.000000e+00> : vector<8x32xf32>
    %21 = tpu.matmul %19, %20, %cst_11 {dimension_numbers = #tpu.dot_dimension_numbers<[1], [0], [0], [1], [0, 0, 1, 1], [], []>} : vector<8x8xbf16>, vector<8x32xbf16>, vector<8x32xf32> -> vector<8x32xf32>
    %c0_12 = arith.constant 0 : index
    %c0_13 = arith.constant 0 : index
    %22 = vector.load %arg5[%c0_12, %c0_13] : memref<1x32xf32, #tpu.memory_space<vmem>>, vector<1x32xf32>
    %23 = vector.broadcast %22 : vector<1x32xf32> to vector<8x32xf32>
    %24 = arith.addf %21, %23 : vector<8x32xf32>
    %25 = arith.extf %0 : vector<8x32xbf16> to vector<8x32xf32>
    %26 = arith.addf %24, %25 : vector<8x32xf32>
    %27 = arith.truncf %26 : vector<8x32xf32> to vector<8x32xbf16>
    %c0_14 = arith.constant 0 : index
    %c0_15 = arith.constant 0 : index
    %28 = vector.load %arg6[%c0_14, %c0_15] : memref<8x32xbf16, #tpu.memory_space<vmem>>, vector<8x32xbf16>
    tpu.vector_store %arg6[%c0_14, %c0_15], %27 {strides = array<i32>} : memref<8x32xbf16, #tpu.memory_space<vmem>>, vector<8x32xbf16>,
    return
  }
  func.func @transform_0(%arg0: i32) -> (i32, i32) {
    %c0_i32 = arith.constant 0 : i32
    %c0_i32_0 = arith.constant 0 : i32
    return %arg0, %c0_i32 : i32, i32
  }
  func.func @transform_1(%arg0: i32) -> (i32, i32) {
    %c0_i32 = arith.constant 0 : i32
    %c0_i32_0 = arith.constant 0 : i32
    %c0_i32_1 = arith.constant 0 : i32
    return %c0_i32, %c0_i32_0 : i32, i32
  }
  func.func @transform_2(%arg0: i32) -> (i32, i32) {
    %c0_i32 = arith.constant 0 : i32
    %c0_i32_0 = arith.constant 0 : i32
    %c0_i32_1 = arith.constant 0 : i32
    return %c0_i32, %c0_i32_0 : i32, i32
  }
  func.func @transform_3(%arg0: i32) -> (i32, i32) {
    %c0_i32 = arith.constant 0 : i32
    %c0_i32_0 = arith.constant 0 : i32
    %c0_i32_1 = arith.constant 0 : i32
    return %c0_i32, %c0_i32_0 : i32, i32
  }
  func.func @transform_4(%arg0: i32) -> (i32, i32) {
    %c0_i32 = arith.constant 0 : i32
    %c0_i32_0 = arith.constant 0 : i32
    %c0_i32_1 = arith.constant 0 : i32
    return %c0_i32, %c0_i32_0 : i32, i32
  }
  func.func @transform_5(%arg0: i32) -> (i32, i32) {
    %c0_i32 = arith.constant 0 : i32
    %c0_i32_0 = arith.constant 0 : i32
    return %arg0, %c0_i32 : i32, i32
  }
}

module attributes {stable_mosaic.version = 11 : i64} {
  func.func @_pw_kernel(%arg0: i32, %arg1: memref<8x64xbf16, #tpu.memory_space<vmem>>, %arg2: memref<64x32xbf16, #tpu.memory_space<vmem>>, %arg3: memref<1x32xf32, #tpu.memory_space<vmem>>, %arg4: memref<8x32xbf16, #tpu.memory_space<vmem>>) attributes {dimension_semantics = [#tpu.dimension_semantics<parallel>], iteration_bounds = array<i64: 1>, scalar_prefetch = 0 : i64, scratch_operands = 0 : i64, tpu.core_type = #tpu.core_type<tc>, window_params = [{transform_indices = @transform_0, window_bounds = array<i64: 8, 64>}, {pipeline_mode = #tpu.pipeline_mode<synchronous>, transform_indices = @transform_1, window_bounds = array<i64: 64, 32>}, {pipeline_mode = #tpu.pipeline_mode<synchronous>, transform_indices = @transform_2, window_bounds = array<i64: 1, 32>}, {transform_indices = @transform_3, window_bounds = array<i64: 8, 32>}]} {
    %c0 = arith.constant 0 : index
    %c0_0 = arith.constant 0 : index
    %0 = vector.load %arg1[%c0, %c0_0] : memref<8x64xbf16, #tpu.memory_space<vmem>>, vector<8x64xbf16>
    %c0_1 = arith.constant 0 : index
    %c0_2 = arith.constant 0 : index
    %1 = vector.load %arg2[%c0_1, %c0_2] : memref<64x32xbf16, #tpu.memory_space<vmem>>, vector<64x32xbf16>
    %cst = arith.constant dense<0.000000e+00> : vector<8x32xf32>
    %2 = tpu.matmul %0, %1, %cst {dimension_numbers = #tpu.dot_dimension_numbers<[1], [0], [0], [1], [0, 0, 1, 1], [], []>} : vector<8x64xbf16>, vector<64x32xbf16>, vector<8x32xf32> -> vector<8x32xf32>
    %c0_3 = arith.constant 0 : index
    %c0_4 = arith.constant 0 : index
    %3 = vector.load %arg3[%c0_3, %c0_4] : memref<1x32xf32, #tpu.memory_space<vmem>>, vector<1x32xf32>
    %4 = vector.broadcast %3 : vector<1x32xf32> to vector<8x32xf32>
    %5 = arith.addf %2, %4 : vector<8x32xf32>
    %6 = arith.truncf %5 : vector<8x32xf32> to vector<8x32xbf16>
    %c0_5 = arith.constant 0 : index
    %c0_6 = arith.constant 0 : index
    %7 = vector.load %arg4[%c0_5, %c0_6] : memref<8x32xbf16, #tpu.memory_space<vmem>>, vector<8x32xbf16>
    tpu.vector_store %arg4[%c0_5, %c0_6], %6 {strides = array<i32>} : memref<8x32xbf16, #tpu.memory_space<vmem>>, vector<8x32xbf16>,
    return
  }
  func.func @transform_0(%arg0: i32) -> (i32, i32) {
    %c0_i32 = arith.constant 0 : i32
    %c0_i32_0 = arith.constant 0 : i32
    return %arg0, %c0_i32 : i32, i32
  }
  func.func @transform_1(%arg0: i32) -> (i32, i32) {
    %c0_i32 = arith.constant 0 : i32
    %c0_i32_0 = arith.constant 0 : i32
    %c0_i32_1 = arith.constant 0 : i32
    return %c0_i32, %c0_i32_0 : i32, i32
  }
  func.func @transform_2(%arg0: i32) -> (i32, i32) {
    %c0_i32 = arith.constant 0 : i32
    %c0_i32_0 = arith.constant 0 : i32
    %c0_i32_1 = arith.constant 0 : i32
    return %c0_i32, %c0_i32_0 : i32, i32
  }
  func.func @transform_3(%arg0: i32) -> (i32, i32) {
    %c0_i32 = arith.constant 0 : i32
    %c0_i32_0 = arith.constant 0 : i32
    return %arg0, %c0_i32 : i32, i32
  }
}

module attributes {stable_mosaic.version = 11 : i64} {
  func.func @_head_kernel(%arg0: i32, %arg1: memref<64x32xbf16, #tpu.memory_space<vmem>>, %arg2: memref<64x32xbf16, #tpu.memory_space<vmem>>, %arg3: memref<32x32xbf16, #tpu.memory_space<vmem>>, %arg4: memref<32x32xbf16, #tpu.memory_space<vmem>>, %arg5: memref<1x32xf32, #tpu.memory_space<vmem>>, %arg6: memref<32x16xbf16, #tpu.memory_space<vmem>>, %arg7: memref<1x16xf32, #tpu.memory_space<vmem>>, %arg8: memref<1x16xbf16, #tpu.memory_space<vmem>>, %arg9: memref<1x1xf32, #tpu.memory_space<vmem>>, %arg10: memref<1x1x64xf32, #tpu.memory_space<vmem>>) attributes {dimension_semantics = [#tpu.dimension_semantics<parallel>], iteration_bounds = array<i64: 2>, scalar_prefetch = 0 : i64, scratch_operands = 0 : i64, tpu.core_type = #tpu.core_type<tc>, window_params = [{transform_indices = @transform_0, window_bounds = array<i64: 64, 32>}, {transform_indices = @transform_1, window_bounds = array<i64: 64, 32>}, {pipeline_mode = #tpu.pipeline_mode<synchronous>, transform_indices = @transform_2, window_bounds = array<i64: 32, 32>}, {pipeline_mode = #tpu.pipeline_mode<synchronous>, transform_indices = @transform_3, window_bounds = array<i64: 32, 32>}, {pipeline_mode = #tpu.pipeline_mode<synchronous>, transform_indices = @transform_4, window_bounds = array<i64: 1, 32>}, {pipeline_mode = #tpu.pipeline_mode<synchronous>, transform_indices = @transform_5, window_bounds = array<i64: 32, 16>}, {pipeline_mode = #tpu.pipeline_mode<synchronous>, transform_indices = @transform_6, window_bounds = array<i64: 1, 16>}, {pipeline_mode = #tpu.pipeline_mode<synchronous>, transform_indices = @transform_7, window_bounds = array<i64: 1, 16>}, {pipeline_mode = #tpu.pipeline_mode<synchronous>, transform_indices = @transform_8, window_bounds = array<i64: 1, 1>}, {transform_indices = @transform_9, window_bounds = array<i64: 1, 1, 64>}]} {
    %c0 = arith.constant 0 : index
    %c0_0 = arith.constant 0 : index
    %0 = vector.load %arg1[%c0, %c0_0] : memref<64x32xbf16, #tpu.memory_space<vmem>>, vector<64x32xbf16>
    %c0_1 = arith.constant 0 : index
    %c0_2 = arith.constant 0 : index
    %1 = vector.load %arg3[%c0_1, %c0_2] : memref<32x32xbf16, #tpu.memory_space<vmem>>, vector<32x32xbf16>
    %cst = arith.constant dense<0.000000e+00> : vector<64x32xf32>
    %2 = tpu.matmul %0, %1, %cst {dimension_numbers = #tpu.dot_dimension_numbers<[1], [0], [0], [1], [0, 0, 1, 1], [], []>} : vector<64x32xbf16>, vector<32x32xbf16>, vector<64x32xf32> -> vector<64x32xf32>
    %c0_3 = arith.constant 0 : index
    %c0_4 = arith.constant 0 : index
    %3 = vector.load %arg2[%c0_3, %c0_4] : memref<64x32xbf16, #tpu.memory_space<vmem>>, vector<64x32xbf16>
    %c0_5 = arith.constant 0 : index
    %c0_6 = arith.constant 0 : index
    %4 = vector.load %arg4[%c0_5, %c0_6] : memref<32x32xbf16, #tpu.memory_space<vmem>>, vector<32x32xbf16>
    %cst_7 = arith.constant dense<0.000000e+00> : vector<64x32xf32>
    %5 = tpu.matmul %3, %4, %cst_7 {dimension_numbers = #tpu.dot_dimension_numbers<[1], [0], [0], [1], [0, 0, 1, 1], [], []>} : vector<64x32xbf16>, vector<32x32xbf16>, vector<64x32xf32> -> vector<64x32xf32>
    %6 = arith.addf %2, %5 : vector<64x32xf32>
    %c0_8 = arith.constant 0 : index
    %c0_9 = arith.constant 0 : index
    %7 = vector.load %arg5[%c0_8, %c0_9] : memref<1x32xf32, #tpu.memory_space<vmem>>, vector<1x32xf32>
    %8 = vector.broadcast %7 : vector<1x32xf32> to vector<64x32xf32>
    %9 = arith.addf %6, %8 : vector<64x32xf32>
    %cst_10 = arith.constant 5.000000e-01 : f32
    %10 = vector.broadcast %cst_10 : f32 to vector<64x32xf32>
    %11 = arith.mulf %10, %9 : vector<64x32xf32>
    %cst_11 = arith.constant 4.471500e-02 : f32
    %12 = vector.broadcast %cst_11 : f32 to vector<64x32xf32>
    %13 = arith.mulf %12, %9 : vector<64x32xf32>
    %14 = arith.mulf %13, %9 : vector<64x32xf32>
    %15 = arith.mulf %14, %9 : vector<64x32xf32>
    %16 = arith.addf %9, %15 : vector<64x32xf32>
    %cst_12 = arith.constant 0.797884583 : f32
    %17 = vector.broadcast %cst_12 : f32 to vector<64x32xf32>
    %18 = arith.mulf %17, %16 : vector<64x32xf32>
    %19 = math.tanh %18 : vector<64x32xf32>
    %cst_13 = arith.constant 1.000000e+00 : f32
    %20 = vector.broadcast %cst_13 : f32 to vector<64x32xf32>
    %21 = arith.addf %20, %19 : vector<64x32xf32>
    %22 = arith.mulf %11, %21 : vector<64x32xf32>
    %23 = arith.truncf %22 : vector<64x32xf32> to vector<64x32xbf16>
    %c0_14 = arith.constant 0 : index
    %c0_15 = arith.constant 0 : index
    %24 = vector.load %arg6[%c0_14, %c0_15] : memref<32x16xbf16, #tpu.memory_space<vmem>>, vector<32x16xbf16>
    %cst_16 = arith.constant dense<0.000000e+00> : vector<64x16xf32>
    %25 = tpu.matmul %23, %24, %cst_16 {dimension_numbers = #tpu.dot_dimension_numbers<[1], [0], [0], [1], [0, 0, 1, 1], [], []>} : vector<64x32xbf16>, vector<32x16xbf16>, vector<64x16xf32> -> vector<64x16xf32>
    %c0_17 = arith.constant 0 : index
    %c0_18 = arith.constant 0 : index
    %26 = vector.load %arg7[%c0_17, %c0_18] : memref<1x16xf32, #tpu.memory_space<vmem>>, vector<1x16xf32>
    %27 = vector.broadcast %26 : vector<1x16xf32> to vector<64x16xf32>
    %28 = arith.addf %25, %27 : vector<64x16xf32>
    %cst_19 = arith.constant 5.000000e-01 : f32
    %29 = vector.broadcast %cst_19 : f32 to vector<64x16xf32>
    %30 = arith.mulf %29, %28 : vector<64x16xf32>
    %cst_20 = arith.constant 4.471500e-02 : f32
    %31 = vector.broadcast %cst_20 : f32 to vector<64x16xf32>
    %32 = arith.mulf %31, %28 : vector<64x16xf32>
    %33 = arith.mulf %32, %28 : vector<64x16xf32>
    %34 = arith.mulf %33, %28 : vector<64x16xf32>
    %35 = arith.addf %28, %34 : vector<64x16xf32>
    %cst_21 = arith.constant 0.797884583 : f32
    %36 = vector.broadcast %cst_21 : f32 to vector<64x16xf32>
    %37 = arith.mulf %36, %35 : vector<64x16xf32>
    %38 = math.tanh %37 : vector<64x16xf32>
    %cst_22 = arith.constant 1.000000e+00 : f32
    %39 = vector.broadcast %cst_22 : f32 to vector<64x16xf32>
    %40 = arith.addf %39, %38 : vector<64x16xf32>
    %41 = arith.mulf %30, %40 : vector<64x16xf32>
    %42 = arith.truncf %41 : vector<64x16xf32> to vector<64x16xbf16>
    %c0_23 = arith.constant 0 : index
    %c0_24 = arith.constant 0 : index
    %43 = vector.load %arg8[%c0_23, %c0_24] : memref<1x16xbf16, #tpu.memory_space<vmem>>, vector<1x16xbf16>
    %cst_25 = arith.constant dense<0.000000e+00> : vector<1x64xf32>
    %44 = tpu.matmul %43, %42, %cst_25 {dimension_numbers = #tpu.dot_dimension_numbers<[1], [1], [0], [0], [0, 0, 1, 0], [], []>} : vector<1x16xbf16>, vector<64x16xbf16>, vector<1x64xf32> -> vector<1x64xf32>
    %c0_26 = arith.constant 0 : index
    %c0_27 = arith.constant 0 : index
    %45 = vector.load %arg9[%c0_26, %c0_27] : memref<1x1xf32, #tpu.memory_space<vmem>>, vector<1x1xf32>
    %46 = vector.broadcast %45 : vector<1x1xf32> to vector<1x64xf32>
    %47 = arith.addf %44, %46 : vector<1x64xf32>
    %48 = vector.shape_cast %47 : vector<1x64xf32> to vector<1x1x64xf32>
    %c0_28 = arith.constant 0 : index
    %c0_29 = arith.constant 0 : index
    %c0_30 = arith.constant 0 : index
    %49 = vector.load %arg10[%c0_28, %c0_29, %c0_30] : memref<1x1x64xf32, #tpu.memory_space<vmem>>, vector<1x1x64xf32>
    tpu.vector_store %arg10[%c0_28, %c0_29, %c0_30], %48 {strides = array<i32>} : memref<1x1x64xf32, #tpu.memory_space<vmem>>, vector<1x1x64xf32>,
    return
  }
  func.func @transform_0(%arg0: i32) -> (i32, i32) {
    %c0_i32 = arith.constant 0 : i32
    %c0_i32_0 = arith.constant 0 : i32
    return %arg0, %c0_i32 : i32, i32
  }
  func.func @transform_1(%arg0: i32) -> (i32, i32) {
    %c0_i32 = arith.constant 0 : i32
    %c0_i32_0 = arith.constant 0 : i32
    return %arg0, %c0_i32 : i32, i32
  }
  func.func @transform_2(%arg0: i32) -> (i32, i32) {
    %c0_i32 = arith.constant 0 : i32
    %c0_i32_0 = arith.constant 0 : i32
    %c0_i32_1 = arith.constant 0 : i32
    return %c0_i32, %c0_i32_0 : i32, i32
  }
  func.func @transform_3(%arg0: i32) -> (i32, i32) {
    %c0_i32 = arith.constant 0 : i32
    %c0_i32_0 = arith.constant 0 : i32
    %c0_i32_1 = arith.constant 0 : i32
    return %c0_i32, %c0_i32_0 : i32, i32
  }
  func.func @transform_4(%arg0: i32) -> (i32, i32) {
    %c0_i32 = arith.constant 0 : i32
    %c0_i32_0 = arith.constant 0 : i32
    %c0_i32_1 = arith.constant 0 : i32
    return %c0_i32, %c0_i32_0 : i32, i32
  }
  func.func @transform_5(%arg0: i32) -> (i32, i32) {
    %c0_i32 = arith.constant 0 : i32
    %c0_i32_0 = arith.constant 0 : i32
    %c0_i32_1 = arith.constant 0 : i32
    return %c0_i32, %c0_i32_0 : i32, i32
  }
  func.func @transform_6(%arg0: i32) -> (i32, i32) {
    %c0_i32 = arith.constant 0 : i32
    %c0_i32_0 = arith.constant 0 : i32
    %c0_i32_1 = arith.constant 0 : i32
    return %c0_i32, %c0_i32_0 : i32, i32
  }
  func.func @transform_7(%arg0: i32) -> (i32, i32) {
    %c0_i32 = arith.constant 0 : i32
    %c0_i32_0 = arith.constant 0 : i32
    %c0_i32_1 = arith.constant 0 : i32
    return %c0_i32, %c0_i32_0 : i32, i32
  }
  func.func @transform_8(%arg0: i32) -> (i32, i32) {
    %c0_i32 = arith.constant 0 : i32
    %c0_i32_0 = arith.constant 0 : i32
    %c0_i32_1 = arith.constant 0 : i32
    return %c0_i32, %c0_i32_0 : i32, i32
  }
  func.func @transform_9(%arg0: i32) -> (i32, i32, i32) {
    %c0_i32 = arith.constant 0 : i32
    %c0_i32_0 = arith.constant 0 : i32
    %c0_i32_1 = arith.constant 0 : i32
    return %arg0, %c0_i32, %c0_i32_0 : i32, i32, i32
  }
}

</mosaic_0001>

<llo_original>
// kernel: _lambda_.20
$region0: #{_lambda_.20}
  #allocation0 [shape = 'u32[]', space=smem, size = 0x4, offset = 0x4, fixed_abs, tag = 'smem constant byte address 0x4 - core index']
  #allocation1 [shape = 'u32[144,128]{1,0:T(1,128)}', space=vmem, size = 0x12000, scoped, tag = 'internal scratch']
  %s0 = inlined_call_operand.vmem [shape: bf16[8,128], index: 0, kind: input, shape index: {}]
  %s1 = inlined_call_operand.vmem [shape: bf16[128,64], index: 1, kind: input, shape index: {}]
  %s2 = inlined_call_operand.hbm [shape: f32[1,64], index: 2, kind: input, shape index: {}]
  %s3 = inlined_call_operand.vmem [shape: bf16[8,64], index: 3, kind: output, shape index: {}]
  %s4 = sld [smem:[#allocation0]]
  $region26: #{_lambda_.20} parent=0
    _
  %s6 = ssub.s32 1, %s4
  %s7 = scalar_select 0, %s6, %s4
  $region1: #{_lambda_.20} parent=0
    #allocation2 [shape = 'u8[512]{0}', space=vmem, size = 0x400, scoped, tag = 'input window, operand 2, single buffered']
    #allocation3 [shape = 's32[1]{0}', space=sflag, size = 0x4, scoped, tag = 'scoped memory for _lambda_.20']
    %8 = vsyncpa [#allocation3], 0
    // Predicated region
    $region2: #{_lambda_.20} parent=1 // pred_check
      _
    $region3: #{_lambda_.20} parent=1 // pred_check_branch
      %10 = sbr.rel (0) target = $region5
    $region4: #{_lambda_.20} parent=1 // pred_region
      _
    $region5: #{_lambda_.20} parent=1 // pred_fallthru
      _
    // Predicated region
    $region6: #{_lambda_.20} parent=1 // pred_check
      _
    $region7: #{_lambda_.20} parent=1 // pred_check_branch
      %12 = sbr.rel (0) target = $region9
    $region8: #{_lambda_.20} parent=1 // pred_region
      _
    $region9: #{_lambda_.20} parent=1 // pred_fallthru
      _
    // Predicated region
    $region10: #{_lambda_.20} parent=1 // pred_check
      _
    $region11: #{_lambda_.20} parent=1 // pred_check_branch
      %14 = sbr.rel (0) target = $region13
    $region12: #{_lambda_.20} parent=1 // pred_region
      %s16 = ssub.s32 16, 16
      %17 = vsyncadd [#allocation3], %s16
      %s19 = sshll.u32 [#allocation2], 4
      %s20 = int_to_ptr.vmem [resolvable:$true] %s19
      %22 = dma.hbm_to_vmem [thread:$0]  %s2, 16, %s20, [#allocation3]
    $region13: #{_lambda_.20} parent=1 // pred_fallthru
      _
    // Predicated region
    $region14: #{_lambda_.20} parent=1 // pred_check
      _
    $region15: #{_lambda_.20} parent=1 // pred_check_branch
      %24 = sbr.rel (0) target = $region17
    $region16: #{_lambda_.20} parent=1 // pred_region
      %25 = dma.done [#allocation3], 16
    $region17: #{_lambda_.20} parent=1 // pred_fallthru
      _
    %v27 = vld [vmem:[%s0] sm:$0xf]
    %v28 = vld [vmem:[%s1] sm:$0xf]
    %v29 = vld [vmem:[%s1 + $0x4] sm:$0xf]
    %v30 = vld [vmem:[%s1 + $0x8] sm:$0xf]
    %v31 = vld [vmem:[%s1 + $0xc] sm:$0xf]
    %v32 = vld [vmem:[%s1 + $0x10] sm:$0xf]
    %v33 = vld [vmem:[%s1 + $0x14] sm:$0xf]
    %v34 = vld [vmem:[%s1 + $0x18] sm:$0xf]
    %v35 = vld [vmem:[%s1 + $0x1c] sm:$0xf]
    %v36 = vld [vmem:[%s1 + $0x20] sm:$0xf]
    %v37 = vld [vmem:[%s1 + $0x24] sm:$0xf]
    %v38 = vld [vmem:[%s1 + $0x28] sm:$0xf]
    %v39 = vld [vmem:[%s1 + $0x2c] sm:$0xf]
    %v40 = vld [vmem:[%s1 + $0x30] sm:$0xf]
    %v41 = vld [vmem:[%s1 + $0x34] sm:$0xf]
    %v42 = vld [vmem:[%s1 + $0x38] sm:$0xf]
    %v43 = vld [vmem:[%s1 + $0x3c] sm:$0xf]
    %v44 = vld [vmem:[#allocation2] sm:$0x1]
    %v46 = vlaneseq
    %v47 = vshrl.u32 %v46, 7
    %v48 = vsub.s32 0, %v47
    %v49 = vrot.slane %v44, %v48
    %v67 = vunpack.c.l.b16 %v28
    %v68 = vunpack.c.l.b16 %v29
    %v69 = vunpack.c.l.b16 %v30
    %v70 = vunpack.c.l.b16 %v31
    %v71 = vunpack.c.l.b16 %v32
    %v72 = vunpack.c.l.b16 %v33
    %v73 = vunpack.c.l.b16 %v34
    %v74 = vunpack.c.l.b16 %v35
    %v75 = vunpack.c.l.b16 %v36
    %v76 = vunpack.c.l.b16 %v37
    %v77 = vunpack.c.l.b16 %v38
    %v78 = vunpack.c.l.b16 %v39
    %v79 = vunpack.c.l.b16 %v40
    %v80 = vunpack.c.l.b16 %v41
    %v81 = vunpack.c.l.b16 %v42
    %v82 = vunpack.c.l.b16 %v43
    %v83 = vpack.c.b16 %v68, %v67
    %v84 = vpack.c.b16 %v70, %v69
    %v85 = vpack.c.b16 %v72, %v71
    %v86 = vpack.c.b16 %v74, %v73
    %v87 = vpack.c.b16 %v76, %v75
    %v88 = vpack.c.b16 %v78, %v77
    %v89 = vpack.c.b16 %v80, %v79
    %v90 = vpack.c.b16 %v82, %v81
    %99 = vmatprep.subr.bf16.mxu0 0
    %100 = vmatpush1.bf16.msra.mxu0 %v83
    %101 = vmatprep.subr.bf16.mxu0 0
    %102 = vmatpush1.bf16.msra.mxu0 %v84
    %103 = vmatprep.subr.bf16.mxu0 0
    %104 = vmatpush1.bf16.msra.mxu0 %v85
    %105 = vmatprep.subr.bf16.mxu0 0
    %106 = vmatpush1.bf16.msra.mxu0 %v86
    %107 = vmatprep.subr.bf16.mxu0 0
    %108 = vmatpush1.bf16.msra.mxu0 %v87
    %109 = vmatprep.subr.bf16.mxu0 0
    %110 = vmatpush1.bf16.msra.mxu0 %v88
    %111 = vmatprep.subr.bf16.mxu0 0
    %112 = vmatpush1.bf16.msra.mxu0 %v89
    %113 = vmatprep.subr.bf16.mxu0 0
    %114 = vmatpush1.bf16.msra.mxu0 %v90
    %115 = vmatprep.subr.bf16.mxu0 0
    %116 = vmatpush1.bf16.msra.mxu0 0
    %117 = vmatprep.subr.bf16.mxu0 0
    %118 = vmatpush1.bf16.msra.mxu0 0
    %119 = vmatprep.subr.bf16.mxu0 0
    %120 = vmatpush1.bf16.msra.mxu0 0
    %121 = vmatprep.subr.bf16.mxu0 0
    %122 = vmatpush1.bf16.msra.mxu0 0
    %123 = vmatprep.subr.bf16.mxu0 0
    %124 = vmatpush1.bf16.msra.mxu0 0
    %125 = vmatprep.subr.bf16.mxu0 0
    %126 = vmatpush1.bf16.msra.mxu0 0
    %127 = vmatprep.subr.bf16.mxu0 0
    %128 = vmatpush1.bf16.msra.mxu0 0
    %129 = vmatprep.subr.bf16.mxu0 0
    %130 = vmatpush1.bf16.msra.mxu0 0
    %131 = vmatprep.mubr.bf16.mxu0 0
    %132 = vmatmul.mubr.bf16.gmra.mrb[0].mxu0 %v27
    %v133 = vpop.f32.mrb[0].mxu0
    %v134 = vadd.f32 %v49, %v133
    %v135 = vpop.f32.mrb[0].mxu0
    %v136 = vpop.f32.mrb[0].mxu0
    %v137 = vpop.f32.mrb[0].mxu0
    %138 = vdwg.mxu0
    %v139 = vpack.c.bf16 %v134, %v134
    %vm140 = vcmask 519168
    %141 = vst.msk [vmem:[%s3] sm:$0xf] %vm140, %v139
    // Predicated region
    $region18: #{_lambda_.20} parent=1 // pred_check
      _
    $region19: #{_lambda_.20} parent=1 // pred_check_branch
      %143 = sbr.rel (0) target = $region21
    $region20: #{_lambda_.20} parent=1 // pred_region
      _
    $region21: #{_lambda_.20} parent=1 // pred_fallthru
      _
    // Predicated region
    $region22: #{_lambda_.20} parent=1 // pred_check
      _
    $region23: #{_lambda_.20} parent=1 // pred_check_branch
      %145 = sbr.rel (0) target = $region25
    $region24: #{_lambda_.20} parent=1 // pred_region
      _
    $region25: #{_lambda_.20} parent=1 // pred_fallthru
      _
    %146 = vsyncpa [#allocation3], 1

// kernel: _lambda_.19
$region0: #{_lambda_.19}
  #allocation0 [shape = 'u32[]', space=smem, size = 0x4, offset = 0x4, fixed_abs, tag = 'smem constant byte address 0x4 - core index']
  #allocation1 [shape = 'u32[144,128]{1,0:T(1,128)}', space=vmem, size = 0x12000, scoped, tag = 'internal scratch']
  %s0 = inlined_call_operand.vmem [shape: bf16[8,3072], index: 0, kind: input, shape index: {}]
  %s1 = inlined_call_operand.vmem [shape: bf16[3072,128], index: 1, kind: input, shape index: {}]
  %s2 = inlined_call_operand.hbm [shape: f32[1,128], index: 2, kind: input, shape index: {}]
  %s3 = inlined_call_operand.vmem [shape: bf16[8,128], index: 3, kind: output, shape index: {}]
  %s4 = sld [smem:[#allocation0]]
  $region26: #{_lambda_.19} parent=0
    _
  %s6 = ssub.s32 1, %s4
  %s7 = scalar_select 0, %s6, %s4
  $region1: #{_lambda_.19} parent=0
    #allocation2 [shape = 'u8[512]{0}', space=vmem, size = 0x400, scoped, tag = 'input window, operand 2, single buffered']
    #allocation3 [shape = 's32[1]{0}', space=sflag, size = 0x4, scoped, tag = 'scoped memory for _lambda_.19']
    %8 = vsyncpa [#allocation3], 0
    // Predicated region
    $region2: #{_lambda_.19} parent=1 // pred_check
      _
    $region3: #{_lambda_.19} parent=1 // pred_check_branch
      %10 = sbr.rel (0) target = $region5
    $region4: #{_lambda_.19} parent=1 // pred_region
      _
    $region5: #{_lambda_.19} parent=1 // pred_fallthru
      _
    // Predicated region
    $region6: #{_lambda_.19} parent=1 // pred_check
      _
    $region7: #{_lambda_.19} parent=1 // pred_check_branch
      %12 = sbr.rel (0) target = $region9
    $region8: #{_lambda_.19} parent=1 // pred_region
      _
    $region9: #{_lambda_.19} parent=1 // pred_fallthru
      _
    // Predicated region
    $region10: #{_lambda_.19} parent=1 // pred_check
      _
    $region11: #{_lambda_.19} parent=1 // pred_check_branch
      %14 = sbr.rel (0) target = $region13
    $region12: #{_lambda_.19} parent=1 // pred_region
      %s16 = ssub.s32 16, 16
      %17 = vsyncadd [#allocation3], %s16
      %s19 = sshll.u32 [#allocation2], 4
      %s20 = int_to_ptr.vmem [resolvable:$true] %s19
      %22 = dma.hbm_to_vmem [thread:$0]  %s2, 16, %s20, [#allocation3]
    $region13: #{_lambda_.19} parent=1 // pred_fallthru
      _
    // Predicated region
    $region14: #{_lambda_.19} parent=1 // pred_check
      _
    $region15: #{_lambda_.19} parent=1 // pred_check_branch
      %24 = sbr.rel (0) target = $region17
    $region16: #{_lambda_.19} parent=1 // pred_region
      %25 = dma.done [#allocation3], 16
    $region17: #{_lambda_.19} parent=1 // pred_fallthru
      _
    %v27 = vld [vmem:[%s0] sm:$0xff]
    %v28 = vld [vmem:[%s0 + $0x8] sm:$0xff]
    %v29 = vld [vmem:[%s0 + $0x10] sm:$0xff]
    %v30 = vld [vmem:[%s0 + $0x18] sm:$0xff]
    %v31 = vld [vmem:[%s0 + $0x20] sm:$0xff]
    %v32 = vld [vmem:[%s0 + $0x28] sm:$0xff]
    %v33 = vld [vmem:[%s0 + $0x30] sm:$0xff]
    %v34 = vld [vmem:[%s0 + $0x38] sm:$0xff]
    %v35 = vld [vmem:[%s0 + $0x40] sm:$0xff]
    %v36 = vld [vmem:[%s0 + $0x48] sm:$0xff]
    %v37 = vld [vmem:[%s0 + $0x50] sm:$0xff]
    %v38 = vld [vmem:[%s0 + $0x58] sm:$0xff]
    %v39 = vld [vmem:[%s1] sm:$0xf]
    %v40 = vld [vmem:[%s1 + $0x4] sm:$0xf]
    %v41 = vld [vmem:[%s1 + $0x8] sm:$0xf]
    %v42 = vld [vmem:[%s1 + $0xc] sm:$0xf]
    %v43 = vld [vmem:[%s1 + $0x10] sm:$0xf]
    %v44 = vld [vmem:[%s1 + $0x14] sm:$0xf]
    %v45 = vld [vmem:[%s1 + $0x18] sm:$0xf]
    %v46 = vld [vmem:[%s1 + $0x1c] sm:$0xf]
    %v47 = vld [vmem:[%s1 + $0x20] sm:$0xf]
    %v48 = vld [vmem:[%s1 + $0x24] sm:$0xf]
    %v49 = vld [vmem:[%s1 + $0x28] sm:$0xf]
    %v50 = vld [vmem:[%s1 + $0x2c] sm:$0xf]
    %v51 = vld [vmem:[%s1 + $0x30] sm:$0xf]
    %v52 = vld [vmem:[%s1 + $0x34] sm:$0xf]
    %v53 = vld [vmem:[%s1 + $0x38] sm:$0xf]
    %v54 = vld [vmem:[%s1 + $0x3c] sm:$0xf]
    %v55 = vld [vmem:[%s1 + $0x40] sm:$0xf]
    %v56 = vld [vmem:[%s1 + $0x44] sm:$0xf]
    %v57 = vld [vmem:[%s1 + $0x48] sm:$0xf]
    %v58 = vld [vmem:[%s1 + $0x4c] sm:$0xf]
    %v59 = vld [vmem:[%s1 + $0x50] sm:$0xf]
    %v60 = vld [vmem:[%s1 + $0x54] sm:$0xf]
    %v61 = vld [vmem:[%s1 + $0x58] sm:$0xf]
    %v62 = vld [vmem:[%s1 + $0x5c] sm:$0xf]
    %v63 = vld [vmem:[%s1 + $0x60] sm:$0xf]
    %v64 = vld [vmem:[%s1 + $0x64] sm:$0xf]
    %v65 = vld [vmem:[%s1 + $0x68] sm:$0xf]
    %v66 = vld [vmem:[%s1 + $0x6c] sm:$0xf]
    %v67 = vld [vmem:[%s1 + $0x70] sm:$0xf]
    %v68 = vld [vmem:[%s1 + $0x74] sm:$0xf]
    %v69 = vld [vmem:[%s1 + $0x78] sm:$0xf]
    %v70 = vld [vmem:[%s1 + $0x7c] sm:$0xf]
    %v71 = vld [vmem:[%s1 + $0x80] sm:$0xf]
    %v72 = vld [vmem:[%s1 + $0x84] sm:$0xf]
    %v73 = vld [vmem:[%s1 + $0x88] sm:$0xf]
    %v74 = vld [vmem:[%s1 + $0x8c] sm:$0xf]
    %v75 = vld [vmem:[%s1 + $0x90] sm:$0xf]
    %v76 = vld [vmem:[%s1 + $0x94] sm:$0xf]
    %v77 = vld [vmem:[%s1 + $0x98] sm:$0xf]
    %v78 = vld [vmem:[%s1 + $0x9c] sm:$0xf]
    %v79 = vld [vmem:[%s1 + $0xa0] sm:$0xf]
    %v80 = vld [vmem:[%s1 + $0xa4] sm:$0xf]
    %v81 = vld [vmem:[%s1 + $0xa8] sm:$0xf]
    %v82 = vld [vmem:[%s1 + $0xac] sm:$0xf]
    %v83 = vld [vmem:[%s1 + $0xb0] sm:$0xf]
    %v84 = vld [vmem:[%s1 + $0xb4] sm:$0xf]
    %v85 = vld [vmem:[%s1 + $0xb8] sm:$0xf]
    %v86 = vld [vmem:[%s1 + $0xbc] sm:$0xf]
    %v87 = vld [vmem:[%s1 + $0xc0] sm:$0xf]
    %v88 = vld [vmem:[%s1 + $0xc4] sm:$0xf]
    %v89 = vld [vmem:[%s1 + $0xc8] sm:$0xf]
    %v90 = vld [vmem:[%s1 + $0xcc] sm:$0xf]
    %v91 = vld [vmem:[%s1 + $0xd0] sm:$0xf]
    %v92 = vld [vmem:[%s1 + $0xd4] sm:$0xf]
    %v93 = vld [vmem:[%s1 + $0xd8] sm:$0xf]
    %v94 = vld [vmem:[%s1 + $0xdc] sm:$0xf]
    %v95 = vld [vmem:[%s1 + $0xe0] sm:$0xf]
    %v96 = vld [vmem:[%s1 + $0xe4] sm:$0xf]
    %v97 = vld [vmem:[%s1 + $0xe8] sm:$0xf]
    %v98 = vld [vmem:[%s1 + $0xec] sm:$0xf]
    %v99 = vld [vmem:[%s1 + $0xf0] sm:$0xf]
    %v100 = vld [vmem:[%s1 + $0xf4] sm:$0xf]
    %v101 = vld [vmem:[%s1 + $0xf8] sm:$0xf]
    %v102 = vld [vmem:[%s1 + $0xfc] sm:$0xf]
    %v103 = vld [vmem:[%s1 + $0x100] sm:$0xf]
    %v104 = vld [vmem:[%s1 + $0x104] sm:$0xf]
    %v105 = vld [vmem:[%s1 + $0x108] sm:$0xf]
    %v106 = vld [vmem:[%s1 + $0x10c] sm:$0xf]
    %v107 = vld [vmem:[%s1 + $0x110] sm:$0xf]
    %v108 = vld [vmem:[%s1 + $0x114] sm:$0xf]
    %v109 = vld [vmem:[%s1 + $0x118] sm:$0xf]
    %v110 = vld [vmem:[%s1 + $0x11c] sm:$0xf]
    %v111 = vld [vmem:[%s1 + $0x120] sm:$0xf]
    %v112 = vld [vmem:[%s1 + $0x124] sm:$0xf]
    %v113 = vld [vmem:[%s1 + $0x128] sm:$0xf]
    %v114 = vld [vmem:[%s1 + $0x12c] sm:$0xf]
    %v115 = vld [vmem:[%s1 + $0x130] sm:$0xf]
    %v116 = vld [vmem:[%s1 + $0x134] sm:$0xf]
    %v117 = vld [vmem:[%s1 + $0x138] sm:$0xf]
    %v118 = vld [vmem:[%s1 + $0x13c] sm:$0xf]
    %v119 = vld [vmem:[%s1 + $0x140] sm:$0xf]
    %v120 = vld [vmem:[%s1 + $0x144] sm:$0xf]
    %v121 = vld [vmem:[%s1 + $0x148] sm:$0xf]
    %v122 = vld [vmem:[%s1 + $0x14c] sm:$0xf]
    %v123 = vld [vmem:[%s1 + $0x150] sm:$0xf]
    %v124 = vld [vmem:[%s1 + $0x154] sm:$0xf]
    %v125 = vld [vmem:[%s1 + $0x158] sm:$0xf]
    %v126 = vld [vmem:[%s1 + $0x15c] sm:$0xf]
    %v127 = vld [vmem:[%s1 + $0x160] sm:$0xf]
    %v128 = vld [vmem:[%s1 + $0x164] sm:$0xf]
    %v129 = vld [vmem:[%s1 + $0x168] sm:$0xf]
    %v130 = vld [vmem:[%s1 + $0x16c] sm:$0xf]
    %v131 = vld [vmem:[%s1 + $0x170] sm:$0xf]
    %v132 = vld [vmem:[%s1 + $0x174] sm:$0xf]
    %v133 = vld [vmem:[%s1 + $0x178] sm:$0xf]
    %v134 = vld [vmem:[%s1 + $0x17c] sm:$0xf]
    %v135 = vld [vmem:[%s1 + $0x180] sm:$0xf]
    %v136 = vld [vmem:[%s1 + $0x184] sm:$0xf]
    %v137 = vld [vmem:[%s1 + $0x188] sm:$0xf]
    %v138 = vld [vmem:[%s1 + $0x18c] sm:$0xf]
    %v139 = vld [vmem:[%s1 + $0x190] sm:$0xf]
    %v140 = vld [vmem:[%s1 + $0x194] sm:$0xf]
    %v141 = vld [vmem:[%s1 + $0x198] sm:$0xf]
    %v142 = vld [vmem:[%s1 + $0x19c] sm:$0xf]
    %v143 = vld [vmem:[%s1 + $0x1a0] sm:$0xf]
    %v144 = vld [vmem:[%s1 + $0x1a4] sm:$0xf]
    %v145 = vld [vmem:[%s1 + $0x1a8] sm:$0xf]
    %v146 = vld [vmem:[%s1 + $0x1ac] sm:$0xf]
    %v147 = vld [vmem:[%s1 + $0x1b0] sm:$0xf]
    %v148 = vld [vmem:[%s1 + $0x1b4] sm:$0xf]
    %v149 = vld [vmem:[%s1 + $0x1b8] sm:$0xf]
    %v150 = vld [vmem:[%s1 + $0x1bc] sm:$0xf]
    %v151 = vld [vmem:[%s1 + $0x1c0] sm:$0xf]
    %v152 = vld [vmem:[%s1 + $0x1c4] sm:$0xf]
    %v153 = vld [vmem:[%s1 + $0x1c8] sm:$0xf]
    %v154 = vld [vmem:[%s1 + $0x1cc] sm:$0xf]
    %v155 = vld [vmem:[%s1 + $0x1d0] sm:$0xf]
    %v156 = vld [vmem:[%s1 + $0x1d4] sm:$0xf]
    %v157 = vld [vmem:[%s1 + $0x1d8] sm:$0xf]
    %v158 = vld [vmem:[%s1 + $0x1dc] sm:$0xf]
    %v159 = vld [vmem:[%s1 + $0x1e0] sm:$0xf]
    %v160 = vld [vmem:[%s1 + $0x1e4] sm:$0xf]
    %v161 = vld [vmem:[%s1 + $0x1e8] sm:$0xf]
    %v162 = vld [vmem:[%s1 + $0x1ec] sm:$0xf]
    %v163 = vld [vmem:[%s1 + $0x1f0] sm:$0xf]
    %v164 = vld [vmem:[%s1 + $0x1f4] sm:$0xf]
    %v165 = vld [vmem:[%s1 + $0x1f8] sm:$0xf]
    %v166 = vld [vmem:[%s1 + $0x1fc] sm:$0xf]
    %v167 = vld [vmem:[%s1 + $0x200] sm:$0xf]
    %v168 = vld [vmem:[%s1 + $0x204] sm:$0xf]
    %v169 = vld [vmem:[%s1 + $0x208] sm:$0xf]
    %v170 = vld [vmem:[%s1 + $0x20c] sm:$0xf]
    %v171 = vld [vmem:[%s1 + $0x210] sm:$0xf]
    %v172 = vld [vmem:[%s1 + $0x214] sm:$0xf]
    %v173 = vld [vmem:[%s1 + $0x218] sm:$0xf]
    %v174 = vld [vmem:[%s1 + $0x21c] sm:$0xf]
    %v175 = vld [vmem:[%s1 + $0x220] sm:$0xf]
    %v176 = vld [vmem:[%s1 + $0x224] sm:$0xf]
    %v177 = vld [vmem:[%s1 + $0x228] sm:$0xf]
    %v178 = vld [vmem:[%s1 + $0x22c] sm:$0xf]
    %v179 = vld [vmem:[%s1 + $0x230] sm:$0xf]
    %v180 = vld [vmem:[%s1 + $0x234] sm:$0xf]
    %v181 = vld [vmem:[%s1 + $0x238] sm:$0xf]
    %v182 = vld [vmem:[%s1 + $0x23c] sm:$0xf]
    %v183 = vld [vmem:[%s1 + $0x240] sm:$0xf]
    %v184 = vld [vmem:[%s1 + $0x244] sm:$0xf]
    %v185 = vld [vmem:[%s1 + $0x248] sm:$0xf]
    %v186 = vld [vmem:[%s1 + $0x24c] sm:$0xf]
    %v187 = vld [vmem:[%s1 + $0x250] sm:$0xf]
    %v188 = vld [vmem:[%s1 + $0x254] sm:$0xf]
    %v189 = vld [vmem:[%s1 + $0x258] sm:$0xf]
    %v190 = vld [vmem:[%s1 + $0x25c] sm:$0xf]
    %v191 = vld [vmem:[%s1 + $0x260] sm:$0xf]
    %v192 = vld [vmem:[%s1 + $0x264] sm:$0xf]
    %v193 = vld [vmem:[%s1 + $0x268] sm:$0xf]
    %v194 = vld [vmem:[%s1 + $0x26c] sm:$0xf]
    %v195 = vld [vmem:[%s1 + $0x270] sm:$0xf]
    %v196 = vld [vmem:[%s1 + $0x274] sm:$0xf]
    %v197 = vld [vmem:[%s1 + $0x278] sm:$0xf]
    %v198 = vld [vmem:[%s1 + $0x27c] sm:$0xf]
    %v199 = vld [vmem:[%s1 + $0x280] sm:$0xf]
    %v200 = vld [vmem:[%s1 + $0x284] sm:$0xf]
    %v201 = vld [vmem:[%s1 + $0x288] sm:$0xf]
    %v202 = vld [vmem:[%s1 + $0x28c] sm:$0xf]
    %v203 = vld [vmem:[%s1 + $0x290] sm:$0xf]
    %v204 = vld [vmem:[%s1 + $0x294] sm:$0xf]
    %v205 = vld [vmem:[%s1 + $0x298] sm:$0xf]
    %v206 = vld [vmem:[%s1 + $0x29c] sm:$0xf]
    %v207 = vld [vmem:[%s1 + $0x2a0] sm:$0xf]
    %v208 = vld [vmem:[%s1 + $0x2a4] sm:$0xf]
    %v209 = vld [vmem:[%s1 + $0x2a8] sm:$0xf]
    %v210 = vld [vmem:[%s1 + $0x2ac] sm:$0xf]
    %v211 = vld [vmem:[%s1 + $0x2b0] sm:$0xf]
    %v212 = vld [vmem:[%s1 + $0x2b4] sm:$0xf]
    %v213 = vld [vmem:[%s1 + $0x2b8] sm:$0xf]
    %v214 = vld [vmem:[%s1 + $0x2bc] sm:$0xf]
    %v215 = vld [vmem:[%s1 + $0x2c0] sm:$0xf]
    %v216 = vld [vmem:[%s1 + $0x2c4] sm:$0xf]
    %v217 = vld [vmem:[%s1 + $0x2c8] sm:$0xf]
    %v218 = vld [vmem:[%s1 + $0x2cc] sm:$0xf]
    %v219 = vld [vmem:[%s1 + $0x2d0] sm:$0xf]
    %v220 = vld [vmem:[%s1 + $0x2d4] sm:$0xf]
    %v221 = vld [vmem:[%s1 + $0x2d8] sm:$0xf]
    %v222 = vld [vmem:[%s1 + $0x2dc] sm:$0xf]
    %v223 = vld [vmem:[%s1 + $0x2e0] sm:$0xf]
    %v224 = vld [vmem:[%s1 + $0x2e4] sm:$0xf]
    %v225 = vld [vmem:[%s1 + $0x2e8] sm:$0xf]
    %v226 = vld [vmem:[%s1 + $0x2ec] sm:$0xf]
    %v227 = vld [vmem:[%s1 + $0x2f0] sm:$0xf]
    %v228 = vld [vmem:[%s1 + $0x2f4] sm:$0xf]
    %v229 = vld [vmem:[%s1 + $0x2f8] sm:$0xf]
    %v230 = vld [vmem:[%s1 + $0x2fc] sm:$0xf]
    %v231 = vld [vmem:[%s1 + $0x300] sm:$0xf]
    %v232 = vld [vmem:[%s1 + $0x304] sm:$0xf]
    %v233 = vld [vmem:[%s1 + $0x308] sm:$0xf]
    %v234 = vld [vmem:[%s1 + $0x30c] sm:$0xf]
    %v235 = vld [vmem:[%s1 + $0x310] sm:$0xf]
    %v236 = vld [vmem:[%s1 + $0x314] sm:$0xf]
    %v237 = vld [vmem:[%s1 + $0x318] sm:$0xf]
    %v238 = vld [vmem:[%s1 + $0x31c] sm:$0xf]
    %v239 = vld [vmem:[%s1 + $0x320] sm:$0xf]
    %v240 = vld [vmem:[%s1 + $0x324] sm:$0xf]
    %v241 = vld [vmem:[%s1 + $0x328] sm:$0xf]
    %v242 = vld [vmem:[%s1 + $0x32c] sm:$0xf]
    %v243 = vld [vmem:[%s1 + $0x330] sm:$0xf]
    %v244 = vld [vmem:[%s1 + $0x334] sm:$0xf]
    %v245 = vld [vmem:[%s1 + $0x338] sm:$0xf]
    %v246 = vld [vmem:[%s1 + $0x33c] sm:$0xf]
    %v247 = vld [vmem:[%s1 + $0x340] sm:$0xf]
    %v248 = vld [vmem:[%s1 + $0x344] sm:$0xf]
    %v249 = vld [vmem:[%s1 + $0x348] sm:$0xf]
    %v250 = vld [vmem:[%s1 + $0x34c] sm:$0xf]
    %v251 = vld [vmem:[%s1 + $0x350] sm:$0xf]
    %v252 = vld [vmem:[%s1 + $0x354] sm:$0xf]
    %v253 = vld [vmem:[%s1 + $0x358] sm:$0xf]
    %v254 = vld [vmem:[%s1 + $0x35c] sm:$0xf]
    %v255 = vld [vmem:[%s1 + $0x360] sm:$0xf]
    %v256 = vld [vmem:[%s1 + $0x364] sm:$0xf]
    %v257 = vld [vmem:[%s1 + $0x368] sm:$0xf]
    %v258 = vld [vmem:[%s1 + $0x36c] sm:$0xf]
    %v259 = vld [vmem:[%s1 + $0x370] sm:$0xf]
    %v260 = vld [vmem:[%s1 + $0x374] sm:$0xf]
    %v261 = vld [vmem:[%s1 + $0x378] sm:$0xf]
    %v262 = vld [vmem:[%s1 + $0x37c] sm:$0xf]
    %v263 = vld [vmem:[%s1 + $0x380] sm:$0xf]
    %v264 = vld [vmem:[%s1 + $0x384] sm:$0xf]
    %v265 = vld [vmem:[%s1 + $0x388] sm:$0xf]
    %v266 = vld [vmem:[%s1 + $0x38c] sm:$0xf]
    %v267 = vld [vmem:[%s1 + $0x390] sm:$0xf]
    %v268 = vld [vmem:[%s1 + $0x394] sm:$0xf]
    %v269 = vld [vmem:[%s1 + $0x398] sm:$0xf]
    %v270 = vld [vmem:[%s1 + $0x39c] sm:$0xf]
    %v271 = vld [vmem:[%s1 + $0x3a0] sm:$0xf]
    %v272 = vld [vmem:[%s1 + $0x3a4] sm:$0xf]
    %v273 = vld [vmem:[%s1 + $0x3a8] sm:$0xf]
    %v274 = vld [vmem:[%s1 + $0x3ac] sm:$0xf]
    %v275 = vld [vmem:[%s1 + $0x3b0] sm:$0xf]
    %v276 = vld [vmem:[%s1 + $0x3b4] sm:$0xf]
    %v277 = vld [vmem:[%s1 + $0x3b8] sm:$0xf]
    %v278 = vld [vmem:[%s1 + $0x3bc] sm:$0xf]
    %v279 = vld [vmem:[%s1 + $0x3c0] sm:$0xf]
    %v280 = vld [vmem:[%s1 + $0x3c4] sm:$0xf]
    %v281 = vld [vmem:[%s1 + $0x3c8] sm:$0xf]
    %v282 = vld [vmem:[%s1 + $0x3cc] sm:$0xf]
    %v283 = vld [vmem:[%s1 + $0x3d0] sm:$0xf]
    %v284 = vld [vmem:[%s1 + $0x3d4] sm:$0xf]
    %v285 = vld [vmem:[%s1 + $0x3d8] sm:$0xf]
    %v286 = vld [vmem:[%s1 + $0x3dc] sm:$0xf]
    %v287 = vld [vmem:[%s1 + $0x3e0] sm:$0xf]
    %v288 = vld [vmem:[%s1 + $0x3e4] sm:$0xf]
    %v289 = vld [vmem:[%s1 + $0x3e8] sm:$0xf]
    %v290 = vld [vmem:[%s1 + $0x3ec] sm:$0xf]
    %v291 = vld [vmem:[%s1 + $0x3f0] sm:$0xf]
    %v292 = vld [vmem:[%s1 + $0x3f4] sm:$0xf]
    %v293 = vld [vmem:[%s1 + $0x3f8] sm:$0xf]
    %v294 = vld [vmem:[%s1 + $0x3fc] sm:$0xf]
    %v295 = vld [vmem:[%s1 + $0x400] sm:$0xf]
    %v296 = vld [vmem:[%s1 + $0x404] sm:$0xf]
    %v297 = vld [vmem:[%s1 + $0x408] sm:$0xf]
    %v298 = vld [vmem:[%s1 + $0x40c] sm:$0xf]
    %v299 = vld [vmem:[%s1 + $0x410] sm:$0xf]
    %v300 = vld [vmem:[%s1 + $0x414] sm:$0xf]
    %v301 = vld [vmem:[%s1 + $0x418] sm:$0xf]
    %v302 = vld [vmem:[%s1 + $0x41c] sm:$0xf]
    %v303 = vld [vmem:[%s1 + $0x420] sm:$0xf]
    %v304 = vld [vmem:[%s1 + $0x424] sm:$0xf]
    %v305 = vld [vmem:[%s1 + $0x428] sm:$0xf]
    %v306 = vld [vmem:[%s1 + $0x42c] sm:$0xf]
    %v307 = vld [vmem:[%s1 + $0x430] sm:$0xf]
    %v308 = vld [vmem:[%s1 + $0x434] sm:$0xf]
    %v309 = vld [vmem:[%s1 + $0x438] sm:$0xf]
    %v310 = vld [vmem:[%s1 + $0x43c] sm:$0xf]
    %v311 = vld [vmem:[%s1 + $0x440] sm:$0xf]
    %v312 = vld [vmem:[%s1 + $0x444] sm:$0xf]
    %v313 = vld [vmem:[%s1 + $0x448] sm:$0xf]
    %v314 = vld [vmem:[%s1 + $0x44c] sm:$0xf]
    %v315 = vld [vmem:[%s1 + $0x450] sm:$0xf]
    %v316 = vld [vmem:[%s1 + $0x454] sm:$0xf]
    %v317 = vld [vmem:[%s1 + $0x458] sm:$0xf]
    %v318 = vld [vmem:[%s1 + $0x45c] sm:$0xf]
    %v319 = vld [vmem:[%s1 + $0x460] sm:$0xf]
    %v320 = vld [vmem:[%s1 + $0x464] sm:$0xf]
    %v321 = vld [vmem:[%s1 + $0x468] sm:$0xf]
    %v322 = vld [vmem:[%s1 + $0x46c] sm:$0xf]
    %v323 = vld [vmem:[%s1 + $0x470] sm:$0xf]
    %v324 = vld [vmem:[%s1 + $0x474] sm:$0xf]
    %v325 = vld [vmem:[%s1 + $0x478] sm:$0xf]
    %v326 = vld [vmem:[%s1 + $0x47c] sm:$0xf]
    %v327 = vld [vmem:[%s1 + $0x480] sm:$0xf]
    %v328 = vld [vmem:[%s1 + $0x484] sm:$0xf]
    %v329 = vld [vmem:[%s1 + $0x488] sm:$0xf]
    %v330 = vld [vmem:[%s1 + $0x48c] sm:$0xf]
    %v331 = vld [vmem:[%s1 + $0x490] sm:$0xf]
    %v332 = vld [vmem:[%s1 + $0x494] sm:$0xf]
    %v333 = vld [vmem:[%s1 + $0x498] sm:$0xf]
    %v334 = vld [vmem:[%s1 + $0x49c] sm:$0xf]
    %v335 = vld [vmem:[%s1 + $0x4a0] sm:$0xf]
    %v336 = vld [vmem:[%s1 + $0x4a4] sm:$0xf]
    %v337 = vld [vmem:[%s1 + $0x4a8] sm:$0xf]
    %v338 = vld [vmem:[%s1 + $0x4ac] sm:$0xf]
    %v339 = vld [vmem:[%s1 + $0x4b0] sm:$0xf]
    %v340 = vld [vmem:[%s1 + $0x4b4] sm:$0xf]
    %v341 = vld [vmem:[%s1 + $0x4b8] sm:$0xf]
    %v342 = vld [vmem:[%s1 + $0x4bc] sm:$0xf]
    %v343 = vld [vmem:[%s1 + $0x4c0] sm:$0xf]
    %v344 = vld [vmem:[%s1 + $0x4c4] sm:$0xf]
    %v345 = vld [vmem:[%s1 + $0x4c8] sm:$0xf]
    %v346 = vld [vmem:[%s1 + $0x4cc] sm:$0xf]
    %v347 = vld [vmem:[%s1 + $0x4d0] sm:$0xf]
    %v348 = vld [vmem:[%s1 + $0x4d4] sm:$0xf]
    %v349 = vld [vmem:[%s1 + $0x4d8] sm:$0xf]
    %v350 = vld [vmem:[%s1 + $0x4dc] sm:$0xf]
    %v351 = vld [vmem:[%s1 + $0x4e0] sm:$0xf]
    %v352 = vld [vmem:[%s1 + $0x4e4] sm:$0xf]
    %v353 = vld [vmem:[%s1 + $0x4e8] sm:$0xf]
    %v354 = vld [vmem:[%s1 + $0x4ec] sm:$0xf]
    %v355 = vld [vmem:[%s1 + $0x4f0] sm:$0xf]
    %v356 = vld [vmem:[%s1 + $0x4f4] sm:$0xf]
    %v357 = vld [vmem:[%s1 + $0x4f8] sm:$0xf]
    %v358 = vld [vmem:[%s1 + $0x4fc] sm:$0xf]
    %v359 = vld [vmem:[%s1 + $0x500] sm:$0xf]
    %v360 = vld [vmem:[%s1 + $0x504] sm:$0xf]
    %v361 = vld [vmem:[%s1 + $0x508] sm:$0xf]
    %v362 = vld [vmem:[%s1 + $0x50c] sm:$0xf]
    %v363 = vld [vmem:[%s1 + $0x510] sm:$0xf]
    %v364 = vld [vmem:[%s1 + $0x514] sm:$0xf]
    %v365 = vld [vmem:[%s1 + $0x518] sm:$0xf]
    %v366 = vld [vmem:[%s1 + $0x51c] sm:$0xf]
    %v367 = vld [vmem:[%s1 + $0x520] sm:$0xf]
    %v368 = vld [vmem:[%s1 + $0x524] sm:$0xf]
    %v369 = vld [vmem:[%s1 + $0x528] sm:$0xf]
    %v370 = vld [vmem:[%s1 + $0x52c] sm:$0xf]
    %v371 = vld [vmem:[%s1 + $0x530] sm:$0xf]
    %v372 = vld [vmem:[%s1 + $0x534] sm:$0xf]
    %v373 = vld [vmem:[%s1 + $0x538] sm:$0xf]
    %v374 = vld [vmem:[%s1 + $0x53c] sm:$0xf]
    %v375 = vld [vmem:[%s1 + $0x540] sm:$0xf]
    %v376 = vld [vmem:[%s1 + $0x544] sm:$0xf]
    %v377 = vld [vmem:[%s1 + $0x548] sm:$0xf]
    %v378 = vld [vmem:[%s1 + $0x54c] sm:$0xf]
    %v379 = vld [vmem:[%s1 + $0x550] sm:$0xf]
    %v380 = vld [vmem:[%s1 + $0x554] sm:$0xf]
    %v381 = vld [vmem:[%s1 + $0x558] sm:$0xf]
    %v382 = vld [vmem:[%s1 + $0x55c] sm:$0xf]
    %v383 = vld [vmem:[%s1 + $0x560] sm:$0xf]
    %v384 = vld [vmem:[%s1 + $0x564] sm:$0xf]
    %v385 = vld [vmem:[%s1 + $0x568] sm:$0xf]
    %v386 = vld [vmem:[%s1 + $0x56c] sm:$0xf]
    %v387 = vld [vmem:[%s1 + $0x570] sm:$0xf]
    %v388 = vld [vmem:[%s1 + $0x574] sm:$0xf]
    %v389 = vld [vmem:[%s1 + $0x578] sm:$0xf]
    %v390 = vld [vmem:[%s1 + $0x57c] sm:$0xf]
    %v391 = vld [vmem:[%s1 + $0x580] sm:$0xf]
    %v392 = vld [vmem:[%s1 + $0x584] sm:$0xf]
    %v393 = vld [vmem:[%s1 + $0x588] sm:$0xf]
    %v394 = vld [vmem:[%s1 + $0x58c] sm:$0xf]
    %v395 = vld [vmem:[%s1 + $0x590] sm:$0xf]
    %v396 = vld [vmem:[%s1 + $0x594] sm:$0xf]
    %v397 = vld [vmem:[%s1 + $0x598] sm:$0xf]
    %v398 = vld [vmem:[%s1 + $0x59c] sm:$0xf]
    %v399 = vld [vmem:[%s1 + $0x5a0] sm:$0xf]
    %v400 = vld [vmem:[%s1 + $0x5a4] sm:$0xf]
    %v401 = vld [vmem:[%s1 + $0x5a8] sm:$0xf]
    %v402 = vld [vmem:[%s1 + $0x5ac] sm:$0xf]
    %v403 = vld [vmem:[%s1 + $0x5b0] sm:$0xf]
    %v404 = vld [vmem:[%s1 + $0x5b4] sm:$0xf]
    %v405 = vld [vmem:[%s1 + $0x5b8] sm:$0xf]
    %v406 = vld [vmem:[%s1 + $0x5bc] sm:$0xf]
    %v407 = vld [vmem:[%s1 + $0x5c0] sm:$0xf]
    %v408 = vld [vmem:[%s1 + $0x5c4] sm:$0xf]
    %v409 = vld [vmem:[%s1 + $0x5c8] sm:$0xf]
    %v410 = vld [vmem:[%s1 + $0x5cc] sm:$0xf]
    %v411 = vld [vmem:[%s1 + $0x5d0] sm:$0xf]
    %v412 = vld [vmem:[%s1 + $0x5d4] sm:$0xf]
    %v413 = vld [vmem:[%s1 + $0x5d8] sm:$0xf]
    %v414 = vld [vmem:[%s1 + $0x5dc] sm:$0xf]
    %v415 = vld [vmem:[%s1 + $0x5e0] sm:$0xf]
    %v416 = vld [vmem:[%s1 + $0x5e4] sm:$0xf]
    %v417 = vld [vmem:[%s1 + $0x5e8] sm:$0xf]
    %v418 = vld [vmem:[%s1 + $0x5ec] sm:$0xf]
    %v419 = vld [vmem:[%s1 + $0x5f0] sm:$0xf]
    %v420 = vld [vmem:[%s1 + $0x5f4] sm:$0xf]
    %v421 = vld [vmem:[%s1 + $0x5f8] sm:$0xf]
    %v422 = vld [vmem:[%s1 + $0x5fc] sm:$0xf]
    %v423 = vld [vmem:[#allocation2] sm:$0x1]
    %v425 = vlaneseq
    %v426 = vshrl.u32 %v425, 7
    %v427 = vsub.s32 0, %v426
    %v428 = vrot.slane %v423, %v427
    %v442 = vunpack.c.l.b16 %v27
    %v443 = vunpack.c.h.b16 %v27
    %v444 = vunpack.c.l.b16 %v28
    %v445 = vunpack.c.h.b16 %v28
    %v446 = vunpack.c.l.b16 %v29
    %v447 = vunpack.c.h.b16 %v29
    %v448 = vunpack.c.l.b16 %v30
    %v449 = vunpack.c.h.b16 %v30
    %v450 = vunpack.c.l.b16 %v31
    %v451 = vunpack.c.h.b16 %v31
    %v452 = vunpack.c.l.b16 %v32
    %v453 = vunpack.c.h.b16 %v32
    %v454 = vunpack.c.l.b16 %v33
    %v455 = vunpack.c.h.b16 %v33
    %v456 = vunpack.c.l.b16 %v34
    %v457 = vunpack.c.h.b16 %v34
    %v458 = vunpack.c.l.b16 %v35
    %v459 = vunpack.c.h.b16 %v35
    %v460 = vunpack.c.l.b16 %v36
    %v461 = vunpack.c.h.b16 %v36
    %v462 = vunpack.c.l.b16 %v37
    %v463 = vunpack.c.h.b16 %v37
    %v464 = vunpack.c.l.b16 %v38
    %v465 = vunpack.c.h.b16 %v38
    %v466 = vpack.c.b16 %v442, %v442
    %v467 = vpack.c.b16 %v443, %v443
    %v468 = vpack.c.b16 %v444, %v444
    %v469 = vpack.c.b16 %v445, %v445
    %v470 = vpack.c.b16 %v446, %v446
    %v471 = vpack.c.b16 %v447, %v447
    %v472 = vpack.c.b16 %v448, %v448
    %v473 = vpack.c.b16 %v449, %v449
    %v474 = vpack.c.b16 %v450, %v450
    %v475 = vpack.c.b16 %v451, %v451
    %v476 = vpack.c.b16 %v452, %v452
    %v477 = vpack.c.b16 %v453, %v453
    %v478 = vpack.c.b16 %v454, %v454
    %v479 = vpack.c.b16 %v455, %v455
    %v480 = vpack.c.b16 %v456, %v456
    %v481 = vpack.c.b16 %v457, %v457
    %v482 = vpack.c.b16 %v458, %v458
    %v483 = vpack.c.b16 %v459, %v459
    %v484 = vpack.c.b16 %v460, %v460
    %v485 = vpack.c.b16 %v461, %v461
    %v486 = vpack.c.b16 %v462, %v462
    %v487 = vpack.c.b16 %v463, %v463
    %v488 = vpack.c.b16 %v464, %v464
    %v489 = vpack.c.b16 %v465, %v465
    %v898 = vunpack.c.l.b16 %v39
    %v899 = vunpack.c.l.b16 %v40
    %v900 = vunpack.c.l.b16 %v41
    %v901 = vunpack.c.l.b16 %v42
    %v902 = vunpack.c.l.b16 %v43
    %v903 = vunpack.c.l.b16 %v44
    %v904 = vunpack.c.l.b16 %v45
    %v905 = vunpack.c.l.b16 %v46
    %v906 = vunpack.c.l.b16 %v47
    %v907 = vunpack.c.l.b16 %v48
    %v908 = vunpack.c.l.b16 %v49
    %v909 = vunpack.c.l.b16 %v50
    %v910 = vunpack.c.l.b16 %v51
    %v911 = vunpack.c.l.b16 %v52
    %v912 = vunpack.c.l.b16 %v53
    %v913 = vunpack.c.l.b16 %v54
    %v914 = vunpack.c.l.b16 %v55
    %v915 = vunpack.c.l.b16 %v56
    %v916 = vunpack.c.l.b16 %v57
    %v917 = vunpack.c.l.b16 %v58
    %v918 = vunpack.c.l.b16 %v59
    %v919 = vunpack.c.l.b16 %v60
    %v920 = vunpack.c.l.b16 %v61
    %v921 = vunpack.c.l.b16 %v62
    %v922 = vunpack.c.l.b16 %v63
    %v923 = vunpack.c.l.b16 %v64
    %v924 = vunpack.c.l.b16 %v65
    %v925 = vunpack.c.l.b16 %v66
    %v926 = vunpack.c.l.b16 %v67
    %v927 = vunpack.c.l.b16 %v68
    %v928 = vunpack.c.l.b16 %v69
    %v929 = vunpack.c.l.b16 %v70
    %v930 = vunpack.c.l.b16 %v71
    %v931 = vunpack.c.l.b16 %v72
    %v932 = vunpack.c.l.b16 %v73
    %v933 = vunpack.c.l.b16 %v74
    %v934 = vunpack.c.l.b16 %v75
    %v935 = vunpack.c.l.b16 %v76
    %v936 = vunpack.c.l.b16 %v77
    %v937 = vunpack.c.l.b16 %v78
    %v938 = vunpack.c.l.b16 %v79
    %v939 = vunpack.c.l.b16 %v80
    %v940 = vunpack.c.l.b16 %v81
    %v941 = vunpack.c.l.b16 %v82
    %v942 = vunpack.c.l.b16 %v83
    %v943 = vunpack.c.l.b16 %v84
    %v944 = vunpack.c.l.b16 %v85
    %v945 = vunpack.c.l.b16 %v86
    %v946 = vunpack.c.l.b16 %v87
    %v947 = vunpack.c.l.b16 %v88
    %v948 = vunpack.c.l.b16 %v89
    %v949 = vunpack.c.l.b16 %v90
    %v950 = vunpack.c.l.b16 %v91
    %v951 = vunpack.c.l.b16 %v92
    %v952 = vunpack.c.l.b16 %v93
    %v953 = vunpack.c.l.b16 %v94
    %v954 = vunpack.c.l.b16 %v95
    %v955 = vunpack.c.l.b16 %v96
    %v956 = vunpack.c.l.b16 %v97
    %v957 = vunpack.c.l.b16 %v98
    %v958 = vunpack.c.l.b16 %v99
    %v959 = vunpack.c.l.b16 %v100
    %v960 = vunpack.c.l.b16 %v101
    %v961 = vunpack.c.l.b16 %v102
    %v962 = vunpack.c.l.b16 %v103
    %v963 = vunpack.c.l.b16 %v104
    %v964 = vunpack.c.l.b16 %v105
    %v965 = vunpack.c.l.b16 %v106
    %v966 = vunpack.c.l.b16 %v107
    %v967 = vunpack.c.l.b16 %v108
    %v968 = vunpack.c.l.b16 %v109
    %v969 = vunpack.c.l.b16 %v110
    %v970 = vunpack.c.l.b16 %v111
    %v971 = vunpack.c.l.b16 %v112
    %v972 = vunpack.c.l.b16 %v113
    %v973 = vunpack.c.l.b16 %v114
    %v974 = vunpack.c.l.b16 %v115
    %v975 = vunpack.c.l.b16 %v116
    %v976 = vunpack.c.l.b16 %v117
    %v977 = vunpack.c.l.b16 %v118
    %v978 = vunpack.c.l.b16 %v119
    %v979 = vunpack.c.l.b16 %v120
    %v980 = vunpack.c.l.b16 %v121
    %v981 = vunpack.c.l.b16 %v122
    %v982 = vunpack.c.l.b16 %v123
    %v983 = vunpack.c.l.b16 %v124
    %v984 = vunpack.c.l.b16 %v125
    %v985 = vunpack.c.l.b16 %v126
    %v986 = vunpack.c.l.b16 %v127
    %v987 = vunpack.c.l.b16 %v128
    %v988 = vunpack.c.l.b16 %v129
    %v989 = vunpack.c.l.b16 %v130
    %v990 = vunpack.c.l.b16 %v131
    %v991 = vunpack.c.l.b16 %v132
    %v992 = vunpack.c.l.b16 %v133
    %v993 = vunpack.c.l.b16 %v134
    %v994 = vunpack.c.l.b16 %v135
    %v995 = vunpack.c.l.b16 %v136
    %v996 = vunpack.c.l.b16 %v137
    %v997 = vunpack.c.l.b16 %v138
    %v998 = vunpack.c.l.b16 %v139
    %v999 = vunpack.c.l.b16 %v140
    %v1000 = vunpack.c.l.b16 %v141
    %v1001 = vunpack.c.l.b16 %v142
    %v1002 = vunpack.c.l.b16 %v143
    %v1003 = vunpack.c.l.b16 %v144
    %v1004 = vunpack.c.l.b16 %v145
    %v1005 = vunpack.c.l.b16 %v146
    %v1006 = vunpack.c.l.b16 %v147
    %v1007 = vunpack.c.l.b16 %v148
    %v1008 = vunpack.c.l.b16 %v149
    %v1009 = vunpack.c.l.b16 %v150
    %v1010 = vunpack.c.l.b16 %v151
    %v1011 = vunpack.c.l.b16 %v152
    %v1012 = vunpack.c.l.b16 %v153
    %v1013 = vunpack.c.l.b16 %v154
    %v1014 = vunpack.c.l.b16 %v155
    %v1015 = vunpack.c.l.b16 %v156
    %v1016 = vunpack.c.l.b16 %v157
    %v1017 = vunpack.c.l.b16 %v158
    %v1018 = vunpack.c.l.b16 %v159
    %v1019 = vunpack.c.l.b16 %v160
    %v1020 = vunpack.c.l.b16 %v161
    %v1021 = vunpack.c.l.b16 %v162
    %v1022 = vunpack.c.l.b16 %v163
    %v1023 = vunpack.c.l.b16 %v164
    %v1024 = vunpack.c.l.b16 %v165
    %v1025 = vunpack.c.l.b16 %v166
    %v1026 = vunpack.c.l.b16 %v167
    %v1027 = vunpack.c.l.b16 %v168
    %v1028 = vunpack.c.l.b16 %v169
    %v1029 = vunpack.c.l.b16 %v170
    %v1030 = vunpack.c.l.b16 %v171
    %v1031 = vunpack.c.l.b16 %v172
    %v1032 = vunpack.c.l.b16 %v173
    %v1033 = vunpack.c.l.b16 %v174
    %v1034 = vunpack.c.l.b16 %v175
    %v1035 = vunpack.c.l.b16 %v176
    %v1036 = vunpack.c.l.b16 %v177
    %v1037 = vunpack.c.l.b16 %v178
    %v1038 = vunpack.c.l.b16 %v179
    %v1039 = vunpack.c.l.b16 %v180
    %v1040 = vunpack.c.l.b16 %v181
    %v1041 = vunpack.c.l.b16 %v182
    %v1042 = vunpack.c.l.b16 %v183
    %v1043 = vunpack.c.l.b16 %v184
    %v1044 = vunpack.c.l.b16 %v185
    %v1045 = vunpack.c.l.b16 %v186
    %v1046 = vunpack.c.l.b16 %v187
    %v1047 = vunpack.c.l.b16 %v188
    %v1048 = vunpack.c.l.b16 %v189
    %v1049 = vunpack.c.l.b16 %v190
    %v1050 = vunpack.c.l.b16 %v191
    %v1051 = vunpack.c.l.b16 %v192
    %v1052 = vunpack.c.l.b16 %v193
    %v1053 = vunpack.c.l.b16 %v194
    %v1054 = vunpack.c.l.b16 %v195
    %v1055 = vunpack.c.l.b16 %v196
    %v1056 = vunpack.c.l.b16 %v197
    %v1057 = vunpack.c.l.b16 %v198
    %v1058 = vunpack.c.l.b16 %v199
    %v1059 = vunpack.c.l.b16 %v200
    %v1060 = vunpack.c.l.b16 %v201
    %v1061 = vunpack.c.l.b16 %v202
    %v1062 = vunpack.c.l.b16 %v203
    %v1063 = vunpack.c.l.b16 %v204
    %v1064 = vunpack.c.l.b16 %v205
    %v1065 = vunpack.c.l.b16 %v206
    %v1066 = vunpack.c.l.b16 %v207
    %v1067 = vunpack.c.l.b16 %v208
    %v1068 = vunpack.c.l.b16 %v209
    %v1069 = vunpack.c.l.b16 %v210
    %v1070 = vunpack.c.l.b16 %v211
    %v1071 = vunpack.c.l.b16 %v212
    %v1072 = vunpack.c.l.b16 %v213
    %v1073 = vunpack.c.l.b16 %v214
    %v1074 = vunpack.c.l.b16 %v215
    %v1075 = vunpack.c.l.b16 %v216
    %v1076 = vunpack.c.l.b16 %v217
    %v1077 = vunpack.c.l.b16 %v218
    %v1078 = vunpack.c.l.b16 %v219
    %v1079 = vunpack.c.l.b16 %v220
    %v1080 = vunpack.c.l.b16 %v221
    %v1081 = vunpack.c.l.b16 %v222
    %v1082 = vunpack.c.l.b16 %v223
    %v1083 = vunpack.c.l.b16 %v224
    %v1084 = vunpack.c.l.b16 %v225
    %v1085 = vunpack.c.l.b16 %v226
    %v1086 = vunpack.c.l.b16 %v227
    %v1087 = vunpack.c.l.b16 %v228
    %v1088 = vunpack.c.l.b16 %v229
    %v1089 = vunpack.c.l.b16 %v230
    %v1090 = vunpack.c.l.b16 %v231
    %v1091 = vunpack.c.l.b16 %v232
    %v1092 = vunpack.c.l.b16 %v233
    %v1093 = vunpack.c.l.b16 %v234
    %v1094 = vunpack.c.l.b16 %v235
    %v1095 = vunpack.c.l.b16 %v236
    %v1096 = vunpack.c.l.b16 %v237
    %v1097 = vunpack.c.l.b16 %v238
    %v1098 = vunpack.c.l.b16 %v239
    %v1099 = vunpack.c.l.b16 %v240
    %v1100 = vunpack.c.l.b16 %v241
    %v1101 = vunpack.c.l.b16 %v242
    %v1102 = vunpack.c.l.b16 %v243
    %v1103 = vunpack.c.l.b16 %v244
    %v1104 = vunpack.c.l.b16 %v245
    %v1105 = vunpack.c.l.b16 %v246
    %v1106 = vunpack.c.l.b16 %v247
    %v1107 = vunpack.c.l.b16 %v248
    %v1108 = vunpack.c.l.b16 %v249
    %v1109 = vunpack.c.l.b16 %v250
    %v1110 = vunpack.c.l.b16 %v251
    %v1111 = vunpack.c.l.b16 %v252
    %v1112 = vunpack.c.l.b16 %v253
    %v1113 = vunpack.c.l.b16 %v254
    %v1114 = vunpack.c.l.b16 %v255
    %v1115 = vunpack.c.l.b16 %v256
    %v1116 = vunpack.c.l.b16 %v257
    %v1117 = vunpack.c.l.b16 %v258
    %v1118 = vunpack.c.l.b16 %v259
    %v1119 = vunpack.c.l.b16 %v260
    %v1120 = vunpack.c.l.b16 %v261
    %v1121 = vunpack.c.l.b16 %v262
    %v1122 = vunpack.c.l.b16 %v263
    %v1123 = vunpack.c.l.b16 %v264
    %v1124 = vunpack.c.l.b16 %v265
    %v1125 = vunpack.c.l.b16 %v266
    %v1126 = vunpack.c.l.b16 %v267
    %v1127 = vunpack.c.l.b16 %v268
    %v1128 = vunpack.c.l.b16 %v269
    %v1129 = vunpack.c.l.b16 %v270
    %v1130 = vunpack.c.l.b16 %v271
    %v1131 = vunpack.c.l.b16 %v272
    %v1132 = vunpack.c.l.b16 %v273
    %v1133 = vunpack.c.l.b16 %v274
    %v1134 = vunpack.c.l.b16 %v275
    %v1135 = vunpack.c.l.b16 %v276
    %v1136 = vunpack.c.l.b16 %v277
    %v1137 = vunpack.c.l.b16 %v278
    %v1138 = vunpack.c.l.b16 %v279
    %v1139 = vunpack.c.l.b16 %v280
    %v1140 = vunpack.c.l.b16 %v281
    %v1141 = vunpack.c.l.b16 %v282
    %v1142 = vunpack.c.l.b16 %v283
    %v1143 = vunpack.c.l.b16 %v284
    %v1144 = vunpack.c.l.b16 %v285
    %v1145 = vunpack.c.l.b16 %v286
    %v1146 = vunpack.c.l.b16 %v287
    %v1147 = vunpack.c.l.b16 %v288
    %v1148 = vunpack.c.l.b16 %v289
    %v1149 = vunpack.c.l.b16 %v290
    %v1150 = vunpack.c.l.b16 %v291
    %v1151 = vunpack.c.l.b16 %v292
    %v1152 = vunpack.c.l.b16 %v293
    %v1153 = vunpack.c.l.b16 %v294
    %v1154 = vunpack.c.l.b16 %v295
    %v1155 = vunpack.c.l.b16 %v296
    %v1156 = vunpack.c.l.b16 %v297
    %v1157 = vunpack.c.l.b16 %v298
    %v1158 = vunpack.c.l.b16 %v299
    %v1159 = vunpack.c.l.b16 %v300
    %v1160 = vunpack.c.l.b16 %v301
    %v1161 = vunpack.c.l.b16 %v302
    %v1162 = vunpack.c.l.b16 %v303
    %v1163 = vunpack.c.l.b16 %v304
    %v1164 = vunpack.c.l.b16 %v305
    %v1165 = vunpack.c.l.b16 %v306
    %v1166 = vunpack.c.l.b16 %v307
    %v1167 = vunpack.c.l.b16 %v308
    %v1168 = vunpack.c.l.b16 %v309
    %v1169 = vunpack.c.l.b16 %v310
    %v1170 = vunpack.c.l.b16 %v311
    %v1171 = vunpack.c.l.b16 %v312
    %v1172 = vunpack.c.l.b16 %v313
    %v1173 = vunpack.c.l.b16 %v314
    %v1174 = vunpack.c.l.b16 %v315
    %v1175 = vunpack.c.l.b16 %v316
    %v1176 = vunpack.c.l.b16 %v317
    %v1177 = vunpack.c.l.b16 %v318
    %v1178 = vunpack.c.l.b16 %v319
    %v1179 = vunpack.c.l.b16 %v320
    %v1180 = vunpack.c.l.b16 %v321
    %v1181 = vunpack.c.l.b16 %v322
    %v1182 = vunpack.c.l.b16 %v323
    %v1183 = vunpack.c.l.b16 %v324
    %v1184 = vunpack.c.l.b16 %v325
    %v1185 = vunpack.c.l.b16 %v326
    %v1186 = vunpack.c.l.b16 %v327
    %v1187 = vunpack.c.l.b16 %v328
    %v1188 = vunpack.c.l.b16 %v329
    %v1189 = vunpack.c.l.b16 %v330
    %v1190 = vunpack.c.l.b16 %v331
    %v1191 = vunpack.c.l.b16 %v332
    %v1192 = vunpack.c.l.b16 %v333
    %v1193 = vunpack.c.l.b16 %v334
    %v1194 = vunpack.c.l.b16 %v335
    %v1195 = vunpack.c.l.b16 %v336
    %v1196 = vunpack.c.l.b16 %v337
    %v1197 = vunpack.c.l.b16 %v338
    %v1198 = vunpack.c.l.b16 %v339
    %v1199 = vunpack.c.l.b16 %v340
    %v1200 = vunpack.c.l.b16 %v341
    %v1201 = vunpack.c.l.b16 %v342
    %v1202 = vunpack.c.l.b16 %v343
    %v1203 = vunpack.c.l.b16 %v344
    %v1204 = vunpack.c.l.b16 %v345
    %v1205 = vunpack.c.l.b16 %v346
    %v1206 = vunpack.c.l.b16 %v347
    %v1207 = vunpack.c.l.b16 %v348
    %v1208 = vunpack.c.l.b16 %v349
    %v1209 = vunpack.c.l.b16 %v350
    %v1210 = vunpack.c.l.b16 %v351
    %v1211 = vunpack.c.l.b16 %v352
    %v1212 = vunpack.c.l.b16 %v353
    %v1213 = vunpack.c.l.b16 %v354
    %v1214 = vunpack.c.l.b16 %v355
    %v1215 = vunpack.c.l.b16 %v356
    %v1216 = vunpack.c.l.b16 %v357
    %v1217 = vunpack.c.l.b16 %v358
    %v1218 = vunpack.c.l.b16 %v359
    %v1219 = vunpack.c.l.b16 %v360
    %v1220 = vunpack.c.l.b16 %v361
    %v1221 = vunpack.c.l.b16 %v362
    %v1222 = vunpack.c.l.b16 %v363
    %v1223 = vunpack.c.l.b16 %v364
    %v1224 = vunpack.c.l.b16 %v365
    %v1225 = vunpack.c.l.b16 %v366
    %v1226 = vunpack.c.l.b16 %v367
    %v1227 = vunpack.c.l.b16 %v368
    %v1228 = vunpack.c.l.b16 %v369
    %v1229 = vunpack.c.l.b16 %v370
    %v1230 = vunpack.c.l.b16 %v371
    %v1231 = vunpack.c.l.b16 %v372
    %v1232 = vunpack.c.l.b16 %v373
    %v1233 = vunpack.c.l.b16 %v374
    %v1234 = vunpack.c.l.b16 %v375
    %v1235 = vunpack.c.l.b16 %v376
    %v1236 = vunpack.c.l.b16 %v377
    %v1237 = vunpack.c.l.b16 %v378
    %v1238 = vunpack.c.l.b16 %v379
    %v1239 = vunpack.c.l.b16 %v380
    %v1240 = vunpack.c.l.b16 %v381
    %v1241 = vunpack.c.l.b16 %v382
    %v1242 = vunpack.c.l.b16 %v383
    %v1243 = vunpack.c.l.b16 %v384
    %v1244 = vunpack.c.l.b16 %v385
    %v1245 = vunpack.c.l.b16 %v386
    %v1246 = vunpack.c.l.b16 %v387
    %v1247 = vunpack.c.l.b16 %v388
    %v1248 = vunpack.c.l.b16 %v389
    %v1249 = vunpack.c.l.b16 %v390
    %v1250 = vunpack.c.l.b16 %v391
    %v1251 = vunpack.c.l.b16 %v392
    %v1252 = vunpack.c.l.b16 %v393
    %v1253 = vunpack.c.l.b16 %v394
    %v1254 = vunpack.c.l.b16 %v395
    %v1255 = vunpack.c.l.b16 %v396
    %v1256 = vunpack.c.l.b16 %v397
    %v1257 = vunpack.c.l.b16 %v398
    %v1258 = vunpack.c.l.b16 %v399
    %v1259 = vunpack.c.l.b16 %v400
    %v1260 = vunpack.c.l.b16 %v401
    %v1261 = vunpack.c.l.b16 %v402
    %v1262 = vunpack.c.l.b16 %v403
    %v1263 = vunpack.c.l.b16 %v404
    %v1264 = vunpack.c.l.b16 %v405
    %v1265 = vunpack.c.l.b16 %v406
    %v1266 = vunpack.c.l.b16 %v407
    %v1267 = vunpack.c.l.b16 %v408
    %v1268 = vunpack.c.l.b16 %v409
    %v1269 = vunpack.c.l.b16 %v410
    %v1270 = vunpack.c.l.b16 %v411
    %v1271 = vunpack.c.l.b16 %v412
    %v1272 = vunpack.c.l.b16 %v413
    %v1273 = vunpack.c.l.b16 %v414
    %v1274 = vunpack.c.l.b16 %v415
    %v1275 = vunpack.c.l.b16 %v416
    %v1276 = vunpack.c.l.b16 %v417
    %v1277 = vunpack.c.l.b16 %v418
    %v1278 = vunpack.c.l.b16 %v419
    %v1279 = vunpack.c.l.b16 %v420
    %v1280 = vunpack.c.l.b16 %v421
    %v1281 = vunpack.c.l.b16 %v422
    %v1282 = vpack.c.b16 %v899, %v898
    %v1283 = vpack.c.b16 %v901, %v900
    %v1284 = vpack.c.b16 %v903, %v902
    %v1285 = vpack.c.b16 %v905, %v904
    %v1286 = vpack.c.b16 %v907, %v906
    %v1287 = vpack.c.b16 %v909, %v908
    %v1288 = vpack.c.b16 %v911, %v910
    %v1289 = vpack.c.b16 %v913, %v912
    %v1290 = vpack.c.b16 %v915, %v914
    %v1291 = vpack.c.b16 %v917, %v916
    %v1292 = vpack.c.b16 %v919, %v918
    %v1293 = vpack.c.b16 %v921, %v920
    %v1294 = vpack.c.b16 %v923, %v922
    %v1295 = vpack.c.b16 %v925, %v924
    %v1296 = vpack.c.b16 %v927, %v926
    %v1297 = vpack.c.b16 %v929, %v928
    %v1298 = vpack.c.b16 %v931, %v930
    %v1299 = vpack.c.b16 %v933, %v932
    %v1300 = vpack.c.b16 %v935, %v934
    %v1301 = vpack.c.b16 %v937, %v936
    %v1302 = vpack.c.b16 %v939, %v938
    %v1303 = vpack.c.b16 %v941, %v940
    %v1304 = vpack.c.b16 %v943, %v942
    %v1305 = vpack.c.b16 %v945, %v944
    %v1306 = vpack.c.b16 %v947, %v946
    %v1307 = vpack.c.b16 %v949, %v948
    %v1308 = vpack.c.b16 %v951, %v950
    %v1309 = vpack.c.b16 %v953, %v952
    %v1310 = vpack.c.b16 %v955, %v954
    %v1311 = vpack.c.b16 %v957, %v956
    %v1312 = vpack.c.b16 %v959, %v958
    %v1313 = vpack.c.b16 %v961, %v960
    %v1314 = vpack.c.b16 %v963, %v962
    %v1315 = vpack.c.b16 %v965, %v964
    %v1316 = vpack.c.b16 %v967, %v966
    %v1317 = vpack.c.b16 %v969, %v968
    %v1318 = vpack.c.b16 %v971, %v970
    %v1319 = vpack.c.b16 %v973, %v972
    %v1320 = vpack.c.b16 %v975, %v974
    %v1321 = vpack.c.b16 %v977, %v976
    %v1322 = vpack.c.b16 %v979, %v978
    %v1323 = vpack.c.b16 %v981, %v980
    %v1324 = vpack.c.b16 %v983, %v982
    %v1325 = vpack.c.b16 %v985, %v984
    %v1326 = vpack.c.b16 %v987, %v986
    %v1327 = vpack.c.b16 %v989, %v988
    %v1328 = vpack.c.b16 %v991, %v990
    %v1329 = vpack.c.b16 %v993, %v992
    %v1330 = vpack.c.b16 %v995, %v994
    %v1331 = vpack.c.b16 %v997, %v996
    %v1332 = vpack.c.b16 %v999, %v998
    %v1333 = vpack.c.b16 %v1001, %v1000
    %v1334 = vpack.c.b16 %v1003, %v1002
    %v1335 = vpack.c.b16 %v1005, %v1004
    %v1336 = vpack.c.b16 %v1007, %v1006
    %v1337 = vpack.c.b16 %v1009, %v1008
    %v1338 = vpack.c.b16 %v1011, %v1010
    %v1339 = vpack.c.b16 %v1013, %v1012
    %v1340 = vpack.c.b16 %v1015, %v1014
    %v1341 = vpack.c.b16 %v1017, %v1016
    %v1342 = vpack.c.b16 %v1019, %v1018
    %v1343 = vpack.c.b16 %v1021, %v1020
    %v1344 = vpack.c.b16 %v1023, %v1022
    %v1345 = vpack.c.b16 %v1025, %v1024
    %v1346 = vpack.c.b16 %v1027, %v1026
    %v1347 = vpack.c.b16 %v1029, %v1028
    %v1348 = vpack.c.b16 %v1031, %v1030
    %v1349 = vpack.c.b16 %v1033, %v1032
    %v1350 = vpack.c.b16 %v1035, %v1034
    %v1351 = vpack.c.b16 %v1037, %v1036
    %v1352 = vpack.c.b16 %v1039, %v1038
    %v1353 = vpack.c.b16 %v1041, %v1040
    %v1354 = vpack.c.b16 %v1043, %v1042
    %v1355 = vpack.c.b16 %v1045, %v1044
    %v1356 = vpack.c.b16 %v1047, %v1046
    %v1357 = vpack.c.b16 %v1049, %v1048
    %v1358 = vpack.c.b16 %v1051, %v1050
    %v1359 = vpack.c.b16 %v1053, %v1052
    %v1360 = vpack.c.b16 %v1055, %v1054
    %v1361 = vpack.c.b16 %v1057, %v1056
    %v1362 = vpack.c.b16 %v1059, %v1058
    %v1363 = vpack.c.b16 %v1061, %v1060
    %v1364 = vpack.c.b16 %v1063, %v1062
    %v1365 = vpack.c.b16 %v1065, %v1064
    %v1366 = vpack.c.b16 %v1067, %v1066
    %v1367 = vpack.c.b16 %v1069, %v1068
    %v1368 = vpack.c.b16 %v1071, %v1070
    %v1369 = vpack.c.b16 %v1073, %v1072
    %v1370 = vpack.c.b16 %v1075, %v1074
    %v1371 = vpack.c.b16 %v1077, %v1076
    %v1372 = vpack.c.b16 %v1079, %v1078
    %v1373 = vpack.c.b16 %v1081, %v1080
    %v1374 = vpack.c.b16 %v1083, %v1082
    %v1375 = vpack.c.b16 %v1085, %v1084
    %v1376 = vpack.c.b16 %v1087, %v1086
    %v1377 = vpack.c.b16 %v1089, %v1088
    %v1378 = vpack.c.b16 %v1091, %v1090
    %v1379 = vpack.c.b16 %v1093, %v1092
    %v1380 = vpack.c.b16 %v1095, %v1094
    %v1381 = vpack.c.b16 %v1097, %v1096
    %v1382 = vpack.c.b16 %v1099, %v1098
    %v1383 = vpack.c.b16 %v1101, %v1100
    %v1384 = vpack.c.b16 %v1103, %v1102
    %v1385 = vpack.c.b16 %v1105, %v1104
    %v1386 = vpack.c.b16 %v1107, %v1106
    %v1387 = vpack.c.b16 %v1109, %v1108
    %v1388 = vpack.c.b16 %v1111, %v1110
    %v1389 = vpack.c.b16 %v1113, %v1112
    %v1390 = vpack.c.b16 %v1115, %v1114
    %v1391 = vpack.c.b16 %v1117, %v1116
    %v1392 = vpack.c.b16 %v1119, %v1118
    %v1393 = vpack.c.b16 %v1121, %v1120
    %v1394 = vpack.c.b16 %v1123, %v1122
    %v1395 = vpack.c.b16 %v1125, %v1124
    %v1396 = vpack.c.b16 %v1127, %v1126
    %v1397 = vpack.c.b16 %v1129, %v1128
    %v1398 = vpack.c.b16 %v1131, %v1130
    %v1399 = vpack.c.b16 %v1133, %v1132
    %v1400 = vpack.c.b16 %v1135, %v1134
    %v1401 = vpack.c.b16 %v1137, %v1136
    %v1402 = vpack.c.b16 %v1139, %v1138
    %v1403 = vpack.c.b16 %v1141, %v1140
    %v1404 = vpack.c.b16 %v1143, %v1142
    %v1405 = vpack.c.b16 %v1145, %v1144
    %v1406 = vpack.c.b16 %v1147, %v1146
    %v1407 = vpack.c.b16 %v1149, %v1148
    %v1408 = vpack.c.b16 %v1151, %v1150
    %v1409 = vpack.c.b16 %v1153, %v1152
    %v1410 = vpack.c.b16 %v1155, %v1154
    %v1411 = vpack.c.b16 %v1157, %v1156
    %v1412 = vpack.c.b16 %v1159, %v1158
    %v1413 = vpack.c.b16 %v1161, %v1160
    %v1414 = vpack.c.b16 %v1163, %v1162
    %v1415 = vpack.c.b16 %v1165, %v1164
    %v1416 = vpack.c.b16 %v1167, %v1166
    %v1417 = vpack.c.b16 %v1169, %v1168
    %v1418 = vpack.c.b16 %v1171, %v1170
    %v1419 = vpack.c.b16 %v1173, %v1172
    %v1420 = vpack.c.b16 %v1175, %v1174
    %v1421 = vpack.c.b16 %v1177, %v1176
    %v1422 = vpack.c.b16 %v1179, %v1178
    %v1423 = vpack.c.b16 %v1181, %v1180
    %v1424 = vpack.c.b16 %v1183, %v1182
    %v1425 = vpack.c.b16 %v1185, %v1184
    %v1426 = vpack.c.b16 %v1187, %v1186
    %v1427 = vpack.c.b16 %v1189, %v1188
    %v1428 = vpack.c.b16 %v1191, %v1190
    %v1429 = vpack.c.b16 %v1193, %v1192
    %v1430 = vpack.c.b16 %v1195, %v1194
    %v1431 = vpack.c.b16 %v1197, %v1196
    %v1432 = vpack.c.b16 %v1199, %v1198
    %v1433 = vpack.c.b16 %v1201, %v1200
    %v1434 = vpack.c.b16 %v1203, %v1202
    %v1435 = vpack.c.b16 %v1205, %v1204
    %v1436 = vpack.c.b16 %v1207, %v1206
    %v1437 = vpack.c.b16 %v1209, %v1208
    %v1438 = vpack.c.b16 %v1211, %v1210
    %v1439 = vpack.c.b16 %v1213, %v1212
    %v1440 = vpack.c.b16 %v1215, %v1214
    %v1441 = vpack.c.b16 %v1217, %v1216
    %v1442 = vpack.c.b16 %v1219, %v1218
    %v1443 = vpack.c.b16 %v1221, %v1220
    %v1444 = vpack.c.b16 %v1223, %v1222
    %v1445 = vpack.c.b16 %v1225, %v1224
    %v1446 = vpack.c.b16 %v1227, %v1226
    %v1447 = vpack.c.b16 %v1229, %v1228
    %v1448 = vpack.c.b16 %v1231, %v1230
    %v1449 = vpack.c.b16 %v1233, %v1232
    %v1450 = vpack.c.b16 %v1235, %v1234
    %v1451 = vpack.c.b16 %v1237, %v1236
    %v1452 = vpack.c.b16 %v1239, %v1238
    %v1453 = vpack.c.b16 %v1241, %v1240
    %v1454 = vpack.c.b16 %v1243, %v1242
    %v1455 = vpack.c.b16 %v1245, %v1244
    %v1456 = vpack.c.b16 %v1247, %v1246
    %v1457 = vpack.c.b16 %v1249, %v1248
    %v1458 = vpack.c.b16 %v1251, %v1250
    %v1459 = vpack.c.b16 %v1253, %v1252
    %v1460 = vpack.c.b16 %v1255, %v1254
    %v1461 = vpack.c.b16 %v1257, %v1256
    %v1462 = vpack.c.b16 %v1259, %v1258
    %v1463 = vpack.c.b16 %v1261, %v1260
    %v1464 = vpack.c.b16 %v1263, %v1262
    %v1465 = vpack.c.b16 %v1265, %v1264
    %v1466 = vpack.c.b16 %v1267, %v1266
    %v1467 = vpack.c.b16 %v1269, %v1268
    %v1468 = vpack.c.b16 %v1271, %v1270
    %v1469 = vpack.c.b16 %v1273, %v1272
    %v1470 = vpack.c.b16 %v1275, %v1274
    %v1471 = vpack.c.b16 %v1277, %v1276
    %v1472 = vpack.c.b16 %v1279, %v1278
    %v1473 = vpack.c.b16 %v1281, %v1280
    %1666 = vmatprep.subr.bf16.mxu0 0
    %1667 = vmatpush1.bf16.msra.mxu0 %v1282
    %1668 = vmatprep.subr.bf16.mxu0 0
    %1669 = vmatpush1.bf16.msra.mxu0 %v1283
    %1670 = vmatprep.subr.bf16.mxu0 0
    %1671 = vmatpush1.bf16.msra.mxu0 %v1284
    %1672 = vmatprep.subr.bf16.mxu0 0
    %1673 = vmatpush1.bf16.msra.mxu0 %v1285
    %1674 = vmatprep.subr.bf16.mxu0 0
    %1675 = vmatpush1.bf16.msra.mxu0 %v1286
    %1676 = vmatprep.subr.bf16.mxu0 0
    %1677 = vmatpush1.bf16.msra.mxu0 %v1287
    %1678 = vmatprep.subr.bf16.mxu0 0
    %1679 = vmatpush1.bf16.msra.mxu0 %v1288
    %1680 = vmatprep.subr.bf16.mxu0 0
    %1681 = vmatpush1.bf16.msra.mxu0 %v1289
    %1682 = vmatprep.subr.bf16.mxu0 0
    %1683 = vmatpush1.bf16.msra.mxu0 %v1290
    %1684 = vmatprep.subr.bf16.mxu0 0
    %1685 = vmatpush1.bf16.msra.mxu0 %v1291
    %1686 = vmatprep.subr.bf16.mxu0 0
    %1687 = vmatpush1.bf16.msra.mxu0 %v1292
    %1688 = vmatprep.subr.bf16.mxu0 0
    %1689 = vmatpush1.bf16.msra.mxu0 %v1293
    %1690 = vmatprep.subr.bf16.mxu0 0
    %1691 = vmatpush1.bf16.msra.mxu0 %v1294
    %1692 = vmatprep.subr.bf16.mxu0 0
    %1693 = vmatpush1.bf16.msra.mxu0 %v1295
    %1694 = vmatprep.subr.bf16.mxu0 0
    %1695 = vmatpush1.bf16.msra.mxu0 %v1296
    %1696 = vmatprep.subr.bf16.mxu0 0
    %1697 = vmatpush1.bf16.msra.mxu0 %v1297
    %1698 = vmatprep.mubr.bf16.mxu0 %v467
    %1699 = vmatmul.mubr.bf16.gmra.mrb[0].mxu0 %v466
    %v1700 = vpop.f32.mrb[0].mxu0
    %v1701 = vadd.f32 %v428, %v1700
    %v1702 = vpop.f32.mrb[0].mxu0
    %v1703 = vpop.f32.mrb[0].mxu0
    %v1704 = vpop.f32.mrb[0].mxu0
    %1705 = vdwg.mxu0
    %1706 = vmatprep.subr.bf16.mxu0 0
    %1707 = vmatpush1.bf16.msra.mxu0 %v1298
    %1708 = vmatprep.subr.bf16.mxu0 0
    %1709 = vmatpush1.bf16.msra.mxu0 %v1299
    %1710 = vmatprep.subr.bf16.mxu0 0
    %1711 = vmatpush1.bf16.msra.mxu0 %v1300
    %1712 = vmatprep.subr.bf16.mxu0 0
    %1713 = vmatpush1.bf16.msra.mxu0 %v1301
    %1714 = vmatprep.subr.bf16.mxu0 0
    %1715 = vmatpush1.bf16.msra.mxu0 %v1302
    %1716 = vmatprep.subr.bf16.mxu0 0
    %1717 = vmatpush1.bf16.msra.mxu0 %v1303
    %1718 = vmatprep.subr.bf16.mxu0 0
    %1719 = vmatpush1.bf16.msra.mxu0 %v1304
    %1720 = vmatprep.subr.bf16.mxu0 0
    %1721 = vmatpush1.bf16.msra.mxu0 %v1305
    %1722 = vmatprep.subr.bf16.mxu0 0
    %1723 = vmatpush1.bf16.msra.mxu0 %v1306
    %1724 = vmatprep.subr.bf16.mxu0 0
    %1725 = vmatpush1.bf16.msra.mxu0 %v1307
    %1726 = vmatprep.subr.bf16.mxu0 0
    %1727 = vmatpush1.bf16.msra.mxu0 %v1308
    %1728 = vmatprep.subr.bf16.mxu0 0
    %1729 = vmatpush1.bf16.msra.mxu0 %v1309
    %1730 = vmatprep.subr.bf16.mxu0 0
    %1731 = vmatpush1.bf16.msra.mxu0 %v1310
    %1732 = vmatprep.subr.bf16.mxu0 0
    %1733 = vmatpush1.bf16.msra.mxu0 %v1311
    %1734 = vmatprep.subr.bf16.mxu0 0
    %1735 = vmatpush1.bf16.msra.mxu0 %v1312
    %1736 = vmatprep.subr.bf16.mxu0 0
    %1737 = vmatpush1.bf16.msra.mxu0 %v1313
    %1738 = vmatprep.mubr.bf16.mxu0 %v469
    %1739 = vmatmul.mubr.bf16.gmra.mrb[0].mxu0 %v468
    %v1740 = vpop.f32.mrb[0].mxu0
    %v1741 = vadd.f32 %v1701, %v1740
    %v1742 = vpop.f32.mrb[0].mxu0
    %v1743 = vpop.f32.mrb[0].mxu0
    %v1744 = vpop.f32.mrb[0].mxu0
    %1745 = vdwg.mxu0
    %1746 = vmatprep.subr.bf16.mxu0 0
    %1747 = vmatpush1.bf16.msra.mxu0 %v1314
    %1748 = vmatprep.subr.bf16.mxu0 0
    %1749 = vmatpush1.bf16.msra.mxu0 %v1315
    %1750 = vmatprep.subr.bf16.mxu0 0
    %1751 = vmatpush1.bf16.msra.mxu0 %v1316
    %1752 = vmatprep.subr.bf16.mxu0 0
    %1753 = vmatpush1.bf16.msra.mxu0 %v1317
    %1754 = vmatprep.subr.bf16.mxu0 0
    %1755 = vmatpush1.bf16.msra.mxu0 %v1318
    %1756 = vmatprep.subr.bf16.mxu0 0
    %1757 = vmatpush1.bf16.msra.mxu0 %v1319
    %1758 = vmatprep.subr.bf16.mxu0 0
    %1759 = vmatpush1.bf16.msra.mxu0 %v1320
    %1760 = vmatprep.subr.bf16.mxu0 0
    %1761 = vmatpush1.bf16.msra.mxu0 %v1321
    %1762 = vmatprep.subr.bf16.mxu0 0
    %1763 = vmatpush1.bf16.msra.mxu0 %v1322
    %1764 = vmatprep.subr.bf16.mxu0 0
    %1765 = vmatpush1.bf16.msra.mxu0 %v1323
    %1766 = vmatprep.subr.bf16.mxu0 0
    %1767 = vmatpush1.bf16.msra.mxu0 %v1324
    %1768 = vmatprep.subr.bf16.mxu0 0
    %1769 = vmatpush1.bf16.msra.mxu0 %v1325
    %1770 = vmatprep.subr.bf16.mxu0 0
    %1771 = vmatpush1.bf16.msra.mxu0 %v1326
    %1772 = vmatprep.subr.bf16.mxu0 0
    %1773 = vmatpush1.bf16.msra.mxu0 %v1327
    %1774 = vmatprep.subr.bf16.mxu0 0
    %1775 = vmatpush1.bf16.msra.mxu0 %v1328
    %1776 = vmatprep.subr.bf16.mxu0 0
    %1777 = vmatpush1.bf16.msra.mxu0 %v1329
    %1778 = vmatprep.mubr.bf16.mxu0 %v471
    %1779 = vmatmul.mubr.bf16.gmra.mrb[0].mxu0 %v470
    %v1780 = vpop.f32.mrb[0].mxu0
    %v1781 = vadd.f32 %v1741, %v1780
    %v1782 = vpop.f32.mrb[0].mxu0
    %v1783 = vpop.f32.mrb[0].mxu0
    %v1784 = vpop.f32.mrb[0].mxu0
    %1785 = vdwg.mxu0
    %1786 = vmatprep.subr.bf16.mxu0 0
    %1787 = vmatpush1.bf16.msra.mxu0 %v1330
    %1788 = vmatprep.subr.bf16.mxu0 0
    %1789 = vmatpush1.bf16.msra.mxu0 %v1331
    %1790 = vmatprep.subr.bf16.mxu0 0
    %1791 = vmatpush1.bf16.msra.mxu0 %v1332
    %1792 = vmatprep.subr.bf16.mxu0 0
    %1793 = vmatpush1.bf16.msra.mxu0 %v1333
    %1794 = vmatprep.subr.bf16.mxu0 0
    %1795 = vmatpush1.bf16.msra.mxu0 %v1334
    %1796 = vmatprep.subr.bf16.mxu0 0
    %1797 = vmatpush1.bf16.msra.mxu0 %v1335
    %1798 = vmatprep.subr.bf16.mxu0 0
    %1799 = vmatpush1.bf16.msra.mxu0 %v1336
    %1800 = vmatprep.subr.bf16.mxu0 0
    %1801 = vmatpush1.bf16.msra.mxu0 %v1337
    %1802 = vmatprep.subr.bf16.mxu0 0
    %1803 = vmatpush1.bf16.msra.mxu0 %v1338
    %1804 = vmatprep.subr.bf16.mxu0 0
    %1805 = vmatpush1.bf16.msra.mxu0 %v1339
    %1806 = vmatprep.subr.bf16.mxu0 0
    %1807 = vmatpush1.bf16.msra.mxu0 %v1340
    %1808 = vmatprep.subr.bf16.mxu0 0
    %1809 = vmatpush1.bf16.msra.mxu0 %v1341
    %1810 = vmatprep.subr.bf16.mxu0 0
    %1811 = vmatpush1.bf16.msra.mxu0 %v1342
    %1812 = vmatprep.subr.bf16.mxu0 0
    %1813 = vmatpush1.bf16.msra.mxu0 %v1343
    %1814 = vmatprep.subr.bf16.mxu0 0
    %1815 = vmatpush1.bf16.msra.mxu0 %v1344
    %1816 = vmatprep.subr.bf16.mxu0 0
    %1817 = vmatpush1.bf16.msra.mxu0 %v1345
    %1818 = vmatprep.mubr.bf16.mxu0 %v473
    %1819 = vmatmul.mubr.bf16.gmra.mrb[0].mxu0 %v472
    %v1820 = vpop.f32.mrb[0].mxu0
    %v1821 = vadd.f32 %v1781, %v1820
    %v1822 = vpop.f32.mrb[0].mxu0
    %v1823 = vpop.f32.mrb[0].mxu0
    %v1824 = vpop.f32.mrb[0].mxu0
    %1825 = vdwg.mxu0
    %1826 = vmatprep.subr.bf16.mxu0 0
    %1827 = vmatpush1.bf16.msra.mxu0 %v1346
    %1828 = vmatprep.subr.bf16.mxu0 0
    %1829 = vmatpush1.bf16.msra.mxu0 %v1347
    %1830 = vmatprep.subr.bf16.mxu0 0
    %1831 = vmatpush1.bf16.msra.mxu0 %v1348
    %1832 = vmatprep.subr.bf16.mxu0 0
    %1833 = vmatpush1.bf16.msra.mxu0 %v1349
    %1834 = vmatprep.subr.bf16.mxu0 0
    %1835 = vmatpush1.bf16.msra.mxu0 %v1350
    %1836 = vmatprep.subr.bf16.mxu0 0
    %1837 = vmatpush1.bf16.msra.mxu0 %v1351
    %1838 = vmatprep.subr.bf16.mxu0 0
    %1839 = vmatpush1.bf16.msra.mxu0 %v1352
    %1840 = vmatprep.subr.bf16.mxu0 0
    %1841 = vmatpush1.bf16.msra.mxu0 %v1353
    %1842 = vmatprep.subr.bf16.mxu0 0
    %1843 = vmatpush1.bf16.msra.mxu0 %v1354
    %1844 = vmatprep.subr.bf16.mxu0 0
    %1845 = vmatpush1.bf16.msra.mxu0 %v1355
    %1846 = vmatprep.subr.bf16.mxu0 0
    %1847 = vmatpush1.bf16.msra.mxu0 %v1356
    %1848 = vmatprep.subr.bf16.mxu0 0
    %1849 = vmatpush1.bf16.msra.mxu0 %v1357
    %1850 = vmatprep.subr.bf16.mxu0 0
    %1851 = vmatpush1.bf16.msra.mxu0 %v1358
    %1852 = vmatprep.subr.bf16.mxu0 0
    %1853 = vmatpush1.bf16.msra.mxu0 %v1359
    %1854 = vmatprep.subr.bf16.mxu0 0
    %1855 = vmatpush1.bf16.msra.mxu0 %v1360
    %1856 = vmatprep.subr.bf16.mxu0 0
    %1857 = vmatpush1.bf16.msra.mxu0 %v1361
    %1858 = vmatprep.mubr.bf16.mxu0 %v475
    %1859 = vmatmul.mubr.bf16.gmra.mrb[0].mxu0 %v474
    %v1860 = vpop.f32.mrb[0].mxu0
    %v1861 = vadd.f32 %v1821, %v1860
    %v1862 = vpop.f32.mrb[0].mxu0
    %v1863 = vpop.f32.mrb[0].mxu0
    %v1864 = vpop.f32.mrb[0].mxu0
    %1865 = vdwg.mxu0
    %1866 = vmatprep.subr.bf16.mxu0 0
    %1867 = vmatpush1.bf16.msra.mxu0 %v1362
    %1868 = vmatprep.subr.bf16.mxu0 0
    %1869 = vmatpush1.bf16.msra.mxu0 %v1363
    %1870 = vmatprep.subr.bf16.mxu0 0
    %1871 = vmatpush1.bf16.msra.mxu0 %v1364
    %1872 = vmatprep.subr.bf16.mxu0 0
    %1873 = vmatpush1.bf16.msra.mxu0 %v1365
    %1874 = vmatprep.subr.bf16.mxu0 0
    %1875 = vmatpush1.bf16.msra.mxu0 %v1366
    %1876 = vmatprep.subr.bf16.mxu0 0
    %1877 = vmatpush1.bf16.msra.mxu0 %v1367
    %1878 = vmatprep.subr.bf16.mxu0 0
    %1879 = vmatpush1.bf16.msra.mxu0 %v1368
    %1880 = vmatprep.subr.bf16.mxu0 0
    %1881 = vmatpush1.bf16.msra.mxu0 %v1369
    %1882 = vmatprep.subr.bf16.mxu0 0
    %1883 = vmatpush1.bf16.msra.mxu0 %v1370
    %1884 = vmatprep.subr.bf16.mxu0 0
    %1885 = vmatpush1.bf16.msra.mxu0 %v1371
    %1886 = vmatprep.subr.bf16.mxu0 0
    %1887 = vmatpush1.bf16.msra.mxu0 %v1372
    %1888 = vmatprep.subr.bf16.mxu0 0
    %1889 = vmatpush1.bf16.msra.mxu0 %v1373
    %1890 = vmatprep.subr.bf16.mxu0 0
    %1891 = vmatpush1.bf16.msra.mxu0 %v1374
    %1892 = vmatprep.subr.bf16.mxu0 0
    %1893 = vmatpush1.bf16.msra.mxu0 %v1375
    %1894 = vmatprep.subr.bf16.mxu0 0
    %1895 = vmatpush1.bf16.msra.mxu0 %v1376
    %1896 = vmatprep.subr.bf16.mxu0 0
    %1897 = vmatpush1.bf16.msra.mxu0 %v1377
    %1898 = vmatprep.mubr.bf16.mxu0 %v477
    %1899 = vmatmul.mubr.bf16.gmra.mrb[0].mxu0 %v476
    %v1900 = vpop.f32.mrb[0].mxu0
    %v1901 = vadd.f32 %v1861, %v1900
    %v1902 = vpop.f32.mrb[0].mxu0
    %v1903 = vpop.f32.mrb[0].mxu0
    %v1904 = vpop.f32.mrb[0].mxu0
    %1905 = vdwg.mxu0
    %1906 = vmatprep.subr.bf16.mxu0 0
    %1907 = vmatpush1.bf16.msra.mxu0 %v1378
    %1908 = vmatprep.subr.bf16.mxu0 0
    %1909 = vmatpush1.bf16.msra.mxu0 %v1379
    %1910 = vmatprep.subr.bf16.mxu0 0
    %1911 = vmatpush1.bf16.msra.mxu0 %v1380
    %1912 = vmatprep.subr.bf16.mxu0 0
    %1913 = vmatpush1.bf16.msra.mxu0 %v1381
    %1914 = vmatprep.subr.bf16.mxu0 0
    %1915 = vmatpush1.bf16.msra.mxu0 %v1382
    %1916 = vmatprep.subr.bf16.mxu0 0
    %1917 = vmatpush1.bf16.msra.mxu0 %v1383
    %1918 = vmatprep.subr.bf16.mxu0 0
    %1919 = vmatpush1.bf16.msra.mxu0 %v1384
    %1920 = vmatprep.subr.bf16.mxu0 0
    %1921 = vmatpush1.bf16.msra.mxu0 %v1385
    %1922 = vmatprep.subr.bf16.mxu0 0
    %1923 = vmatpush1.bf16.msra.mxu0 %v1386
    %1924 = vmatprep.subr.bf16.mxu0 0
    %1925 = vmatpush1.bf16.msra.mxu0 %v1387
    %1926 = vmatprep.subr.bf16.mxu0 0
    %1927 = vmatpush1.bf16.msra.mxu0 %v1388
    %1928 = vmatprep.subr.bf16.mxu0 0
    %1929 = vmatpush1.bf16.msra.mxu0 %v1389
    %1930 = vmatprep.subr.bf16.mxu0 0
    %1931 = vmatpush1.bf16.msra.mxu0 %v1390
    %1932 = vmatprep.subr.bf16.mxu0 0
    %1933 = vmatpush1.bf16.msra.mxu0 %v1391
    %1934 = vmatprep.subr.bf16.mxu0 0
    %1935 = vmatpush1.bf16.msra.mxu0 %v1392
    %1936 = vmatprep.subr.bf16.mxu0 0
    %1937 = vmatpush1.bf16.msra.mxu0 %v1393
    %1938 = vmatprep.mubr.bf16.mxu0 %v479
    %1939 = vmatmul.mubr.bf16.gmra.mrb[0].mxu0 %v478
    %v1940 = vpop.f32.mrb[0].mxu0
    %v1941 = vadd.f32 %v1901, %v1940
    %v1942 = vpop.f32.mrb[0].mxu0
    %v1943 = vpop.f32.mrb[0].mxu0
    %v1944 = vpop.f32.mrb[0].mxu0
    %1945 = vdwg.mxu0
    %1946 = vmatprep.subr.bf16.mxu0 0
    %1947 = vmatpush1.bf16.msra.mxu0 %v1394
    %1948 = vmatprep.subr.bf16.mxu0 0
    %1949 = vmatpush1.bf16.msra.mxu0 %v1395
    %1950 = vmatprep.subr.bf16.mxu0 0
    %1951 = vmatpush1.bf16.msra.mxu0 %v1396
    %1952 = vmatprep.subr.bf16.mxu0 0
    %1953 = vmatpush1.bf16.msra.mxu0 %v1397
    %1954 = vmatprep.subr.bf16.mxu0 0
    %1955 = vmatpush1.bf16.msra.mxu0 %v1398
    %1956 = vmatprep.subr.bf16.mxu0 0
    %1957 = vmatpush1.bf16.msra.mxu0 %v1399
    %1958 = vmatprep.subr.bf16.mxu0 0
    %1959 = vmatpush1.bf16.msra.mxu0 %v1400
    %1960 = vmatprep.subr.bf16.mxu0 0
    %1961 = vmatpush1.bf16.msra.mxu0 %v1401
    %1962 = vmatprep.subr.bf16.mxu0 0
    %1963 = vmatpush1.bf16.msra.mxu0 %v1402
    %1964 = vmatprep.subr.bf16.mxu0 0
    %1965 = vmatpush1.bf16.msra.mxu0 %v1403
    %1966 = vmatprep.subr.bf16.mxu0 0
    %1967 = vmatpush1.bf16.msra.mxu0 %v1404
    %1968 = vmatprep.subr.bf16.mxu0 0
    %1969 = vmatpush1.bf16.msra.mxu0 %v1405
    %1970 = vmatprep.subr.bf16.mxu0 0
    %1971 = vmatpush1.bf16.msra.mxu0 %v1406
    %1972 = vmatprep.subr.bf16.mxu0 0
    %1973 = vmatpush1.bf16.msra.mxu0 %v1407
    %1974 = vmatprep.subr.bf16.mxu0 0
    %1975 = vmatpush1.bf16.msra.mxu0 %v1408
    %1976 = vmatprep.subr.bf16.mxu0 0
    %1977 = vmatpush1.bf16.msra.mxu0 %v1409
    %1978 = vmatprep.mubr.bf16.mxu0 %v481
    %1979 = vmatmul.mubr.bf16.gmra.mrb[0].mxu0 %v480
    %v1980 = vpop.f32.mrb[0].mxu0
    %v1981 = vadd.f32 %v1941, %v1980
    %v1982 = vpop.f32.mrb[0].mxu0
    %v1983 = vpop.f32.mrb[0].mxu0
    %v1984 = vpop.f32.mrb[0].mxu0
    %1985 = vdwg.mxu0
    %1986 = vmatprep.subr.bf16.mxu0 0
    %1987 = vmatpush1.bf16.msra.mxu0 %v1410
    %1988 = vmatprep.subr.bf16.mxu0 0
    %1989 = vmatpush1.bf16.msra.mxu0 %v1411
    %1990 = vmatprep.subr.bf16.mxu0 0
    %1991 = vmatpush1.bf16.msra.mxu0 %v1412
    %1992 = vmatprep.subr.bf16.mxu0 0
    %1993 = vmatpush1.bf16.msra.mxu0 %v1413
    %1994 = vmatprep.subr.bf16.mxu0 0
    %1995 = vmatpush1.bf16.msra.mxu0 %v1414
    %1996 = vmatprep.subr.bf16.mxu0 0
    %1997 = vmatpush1.bf16.msra.mxu0 %v1415
    %1998 = vmatprep.subr.bf16.mxu0 0
    %1999 = vmatpush1.bf16.msra.mxu0 %v1416
    %2000 = vmatprep.subr.bf16.mxu0 0
    %2001 = vmatpush1.bf16.msra.mxu0 %v1417
    %2002 = vmatprep.subr.bf16.mxu0 0
    %2003 = vmatpush1.bf16.msra.mxu0 %v1418
    %2004 = vmatprep.subr.bf16.mxu0 0
    %2005 = vmatpush1.bf16.msra.mxu0 %v1419
    %2006 = vmatprep.subr.bf16.mxu0 0
    %2007 = vmatpush1.bf16.msra.mxu0 %v1420
    %2008 = vmatprep.subr.bf16.mxu0 0
    %2009 = vmatpush1.bf16.msra.mxu0 %v1421
    %2010 = vmatprep.subr.bf16.mxu0 0
    %2011 = vmatpush1.bf16.msra.mxu0 %v1422
    %2012 = vmatprep.subr.bf16.mxu0 0
    %2013 = vmatpush1.bf16.msra.mxu0 %v1423
    %2014 = vmatprep.subr.bf16.mxu0 0
    %2015 = vmatpush1.bf16.msra.mxu0 %v1424
    %2016 = vmatprep.subr.bf16.mxu0 0
    %2017 = vmatpush1.bf16.msra.mxu0 %v1425
    %2018 = vmatprep.mubr.bf16.mxu0 %v483
    %2019 = vmatmul.mubr.bf16.gmra.mrb[0].mxu0 %v482
    %v2020 = vpop.f32.mrb[0].mxu0
    %v2021 = vadd.f32 %v1981, %v2020
    %v2022 = vpop.f32.mrb[0].mxu0
    %v2023 = vpop.f32.mrb[0].mxu0
    %v2024 = vpop.f32.mrb[0].mxu0
    %2025 = vdwg.mxu0
    %2026 = vmatprep.subr.bf16.mxu0 0
    %2027 = vmatpush1.bf16.msra.mxu0 %v1426
    %2028 = vmatprep.subr.bf16.mxu0 0
    %2029 = vmatpush1.bf16.msra.mxu0 %v1427
    %2030 = vmatprep.subr.bf16.mxu0 0
    %2031 = vmatpush1.bf16.msra.mxu0 %v1428
    %2032 = vmatprep.subr.bf16.mxu0 0
    %2033 = vmatpush1.bf16.msra.mxu0 %v1429
    %2034 = vmatprep.subr.bf16.mxu0 0
    %2035 = vmatpush1.bf16.msra.mxu0 %v1430
    %2036 = vmatprep.subr.bf16.mxu0 0
    %2037 = vmatpush1.bf16.msra.mxu0 %v1431
    %2038 = vmatprep.subr.bf16.mxu0 0
    %2039 = vmatpush1.bf16.msra.mxu0 %v1432
    %2040 = vmatprep.subr.bf16.mxu0 0
    %2041 = vmatpush1.bf16.msra.mxu0 %v1433
    %2042 = vmatprep.subr.bf16.mxu0 0
    %2043 = vmatpush1.bf16.msra.mxu0 %v1434
    %2044 = vmatprep.subr.bf16.mxu0 0
    %2045 = vmatpush1.bf16.msra.mxu0 %v1435
    %2046 = vmatprep.subr.bf16.mxu0 0
    %2047 = vmatpush1.bf16.msra.mxu0 %v1436
    %2048 = vmatprep.subr.bf16.mxu0 0
    %2049 = vmatpush1.bf16.msra.mxu0 %v1437
    %2050 = vmatprep.subr.bf16.mxu0 0
    %2051 = vmatpush1.bf16.msra.mxu0 %v1438
    %2052 = vmatprep.subr.bf16.mxu0 0
    %2053 = vmatpush1.bf16.msra.mxu0 %v1439
    %2054 = vmatprep.subr.bf16.mxu0 0
    %2055 = vmatpush1.bf16.msra.mxu0 %v1440
    %2056 = vmatprep.subr.bf16.mxu0 0
    %2057 = vmatpush1.bf16.msra.mxu0 %v1441
    %2058 = vmatprep.mubr.bf16.mxu0 %v485
    %2059 = vmatmul.mubr.bf16.gmra.mrb[0].mxu0 %v484
    %v2060 = vpop.f32.mrb[0].mxu0
    %v2061 = vadd.f32 %v2021, %v2060
    %v2062 = vpop.f32.mrb[0].mxu0
    %v2063 = vpop.f32.mrb[0].mxu0
    %v2064 = vpop.f32.mrb[0].mxu0
    %2065 = vdwg.mxu0
    %2066 = vmatprep.subr.bf16.mxu0 0
    %2067 = vmatpush1.bf16.msra.mxu0 %v1442
    %2068 = vmatprep.subr.bf16.mxu0 0
    %2069 = vmatpush1.bf16.msra.mxu0 %v1443
    %2070 = vmatprep.subr.bf16.mxu0 0
    %2071 = vmatpush1.bf16.msra.mxu0 %v1444
    %2072 = vmatprep.subr.bf16.mxu0 0
    %2073 = vmatpush1.bf16.msra.mxu0 %v1445
    %2074 = vmatprep.subr.bf16.mxu0 0
    %2075 = vmatpush1.bf16.msra.mxu0 %v1446
    %2076 = vmatprep.subr.bf16.mxu0 0
    %2077 = vmatpush1.bf16.msra.mxu0 %v1447
    %2078 = vmatprep.subr.bf16.mxu0 0
    %2079 = vmatpush1.bf16.msra.mxu0 %v1448
    %2080 = vmatprep.subr.bf16.mxu0 0
    %2081 = vmatpush1.bf16.msra.mxu0 %v1449
    %2082 = vmatprep.subr.bf16.mxu0 0
    %2083 = vmatpush1.bf16.msra.mxu0 %v1450
    %2084 = vmatprep.subr.bf16.mxu0 0
    %2085 = vmatpush1.bf16.msra.mxu0 %v1451
    %2086 = vmatprep.subr.bf16.mxu0 0
    %2087 = vmatpush1.bf16.msra.mxu0 %v1452
    %2088 = vmatprep.subr.bf16.mxu0 0
    %2089 = vmatpush1.bf16.msra.mxu0 %v1453
    %2090 = vmatprep.subr.bf16.mxu0 0
    %2091 = vmatpush1.bf16.msra.mxu0 %v1454
    %2092 = vmatprep.subr.bf16.mxu0 0
    %2093 = vmatpush1.bf16.msra.mxu0 %v1455
    %2094 = vmatprep.subr.bf16.mxu0 0
    %2095 = vmatpush1.bf16.msra.mxu0 %v1456
    %2096 = vmatprep.subr.bf16.mxu0 0
    %2097 = vmatpush1.bf16.msra.mxu0 %v1457
    %2098 = vmatprep.mubr.bf16.mxu0 %v487
    %2099 = vmatmul.mubr.bf16.gmra.mrb[0].mxu0 %v486
    %v2100 = vpop.f32.mrb[0].mxu0
    %v2101 = vadd.f32 %v2061, %v2100
    %v2102 = vpop.f32.mrb[0].mxu0
    %v2103 = vpop.f32.mrb[0].mxu0
    %v2104 = vpop.f32.mrb[0].mxu0
    %2105 = vdwg.mxu0
    %2106 = vmatprep.subr.bf16.mxu0 0
    %2107 = vmatpush1.bf16.msra.mxu0 %v1458
    %2108 = vmatprep.subr.bf16.mxu0 0
    %2109 = vmatpush1.bf16.msra.mxu0 %v1459
    %2110 = vmatprep.subr.bf16.mxu0 0
    %2111 = vmatpush1.bf16.msra.mxu0 %v1460
    %2112 = vmatprep.subr.bf16.mxu0 0
    %2113 = vmatpush1.bf16.msra.mxu0 %v1461
    %2114 = vmatprep.subr.bf16.mxu0 0
    %2115 = vmatpush1.bf16.msra.mxu0 %v1462
    %2116 = vmatprep.subr.bf16.mxu0 0
    %2117 = vmatpush1.bf16.msra.mxu0 %v1463
    %2118 = vmatprep.subr.bf16.mxu0 0
    %2119 = vmatpush1.bf16.msra.mxu0 %v1464
    %2120 = vmatprep.subr.bf16.mxu0 0
    %2121 = vmatpush1.bf16.msra.mxu0 %v1465
    %2122 = vmatprep.subr.bf16.mxu0 0
    %2123 = vmatpush1.bf16.msra.mxu0 %v1466
    %2124 = vmatprep.subr.bf16.mxu0 0
    %2125 = vmatpush1.bf16.msra.mxu0 %v1467
    %2126 = vmatprep.subr.bf16.mxu0 0
    %2127 = vmatpush1.bf16.msra.mxu0 %v1468
    %2128 = vmatprep.subr.bf16.mxu0 0
    %2129 = vmatpush1.bf16.msra.mxu0 %v1469
    %2130 = vmatprep.subr.bf16.mxu0 0
    %2131 = vmatpush1.bf16.msra.mxu0 %v1470
    %2132 = vmatprep.subr.bf16.mxu0 0
    %2133 = vmatpush1.bf16.msra.mxu0 %v1471
    %2134 = vmatprep.subr.bf16.mxu0 0
    %2135 = vmatpush1.bf16.msra.mxu0 %v1472
    %2136 = vmatprep.subr.bf16.mxu0 0
    %2137 = vmatpush1.bf16.msra.mxu0 %v1473
    %2138 = vmatprep.mubr.bf16.mxu0 %v489
    %2139 = vmatmul.mubr.bf16.gmra.mrb[0].mxu0 %v488
    %v2140 = vpop.f32.mrb[0].mxu0
    %v2141 = vadd.f32 %v2101, %v2140
    %v2142 = vpop.f32.mrb[0].mxu0
    %v2143 = vpop.f32.mrb[0].mxu0
    %v2144 = vpop.f32.mrb[0].mxu0
    %2145 = vdwg.mxu0
    %v2146 = vpack.c.bf16 %v2141, %v2141
    %2147 = vst [vmem:[%s3] sm:$0xf] %v2146
    // Predicated region
    $region18: #{_lambda_.19} parent=1 // pred_check
      _
    $region19: #{_lambda_.19} parent=1 // pred_check_branch
      %2149 = sbr.rel (0) target = $region21
    $region20: #{_lambda_.19} parent=1 // pred_region
      _
    $region21: #{_lambda_.19} parent=1 // pred_fallthru
      _
    // Predicated region
    $region22: #{_lambda_.19} parent=1 // pred_check
      _
    $region23: #{_lambda_.19} parent=1 // pred_check_branch
      %2151 = sbr.rel (0) target = $region25
    $region24: #{_lambda_.19} parent=1 // pred_region
      _
    $region25: #{_lambda_.19} parent=1 // pred_fallthru
      _
    %2152 = vsyncpa [#allocation3], 1

// kernel: _lambda_.24
$region0: #{_lambda_.24}
  #allocation0 [shape = 'u32[]', space=smem, size = 0x4, offset = 0x4, fixed_abs, tag = 'smem constant byte address 0x4 - core index']
  #allocation1 [shape = 'u32[144,128]{1,0:T(1,128)}', space=vmem, size = 0x12000, scoped, tag = 'internal scratch']
  %s0 = inlined_call_operand.vmem [shape: bf16[32,64], index: 0, kind: input, shape index: {}]
  %s1 = inlined_call_operand.vmem [shape: bf16[64,128], index: 1, kind: input, shape index: {}]
  %s2 = inlined_call_operand.hbm [shape: f32[1,128], index: 2, kind: input, shape index: {}]
  %s3 = inlined_call_operand.vmem [shape: bf16[128,64], index: 3, kind: input, shape index: {}]
  %s4 = inlined_call_operand.hbm [shape: f32[1,64], index: 4, kind: input, shape index: {}]
  %s5 = inlined_call_operand.vmem [shape: bf16[32,64], index: 5, kind: output, shape index: {}]
  %s6 = sld [smem:[#allocation0]]
  $region61: #{_lambda_.24} parent=0
    _
  %s8 = ssub.s32 1, %s6
  %s9 = scalar_select 0, %s8, %s6
  $region1: #{_lambda_.24} parent=0
    #allocation2 [shape = 'u8[512]{0}', space=vmem, size = 0x400, scoped, tag = 'input window, operand 2, single buffered']
    #allocation3 [shape = 's32[2]{0}', space=sflag, size = 0x8, scoped, tag = 'scoped memory for _lambda_.24']
    #allocation4 [shape = 'u8[512]{0}', space=vmem, size = 0x400, scoped, tag = 'input window, operand 4, single buffered']
    #allocation5 [shape = 's32[1]{0}', space=sflag, size = 0x4, scoped, tag = 'scoped memory for _lambda_.24']
    %10 = vsyncpa [#allocation3], 0
    %11 = vsyncpa [#allocation5], 0
    loop: start=0, step=1, limit=4
    $region2: #{_lambda_.24} parent=1 // loop_pre_header
      _
    $region3: #{_lambda_.24} parent=1 // loop_header
      %s13 = sphi 0, %s17
      %p14 = scmp.ge.s32.totalorder %s13, 4
      %s23 = sphi 0, %s25
      %s26 = sphi 0, %s23
      %s27 = sphi 0, %s26
      %s43 = sphi 0, %s27
      %s47 = sphi 0, %s47
      %s49 = sphi 0, %s47
      %s50 = sphi 0, %s49
      %s64 = sphi 0, %s50
      %s68 = sphi 0, %s68
      %s70 = sphi 0, %s68
      %s71 = sphi 0, %s70
      %s85 = sphi 0, %s71
      %s89 = sphi 0, %s89
      %s91 = sphi 0, %s89
      %s92 = sphi 0, %s91
      %s106 = sphi 0, %s92
      %s110 = sphi 0, %s110
      %s112 = sphi 0, %s110
      %s113 = sphi 0, %s112
      %s127 = sphi 0, %s113
      %s133 = sphi 0, %s135
      %s136 = sphi 0, %s133
      %s137 = sphi 0, %s136
      %s153 = sphi 0, %s137
    $region4: #{_lambda_.24} parent=1 // loop_header_branch
      %16 = sbr.rel (%p14) target = $region8
    $region5: #{_lambda_.24} parent=1 // loop_body
      %s18 = ssub.s32 %s13, 1
      %s19 = ssub.s32 %s13, 2
      %s20 = sadd.s32 %s13, 1
      %s21 = ssub.s32 %s13, %s20
      %p22 = scmp.eq.s32.totalorder %s21, 0
      %s24 = sadd.s32 %s23, 1
      %s25 = scalar_select %p22, %s23, %s24
      %p28 = pneg %p22
      %p29 = scmp.eq.s32.totalorder %s13, 1
      %p30 = por %p28, %p29
      %p31 = scmp.ne.s32.totalorder %s23, %s26
      %p32 = scmp.eq.s32.totalorder %s13, 0
      %p33 = por %p31, %p32
      %p34 = scmp.ne.s32.totalorder %s23, %s26
      %p35 = scmp.eq.s32.totalorder %s18, 1
      %p36 = por %p34, %p35
      %p37 = scmp.ne.s32.totalorder %s26, %s27
      %p38 = scmp.eq.s32.totalorder %s18, 0
      %p39 = por %p37, %p38
      %p40 = scmp.ne.s32.totalorder %s26, %s27
      %p41 = scmp.eq.s32.totalorder %s19, 1
      %p42 = por %p40, %p41
      %p44 = scmp.ne.s32.totalorder %s27, %s43
      %p45 = scmp.eq.s32.totalorder %s19, 0
      %p46 = por %p44, %p45
      %s48 = sadd.s32 %s47, 1
      %p51 = scmp.eq.s32.totalorder %s13, 1
      %p52 = scmp.ne.s32.totalorder %s47, %s49
      %p53 = scmp.eq.s32.totalorder %s13, 0
      %p54 = por %p52, %p53
      %p55 = scmp.ne.s32.totalorder %s47, %s49
      %p56 = scmp.eq.s32.totalorder %s18, 1
      %p57 = por %p55, %p56
      %p58 = scmp.ne.s32.totalorder %s49, %s50
      %p59 = scmp.eq.s32.totalorder %s18, 0
      %p60 = por %p58, %p59
      %p61 = scmp.ne.s32.totalorder %s49, %s50
      %p62 = scmp.eq.s32.totalorder %s19, 1
      %p63 = por %p61, %p62
      %p65 = scmp.ne.s32.totalorder %s50, %s64
      %p66 = scmp.eq.s32.totalorder %s19, 0
      %p67 = por %p65, %p66
      %s69 = sadd.s32 %s68, 1
      %p72 = scmp.eq.s32.totalorder %s13, 1
      %p73 = scmp.ne.s32.totalorder %s68, %s70
      %p74 = scmp.eq.s32.totalorder %s13, 0
      %p75 = por %p73, %p74
      %p76 = scmp.ne.s32.totalorder %s68, %s70
      %p77 = scmp.eq.s32.totalorder %s18, 1
      %p78 = por %p76, %p77
      %p79 = scmp.ne.s32.totalorder %s70, %s71
      %p80 = scmp.eq.s32.totalorder %s18, 0
      %p81 = por %p79, %p80
      %p82 = scmp.ne.s32.totalorder %s70, %s71
      %p83 = scmp.eq.s32.totalorder %s19, 1
      %p84 = por %p82, %p83
      %p86 = scmp.ne.s32.totalorder %s71, %s85
      %p87 = scmp.eq.s32.totalorder %s19, 0
      %p88 = por %p86, %p87
      %s90 = sadd.s32 %s89, 1
      %p93 = scmp.eq.s32.totalorder %s13, 1
      %p94 = scmp.ne.s32.totalorder %s89, %s91
      %p95 = scmp.eq.s32.totalorder %s13, 0
      %p96 = por %p94, %p95
      %p97 = scmp.ne.s32.totalorder %s89, %s91
      %p98 = scmp.eq.s32.totalorder %s18, 1
      %p99 = por %p97, %p98
      %p100 = scmp.ne.s32.totalorder %s91, %s92
      %p101 = scmp.eq.s32.totalorder %s18, 0
      %p102 = por %p100, %p101
      %p103 = scmp.ne.s32.totalorder %s91, %s92
      %p104 = scmp.eq.s32.totalorder %s19, 1
      %p105 = por %p103, %p104
      %p107 = scmp.ne.s32.totalorder %s92, %s106
      %p108 = scmp.eq.s32.totalorder %s19, 0
      %p109 = por %p107, %p108
      %s111 = sadd.s32 %s110, 1
      %p114 = scmp.eq.s32.totalorder %s13, 1
      %p115 = scmp.ne.s32.totalorder %s110, %s112
      %p116 = scmp.eq.s32.totalorder %s13, 0
      %p117 = por %p115, %p116
      %p118 = scmp.ne.s32.totalorder %s110, %s112
      %p119 = scmp.eq.s32.totalorder %s18, 1
      %p120 = por %p118, %p119
      %p121 = scmp.ne.s32.totalorder %s112, %s113
      %p122 = scmp.eq.s32.totalorder %s18, 0
      %p123 = por %p121, %p122
      %p124 = scmp.ne.s32.totalorder %s112, %s113
      %p125 = scmp.eq.s32.totalorder %s19, 1
      %p126 = por %p124, %p125
      %p128 = scmp.ne.s32.totalorder %s113, %s127
      %p129 = scmp.eq.s32.totalorder %s19, 0
      %p130 = por %p128, %p129
      %s131 = ssub.s32 %s13, %s20
      %p132 = scmp.eq.s32.totalorder %s131, 0
      %s134 = sadd.s32 %s133, 1
      %s135 = scalar_select %p132, %s133, %s134
      %p138 = pneg %p132
      %p139 = scmp.eq.s32.totalorder %s13, 1
      %p140 = por %p138, %p139
      %p141 = scmp.ne.s32.totalorder %s133, %s136
      %p142 = scmp.eq.s32.totalorder %s13, 0
      %p143 = por %p141, %p142
      %p144 = scmp.ne.s32.totalorder %s133, %s136
      %p145 = scmp.eq.s32.totalorder %s18, 1
      %p146 = por %p144, %p145
      %p147 = scmp.ne.s32.totalorder %s136, %s137
      %p148 = scmp.eq.s32.totalorder %s18, 0
      %p149 = por %p147, %p148
      %p150 = scmp.ne.s32.totalorder %s136, %s137
      %p151 = scmp.eq.s32.totalorder %s19, 1
      %p152 = por %p150, %p151
      %p154 = scmp.ne.s32.totalorder %s137, %s153
      %p155 = scmp.eq.s32.totalorder %s19, 0
      %p156 = por %p154, %p155
      %p157 = scmp.le.s32.totalorder 1, %s13
      %p158 = scmp.lt.s32.totalorder %s13, 3
      %p159 = pnand %p157, %p158
      %p160 = pneg %p159
      // Predicated region
      $region9: #{_lambda_.24} parent=5 // pred_check
        _
      $region10: #{_lambda_.24} parent=5 // pred_check_branch
        %162 = sbr.rel (%p159) target = $region12
      $region11: #{_lambda_.24} parent=5 // pred_region
        %s163 = ssub.s32 %s13, 1
        // Predicated region
        $region13: #{_lambda_.24} parent=11 // pred_check
          %p164 = pneg %p60
        $region14: #{_lambda_.24} parent=11 // pred_check_branch
          %166 = sbr.rel (%p164) target = $region16
        $region15: #{_lambda_.24} parent=11 // pred_region
          _
        $region16: #{_lambda_.24} parent=11 // pred_fallthru
          _
        // Predicated region
        $region17: #{_lambda_.24} parent=11 // pred_check
          %p167 = pneg %p81
        $region18: #{_lambda_.24} parent=11 // pred_check_branch
          %169 = sbr.rel (%p167) target = $region20
        $region19: #{_lambda_.24} parent=11 // pred_region
          %s171 = ssub.s32 16, 16
          %172 = vsyncadd [#allocation3], %s171
          %s174 = sshll.u32 [#allocation2], 4
          %s175 = int_to_ptr.vmem [resolvable:$true] %s174
          %177 = dma.hbm_to_vmem [thread:$0]  %s2, 16, %s175, [#allocation3]
        $region20: #{_lambda_.24} parent=11 // pred_fallthru
          _
        // Predicated region
        $region21: #{_lambda_.24} parent=11 // pred_check
          %p178 = pneg %p102
        $region22: #{_lambda_.24} parent=11 // pred_check_branch
          %180 = sbr.rel (%p178) target = $region24
        $region23: #{_lambda_.24} parent=11 // pred_region
          _
        $region24: #{_lambda_.24} parent=11 // pred_fallthru
          _
        // Predicated region
        $region25: #{_lambda_.24} parent=11 // pred_check
          %p181 = pneg %p123
        $region26: #{_lambda_.24} parent=11 // pred_check_branch
          %183 = sbr.rel (%p181) target = $region28
        $region27: #{_lambda_.24} parent=11 // pred_region
          %s185 = ssub.s32 16, 16
          %186 = vsyncadd [#allocation5], %s185
          %s188 = sshll.u32 [#allocation4], 4
          %s189 = int_to_ptr.vmem [resolvable:$true] %s188
          %191 = dma.hbm_to_vmem [thread:$0]  %s4, 16, %s189, [#allocation5]
        $region28: #{_lambda_.24} parent=11 // pred_fallthru
          _
      $region12: #{_lambda_.24} parent=5 // pred_fallthru
        _
      %p192 = scmp.lt.s32.totalorder %s13, 2
      // Predicated region
      $region29: #{_lambda_.24} parent=5 // pred_check
        %p193 = pneg %p192
      $region30: #{_lambda_.24} parent=5 // pred_check_branch
        %195 = sbr.rel (%p193) target = $region32
      $region31: #{_lambda_.24} parent=5 // pred_region
        // Predicated region
        $region33: #{_lambda_.24} parent=31 // pred_check
          %p196 = pneg %p33
        $region34: #{_lambda_.24} parent=31 // pred_check_branch
          %198 = sbr.rel (%p196) target = $region36
        $region35: #{_lambda_.24} parent=31 // pred_region
          %s199 = smul.u32 2, %s13
          %p200 = scmp.lt.s32.totalorder %s199, 3
          %s201 = scalar_select %p200, %s199, 3
          %s202 = smul.addr %s201, 4
          %s203 = scalar_lea.vmem %s0, %s202
          %s204 = smul.u32 2, %s13
        $region36: #{_lambda_.24} parent=31 // pred_fallthru
          _
      $region32: #{_lambda_.24} parent=5 // pred_fallthru
        _
      %p205 = scmp.le.s32.totalorder 1, %s13
      %p206 = scmp.lt.s32.totalorder %s13, 3
      %p207 = pnand %p205, %p206
      %p208 = pneg %p207
      // Predicated region
      $region37: #{_lambda_.24} parent=5 // pred_check
        _
      $region38: #{_lambda_.24} parent=5 // pred_check_branch
        %210 = sbr.rel (%p207) target = $region40
      $region39: #{_lambda_.24} parent=5 // pred_region
        %s211 = ssub.s32 %s13, 1
        // Predicated region
        $region41: #{_lambda_.24} parent=39 // pred_check
          %p212 = pneg %p81
        $region42: #{_lambda_.24} parent=39 // pred_check_branch
          %214 = sbr.rel (%p212) target = $region44
        $region43: #{_lambda_.24} parent=39 // pred_region
          %215 = dma.done [#allocation3], 16
        $region44: #{_lambda_.24} parent=39 // pred_fallthru
          _
        // Predicated region
        $region45: #{_lambda_.24} parent=39 // pred_check
          %p216 = pneg %p123
        $region46: #{_lambda_.24} parent=39 // pred_check_branch
          %218 = sbr.rel (%p216) target = $region48
        $region47: #{_lambda_.24} parent=39 // pred_region
          %219 = dma.done [#allocation5], 16
        $region48: #{_lambda_.24} parent=39 // pred_fallthru
          _
        %s220 = smul.u32 2, %s18
        %p221 = scmp.lt.s32.totalorder %s220, 3
        %s222 = scalar_select %p221, %s220, 3
        %s223 = smul.addr %s222, 4
        %s224 = scalar_lea.vmem %s0, %s223
        %p225 = pneg %p39
        %p226 = pneg %p36
        %p227 = pneg %p60
        %p228 = pneg %p57
        %p229 = pneg %p81
        %p230 = pneg %p78
        %p231 = pneg %p102
        %p232 = pneg %p99
        %p233 = pneg %p123
        %p234 = pneg %p120
        %p235 = pneg %p149
        %p236 = pneg %p146
        %s237 = smul.u32 2, %s18
        %p238 = scmp.lt.s32.totalorder %s237, 3
        %s239 = scalar_select %p238, %s237, 3
        %s240 = smul.addr %s239, 4
        %s241 = scalar_lea.vmem %s5, %s240
        %s242 = smul.u32 2, %s18
        %p243 = scmp.lt.s32.totalorder %s242, 3
        %s244 = scalar_select %p243, %s242, 3
        %s245 = smul.addr %s244, 4
        %s246 = scalar_lea.vmem %s0, %s245
        %s247 = smul.u32 2, %s18
        %s248 = smul.u32 2, %s18
        %p249 = scmp.lt.s32.totalorder %s248, 3
        %s250 = scalar_select %p249, %s248, 3
        %s251 = smul.addr %s250, 4
        %s252 = scalar_lea.vmem %s5, %s251
        %s253 = smul.u32 2, %s18
        %v255 = vld [vmem:[%s246] sm:$0xf]
        %v256 = vld [vmem:[%s246 + $0x4] sm:$0xf]
        %v257 = vunpack.c.l.bf16 %v255
        %v258 = vunpack.c.l.bf16 %v256
        %v259 = vlaneseq
        %v260 = vshrl.u32 %v259, 7
        %v261 = vadd.s32 %v260, 8
        %v262 = vlaneseq
        %v263 = vand.u32 %v262, 127
        %vm264 = vcmp.lt.s32.totalorder %v260, 4
        %vm265 = vcmp.lt.s32.totalorder %v261, 4
        %v266 = vrot.slane %v257, 4
        %v267 = vrot.slane %v258, 4
        %v268 = vsel %vm264, %v266, %v267
        %v269 = vsel %vm264, %v267, %v266
        %v270 = vsel %vm264, 0.0, %v269
        %v271 = vsel %vm265, 0.0, %v268
        %vm272 = vcmp.ge.s32.totalorder %v260, 12
        %vm273 = vcmp.ge.s32.totalorder %v261, 12
        %v274 = vsel %vm272, 0.0, %v268
        %v275 = vsel %vm273, 0.0, %v269
        %vm276 = vcmp.lt.s32.totalorder %v260, 0
        %v277 = vsub.s32 0, %v260
        %v278 = vsel %vm276, %v277, %v260
        %v279 = vshrl.u32 %v278, 2
        %v280 = vand.u32 %v278, 3
        %v281 = vsub.s32 0, %v280
        %v282 = vsel %vm276, %v281, %v280
        %vm283 = vcmp.lt.s32.totalorder %v261, 0
        %v284 = vsub.s32 0, %v261
        %v285 = vsel %vm283, %v284, %v261
        %v286 = vshrl.u32 %v285, 2
        %v287 = vand.u32 %v285, 3
        %v288 = vsub.s32 0, %v287
        %v289 = vsel %vm283, %v288, %v287
        %vm290 = vcmp.ne.s32.totalorder %v282, 0
        %vm291 = vcmp.ne.s32.totalorder %v289, 0
        %vm292 = vcmp.lt.s32.totalorder %v282, 0
        %vm293 = vcmp.lt.s32.totalorder %v289, 0
        %vm294 = vmand %vm292, %vm290
        %vm295 = vmand %vm293, %vm291
        %v296 = vadd.s32 %v282, 4
        %v297 = vadd.s32 %v289, 4
        %v298 = vsel %vm294, %v296, %v282
        %v299 = vsel %vm295, %v297, %v289
        %vm300 = vcmp.eq.s32.totalorder %v298, 0
        %vm301 = vcmp.eq.s32.totalorder %v299, 0
        %v302 = vrot.slane %v257, 7
        %v303 = vrot.slane %v258, 7
        %vm304 = vcmp.lt.s32.totalorder %v260, 1
        %v305 = vsel %vm304, %v302, %v303
        %v306 = vsel %vm304, %v303, %v302
        %v307 = vsel %vm300, 0.0, %v306
        %v308 = vsel %vm301, 0.0, %v305
        %vm309 = vcmp.eq.s32.totalorder %v298, 3
        %vm310 = vcmp.eq.s32.totalorder %v299, 3
        %v311 = vrot.slane %v257, 1
        %v312 = vrot.slane %v258, 1
        %vm313 = vcmp.lt.s32.totalorder %v260, 7
        %v314 = vsel %vm313, %v311, %v312
        %v315 = vsel %vm313, %v312, %v311
        %v316 = vsel %vm309, 0.0, %v314
        %v317 = vsel %vm310, 0.0, %v315
        %vm318 = vcmp.lt.s32.totalorder %v263, 5
        %vm319 = vcmp.lt.s32.totalorder %v263, 10
        %vm320 = vcmp.lt.s32.totalorder %v263, 15
        %v321 = vsel %vm320, %v307, %v316
        %v322 = vsel %vm320, %v308, %v317
        %v323 = vsel %vm319, %v274, %v321
        %v324 = vsel %vm319, %v275, %v322
        %v325 = vsel %vm318, %v270, %v323
        %v326 = vsel %vm318, %v271, %v324
        %v327 = vpack.c.bf16 %v326, %v325
        %v330 = vunpack.c.l.b16 %v255
        %v331 = vunpack.c.l.b16 %v256
        %v332 = vpack.c.b16 %v331, %v330
        %vm333 = vcmask 162816
        %v336 = vsel %vm333, %v327, %v332
        %v337 = vld [vmem:[%s1] sm:$0xf]
        %v338 = vld [vmem:[%s1 + $0x4] sm:$0xf]
        %v339 = vld [vmem:[%s1 + $0x8] sm:$0xf]
        %v340 = vld [vmem:[%s1 + $0xc] sm:$0xf]
        %v341 = vld [vmem:[%s1 + $0x10] sm:$0xf]
        %v342 = vld [vmem:[%s1 + $0x14] sm:$0xf]
        %v343 = vld [vmem:[%s1 + $0x18] sm:$0xf]
        %v344 = vld [vmem:[%s1 + $0x1c] sm:$0xf]
        %v345 = vld [vmem:[#allocation2] sm:$0x1]
        %v347 = vlaneseq
        %v348 = vshrl.u32 %v347, 7
        %v349 = vsub.s32 0, %v348
        %v350 = vrot.slane %v345, %v349
        %v360 = vunpack.c.l.b16 %v337
        %v361 = vunpack.c.l.b16 %v338
        %v362 = vunpack.c.l.b16 %v339
        %v363 = vunpack.c.l.b16 %v340
        %v364 = vunpack.c.l.b16 %v341
        %v365 = vunpack.c.l.b16 %v342
        %v366 = vunpack.c.l.b16 %v343
        %v367 = vunpack.c.l.b16 %v344
        %v368 = vpack.c.b16 %v361, %v360
        %v369 = vpack.c.b16 %v363, %v362
        %v370 = vpack.c.b16 %v365, %v364
        %v371 = vpack.c.b16 %v367, %v366
        %vm376 = vcmask 523264
        %v377 = vsel %vm376, %v336, 0
        %379 = vmatprep.subr.bf16.mxu0 0
        %380 = vmatpush1.bf16.msra.mxu0 %v368
        %381 = vmatprep.subr.bf16.mxu0 0
        %382 = vmatpush1.bf16.msra.mxu0 %v369
        %383 = vmatprep.subr.bf16.mxu0 0
        %384 = vmatpush1.bf16.msra.mxu0 %v370
        %385 = vmatprep.subr.bf16.mxu0 0
        %386 = vmatpush1.bf16.msra.mxu0 %v371
        %387 = vmatprep.subr.bf16.mxu0 0
        %388 = vmatpush1.bf16.msra.mxu0 0
        %389 = vmatprep.subr.bf16.mxu0 0
        %390 = vmatpush1.bf16.msra.mxu0 0
        %391 = vmatprep.subr.bf16.mxu0 0
        %392 = vmatpush1.bf16.msra.mxu0 0
        %393 = vmatprep.subr.bf16.mxu0 0
        %394 = vmatpush1.bf16.msra.mxu0 0
        %395 = vmatprep.subr.bf16.mxu0 0
        %396 = vmatpush1.bf16.msra.mxu0 0
        %397 = vmatprep.subr.bf16.mxu0 0
        %398 = vmatpush1.bf16.msra.mxu0 0
        %399 = vmatprep.subr.bf16.mxu0 0
        %400 = vmatpush1.bf16.msra.mxu0 0
        %401 = vmatprep.subr.bf16.mxu0 0
        %402 = vmatpush1.bf16.msra.mxu0 0
        %403 = vmatprep.subr.bf16.mxu0 0
        %404 = vmatpush1.bf16.msra.mxu0 0
        %405 = vmatprep.subr.bf16.mxu0 0
        %406 = vmatpush1.bf16.msra.mxu0 0
        %407 = vmatprep.subr.bf16.mxu0 0
        %408 = vmatpush1.bf16.msra.mxu0 0
        %409 = vmatprep.subr.bf16.mxu0 0
        %410 = vmatpush1.bf16.msra.mxu0 0
        %411 = vmatprep.mubr.bf16.mxu0 0
        %412 = vmatmul.mubr.bf16.gmra.mrb[0].mxu0 %v377
        %v413 = vpop.f32.mrb[0].mxu0
        %v414 = vadd.f32 %v350, %v413
        %v415 = vpop.f32.mrb[0].mxu0
        %v416 = vpop.f32.mrb[0].mxu0
        %v417 = vadd.f32 %v350, %v416
        %v418 = vpop.f32.mrb[0].mxu0
        %419 = vdwg.mxu0
        %v420 = vmul.f32 %v414, 0.5
        %v421 = vmul.f32 %v417, 0.5
        %v422 = vmul.f32 %v414, 0.044715
        %v423 = vmul.f32 %v417, 0.044715
        %v424 = vmul.f32 %v422, %v414
        %v425 = vmul.f32 %v423, %v417
        %v426 = vmul.f32 %v424, %v414
        %v427 = vmul.f32 %v425, %v417
        %v428 = vadd.f32 %v414, %v426
        %v429 = vadd.f32 %v417, %v427
        %v430 = vmul.f32 %v428, 0.7978846
        %v431 = vmul.f32 %v429, 0.7978846
        %v432 = vtanh.pop %v430
        %v433 = vtanh.pop %v431
        %v434 = vadd.f32 %v432, 1.0
        %v435 = vadd.f32 %v433, 1.0
        %v436 = vmul.f32 %v420, %v434
        %v437 = vmul.f32 %v421, %v435
        %v438 = vpack.c.bf16 %v437, %v436
        %v439 = vld [vmem:[%s3] sm:$0xf]
        %v440 = vld [vmem:[%s3 + $0x4] sm:$0xf]
        %v441 = vld [vmem:[%s3 + $0x8] sm:$0xf]
        %v442 = vld [vmem:[%s3 + $0xc] sm:$0xf]
        %v443 = vld [vmem:[%s3 + $0x10] sm:$0xf]
        %v444 = vld [vmem:[%s3 + $0x14] sm:$0xf]
        %v445 = vld [vmem:[%s3 + $0x18] sm:$0xf]
        %v446 = vld [vmem:[%s3 + $0x1c] sm:$0xf]
        %v447 = vld [vmem:[%s3 + $0x20] sm:$0xf]
        %v448 = vld [vmem:[%s3 + $0x24] sm:$0xf]
        %v449 = vld [vmem:[%s3 + $0x28] sm:$0xf]
        %v450 = vld [vmem:[%s3 + $0x2c] sm:$0xf]
        %v451 = vld [vmem:[%s3 + $0x30] sm:$0xf]
        %v452 = vld [vmem:[%s3 + $0x34] sm:$0xf]
        %v453 = vld [vmem:[%s3 + $0x38] sm:$0xf]
        %v454 = vld [vmem:[%s3 + $0x3c] sm:$0xf]
        %v455 = vld [vmem:[#allocation4] sm:$0x1]
        %v457 = vlaneseq
        %v458 = vshrl.u32 %v457, 7
        %v459 = vsub.s32 0, %v458
        %v460 = vrot.slane %v455, %v459
        %v478 = vunpack.c.l.b16 %v439
        %v479 = vunpack.c.l.b16 %v440
        %v480 = vunpack.c.l.b16 %v441
        %v481 = vunpack.c.l.b16 %v442
        %v482 = vunpack.c.l.b16 %v443
        %v483 = vunpack.c.l.b16 %v444
        %v484 = vunpack.c.l.b16 %v445
        %v485 = vunpack.c.l.b16 %v446
        %v486 = vunpack.c.l.b16 %v447
        %v487 = vunpack.c.l.b16 %v448
        %v488 = vunpack.c.l.b16 %v449
        %v489 = vunpack.c.l.b16 %v450
        %v490 = vunpack.c.l.b16 %v451
        %v491 = vunpack.c.l.b16 %v452
        %v492 = vunpack.c.l.b16 %v453
        %v493 = vunpack.c.l.b16 %v454
        %v494 = vpack.c.b16 %v479, %v478
        %v495 = vpack.c.b16 %v481, %v480
        %v496 = vpack.c.b16 %v483, %v482
        %v497 = vpack.c.b16 %v485, %v484
        %v498 = vpack.c.b16 %v487, %v486
        %v499 = vpack.c.b16 %v489, %v488
        %v500 = vpack.c.b16 %v491, %v490
        %v501 = vpack.c.b16 %v493, %v492
        %510 = vmatprep.subr.bf16.mxu0 0
        %511 = vmatpush1.bf16.msra.mxu0 %v494
        %512 = vmatprep.subr.bf16.mxu0 0
        %513 = vmatpush1.bf16.msra.mxu0 %v495
        %514 = vmatprep.subr.bf16.mxu0 0
        %515 = vmatpush1.bf16.msra.mxu0 %v496
        %516 = vmatprep.subr.bf16.mxu0 0
        %517 = vmatpush1.bf16.msra.mxu0 %v497
        %518 = vmatprep.subr.bf16.mxu0 0
        %519 = vmatpush1.bf16.msra.mxu0 %v498
        %520 = vmatprep.subr.bf16.mxu0 0
        %521 = vmatpush1.bf16.msra.mxu0 %v499
        %522 = vmatprep.subr.bf16.mxu0 0
        %523 = vmatpush1.bf16.msra.mxu0 %v500
        %524 = vmatprep.subr.bf16.mxu0 0
        %525 = vmatpush1.bf16.msra.mxu0 %v501
        %526 = vmatprep.subr.bf16.mxu0 0
        %527 = vmatpush1.bf16.msra.mxu0 0
        %528 = vmatprep.subr.bf16.mxu0 0
        %529 = vmatpush1.bf16.msra.mxu0 0
        %530 = vmatprep.subr.bf16.mxu0 0
        %531 = vmatpush1.bf16.msra.mxu0 0
        %532 = vmatprep.subr.bf16.mxu0 0
        %533 = vmatpush1.bf16.msra.mxu0 0
        %534 = vmatprep.subr.bf16.mxu0 0
        %535 = vmatpush1.bf16.msra.mxu0 0
        %536 = vmatprep.subr.bf16.mxu0 0
        %537 = vmatpush1.bf16.msra.mxu0 0
        %538 = vmatprep.subr.bf16.mxu0 0
        %539 = vmatpush1.bf16.msra.mxu0 0
        %540 = vmatprep.subr.bf16.mxu0 0
        %541 = vmatpush1.bf16.msra.mxu0 0
        %542 = vmatprep.mubr.bf16.mxu0 0
        %543 = vmatmul.mubr.bf16.gmra.mrb[0].mxu0 %v438
        %v544 = vpop.f32.mrb[0].mxu0
        %v545 = vadd.f32 %v460, %v544
        %v546 = vpop.f32.mrb[0].mxu0
        %v547 = vpop.f32.mrb[0].mxu0
        %v548 = vadd.f32 %v460, %v547
        %v549 = vpop.f32.mrb[0].mxu0
        %550 = vdwg.mxu0
        %v551 = vadd.f32 %v545, %v257
        %v552 = vadd.f32 %v548, %v258
        %v553 = vpack.c.bf16 %v552, %v551
        %v555 = vunpack.c.l.b16 %v553
        %v556 = vunpack.c.h.b16 %v553
        %v557 = vpack.c.b16 %v555, %v555
        %v558 = vpack.c.b16 %v556, %v556
        %vm561 = vcmask 519168
        %562 = vst.msk [vmem:[%s252] sm:$0xf] %vm561, %v557
        %563 = vst.msk [vmem:[%s252 + $0x4] sm:$0xf] %vm561, %v558
        %s564 = smul.u32 2, %s18
        %p565 = scmp.lt.s32.totalorder %s564, 3
        %s566 = scalar_select %p565, %s564, 3
        %s567 = smul.addr %s566, 4
        %s568 = scalar_lea.vmem %s5, %s567
        // Predicated region
        $region49: #{_lambda_.24} parent=39 // pred_check
          %p569 = pneg %p146
        $region50: #{_lambda_.24} parent=39 // pred_check_branch
          %571 = sbr.rel (%p569) target = $region52
        $region51: #{_lambda_.24} parent=39 // pred_region
          %s572 = smul.u32 2, %s18
        $region52: #{_lambda_.24} parent=39 // pred_fallthru
          _
      $region40: #{_lambda_.24} parent=5 // pred_fallthru
        _
      %p573 = scmp.le.s32.totalorder 2, %s13
      // Predicated region
      $region53: #{_lambda_.24} parent=5 // pred_check
        %p574 = pneg %p573
      $region54: #{_lambda_.24} parent=5 // pred_check_branch
        %576 = sbr.rel (%p574) target = $region56
      $region55: #{_lambda_.24} parent=5 // pred_region
        %s577 = ssub.s32 %s13, 2
        // Predicated region
        $region57: #{_lambda_.24} parent=55 // pred_check
          %p578 = pneg %p152
        $region58: #{_lambda_.24} parent=55 // pred_check_branch
          %580 = sbr.rel (%p578) target = $region60
        $region59: #{_lambda_.24} parent=55 // pred_region
          %s581 = smul.u32 2, %s19
          %p582 = scmp.lt.s32.totalorder %s581, 3
          %s583 = scalar_select %p582, %s581, 3
          %s584 = smul.addr %s583, 4
          %s585 = scalar_lea.vmem %s5, %s584
        $region60: #{_lambda_.24} parent=55 // pred_fallthru
          _
      $region56: #{_lambda_.24} parent=5 // pred_fallthru
        _
    $region6: #{_lambda_.24} parent=1 // loop_footer
      %s17 = sadd.s32 1, %s13
    $region7: #{_lambda_.24} parent=1 // loop_footer_branch
      %12 = sbr.rel target = $region3
    $region8: #{_lambda_.24} parent=1 // loop_exit
      _
    %586 = vsyncpa [#allocation3], 1
    %s587 = scalar_lea.sflag [#allocation3], 1
    %588 = vsyncpa %s587, 1
    %589 = vsyncpa [#allocation5], 1

// kernel: _lambda_.30
$region0: #{_lambda_.30}
  #allocation0 [shape = 'u32[]', space=smem, size = 0x4, offset = 0x4, fixed_abs, tag = 'smem constant byte address 0x4 - core index']
  #allocation1 [shape = 'u32[144,128]{1,0:T(1,128)}', space=vmem, size = 0x12000, scoped, tag = 'internal scratch']
  %s0 = inlined_call_operand.vmem [shape: bf16[32,64], index: 0, kind: input, shape index: {}]
  %s1 = inlined_call_operand.vmem [shape: bf16[64,32], index: 1, kind: input, shape index: {}]
  %s2 = inlined_call_operand.vmem [shape: f32[1,32], index: 2, kind: input, shape index: {}]
  %s3 = inlined_call_operand.vmem [shape: bf16[32,32], index: 3, kind: output, shape index: {}]
  %s4 = sld [smem:[#allocation0]]
  $region45: #{_lambda_.30} parent=0
    _
  %s6 = ssub.s32 1, %s4
  %s7 = scalar_select 0, %s6, %s4
  loop: start=0, step=1, limit=4
  $region2: #{_lambda_.30} parent=0 // loop_pre_header
    _
  $region3: #{_lambda_.30} parent=0 // loop_header
    %s9 = sphi 0, %s13
    %p10 = scmp.ge.s32.totalorder %s9, 4
    %s19 = sphi 0, %s21
    %s22 = sphi 0, %s19
    %s23 = sphi 0, %s22
    %s39 = sphi 0, %s23
    %s43 = sphi 0, %s43
    %s45 = sphi 0, %s43
    %s46 = sphi 0, %s45
    %s60 = sphi 0, %s46
    %s64 = sphi 0, %s64
    %s66 = sphi 0, %s64
    %s67 = sphi 0, %s66
    %s81 = sphi 0, %s67
    %s87 = sphi 0, %s89
    %s90 = sphi 0, %s87
    %s91 = sphi 0, %s90
    %s107 = sphi 0, %s91
  $region4: #{_lambda_.30} parent=0 // loop_header_branch
    %12 = sbr.rel (%p10) target = $region8
  $region5: #{_lambda_.30} parent=0 // loop_body
    %s14 = ssub.s32 %s9, 1
    %s15 = ssub.s32 %s9, 2
    %s16 = sadd.s32 %s9, 1
    %s17 = ssub.s32 %s9, %s16
    %p18 = scmp.eq.s32.totalorder %s17, 0
    %s20 = sadd.s32 %s19, 1
    %s21 = scalar_select %p18, %s19, %s20
    %p24 = pneg %p18
    %p25 = scmp.eq.s32.totalorder %s9, 1
    %p26 = por %p24, %p25
    %p27 = scmp.ne.s32.totalorder %s19, %s22
    %p28 = scmp.eq.s32.totalorder %s9, 0
    %p29 = por %p27, %p28
    %p30 = scmp.ne.s32.totalorder %s19, %s22
    %p31 = scmp.eq.s32.totalorder %s14, 1
    %p32 = por %p30, %p31
    %p33 = scmp.ne.s32.totalorder %s22, %s23
    %p34 = scmp.eq.s32.totalorder %s14, 0
    %p35 = por %p33, %p34
    %p36 = scmp.ne.s32.totalorder %s22, %s23
    %p37 = scmp.eq.s32.totalorder %s15, 1
    %p38 = por %p36, %p37
    %p40 = scmp.ne.s32.totalorder %s23, %s39
    %p41 = scmp.eq.s32.totalorder %s15, 0
    %p42 = por %p40, %p41
    %s44 = sadd.s32 %s43, 1
    %p47 = scmp.eq.s32.totalorder %s9, 1
    %p48 = scmp.ne.s32.totalorder %s43, %s45
    %p49 = scmp.eq.s32.totalorder %s9, 0
    %p50 = por %p48, %p49
    %p51 = scmp.ne.s32.totalorder %s43, %s45
    %p52 = scmp.eq.s32.totalorder %s14, 1
    %p53 = por %p51, %p52
    %p54 = scmp.ne.s32.totalorder %s45, %s46
    %p55 = scmp.eq.s32.totalorder %s14, 0
    %p56 = por %p54, %p55
    %p57 = scmp.ne.s32.totalorder %s45, %s46
    %p58 = scmp.eq.s32.totalorder %s15, 1
    %p59 = por %p57, %p58
    %p61 = scmp.ne.s32.totalorder %s46, %s60
    %p62 = scmp.eq.s32.totalorder %s15, 0
    %p63 = por %p61, %p62
    %s65 = sadd.s32 %s64, 1
    %p68 = scmp.eq.s32.totalorder %s9, 1
    %p69 = scmp.ne.s32.totalorder %s64, %s66
    %p70 = scmp.eq.s32.totalorder %s9, 0
    %p71 = por %p69, %p70
    %p72 = scmp.ne.s32.totalorder %s64, %s66
    %p73 = scmp.eq.s32.totalorder %s14, 1
    %p74 = por %p72, %p73
    %p75 = scmp.ne.s32.totalorder %s66, %s67
    %p76 = scmp.eq.s32.totalorder %s14, 0
    %p77 = por %p75, %p76
    %p78 = scmp.ne.s32.totalorder %s66, %s67
    %p79 = scmp.eq.s32.totalorder %s15, 1
    %p80 = por %p78, %p79
    %p82 = scmp.ne.s32.totalorder %s67, %s81
    %p83 = scmp.eq.s32.totalorder %s15, 0
    %p84 = por %p82, %p83
    %s85 = ssub.s32 %s9, %s16
    %p86 = scmp.eq.s32.totalorder %s85, 0
    %s88 = sadd.s32 %s87, 1
    %s89 = scalar_select %p86, %s87, %s88
    %p92 = pneg %p86
    %p93 = scmp.eq.s32.totalorder %s9, 1
    %p94 = por %p92, %p93
    %p95 = scmp.ne.s32.totalorder %s87, %s90
    %p96 = scmp.eq.s32.totalorder %s9, 0
    %p97 = por %p95, %p96
    %p98 = scmp.ne.s32.totalorder %s87, %s90
    %p99 = scmp.eq.s32.totalorder %s14, 1
    %p100 = por %p98, %p99
    %p101 = scmp.ne.s32.totalorder %s90, %s91
    %p102 = scmp.eq.s32.totalorder %s14, 0
    %p103 = por %p101, %p102
    %p104 = scmp.ne.s32.totalorder %s90, %s91
    %p105 = scmp.eq.s32.totalorder %s15, 1
    %p106 = por %p104, %p105
    %p108 = scmp.ne.s32.totalorder %s91, %s107
    %p109 = scmp.eq.s32.totalorder %s15, 0
    %p110 = por %p108, %p109
    %p111 = scmp.le.s32.totalorder 1, %s9
    %p112 = scmp.lt.s32.totalorder %s9, 3
    %p113 = pnand %p111, %p112
    %p114 = pneg %p113
    // Predicated region
    $region9: #{_lambda_.30} parent=5 // pred_check
      _
    $region10: #{_lambda_.30} parent=5 // pred_check_branch
      %116 = sbr.rel (%p113) target = $region12
    $region11: #{_lambda_.30} parent=5 // pred_region
      %s117 = ssub.s32 %s9, 1
      // Predicated region
      $region13: #{_lambda_.30} parent=11 // pred_check
        %p118 = pneg %p56
      $region14: #{_lambda_.30} parent=11 // pred_check_branch
        %120 = sbr.rel (%p118) target = $region16
      $region15: #{_lambda_.30} parent=11 // pred_region
        _
      $region16: #{_lambda_.30} parent=11 // pred_fallthru
        _
      // Predicated region
      $region17: #{_lambda_.30} parent=11 // pred_check
        %p121 = pneg %p77
      $region18: #{_lambda_.30} parent=11 // pred_check_branch
        %123 = sbr.rel (%p121) target = $region20
      $region19: #{_lambda_.30} parent=11 // pred_region
        _
      $region20: #{_lambda_.30} parent=11 // pred_fallthru
        _
    $region12: #{_lambda_.30} parent=5 // pred_fallthru
      _
    %p124 = scmp.lt.s32.totalorder %s9, 2
    // Predicated region
    $region21: #{_lambda_.30} parent=5 // pred_check
      %p125 = pneg %p124
    $region22: #{_lambda_.30} parent=5 // pred_check_branch
      %127 = sbr.rel (%p125) target = $region24
    $region23: #{_lambda_.30} parent=5 // pred_region
      // Predicated region
      $region25: #{_lambda_.30} parent=23 // pred_check
        %p128 = pneg %p29
      $region26: #{_lambda_.30} parent=23 // pred_check_branch
        %130 = sbr.rel (%p128) target = $region28
      $region27: #{_lambda_.30} parent=23 // pred_region
        %s131 = smul.u32 2, %s9
        %p132 = scmp.lt.s32.totalorder %s131, 3
        %s133 = scalar_select %p132, %s131, 3
        %s134 = smul.addr %s133, 4
        %s135 = scalar_lea.vmem %s0, %s134
        %s136 = smul.u32 2, %s9
      $region28: #{_lambda_.30} parent=23 // pred_fallthru
        _
    $region24: #{_lambda_.30} parent=5 // pred_fallthru
      _
    %p137 = scmp.le.s32.totalorder 1, %s9
    %p138 = scmp.lt.s32.totalorder %s9, 3
    %p139 = pnand %p137, %p138
    %p140 = pneg %p139
    // Predicated region
    $region29: #{_lambda_.30} parent=5 // pred_check
      _
    $region30: #{_lambda_.30} parent=5 // pred_check_branch
      %142 = sbr.rel (%p139) target = $region32
    $region31: #{_lambda_.30} parent=5 // pred_region
      %s143 = ssub.s32 %s9, 1
      %s144 = smul.u32 2, %s14
      %p145 = scmp.lt.s32.totalorder %s144, 3
      %s146 = scalar_select %p145, %s144, 3
      %s147 = smul.addr %s146, 4
      %s148 = scalar_lea.vmem %s0, %s147
      %p149 = pneg %p35
      %p150 = pneg %p32
      %p151 = pneg %p56
      %p152 = pneg %p53
      %p153 = pneg %p77
      %p154 = pneg %p74
      %p155 = pneg %p103
      %p156 = pneg %p100
      %s157 = smul.u32 2, %s14
      %p158 = scmp.lt.s32.totalorder %s157, 3
      %s159 = scalar_select %p158, %s157, 3
      %s160 = smul.addr %s159, 4
      %s161 = scalar_lea.vmem %s3, %s160
      %s162 = smul.u32 2, %s14
      %p163 = scmp.lt.s32.totalorder %s162, 3
      %s164 = scalar_select %p163, %s162, 3
      %s165 = smul.addr %s164, 4
      %s166 = scalar_lea.vmem %s0, %s165
      %s167 = smul.u32 2, %s14
      %s168 = smul.u32 2, %s14
      %p169 = scmp.lt.s32.totalorder %s168, 3
      %s170 = scalar_select %p169, %s168, 3
      %s171 = smul.addr %s170, 4
      %s172 = scalar_lea.vmem %s3, %s171
      %s173 = smul.u32 2, %s14
      %v175 = vld [vmem:[%s166] sm:$0xf]
      %v176 = vld [vmem:[%s166 + $0x4] sm:$0xf]
      %v177 = vld [vmem:[%s1] sm:$0xf]
      %v178 = vld [vmem:[%s1 + $0x4] sm:$0xf]
      %v179 = vld [vmem:[%s1 + $0x8] sm:$0xf]
      %v180 = vld [vmem:[%s1 + $0xc] sm:$0xf]
      %v181 = vld [vmem:[%s1 + $0x10] sm:$0xf]
      %v182 = vld [vmem:[%s1 + $0x14] sm:$0xf]
      %v183 = vld [vmem:[%s1 + $0x18] sm:$0xf]
      %v184 = vld [vmem:[%s1 + $0x1c] sm:$0xf]
      %v185 = vld [vmem:[%s2] sm:$0x1]
      %v187 = vlaneseq
      %v188 = vshrl.u32 %v187, 7
      %v189 = vsub.s32 0, %v188
      %v190 = vrot.slane %v185, %v189
      %v194 = vunpack.c.l.b16 %v175
      %v195 = vunpack.c.l.b16 %v176
      %v196 = vpack.c.b16 %v195, %v194
      %v205 = vunpack.c.l.b16 %v177
      %v206 = vunpack.c.l.b16 %v178
      %v207 = vunpack.c.l.b16 %v179
      %v208 = vunpack.c.l.b16 %v180
      %v209 = vunpack.c.l.b16 %v181
      %v210 = vunpack.c.l.b16 %v182
      %v211 = vunpack.c.l.b16 %v183
      %v212 = vunpack.c.l.b16 %v184
      %v213 = vpack.c.b16 %v206, %v205
      %v214 = vpack.c.b16 %v208, %v207
      %v215 = vpack.c.b16 %v210, %v209
      %v216 = vpack.c.b16 %v212, %v211
      %vm221 = vcmask 523264
      %v223 = vsel %vm221, %v196, 0
      %225 = vmatprep.subr.bf16.mxu0 0
      %226 = vmatpush1.bf16.msra.mxu0 %v213
      %227 = vmatprep.subr.bf16.mxu0 0
      %228 = vmatpush1.bf16.msra.mxu0 %v214
      %229 = vmatprep.subr.bf16.mxu0 0
      %230 = vmatpush1.bf16.msra.mxu0 %v215
      %231 = vmatprep.subr.bf16.mxu0 0
      %232 = vmatpush1.bf16.msra.mxu0 %v216
      %233 = vmatprep.subr.bf16.mxu0 0
      %234 = vmatpush1.bf16.msra.mxu0 0
      %235 = vmatprep.subr.bf16.mxu0 0
      %236 = vmatpush1.bf16.msra.mxu0 0
      %237 = vmatprep.subr.bf16.mxu0 0
      %238 = vmatpush1.bf16.msra.mxu0 0
      %239 = vmatprep.subr.bf16.mxu0 0
      %240 = vmatpush1.bf16.msra.mxu0 0
      %241 = vmatprep.subr.bf16.mxu0 0
      %242 = vmatpush1.bf16.msra.mxu0 0
      %243 = vmatprep.subr.bf16.mxu0 0
      %244 = vmatpush1.bf16.msra.mxu0 0
      %245 = vmatprep.subr.bf16.mxu0 0
      %246 = vmatpush1.bf16.msra.mxu0 0
      %247 = vmatprep.subr.bf16.mxu0 0
      %248 = vmatpush1.bf16.msra.mxu0 0
      %249 = vmatprep.subr.bf16.mxu0 0
      %250 = vmatpush1.bf16.msra.mxu0 0
      %251 = vmatprep.subr.bf16.mxu0 0
      %252 = vmatpush1.bf16.msra.mxu0 0
      %253 = vmatprep.subr.bf16.mxu0 0
      %254 = vmatpush1.bf16.msra.mxu0 0
      %255 = vmatprep.subr.bf16.mxu0 0
      %256 = vmatpush1.bf16.msra.mxu0 0
      %257 = vmatprep.mubr.bf16.mxu0 0
      %258 = vmatmul.mubr.bf16.gmra.mrb[0].mxu0 %v223
      %v259 = vpop.f32.mrb[0].mxu0
      %v260 = vadd.f32 %v190, %v259
      %v261 = vpop.f32.mrb[0].mxu0
      %v262 = vpop.f32.mrb[0].mxu0
      %v263 = vadd.f32 %v190, %v262
      %v264 = vpop.f32.mrb[0].mxu0
      %265 = vdwg.mxu0
      %v266 = vpack.c.bf16 %v263, %v260
      %v268 = vunpack.c.l.b16 %v266
      %v269 = vunpack.c.h.b16 %v266
      %v270 = vpack.c.b16 %v268, %v268
      %v271 = vpack.c.b16 %v269, %v269
      %vm274 = vcmask 257024
      %275 = vst.msk [vmem:[%s172] sm:$0xf] %vm274, %v270
      %276 = vst.msk [vmem:[%s172 + $0x4] sm:$0xf] %vm274, %v271
      %s277 = smul.u32 2, %s14
      %p278 = scmp.lt.s32.totalorder %s277, 3
      %s279 = scalar_select %p278, %s277, 3
      %s280 = smul.addr %s279, 4
      %s281 = scalar_lea.vmem %s3, %s280
      // Predicated region
      $region33: #{_lambda_.30} parent=31 // pred_check
        %p282 = pneg %p100
      $region34: #{_lambda_.30} parent=31 // pred_check_branch
        %284 = sbr.rel (%p282) target = $region36
      $region35: #{_lambda_.30} parent=31 // pred_region
        %s285 = smul.u32 2, %s14
      $region36: #{_lambda_.30} parent=31 // pred_fallthru
        _
    $region32: #{_lambda_.30} parent=5 // pred_fallthru
      _
    %p286 = scmp.le.s32.totalorder 2, %s9
    // Predicated region
    $region37: #{_lambda_.30} parent=5 // pred_check
      %p287 = pneg %p286
    $region38: #{_lambda_.30} parent=5 // pred_check_branch
      %289 = sbr.rel (%p287) target = $region40
    $region39: #{_lambda_.30} parent=5 // pred_region
      %s290 = ssub.s32 %s9, 2
      // Predicated region
      $region41: #{_lambda_.30} parent=39 // pred_check
        %p291 = pneg %p106
      $region42: #{_lambda_.30} parent=39 // pred_check_branch
        %293 = sbr.rel (%p291) target = $region44
      $region43: #{_lambda_.30} parent=39 // pred_region
        %s294 = smul.u32 2, %s15
        %p295 = scmp.lt.s32.totalorder %s294, 3
        %s296 = scalar_select %p295, %s294, 3
        %s297 = smul.addr %s296, 4
        %s298 = scalar_lea.vmem %s3, %s297
      $region44: #{_lambda_.30} parent=39 // pred_fallthru
        _
    $region40: #{_lambda_.30} parent=5 // pred_fallthru
      _
  $region6: #{_lambda_.30} parent=0 // loop_footer
    %s13 = sadd.s32 1, %s9
  $region7: #{_lambda_.30} parent=0 // loop_footer_branch
    %8 = sbr.rel target = $region3
  $region8: #{_lambda_.30} parent=0 // loop_exit
    _

// kernel: _lambda_.29
$region0: #{_lambda_.29}
  #allocation0 [shape = 'u32[]', space=smem, size = 0x4, offset = 0x4, fixed_abs, tag = 'smem constant byte address 0x4 - core index']
  #allocation1 [shape = 'u32[144,128]{1,0:T(1,128)}', space=vmem, size = 0x12000, scoped, tag = 'internal scratch']
  %s0 = inlined_call_operand.vmem [shape: bf16[32,64], index: 0, kind: input, shape index: {}]
  %s1 = inlined_call_operand.vmem [shape: bf16[64,128], index: 1, kind: input, shape index: {}]
  %s2 = inlined_call_operand.hbm [shape: f32[1,128], index: 2, kind: input, shape index: {}]
  %s3 = inlined_call_operand.vmem [shape: bf16[128,64], index: 3, kind: input, shape index: {}]
  %s4 = inlined_call_operand.hbm [shape: f32[1,64], index: 4, kind: input, shape index: {}]
  %s5 = inlined_call_operand.vmem [shape: bf16[32,64], index: 5, kind: input, shape index: {}]
  %s6 = inlined_call_operand.vmem [shape: bf16[32,64], index: 6, kind: output, shape index: {}]
  %s7 = sld [smem:[#allocation0]]
  $region65: #{_lambda_.29} parent=0
    _
  %s9 = ssub.s32 1, %s7
  %s10 = scalar_select 0, %s9, %s7
  $region1: #{_lambda_.29} parent=0
    #allocation2 [shape = 'u8[512]{0}', space=vmem, size = 0x400, scoped, tag = 'input window, operand 2, single buffered']
    #allocation3 [shape = 's32[2]{0}', space=sflag, size = 0x8, scoped, tag = 'scoped memory for _lambda_.29']
    #allocation4 [shape = 'u8[512]{0}', space=vmem, size = 0x400, scoped, tag = 'input window, operand 4, single buffered']
    #allocation5 [shape = 's32[1]{0}', space=sflag, size = 0x4, scoped, tag = 'scoped memory for _lambda_.29']
    %11 = vsyncpa [#allocation3], 0
    %12 = vsyncpa [#allocation5], 0
    loop: start=0, step=1, limit=4
    $region2: #{_lambda_.29} parent=1 // loop_pre_header
      _
    $region3: #{_lambda_.29} parent=1 // loop_header
      %s14 = sphi 0, %s18
      %p15 = scmp.ge.s32.totalorder %s14, 4
      %s24 = sphi 0, %s26
      %s27 = sphi 0, %s24
      %s28 = sphi 0, %s27
      %s44 = sphi 0, %s28
      %s48 = sphi 0, %s48
      %s50 = sphi 0, %s48
      %s51 = sphi 0, %s50
      %s65 = sphi 0, %s51
      %s69 = sphi 0, %s69
      %s71 = sphi 0, %s69
      %s72 = sphi 0, %s71
      %s86 = sphi 0, %s72
      %s90 = sphi 0, %s90
      %s92 = sphi 0, %s90
      %s93 = sphi 0, %s92
      %s107 = sphi 0, %s93
      %s111 = sphi 0, %s111
      %s113 = sphi 0, %s111
      %s114 = sphi 0, %s113
      %s128 = sphi 0, %s114
      %s134 = sphi 0, %s136
      %s137 = sphi 0, %s134
      %s138 = sphi 0, %s137
      %s154 = sphi 0, %s138
      %s160 = sphi 0, %s162
      %s163 = sphi 0, %s160
      %s164 = sphi 0, %s163
      %s180 = sphi 0, %s164
    $region4: #{_lambda_.29} parent=1 // loop_header_branch
      %17 = sbr.rel (%p15) target = $region8
    $region5: #{_lambda_.29} parent=1 // loop_body
      %s19 = ssub.s32 %s14, 1
      %s20 = ssub.s32 %s14, 2
      %s21 = sadd.s32 %s14, 1
      %s22 = ssub.s32 %s14, %s21
      %p23 = scmp.eq.s32.totalorder %s22, 0
      %s25 = sadd.s32 %s24, 1
      %s26 = scalar_select %p23, %s24, %s25
      %p29 = pneg %p23
      %p30 = scmp.eq.s32.totalorder %s14, 1
      %p31 = por %p29, %p30
      %p32 = scmp.ne.s32.totalorder %s24, %s27
      %p33 = scmp.eq.s32.totalorder %s14, 0
      %p34 = por %p32, %p33
      %p35 = scmp.ne.s32.totalorder %s24, %s27
      %p36 = scmp.eq.s32.totalorder %s19, 1
      %p37 = por %p35, %p36
      %p38 = scmp.ne.s32.totalorder %s27, %s28
      %p39 = scmp.eq.s32.totalorder %s19, 0
      %p40 = por %p38, %p39
      %p41 = scmp.ne.s32.totalorder %s27, %s28
      %p42 = scmp.eq.s32.totalorder %s20, 1
      %p43 = por %p41, %p42
      %p45 = scmp.ne.s32.totalorder %s28, %s44
      %p46 = scmp.eq.s32.totalorder %s20, 0
      %p47 = por %p45, %p46
      %s49 = sadd.s32 %s48, 1
      %p52 = scmp.eq.s32.totalorder %s14, 1
      %p53 = scmp.ne.s32.totalorder %s48, %s50
      %p54 = scmp.eq.s32.totalorder %s14, 0
      %p55 = por %p53, %p54
      %p56 = scmp.ne.s32.totalorder %s48, %s50
      %p57 = scmp.eq.s32.totalorder %s19, 1
      %p58 = por %p56, %p57
      %p59 = scmp.ne.s32.totalorder %s50, %s51
      %p60 = scmp.eq.s32.totalorder %s19, 0
      %p61 = por %p59, %p60
      %p62 = scmp.ne.s32.totalorder %s50, %s51
      %p63 = scmp.eq.s32.totalorder %s20, 1
      %p64 = por %p62, %p63
      %p66 = scmp.ne.s32.totalorder %s51, %s65
      %p67 = scmp.eq.s32.totalorder %s20, 0
      %p68 = por %p66, %p67
      %s70 = sadd.s32 %s69, 1
      %p73 = scmp.eq.s32.totalorder %s14, 1
      %p74 = scmp.ne.s32.totalorder %s69, %s71
      %p75 = scmp.eq.s32.totalorder %s14, 0
      %p76 = por %p74, %p75
      %p77 = scmp.ne.s32.totalorder %s69, %s71
      %p78 = scmp.eq.s32.totalorder %s19, 1
      %p79 = por %p77, %p78
      %p80 = scmp.ne.s32.totalorder %s71, %s72
      %p81 = scmp.eq.s32.totalorder %s19, 0
      %p82 = por %p80, %p81
      %p83 = scmp.ne.s32.totalorder %s71, %s72
      %p84 = scmp.eq.s32.totalorder %s20, 1
      %p85 = por %p83, %p84
      %p87 = scmp.ne.s32.totalorder %s72, %s86
      %p88 = scmp.eq.s32.totalorder %s20, 0
      %p89 = por %p87, %p88
      %s91 = sadd.s32 %s90, 1
      %p94 = scmp.eq.s32.totalorder %s14, 1
      %p95 = scmp.ne.s32.totalorder %s90, %s92
      %p96 = scmp.eq.s32.totalorder %s14, 0
      %p97 = por %p95, %p96
      %p98 = scmp.ne.s32.totalorder %s90, %s92
      %p99 = scmp.eq.s32.totalorder %s19, 1
      %p100 = por %p98, %p99
      %p101 = scmp.ne.s32.totalorder %s92, %s93
      %p102 = scmp.eq.s32.totalorder %s19, 0
      %p103 = por %p101, %p102
      %p104 = scmp.ne.s32.totalorder %s92, %s93
      %p105 = scmp.eq.s32.totalorder %s20, 1
      %p106 = por %p104, %p105
      %p108 = scmp.ne.s32.totalorder %s93, %s107
      %p109 = scmp.eq.s32.totalorder %s20, 0
      %p110 = por %p108, %p109
      %s112 = sadd.s32 %s111, 1
      %p115 = scmp.eq.s32.totalorder %s14, 1
      %p116 = scmp.ne.s32.totalorder %s111, %s113
      %p117 = scmp.eq.s32.totalorder %s14, 0
      %p118 = por %p116, %p117
      %p119 = scmp.ne.s32.totalorder %s111, %s113
      %p120 = scmp.eq.s32.totalorder %s19, 1
      %p121 = por %p119, %p120
      %p122 = scmp.ne.s32.totalorder %s113, %s114
      %p123 = scmp.eq.s32.totalorder %s19, 0
      %p124 = por %p122, %p123
      %p125 = scmp.ne.s32.totalorder %s113, %s114
      %p126 = scmp.eq.s32.totalorder %s20, 1
      %p127 = por %p125, %p126
      %p129 = scmp.ne.s32.totalorder %s114, %s128
      %p130 = scmp.eq.s32.totalorder %s20, 0
      %p131 = por %p129, %p130
      %s132 = ssub.s32 %s14, %s21
      %p133 = scmp.eq.s32.totalorder %s132, 0
      %s135 = sadd.s32 %s134, 1
      %s136 = scalar_select %p133, %s134, %s135
      %p139 = pneg %p133
      %p140 = scmp.eq.s32.totalorder %s14, 1
      %p141 = por %p139, %p140
      %p142 = scmp.ne.s32.totalorder %s134, %s137
      %p143 = scmp.eq.s32.totalorder %s14, 0
      %p144 = por %p142, %p143
      %p145 = scmp.ne.s32.totalorder %s134, %s137
      %p146 = scmp.eq.s32.totalorder %s19, 1
      %p147 = por %p145, %p146
      %p148 = scmp.ne.s32.totalorder %s137, %s138
      %p149 = scmp.eq.s32.totalorder %s19, 0
      %p150 = por %p148, %p149
      %p151 = scmp.ne.s32.totalorder %s137, %s138
      %p152 = scmp.eq.s32.totalorder %s20, 1
      %p153 = por %p151, %p152
      %p155 = scmp.ne.s32.totalorder %s138, %s154
      %p156 = scmp.eq.s32.totalorder %s20, 0
      %p157 = por %p155, %p156
      %s158 = ssub.s32 %s14, %s21
      %p159 = scmp.eq.s32.totalorder %s158, 0
      %s161 = sadd.s32 %s160, 1
      %s162 = scalar_select %p159, %s160, %s161
      %p165 = pneg %p159
      %p166 = scmp.eq.s32.totalorder %s14, 1
      %p167 = por %p165, %p166
      %p168 = scmp.ne.s32.totalorder %s160, %s163
      %p169 = scmp.eq.s32.totalorder %s14, 0
      %p170 = por %p168, %p169
      %p171 = scmp.ne.s32.totalorder %s160, %s163
      %p172 = scmp.eq.s32.totalorder %s19, 1
      %p173 = por %p171, %p172
      %p174 = scmp.ne.s32.totalorder %s163, %s164
      %p175 = scmp.eq.s32.totalorder %s19, 0
      %p176 = por %p174, %p175
      %p177 = scmp.ne.s32.totalorder %s163, %s164
      %p178 = scmp.eq.s32.totalorder %s20, 1
      %p179 = por %p177, %p178
      %p181 = scmp.ne.s32.totalorder %s164, %s180
      %p182 = scmp.eq.s32.totalorder %s20, 0
      %p183 = por %p181, %p182
      %p184 = scmp.le.s32.totalorder 1, %s14
      %p185 = scmp.lt.s32.totalorder %s14, 3
      %p186 = pnand %p184, %p185
      %p187 = pneg %p186
      // Predicated region
      $region9: #{_lambda_.29} parent=5 // pred_check
        _
      $region10: #{_lambda_.29} parent=5 // pred_check_branch
        %189 = sbr.rel (%p186) target = $region12
      $region11: #{_lambda_.29} parent=5 // pred_region
        %s190 = ssub.s32 %s14, 1
        // Predicated region
        $region13: #{_lambda_.29} parent=11 // pred_check
          %p191 = pneg %p61
        $region14: #{_lambda_.29} parent=11 // pred_check_branch
          %193 = sbr.rel (%p191) target = $region16
        $region15: #{_lambda_.29} parent=11 // pred_region
          _
        $region16: #{_lambda_.29} parent=11 // pred_fallthru
          _
        // Predicated region
        $region17: #{_lambda_.29} parent=11 // pred_check
          %p194 = pneg %p82
        $region18: #{_lambda_.29} parent=11 // pred_check_branch
          %196 = sbr.rel (%p194) target = $region20
        $region19: #{_lambda_.29} parent=11 // pred_region
          %s198 = ssub.s32 16, 16
          %199 = vsyncadd [#allocation3], %s198
          %s201 = sshll.u32 [#allocation2], 4
          %s202 = int_to_ptr.vmem [resolvable:$true] %s201
          %204 = dma.hbm_to_vmem [thread:$0]  %s2, 16, %s202, [#allocation3]
        $region20: #{_lambda_.29} parent=11 // pred_fallthru
          _
        // Predicated region
        $region21: #{_lambda_.29} parent=11 // pred_check
          %p205 = pneg %p103
        $region22: #{_lambda_.29} parent=11 // pred_check_branch
          %207 = sbr.rel (%p205) target = $region24
        $region23: #{_lambda_.29} parent=11 // pred_region
          _
        $region24: #{_lambda_.29} parent=11 // pred_fallthru
          _
        // Predicated region
        $region25: #{_lambda_.29} parent=11 // pred_check
          %p208 = pneg %p124
        $region26: #{_lambda_.29} parent=11 // pred_check_branch
          %210 = sbr.rel (%p208) target = $region28
        $region27: #{_lambda_.29} parent=11 // pred_region
          %s212 = ssub.s32 16, 16
          %213 = vsyncadd [#allocation5], %s212
          %s215 = sshll.u32 [#allocation4], 4
          %s216 = int_to_ptr.vmem [resolvable:$true] %s215
          %218 = dma.hbm_to_vmem [thread:$0]  %s4, 16, %s216, [#allocation5]
        $region28: #{_lambda_.29} parent=11 // pred_fallthru
          _
      $region12: #{_lambda_.29} parent=5 // pred_fallthru
        _
      %p219 = scmp.lt.s32.totalorder %s14, 2
      // Predicated region
      $region29: #{_lambda_.29} parent=5 // pred_check
        %p220 = pneg %p219
      $region30: #{_lambda_.29} parent=5 // pred_check_branch
        %222 = sbr.rel (%p220) target = $region32
      $region31: #{_lambda_.29} parent=5 // pred_region
        // Predicated region
        $region33: #{_lambda_.29} parent=31 // pred_check
          %p223 = pneg %p34
        $region34: #{_lambda_.29} parent=31 // pred_check_branch
          %225 = sbr.rel (%p223) target = $region36
        $region35: #{_lambda_.29} parent=31 // pred_region
          %s226 = smul.u32 2, %s14
          %p227 = scmp.lt.s32.totalorder %s226, 3
          %s228 = scalar_select %p227, %s226, 3
          %s229 = smul.addr %s228, 4
          %s230 = scalar_lea.vmem %s0, %s229
          %s231 = smul.u32 2, %s14
        $region36: #{_lambda_.29} parent=31 // pred_fallthru
          _
        // Predicated region
        $region37: #{_lambda_.29} parent=31 // pred_check
          %p232 = pneg %p144
        $region38: #{_lambda_.29} parent=31 // pred_check_branch
          %234 = sbr.rel (%p232) target = $region40
        $region39: #{_lambda_.29} parent=31 // pred_region
          %s235 = smul.u32 2, %s14
          %p236 = scmp.lt.s32.totalorder %s235, 3
          %s237 = scalar_select %p236, %s235, 3
          %s238 = smul.addr %s237, 4
          %s239 = scalar_lea.vmem %s5, %s238
          %s240 = smul.u32 2, %s14
        $region40: #{_lambda_.29} parent=31 // pred_fallthru
          _
      $region32: #{_lambda_.29} parent=5 // pred_fallthru
        _
      %p241 = scmp.le.s32.totalorder 1, %s14
      %p242 = scmp.lt.s32.totalorder %s14, 3
      %p243 = pnand %p241, %p242
      %p244 = pneg %p243
      // Predicated region
      $region41: #{_lambda_.29} parent=5 // pred_check
        _
      $region42: #{_lambda_.29} parent=5 // pred_check_branch
        %246 = sbr.rel (%p243) target = $region44
      $region43: #{_lambda_.29} parent=5 // pred_region
        %s247 = ssub.s32 %s14, 1
        // Predicated region
        $region45: #{_lambda_.29} parent=43 // pred_check
          %p248 = pneg %p82
        $region46: #{_lambda_.29} parent=43 // pred_check_branch
          %250 = sbr.rel (%p248) target = $region48
        $region47: #{_lambda_.29} parent=43 // pred_region
          %251 = dma.done [#allocation3], 16
        $region48: #{_lambda_.29} parent=43 // pred_fallthru
          _
        // Predicated region
        $region49: #{_lambda_.29} parent=43 // pred_check
          %p252 = pneg %p124
        $region50: #{_lambda_.29} parent=43 // pred_check_branch
          %254 = sbr.rel (%p252) target = $region52
        $region51: #{_lambda_.29} parent=43 // pred_region
          %255 = dma.done [#allocation5], 16
        $region52: #{_lambda_.29} parent=43 // pred_fallthru
          _
        %s256 = smul.u32 2, %s19
        %p257 = scmp.lt.s32.totalorder %s256, 3
        %s258 = scalar_select %p257, %s256, 3
        %s259 = smul.addr %s258, 4
        %s260 = scalar_lea.vmem %s0, %s259
        %p261 = pneg %p40
        %p262 = pneg %p37
        %p263 = pneg %p61
        %p264 = pneg %p58
        %p265 = pneg %p82
        %p266 = pneg %p79
        %p267 = pneg %p103
        %p268 = pneg %p100
        %p269 = pneg %p124
        %p270 = pneg %p121
        %s271 = smul.u32 2, %s19
        %p272 = scmp.lt.s32.totalorder %s271, 3
        %s273 = scalar_select %p272, %s271, 3
        %s274 = smul.addr %s273, 4
        %s275 = scalar_lea.vmem %s5, %s274
        %p276 = pneg %p150
        %p277 = pneg %p147
        %p278 = pneg %p176
        %p279 = pneg %p173
        %s280 = smul.u32 2, %s19
        %p281 = scmp.lt.s32.totalorder %s280, 3
        %s282 = scalar_select %p281, %s280, 3
        %s283 = smul.addr %s282, 4
        %s284 = scalar_lea.vmem %s6, %s283
        %s285 = smul.u32 2, %s19
        %p286 = scmp.lt.s32.totalorder %s285, 3
        %s287 = scalar_select %p286, %s285, 3
        %s288 = smul.addr %s287, 4
        %s289 = scalar_lea.vmem %s0, %s288
        %s290 = smul.u32 2, %s19
        %s291 = smul.u32 2, %s19
        %p292 = scmp.lt.s32.totalorder %s291, 3
        %s293 = scalar_select %p292, %s291, 3
        %s294 = smul.addr %s293, 4
        %s295 = scalar_lea.vmem %s5, %s294
        %s296 = smul.u32 2, %s19
        %s297 = smul.u32 2, %s19
        %p298 = scmp.lt.s32.totalorder %s297, 3
        %s299 = scalar_select %p298, %s297, 3
        %s300 = smul.addr %s299, 4
        %s301 = scalar_lea.vmem %s6, %s300
        %s302 = smul.u32 2, %s19
        %v304 = vld [vmem:[%s289] sm:$0xf]
        %v305 = vld [vmem:[%s289 + $0x4] sm:$0xf]
        %v306 = vunpack.c.l.bf16 %v304
        %v307 = vunpack.c.l.bf16 %v305
        %v308 = vlaneseq
        %v309 = vshrl.u32 %v308, 7
        %v310 = vadd.s32 %v309, 8
        %v311 = vlaneseq
        %v312 = vand.u32 %v311, 127
        %vm313 = vcmp.lt.s32.totalorder %v309, 4
        %vm314 = vcmp.lt.s32.totalorder %v310, 4
        %v315 = vrot.slane %v306, 4
        %v316 = vrot.slane %v307, 4
        %v317 = vsel %vm313, %v315, %v316
        %v318 = vsel %vm313, %v316, %v315
        %v319 = vsel %vm313, 0.0, %v318
        %v320 = vsel %vm314, 0.0, %v317
        %vm321 = vcmp.ge.s32.totalorder %v309, 12
        %vm322 = vcmp.ge.s32.totalorder %v310, 12
        %v323 = vsel %vm321, 0.0, %v317
        %v324 = vsel %vm322, 0.0, %v318
        %vm325 = vcmp.lt.s32.totalorder %v309, 0
        %v326 = vsub.s32 0, %v309
        %v327 = vsel %vm325, %v326, %v309
        %v328 = vshrl.u32 %v327, 2
        %v329 = vand.u32 %v327, 3
        %v330 = vsub.s32 0, %v329
        %v331 = vsel %vm325, %v330, %v329
        %vm332 = vcmp.lt.s32.totalorder %v310, 0
        %v333 = vsub.s32 0, %v310
        %v334 = vsel %vm332, %v333, %v310
        %v335 = vshrl.u32 %v334, 2
        %v336 = vand.u32 %v334, 3
        %v337 = vsub.s32 0, %v336
        %v338 = vsel %vm332, %v337, %v336
        %vm339 = vcmp.ne.s32.totalorder %v331, 0
        %vm340 = vcmp.ne.s32.totalorder %v338, 0
        %vm341 = vcmp.lt.s32.totalorder %v331, 0
        %vm342 = vcmp.lt.s32.totalorder %v338, 0
        %vm343 = vmand %vm341, %vm339
        %vm344 = vmand %vm342, %vm340
        %v345 = vadd.s32 %v331, 4
        %v346 = vadd.s32 %v338, 4
        %v347 = vsel %vm343, %v345, %v331
        %v348 = vsel %vm344, %v346, %v338
        %vm349 = vcmp.eq.s32.totalorder %v347, 0
        %vm350 = vcmp.eq.s32.totalorder %v348, 0
        %v351 = vrot.slane %v306, 7
        %v352 = vrot.slane %v307, 7
        %vm353 = vcmp.lt.s32.totalorder %v309, 1
        %v354 = vsel %vm353, %v351, %v352
        %v355 = vsel %vm353, %v352, %v351
        %v356 = vsel %vm349, 0.0, %v355
        %v357 = vsel %vm350, 0.0, %v354
        %vm358 = vcmp.eq.s32.totalorder %v347, 3
        %vm359 = vcmp.eq.s32.totalorder %v348, 3
        %v360 = vrot.slane %v306, 1
        %v361 = vrot.slane %v307, 1
        %vm362 = vcmp.lt.s32.totalorder %v309, 7
        %v363 = vsel %vm362, %v360, %v361
        %v364 = vsel %vm362, %v361, %v360
        %v365 = vsel %vm358, 0.0, %v363
        %v366 = vsel %vm359, 0.0, %v364
        %vm367 = vcmp.lt.s32.totalorder %v312, 5
        %vm368 = vcmp.lt.s32.totalorder %v312, 10
        %vm369 = vcmp.lt.s32.totalorder %v312, 15
        %v370 = vsel %vm369, %v356, %v365
        %v371 = vsel %vm369, %v357, %v366
        %v372 = vsel %vm368, %v323, %v370
        %v373 = vsel %vm368, %v324, %v371
        %v374 = vsel %vm367, %v319, %v372
        %v375 = vsel %vm367, %v320, %v373
        %v376 = vpack.c.bf16 %v375, %v374
        %v379 = vunpack.c.l.b16 %v304
        %v380 = vunpack.c.l.b16 %v305
        %v381 = vpack.c.b16 %v380, %v379
        %vm382 = vcmask 162816
        %v385 = vsel %vm382, %v376, %v381
        %v386 = vld [vmem:[%s1] sm:$0xf]
        %v387 = vld [vmem:[%s1 + $0x4] sm:$0xf]
        %v388 = vld [vmem:[%s1 + $0x8] sm:$0xf]
        %v389 = vld [vmem:[%s1 + $0xc] sm:$0xf]
        %v390 = vld [vmem:[%s1 + $0x10] sm:$0xf]
        %v391 = vld [vmem:[%s1 + $0x14] sm:$0xf]
        %v392 = vld [vmem:[%s1 + $0x18] sm:$0xf]
        %v393 = vld [vmem:[%s1 + $0x1c] sm:$0xf]
        %v394 = vld [vmem:[#allocation2] sm:$0x1]
        %v396 = vlaneseq
        %v397 = vshrl.u32 %v396, 7
        %v398 = vsub.s32 0, %v397
        %v399 = vrot.slane %v394, %v398
        %v409 = vunpack.c.l.b16 %v386
        %v410 = vunpack.c.l.b16 %v387
        %v411 = vunpack.c.l.b16 %v388
        %v412 = vunpack.c.l.b16 %v389
        %v413 = vunpack.c.l.b16 %v390
        %v414 = vunpack.c.l.b16 %v391
        %v415 = vunpack.c.l.b16 %v392
        %v416 = vunpack.c.l.b16 %v393
        %v417 = vpack.c.b16 %v410, %v409
        %v418 = vpack.c.b16 %v412, %v411
        %v419 = vpack.c.b16 %v414, %v413
        %v420 = vpack.c.b16 %v416, %v415
        %vm425 = vcmask 523264
        %v426 = vsel %vm425, %v385, 0
        %428 = vmatprep.subr.bf16.mxu0 0
        %429 = vmatpush1.bf16.msra.mxu0 %v417
        %430 = vmatprep.subr.bf16.mxu0 0
        %431 = vmatpush1.bf16.msra.mxu0 %v418
        %432 = vmatprep.subr.bf16.mxu0 0
        %433 = vmatpush1.bf16.msra.mxu0 %v419
        %434 = vmatprep.subr.bf16.mxu0 0
        %435 = vmatpush1.bf16.msra.mxu0 %v420
        %436 = vmatprep.subr.bf16.mxu0 0
        %437 = vmatpush1.bf16.msra.mxu0 0
        %438 = vmatprep.subr.bf16.mxu0 0
        %439 = vmatpush1.bf16.msra.mxu0 0
        %440 = vmatprep.subr.bf16.mxu0 0
        %441 = vmatpush1.bf16.msra.mxu0 0
        %442 = vmatprep.subr.bf16.mxu0 0
        %443 = vmatpush1.bf16.msra.mxu0 0
        %444 = vmatprep.subr.bf16.mxu0 0
        %445 = vmatpush1.bf16.msra.mxu0 0
        %446 = vmatprep.subr.bf16.mxu0 0
        %447 = vmatpush1.bf16.msra.mxu0 0
        %448 = vmatprep.subr.bf16.mxu0 0
        %449 = vmatpush1.bf16.msra.mxu0 0
        %450 = vmatprep.subr.bf16.mxu0 0
        %451 = vmatpush1.bf16.msra.mxu0 0
        %452 = vmatprep.subr.bf16.mxu0 0
        %453 = vmatpush1.bf16.msra.mxu0 0
        %454 = vmatprep.subr.bf16.mxu0 0
        %455 = vmatpush1.bf16.msra.mxu0 0
        %456 = vmatprep.subr.bf16.mxu0 0
        %457 = vmatpush1.bf16.msra.mxu0 0
        %458 = vmatprep.subr.bf16.mxu0 0
        %459 = vmatpush1.bf16.msra.mxu0 0
        %460 = vmatprep.mubr.bf16.mxu0 0
        %461 = vmatmul.mubr.bf16.gmra.mrb[0].mxu0 %v426
        %v462 = vpop.f32.mrb[0].mxu0
        %v463 = vadd.f32 %v399, %v462
        %v464 = vpop.f32.mrb[0].mxu0
        %v465 = vpop.f32.mrb[0].mxu0
        %v466 = vadd.f32 %v399, %v465
        %v467 = vpop.f32.mrb[0].mxu0
        %468 = vdwg.mxu0
        %v469 = vmul.f32 %v463, 0.5
        %v470 = vmul.f32 %v466, 0.5
        %v471 = vmul.f32 %v463, 0.044715
        %v472 = vmul.f32 %v466, 0.044715
        %v473 = vmul.f32 %v471, %v463
        %v474 = vmul.f32 %v472, %v466
        %v475 = vmul.f32 %v473, %v463
        %v476 = vmul.f32 %v474, %v466
        %v477 = vadd.f32 %v463, %v475
        %v478 = vadd.f32 %v466, %v476
        %v479 = vmul.f32 %v477, 0.7978846
        %v480 = vmul.f32 %v478, 0.7978846
        %v481 = vtanh.pop %v479
        %v482 = vtanh.pop %v480
        %v483 = vadd.f32 %v481, 1.0
        %v484 = vadd.f32 %v482, 1.0
        %v485 = vmul.f32 %v469, %v483
        %v486 = vmul.f32 %v470, %v484
        %v487 = vpack.c.bf16 %v486, %v485
        %v488 = vld [vmem:[%s3] sm:$0xf]
        %v489 = vld [vmem:[%s3 + $0x4] sm:$0xf]
        %v490 = vld [vmem:[%s3 + $0x8] sm:$0xf]
        %v491 = vld [vmem:[%s3 + $0xc] sm:$0xf]
        %v492 = vld [vmem:[%s3 + $0x10] sm:$0xf]
        %v493 = vld [vmem:[%s3 + $0x14] sm:$0xf]
        %v494 = vld [vmem:[%s3 + $0x18] sm:$0xf]
        %v495 = vld [vmem:[%s3 + $0x1c] sm:$0xf]
        %v496 = vld [vmem:[%s3 + $0x20] sm:$0xf]
        %v497 = vld [vmem:[%s3 + $0x24] sm:$0xf]
        %v498 = vld [vmem:[%s3 + $0x28] sm:$0xf]
        %v499 = vld [vmem:[%s3 + $0x2c] sm:$0xf]
        %v500 = vld [vmem:[%s3 + $0x30] sm:$0xf]
        %v501 = vld [vmem:[%s3 + $0x34] sm:$0xf]
        %v502 = vld [vmem:[%s3 + $0x38] sm:$0xf]
        %v503 = vld [vmem:[%s3 + $0x3c] sm:$0xf]
        %v504 = vld [vmem:[#allocation4] sm:$0x1]
        %v506 = vlaneseq
        %v507 = vshrl.u32 %v506, 7
        %v508 = vsub.s32 0, %v507
        %v509 = vrot.slane %v504, %v508
        %v527 = vunpack.c.l.b16 %v488
        %v528 = vunpack.c.l.b16 %v489
        %v529 = vunpack.c.l.b16 %v490
        %v530 = vunpack.c.l.b16 %v491
        %v531 = vunpack.c.l.b16 %v492
        %v532 = vunpack.c.l.b16 %v493
        %v533 = vunpack.c.l.b16 %v494
        %v534 = vunpack.c.l.b16 %v495
        %v535 = vunpack.c.l.b16 %v496
        %v536 = vunpack.c.l.b16 %v497
        %v537 = vunpack.c.l.b16 %v498
        %v538 = vunpack.c.l.b16 %v499
        %v539 = vunpack.c.l.b16 %v500
        %v540 = vunpack.c.l.b16 %v501
        %v541 = vunpack.c.l.b16 %v502
        %v542 = vunpack.c.l.b16 %v503
        %v543 = vpack.c.b16 %v528, %v527
        %v544 = vpack.c.b16 %v530, %v529
        %v545 = vpack.c.b16 %v532, %v531
        %v546 = vpack.c.b16 %v534, %v533
        %v547 = vpack.c.b16 %v536, %v535
        %v548 = vpack.c.b16 %v538, %v537
        %v549 = vpack.c.b16 %v540, %v539
        %v550 = vpack.c.b16 %v542, %v541
        %559 = vmatprep.subr.bf16.mxu0 0
        %560 = vmatpush1.bf16.msra.mxu0 %v543
        %561 = vmatprep.subr.bf16.mxu0 0
        %562 = vmatpush1.bf16.msra.mxu0 %v544
        %563 = vmatprep.subr.bf16.mxu0 0
        %564 = vmatpush1.bf16.msra.mxu0 %v545
        %565 = vmatprep.subr.bf16.mxu0 0
        %566 = vmatpush1.bf16.msra.mxu0 %v546
        %567 = vmatprep.subr.bf16.mxu0 0
        %568 = vmatpush1.bf16.msra.mxu0 %v547
        %569 = vmatprep.subr.bf16.mxu0 0
        %570 = vmatpush1.bf16.msra.mxu0 %v548
        %571 = vmatprep.subr.bf16.mxu0 0
        %572 = vmatpush1.bf16.msra.mxu0 %v549
        %573 = vmatprep.subr.bf16.mxu0 0
        %574 = vmatpush1.bf16.msra.mxu0 %v550
        %575 = vmatprep.subr.bf16.mxu0 0
        %576 = vmatpush1.bf16.msra.mxu0 0
        %577 = vmatprep.subr.bf16.mxu0 0
        %578 = vmatpush1.bf16.msra.mxu0 0
        %579 = vmatprep.subr.bf16.mxu0 0
        %580 = vmatpush1.bf16.msra.mxu0 0
        %581 = vmatprep.subr.bf16.mxu0 0
        %582 = vmatpush1.bf16.msra.mxu0 0
        %583 = vmatprep.subr.bf16.mxu0 0
        %584 = vmatpush1.bf16.msra.mxu0 0
        %585 = vmatprep.subr.bf16.mxu0 0
        %586 = vmatpush1.bf16.msra.mxu0 0
        %587 = vmatprep.subr.bf16.mxu0 0
        %588 = vmatpush1.bf16.msra.mxu0 0
        %589 = vmatprep.subr.bf16.mxu0 0
        %590 = vmatpush1.bf16.msra.mxu0 0
        %591 = vmatprep.mubr.bf16.mxu0 0
        %592 = vmatmul.mubr.bf16.gmra.mrb[0].mxu0 %v487
        %v593 = vpop.f32.mrb[0].mxu0
        %v594 = vadd.f32 %v509, %v593
        %v595 = vpop.f32.mrb[0].mxu0
        %v596 = vpop.f32.mrb[0].mxu0
        %v597 = vadd.f32 %v509, %v596
        %v598 = vpop.f32.mrb[0].mxu0
        %599 = vdwg.mxu0
        %v600 = vadd.f32 %v594, %v306
        %v601 = vadd.f32 %v597, %v307
        %v602 = vld [vmem:[%s295] sm:$0xf]
        %v603 = vld [vmem:[%s295 + $0x4] sm:$0xf]
        %v604 = vunpack.c.l.bf16 %v602
        %v605 = vunpack.c.l.bf16 %v603
        %v606 = vadd.f32 %v600, %v604
        %v607 = vadd.f32 %v601, %v605
        %v608 = vpack.c.bf16 %v607, %v606
        %v610 = vunpack.c.l.b16 %v608
        %v611 = vunpack.c.h.b16 %v608
        %v612 = vpack.c.b16 %v610, %v610
        %v613 = vpack.c.b16 %v611, %v611
        %vm616 = vcmask 519168
        %617 = vst.msk [vmem:[%s301] sm:$0xf] %vm616, %v612
        %618 = vst.msk [vmem:[%s301 + $0x4] sm:$0xf] %vm616, %v613
        %s619 = smul.u32 2, %s19
        %p620 = scmp.lt.s32.totalorder %s619, 3
        %s621 = scalar_select %p620, %s619, 3
        %s622 = smul.addr %s621, 4
        %s623 = scalar_lea.vmem %s6, %s622
        // Predicated region
        $region53: #{_lambda_.29} parent=43 // pred_check
          %p624 = pneg %p173
        $region54: #{_lambda_.29} parent=43 // pred_check_branch
          %626 = sbr.rel (%p624) target = $region56
        $region55: #{_lambda_.29} parent=43 // pred_region
          %s627 = smul.u32 2, %s19
        $region56: #{_lambda_.29} parent=43 // pred_fallthru
          _
      $region44: #{_lambda_.29} parent=5 // pred_fallthru
        _
      %p628 = scmp.le.s32.totalorder 2, %s14
      // Predicated region
      $region57: #{_lambda_.29} parent=5 // pred_check
        %p629 = pneg %p628
      $region58: #{_lambda_.29} parent=5 // pred_check_branch
        %631 = sbr.rel (%p629) target = $region60
      $region59: #{_lambda_.29} parent=5 // pred_region
        %s632 = ssub.s32 %s14, 2
        // Predicated region
        $region61: #{_lambda_.29} parent=59 // pred_check
          %p633 = pneg %p179
        $region62: #{_lambda_.29} parent=59 // pred_check_branch
          %635 = sbr.rel (%p633) target = $region64
        $region63: #{_lambda_.29} parent=59 // pred_region
          %s636 = smul.u32 2, %s20
          %p637 = scmp.lt.s32.totalorder %s636, 3
          %s638 = scalar_select %p637, %s636, 3
          %s639 = smul.addr %s638, 4
          %s640 = scalar_lea.vmem %s6, %s639
        $region64: #{_lambda_.29} parent=59 // pred_fallthru
          _
      $region60: #{_lambda_.29} parent=5 // pred_fallthru
        _
    $region6: #{_lambda_.29} parent=1 // loop_footer
      %s18 = sadd.s32 1, %s14
    $region7: #{_lambda_.29} parent=1 // loop_footer_branch
      %13 = sbr.rel target = $region3
    $region8: #{_lambda_.29} parent=1 // loop_exit
      _
    %641 = vsyncpa [#allocation3], 1
    %s642 = scalar_lea.sflag [#allocation3], 1
    %643 = vsyncpa %s642, 1
    %644 = vsyncpa [#allocation5], 1

// kernel: _lambda_.31
$region0: #{_lambda_.31}
  #allocation0 [shape = 'u32[]', space=smem, size = 0x4, offset = 0x4, fixed_abs, tag = 'smem constant byte address 0x4 - core index']
  #allocation1 [shape = 'u32[144,128]{1,0:T(1,128)}', space=vmem, size = 0x12000, scoped, tag = 'internal scratch']
  %s0 = inlined_call_operand.vmem [shape: bf16[128,32], index: 0, kind: input, shape index: {}]
  %s1 = inlined_call_operand.vmem [shape: bf16[32,64], index: 1, kind: input, shape index: {}]
  %s2 = inlined_call_operand.hbm [shape: f32[1,64], index: 2, kind: input, shape index: {}]
  %s3 = inlined_call_operand.vmem [shape: bf16[64,32], index: 3, kind: input, shape index: {}]
  %s4 = inlined_call_operand.hbm [shape: f32[1,32], index: 4, kind: input, shape index: {}]
  %s5 = inlined_call_operand.vmem [shape: bf16[128,32], index: 5, kind: output, shape index: {}]
  %s6 = sld [smem:[#allocation0]]
  $region61: #{_lambda_.31} parent=0
    _
  %s8 = ssub.s32 1, %s6
  %s9 = scalar_select 0, %s8, %s6
  $region1: #{_lambda_.31} parent=0
    #allocation2 [shape = 'u8[512]{0}', space=vmem, size = 0x400, scoped, tag = 'input window, operand 2, single buffered']
    #allocation3 [shape = 's32[2]{0}', space=sflag, size = 0x8, scoped, tag = 'scoped memory for _lambda_.31']
    #allocation4 [shape = 'u8[512]{0}', space=vmem, size = 0x400, scoped, tag = 'input window, operand 4, single buffered']
    #allocation5 [shape = 's32[1]{0}', space=sflag, size = 0x4, scoped, tag = 'scoped memory for _lambda_.31']
    %10 = vsyncpa [#allocation3], 0
    %11 = vsyncpa [#allocation5], 0
    loop: start=0, step=1, limit=4
    $region2: #{_lambda_.31} parent=1 // loop_pre_header
      _
    $region3: #{_lambda_.31} parent=1 // loop_header
      %s13 = sphi 0, %s17
      %p14 = scmp.ge.s32.totalorder %s13, 4
      %s23 = sphi 0, %s25
      %s26 = sphi 0, %s23
      %s27 = sphi 0, %s26
      %s43 = sphi 0, %s27
      %s47 = sphi 0, %s47
      %s49 = sphi 0, %s47
      %s50 = sphi 0, %s49
      %s64 = sphi 0, %s50
      %s68 = sphi 0, %s68
      %s70 = sphi 0, %s68
      %s71 = sphi 0, %s70
      %s85 = sphi 0, %s71
      %s89 = sphi 0, %s89
      %s91 = sphi 0, %s89
      %s92 = sphi 0, %s91
      %s106 = sphi 0, %s92
      %s110 = sphi 0, %s110
      %s112 = sphi 0, %s110
      %s113 = sphi 0, %s112
      %s127 = sphi 0, %s113
      %s133 = sphi 0, %s135
      %s136 = sphi 0, %s133
      %s137 = sphi 0, %s136
      %s153 = sphi 0, %s137
    $region4: #{_lambda_.31} parent=1 // loop_header_branch
      %16 = sbr.rel (%p14) target = $region8
    $region5: #{_lambda_.31} parent=1 // loop_body
      %s18 = ssub.s32 %s13, 1
      %s19 = ssub.s32 %s13, 2
      %s20 = sadd.s32 %s13, 1
      %s21 = ssub.s32 %s13, %s20
      %p22 = scmp.eq.s32.totalorder %s21, 0
      %s24 = sadd.s32 %s23, 1
      %s25 = scalar_select %p22, %s23, %s24
      %p28 = pneg %p22
      %p29 = scmp.eq.s32.totalorder %s13, 1
      %p30 = por %p28, %p29
      %p31 = scmp.ne.s32.totalorder %s23, %s26
      %p32 = scmp.eq.s32.totalorder %s13, 0
      %p33 = por %p31, %p32
      %p34 = scmp.ne.s32.totalorder %s23, %s26
      %p35 = scmp.eq.s32.totalorder %s18, 1
      %p36 = por %p34, %p35
      %p37 = scmp.ne.s32.totalorder %s26, %s27
      %p38 = scmp.eq.s32.totalorder %s18, 0
      %p39 = por %p37, %p38
      %p40 = scmp.ne.s32.totalorder %s26, %s27
      %p41 = scmp.eq.s32.totalorder %s19, 1
      %p42 = por %p40, %p41
      %p44 = scmp.ne.s32.totalorder %s27, %s43
      %p45 = scmp.eq.s32.totalorder %s19, 0
      %p46 = por %p44, %p45
      %s48 = sadd.s32 %s47, 1
      %p51 = scmp.eq.s32.totalorder %s13, 1
      %p52 = scmp.ne.s32.totalorder %s47, %s49
      %p53 = scmp.eq.s32.totalorder %s13, 0
      %p54 = por %p52, %p53
      %p55 = scmp.ne.s32.totalorder %s47, %s49
      %p56 = scmp.eq.s32.totalorder %s18, 1
      %p57 = por %p55, %p56
      %p58 = scmp.ne.s32.totalorder %s49, %s50
      %p59 = scmp.eq.s32.totalorder %s18, 0
      %p60 = por %p58, %p59
      %p61 = scmp.ne.s32.totalorder %s49, %s50
      %p62 = scmp.eq.s32.totalorder %s19, 1
      %p63 = por %p61, %p62
      %p65 = scmp.ne.s32.totalorder %s50, %s64
      %p66 = scmp.eq.s32.totalorder %s19, 0
      %p67 = por %p65, %p66
      %s69 = sadd.s32 %s68, 1
      %p72 = scmp.eq.s32.totalorder %s13, 1
      %p73 = scmp.ne.s32.totalorder %s68, %s70
      %p74 = scmp.eq.s32.totalorder %s13, 0
      %p75 = por %p73, %p74
      %p76 = scmp.ne.s32.totalorder %s68, %s70
      %p77 = scmp.eq.s32.totalorder %s18, 1
      %p78 = por %p76, %p77
      %p79 = scmp.ne.s32.totalorder %s70, %s71
      %p80 = scmp.eq.s32.totalorder %s18, 0
      %p81 = por %p79, %p80
      %p82 = scmp.ne.s32.totalorder %s70, %s71
      %p83 = scmp.eq.s32.totalorder %s19, 1
      %p84 = por %p82, %p83
      %p86 = scmp.ne.s32.totalorder %s71, %s85
      %p87 = scmp.eq.s32.totalorder %s19, 0
      %p88 = por %p86, %p87
      %s90 = sadd.s32 %s89, 1
      %p93 = scmp.eq.s32.totalorder %s13, 1
      %p94 = scmp.ne.s32.totalorder %s89, %s91
      %p95 = scmp.eq.s32.totalorder %s13, 0
      %p96 = por %p94, %p95
      %p97 = scmp.ne.s32.totalorder %s89, %s91
      %p98 = scmp.eq.s32.totalorder %s18, 1
      %p99 = por %p97, %p98
      %p100 = scmp.ne.s32.totalorder %s91, %s92
      %p101 = scmp.eq.s32.totalorder %s18, 0
      %p102 = por %p100, %p101
      %p103 = scmp.ne.s32.totalorder %s91, %s92
      %p104 = scmp.eq.s32.totalorder %s19, 1
      %p105 = por %p103, %p104
      %p107 = scmp.ne.s32.totalorder %s92, %s106
      %p108 = scmp.eq.s32.totalorder %s19, 0
      %p109 = por %p107, %p108
      %s111 = sadd.s32 %s110, 1
      %p114 = scmp.eq.s32.totalorder %s13, 1
      %p115 = scmp.ne.s32.totalorder %s110, %s112
      %p116 = scmp.eq.s32.totalorder %s13, 0
      %p117 = por %p115, %p116
      %p118 = scmp.ne.s32.totalorder %s110, %s112
      %p119 = scmp.eq.s32.totalorder %s18, 1
      %p120 = por %p118, %p119
      %p121 = scmp.ne.s32.totalorder %s112, %s113
      %p122 = scmp.eq.s32.totalorder %s18, 0
      %p123 = por %p121, %p122
      %p124 = scmp.ne.s32.totalorder %s112, %s113
      %p125 = scmp.eq.s32.totalorder %s19, 1
      %p126 = por %p124, %p125
      %p128 = scmp.ne.s32.totalorder %s113, %s127
      %p129 = scmp.eq.s32.totalorder %s19, 0
      %p130 = por %p128, %p129
      %s131 = ssub.s32 %s13, %s20
      %p132 = scmp.eq.s32.totalorder %s131, 0
      %s134 = sadd.s32 %s133, 1
      %s135 = scalar_select %p132, %s133, %s134
      %p138 = pneg %p132
      %p139 = scmp.eq.s32.totalorder %s13, 1
      %p140 = por %p138, %p139
      %p141 = scmp.ne.s32.totalorder %s133, %s136
      %p142 = scmp.eq.s32.totalorder %s13, 0
      %p143 = por %p141, %p142
      %p144 = scmp.ne.s32.totalorder %s133, %s136
      %p145 = scmp.eq.s32.totalorder %s18, 1
      %p146 = por %p144, %p145
      %p147 = scmp.ne.s32.totalorder %s136, %s137
      %p148 = scmp.eq.s32.totalorder %s18, 0
      %p149 = por %p147, %p148
      %p150 = scmp.ne.s32.totalorder %s136, %s137
      %p151 = scmp.eq.s32.totalorder %s19, 1
      %p152 = por %p150, %p151
      %p154 = scmp.ne.s32.totalorder %s137, %s153
      %p155 = scmp.eq.s32.totalorder %s19, 0
      %p156 = por %p154, %p155
      %p157 = scmp.le.s32.totalorder 1, %s13
      %p158 = scmp.lt.s32.totalorder %s13, 3
      %p159 = pnand %p157, %p158
      %p160 = pneg %p159
      // Predicated region
      $region9: #{_lambda_.31} parent=5 // pred_check
        _
      $region10: #{_lambda_.31} parent=5 // pred_check_branch
        %162 = sbr.rel (%p159) target = $region12
      $region11: #{_lambda_.31} parent=5 // pred_region
        %s163 = ssub.s32 %s13, 1
        // Predicated region
        $region13: #{_lambda_.31} parent=11 // pred_check
          %p164 = pneg %p60
        $region14: #{_lambda_.31} parent=11 // pred_check_branch
          %166 = sbr.rel (%p164) target = $region16
        $region15: #{_lambda_.31} parent=11 // pred_region
          _
        $region16: #{_lambda_.31} parent=11 // pred_fallthru
          _
        // Predicated region
        $region17: #{_lambda_.31} parent=11 // pred_check
          %p167 = pneg %p81
        $region18: #{_lambda_.31} parent=11 // pred_check_branch
          %169 = sbr.rel (%p167) target = $region20
        $region19: #{_lambda_.31} parent=11 // pred_region
          %s171 = ssub.s32 16, 16
          %172 = vsyncadd [#allocation3], %s171
          %s174 = sshll.u32 [#allocation2], 4
          %s175 = int_to_ptr.vmem [resolvable:$true] %s174
          %177 = dma.hbm_to_vmem [thread:$0]  %s2, 16, %s175, [#allocation3]
        $region20: #{_lambda_.31} parent=11 // pred_fallthru
          _
        // Predicated region
        $region21: #{_lambda_.31} parent=11 // pred_check
          %p178 = pneg %p102
        $region22: #{_lambda_.31} parent=11 // pred_check_branch
          %180 = sbr.rel (%p178) target = $region24
        $region23: #{_lambda_.31} parent=11 // pred_region
          _
        $region24: #{_lambda_.31} parent=11 // pred_fallthru
          _
        // Predicated region
        $region25: #{_lambda_.31} parent=11 // pred_check
          %p181 = pneg %p123
        $region26: #{_lambda_.31} parent=11 // pred_check_branch
          %183 = sbr.rel (%p181) target = $region28
        $region27: #{_lambda_.31} parent=11 // pred_region
          %s185 = ssub.s32 16, 16
          %186 = vsyncadd [#allocation5], %s185
          %s188 = sshll.u32 [#allocation4], 4
          %s189 = int_to_ptr.vmem [resolvable:$true] %s188
          %191 = dma.hbm_to_vmem [thread:$0]  %s4, 16, %s189, [#allocation5]
        $region28: #{_lambda_.31} parent=11 // pred_fallthru
          _
      $region12: #{_lambda_.31} parent=5 // pred_fallthru
        _
      %p192 = scmp.lt.s32.totalorder %s13, 2
      // Predicated region
      $region29: #{_lambda_.31} parent=5 // pred_check
        %p193 = pneg %p192
      $region30: #{_lambda_.31} parent=5 // pred_check_branch
        %195 = sbr.rel (%p193) target = $region32
      $region31: #{_lambda_.31} parent=5 // pred_region
        // Predicated region
        $region33: #{_lambda_.31} parent=31 // pred_check
          %p196 = pneg %p33
        $region34: #{_lambda_.31} parent=31 // pred_check_branch
          %198 = sbr.rel (%p196) target = $region36
        $region35: #{_lambda_.31} parent=31 // pred_region
          %s199 = smul.u32 8, %s13
          %p200 = scmp.lt.s32.totalorder %s199, 15
          %s201 = scalar_select %p200, %s199, 15
          %s202 = smul.addr %s201, 4
          %s203 = scalar_lea.vmem %s0, %s202
          %s204 = smul.u32 8, %s13
        $region36: #{_lambda_.31} parent=31 // pred_fallthru
          _
      $region32: #{_lambda_.31} parent=5 // pred_fallthru
        _
      %p205 = scmp.le.s32.totalorder 1, %s13
      %p206 = scmp.lt.s32.totalorder %s13, 3
      %p207 = pnand %p205, %p206
      %p208 = pneg %p207
      // Predicated region
      $region37: #{_lambda_.31} parent=5 // pred_check
        _
      $region38: #{_lambda_.31} parent=5 // pred_check_branch
        %210 = sbr.rel (%p207) target = $region40
      $region39: #{_lambda_.31} parent=5 // pred_region
        %s211 = ssub.s32 %s13, 1
        // Predicated region
        $region41: #{_lambda_.31} parent=39 // pred_check
          %p212 = pneg %p81
        $region42: #{_lambda_.31} parent=39 // pred_check_branch
          %214 = sbr.rel (%p212) target = $region44
        $region43: #{_lambda_.31} parent=39 // pred_region
          %215 = dma.done [#allocation3], 16
        $region44: #{_lambda_.31} parent=39 // pred_fallthru
          _
        // Predicated region
        $region45: #{_lambda_.31} parent=39 // pred_check
          %p216 = pneg %p123
        $region46: #{_lambda_.31} parent=39 // pred_check_branch
          %218 = sbr.rel (%p216) target = $region48
        $region47: #{_lambda_.31} parent=39 // pred_region
          %219 = dma.done [#allocation5], 16
        $region48: #{_lambda_.31} parent=39 // pred_fallthru
          _
        %s220 = smul.u32 8, %s18
        %p221 = scmp.lt.s32.totalorder %s220, 15
        %s222 = scalar_select %p221, %s220, 15
        %s223 = smul.addr %s222, 4
        %s224 = scalar_lea.vmem %s0, %s223
        %p225 = pneg %p39
        %p226 = pneg %p36
        %p227 = pneg %p60
        %p228 = pneg %p57
        %p229 = pneg %p81
        %p230 = pneg %p78
        %p231 = pneg %p102
        %p232 = pneg %p99
        %p233 = pneg %p123
        %p234 = pneg %p120
        %p235 = pneg %p149
        %p236 = pneg %p146
        %s237 = smul.u32 8, %s18
        %p238 = scmp.lt.s32.totalorder %s237, 15
        %s239 = scalar_select %p238, %s237, 15
        %s240 = smul.addr %s239, 4
        %s241 = scalar_lea.vmem %s5, %s240
        %s242 = smul.u32 8, %s18
        %p243 = scmp.lt.s32.totalorder %s242, 15
        %s244 = scalar_select %p243, %s242, 15
        %s245 = smul.addr %s244, 4
        %s246 = scalar_lea.vmem %s0, %s245
        %s247 = smul.u32 8, %s18
        %s248 = smul.u32 8, %s18
        %p249 = scmp.lt.s32.totalorder %s248, 15
        %s250 = scalar_select %p249, %s248, 15
        %s251 = smul.addr %s250, 4
        %s252 = scalar_lea.vmem %s5, %s251
        %s253 = smul.u32 8, %s18
        %v255 = vld [vmem:[%s246] sm:$0xf]
        %v256 = vld [vmem:[%s246 + $0x4] sm:$0xf]
        %v257 = vld [vmem:[%s246 + $0x8] sm:$0xf]
        %v258 = vld [vmem:[%s246 + $0xc] sm:$0xf]
        %v259 = vld [vmem:[%s246 + $0x10] sm:$0xf]
        %v260 = vld [vmem:[%s246 + $0x14] sm:$0xf]
        %v261 = vld [vmem:[%s246 + $0x18] sm:$0xf]
        %v262 = vld [vmem:[%s246 + $0x1c] sm:$0xf]
        %v263 = vunpack.c.l.bf16 %v255
        %v264 = vunpack.c.l.bf16 %v256
        %v265 = vunpack.c.l.bf16 %v257
        %v266 = vunpack.c.l.bf16 %v258
        %v267 = vunpack.c.l.bf16 %v259
        %v268 = vunpack.c.l.bf16 %v260
        %v269 = vunpack.c.l.bf16 %v261
        %v270 = vunpack.c.l.bf16 %v262
        %v271 = vlaneseq
        %v272 = vshrl.u32 %v271, 7
        %v273 = vadd.s32 %v272, 8
        %v274 = vadd.s32 %v272, 16
        %v275 = vadd.s32 %v272, 24
        %v276 = vadd.s32 %v272, 32
        %v277 = vadd.s32 %v272, 40
        %v278 = vadd.s32 %v272, 48
        %v279 = vadd.s32 %v272, 56
        %v280 = vlaneseq
        %v281 = vand.u32 %v280, 127
        %vm282 = vcmp.lt.s32.totalorder %v272, 8
        %vm283 = vcmp.lt.s32.totalorder %v273, 8
        %vm284 = vcmp.lt.s32.totalorder %v274, 8
        %vm285 = vcmp.lt.s32.totalorder %v275, 8
        %vm286 = vcmp.lt.s32.totalorder %v276, 8
        %vm287 = vcmp.lt.s32.totalorder %v277, 8
        %vm288 = vcmp.lt.s32.totalorder %v278, 8
        %vm289 = vcmp.lt.s32.totalorder %v279, 8
        %v290 = vsel %vm282, 0.0, %v270
        %v291 = vsel %vm283, 0.0, %v263
        %v292 = vsel %vm284, 0.0, %v264
        %v293 = vsel %vm285, 0.0, %v265
        %v294 = vsel %vm286, 0.0, %v266
        %v295 = vsel %vm287, 0.0, %v267
        %v296 = vsel %vm288, 0.0, %v268
        %v297 = vsel %vm289, 0.0, %v269
        %vm298 = vcmp.ge.s32.totalorder %v272, 56
        %vm299 = vcmp.ge.s32.totalorder %v273, 56
        %vm300 = vcmp.ge.s32.totalorder %v274, 56
        %vm301 = vcmp.ge.s32.totalorder %v275, 56
        %vm302 = vcmp.ge.s32.totalorder %v276, 56
        %vm303 = vcmp.ge.s32.totalorder %v277, 56
        %vm304 = vcmp.ge.s32.totalorder %v278, 56
        %vm305 = vcmp.ge.s32.totalorder %v279, 56
        %v306 = vsel %vm298, 0.0, %v264
        %v307 = vsel %vm299, 0.0, %v265
        %v308 = vsel %vm300, 0.0, %v266
        %v309 = vsel %vm301, 0.0, %v267
        %v310 = vsel %vm302, 0.0, %v268
        %v311 = vsel %vm303, 0.0, %v269
        %v312 = vsel %vm304, 0.0, %v270
        %v313 = vsel %vm305, 0.0, %v263
        %vm314 = vcmp.lt.s32.totalorder %v272, 0
        %v315 = vsub.s32 0, %v272
        %v316 = vsel %vm314, %v315, %v272
        %v317 = vshrl.u32 %v316, 3
        %v318 = vand.u32 %v316, 7
        %v319 = vsub.s32 0, %v318
        %v320 = vsel %vm314, %v319, %v318
        %vm321 = vcmp.lt.s32.totalorder %v273, 0
        %v322 = vsub.s32 0, %v273
        %v323 = vsel %vm321, %v322, %v273
        %v324 = vshrl.u32 %v323, 3
        %v325 = vand.u32 %v323, 7
        %v326 = vsub.s32 0, %v325
        %v327 = vsel %vm321, %v326, %v325
        %vm328 = vcmp.lt.s32.totalorder %v274, 0
        %v329 = vsub.s32 0, %v274
        %v330 = vsel %vm328, %v329, %v274
        %v331 = vshrl.u32 %v330, 3
        %v332 = vand.u32 %v330, 7
        %v333 = vsub.s32 0, %v332
        %v334 = vsel %vm328, %v333, %v332
        %vm335 = vcmp.lt.s32.totalorder %v275, 0
        %v336 = vsub.s32 0, %v275
        %v337 = vsel %vm335, %v336, %v275
        %v338 = vshrl.u32 %v337, 3
        %v339 = vand.u32 %v337, 7
        %v340 = vsub.s32 0, %v339
        %v341 = vsel %vm335, %v340, %v339
        %vm342 = vcmp.lt.s32.totalorder %v276, 0
        %v343 = vsub.s32 0, %v276
        %v344 = vsel %vm342, %v343, %v276
        %v345 = vshrl.u32 %v344, 3
        %v346 = vand.u32 %v344, 7
        %v347 = vsub.s32 0, %v346
        %v348 = vsel %vm342, %v347, %v346
        %vm349 = vcmp.lt.s32.totalorder %v277, 0
        %v350 = vsub.s32 0, %v277
        %v351 = vsel %vm349, %v350, %v277
        %v352 = vshrl.u32 %v351, 3
        %v353 = vand.u32 %v351, 7
        %v354 = vsub.s32 0, %v353
        %v355 = vsel %vm349, %v354, %v353
        %vm356 = vcmp.lt.s32.totalorder %v278, 0
        %v357 = vsub.s32 0, %v278
        %v358 = vsel %vm356, %v357, %v278
        %v359 = vshrl.u32 %v358, 3
        %v360 = vand.u32 %v358, 7
        %v361 = vsub.s32 0, %v360
        %v362 = vsel %vm356, %v361, %v360
        %vm363 = vcmp.lt.s32.totalorder %v279, 0
        %v364 = vsub.s32 0, %v279
        %v365 = vsel %vm363, %v364, %v279
        %v366 = vshrl.u32 %v365, 3
        %v367 = vand.u32 %v365, 7
        %v368 = vsub.s32 0, %v367
        %v369 = vsel %vm363, %v368, %v367
        %vm370 = vcmp.ne.s32.totalorder %v320, 0
        %vm371 = vcmp.ne.s32.totalorder %v327, 0
        %vm372 = vcmp.ne.s32.totalorder %v334, 0
        %vm373 = vcmp.ne.s32.totalorder %v341, 0
        %vm374 = vcmp.ne.s32.totalorder %v348, 0
        %vm375 = vcmp.ne.s32.totalorder %v355, 0
        %vm376 = vcmp.ne.s32.totalorder %v362, 0
        %vm377 = vcmp.ne.s32.totalorder %v369, 0
        %vm378 = vcmp.lt.s32.totalorder %v320, 0
        %vm379 = vcmp.lt.s32.totalorder %v327, 0
        %vm380 = vcmp.lt.s32.totalorder %v334, 0
        %vm381 = vcmp.lt.s32.totalorder %v341, 0
        %vm382 = vcmp.lt.s32.totalorder %v348, 0
        %vm383 = vcmp.lt.s32.totalorder %v355, 0
        %vm384 = vcmp.lt.s32.totalorder %v362, 0
        %vm385 = vcmp.lt.s32.totalorder %v369, 0
        %vm386 = vmand %vm378, %vm370
        %vm387 = vmand %vm379, %vm371
        %vm388 = vmand %vm380, %vm372
        %vm389 = vmand %vm381, %vm373
        %vm390 = vmand %vm382, %vm374
        %vm391 = vmand %vm383, %vm375
        %vm392 = vmand %vm384, %vm376
        %vm393 = vmand %vm385, %vm377
        %v394 = vadd.s32 %v320, 8
        %v395 = vadd.s32 %v327, 8
        %v396 = vadd.s32 %v334, 8
        %v397 = vadd.s32 %v341, 8
        %v398 = vadd.s32 %v348, 8
        %v399 = vadd.s32 %v355, 8
        %v400 = vadd.s32 %v362, 8
        %v401 = vadd.s32 %v369, 8
        %v402 = vsel %vm386, %v394, %v320
        %v403 = vsel %vm387, %v395, %v327
        %v404 = vsel %vm388, %v396, %v334
        %v405 = vsel %vm389, %v397, %v341
        %v406 = vsel %vm390, %v398, %v348
        %v407 = vsel %vm391, %v399, %v355
        %v408 = vsel %vm392, %v400, %v362
        %v409 = vsel %vm393, %v401, %v369
        %vm410 = vcmp.eq.s32.totalorder %v402, 0
        %vm411 = vcmp.eq.s32.totalorder %v403, 0
        %vm412 = vcmp.eq.s32.totalorder %v404, 0
        %vm413 = vcmp.eq.s32.totalorder %v405, 0
        %vm414 = vcmp.eq.s32.totalorder %v406, 0
        %vm415 = vcmp.eq.s32.totalorder %v407, 0
        %vm416 = vcmp.eq.s32.totalorder %v408, 0
        %vm417 = vcmp.eq.s32.totalorder %v409, 0
        %v418 = vrot.slane %v263, 7
        %v419 = vrot.slane %v264, 7
        %v420 = vrot.slane %v265, 7
        %v421 = vrot.slane %v266, 7
        %v422 = vrot.slane %v267, 7
        %v423 = vrot.slane %v268, 7
        %v424 = vrot.slane %v269, 7
        %v425 = vrot.slane %v270, 7
        %vm426 = vcmp.lt.s32.totalorder %v272, 1
        %v427 = vsel %vm426, %v424, %v425
        %v428 = vsel %vm426, %v423, %v424
        %v429 = vsel %vm426, %v422, %v423
        %v430 = vsel %vm426, %v421, %v422
        %v431 = vsel %vm426, %v420, %v421
        %v432 = vsel %vm426, %v419, %v420
        %v433 = vsel %vm426, %v418, %v419
        %v434 = vsel %vm426, %v425, %v418
        %v435 = vsel %vm410, 0.0, %v434
        %v436 = vsel %vm411, 0.0, %v433
        %v437 = vsel %vm412, 0.0, %v432
        %v438 = vsel %vm413, 0.0, %v431
        %v439 = vsel %vm414, 0.0, %v430
        %v440 = vsel %vm415, 0.0, %v429
        %v441 = vsel %vm416, 0.0, %v428
        %v442 = vsel %vm417, 0.0, %v427
        %vm443 = vcmp.eq.s32.totalorder %v402, 7
        %vm444 = vcmp.eq.s32.totalorder %v403, 7
        %vm445 = vcmp.eq.s32.totalorder %v404, 7
        %vm446 = vcmp.eq.s32.totalorder %v405, 7
        %vm447 = vcmp.eq.s32.totalorder %v406, 7
        %vm448 = vcmp.eq.s32.totalorder %v407, 7
        %vm449 = vcmp.eq.s32.totalorder %v408, 7
        %vm450 = vcmp.eq.s32.totalorder %v409, 7
        %v451 = vrot.slane %v263, 1
        %v452 = vrot.slane %v264, 1
        %v453 = vrot.slane %v265, 1
        %v454 = vrot.slane %v266, 1
        %v455 = vrot.slane %v267, 1
        %v456 = vrot.slane %v268, 1
        %v457 = vrot.slane %v269, 1
        %v458 = vrot.slane %v270, 1
        %vm459 = vcmp.lt.s32.totalorder %v272, 7
        %v460 = vsel %vm459, %v457, %v458
        %v461 = vsel %vm459, %v456, %v457
        %v462 = vsel %vm459, %v455, %v456
        %v463 = vsel %vm459, %v454, %v455
        %v464 = vsel %vm459, %v453, %v454
        %v465 = vsel %vm459, %v452, %v453
        %v466 = vsel %vm459, %v451, %v452
        %v467 = vsel %vm459, %v458, %v451
        %v468 = vsel %vm443, 0.0, %v466
        %v469 = vsel %vm444, 0.0, %v465
        %v470 = vsel %vm445, 0.0, %v464
        %v471 = vsel %vm446, 0.0, %v463
        %v472 = vsel %vm447, 0.0, %v462
        %v473 = vsel %vm448, 0.0, %v461
        %v474 = vsel %vm449, 0.0, %v460
        %v475 = vsel %vm450, 0.0, %v467
        %vm476 = vcmp.lt.s32.totalorder %v281, 2
        %vm477 = vcmp.lt.s32.totalorder %v281, 4
        %vm478 = vcmp.lt.s32.totalorder %v281, 6
        %v479 = vsel %vm478, %v435, %v468
        %v480 = vsel %vm478, %v436, %v469
        %v481 = vsel %vm478, %v437, %v470
        %v482 = vsel %vm478, %v438, %v471
        %v483 = vsel %vm478, %v439, %v472
        %v484 = vsel %vm478, %v440, %v473
        %v485 = vsel %vm478, %v441, %v474
        %v486 = vsel %vm478, %v442, %v475
        %v487 = vsel %vm477, %v306, %v479
        %v488 = vsel %vm477, %v307, %v480
        %v489 = vsel %vm477, %v308, %v481
        %v490 = vsel %vm477, %v309, %v482
        %v491 = vsel %vm477, %v310, %v483
        %v492 = vsel %vm477, %v311, %v484
        %v493 = vsel %vm477, %v312, %v485
        %v494 = vsel %vm477, %v313, %v486
        %v495 = vsel %vm476, %v290, %v487
        %v496 = vsel %vm476, %v291, %v488
        %v497 = vsel %vm476, %v292, %v489
        %v498 = vsel %vm476, %v293, %v490
        %v499 = vsel %vm476, %v294, %v491
        %v500 = vsel %vm476, %v295, %v492
        %v501 = vsel %vm476, %v296, %v493
        %v502 = vsel %vm476, %v297, %v494
        %v503 = vpack.c.bf16 %v496, %v495
        %v504 = vpack.c.bf16 %v498, %v497
        %v505 = vpack.c.bf16 %v500, %v499
        %v506 = vpack.c.bf16 %v502, %v501
        %v515 = vunpack.c.l.b16 %v255
        %v516 = vunpack.c.l.b16 %v256
        %v517 = vunpack.c.l.b16 %v257
        %v518 = vunpack.c.l.b16 %v258
        %v519 = vunpack.c.l.b16 %v259
        %v520 = vunpack.c.l.b16 %v260
        %v521 = vunpack.c.l.b16 %v261
        %v522 = vunpack.c.l.b16 %v262
        %v523 = vpack.c.b16 %v516, %v515
        %v524 = vpack.c.b16 %v518, %v517
        %v525 = vpack.c.b16 %v520, %v519
        %v526 = vpack.c.b16 %v522, %v521
        %vm527 = vcmask 64512
        %v530 = vsel %vm527, %v503, %v523
        %v533 = vsel %vm527, %v504, %v524
        %v536 = vsel %vm527, %v505, %v525
        %v539 = vsel %vm527, %v506, %v526
        %v540 = vld [vmem:[%s1] sm:$0xf]
        %v541 = vld [vmem:[%s1 + $0x4] sm:$0xf]
        %v542 = vld [vmem:[%s1 + $0x8] sm:$0xf]
        %v543 = vld [vmem:[%s1 + $0xc] sm:$0xf]
        %v544 = vld [vmem:[#allocation2] sm:$0x1]
        %v546 = vlaneseq
        %v547 = vshrl.u32 %v546, 7
        %v548 = vsub.s32 0, %v547
        %v549 = vrot.slane %v544, %v548
        %v555 = vunpack.c.l.b16 %v540
        %v556 = vunpack.c.l.b16 %v541
        %v557 = vunpack.c.l.b16 %v542
        %v558 = vunpack.c.l.b16 %v543
        %v559 = vpack.c.b16 %v556, %v555
        %v560 = vpack.c.b16 %v558, %v557
        %vm563 = vcmask 261120
        %v564 = vsel %vm563, %v530, 0
        %v566 = vsel %vm563, %v533, 0
        %v568 = vsel %vm563, %v536, 0
        %v570 = vsel %vm563, %v539, 0
        %572 = vmatprep.subr.bf16.mxu0 0
        %573 = vmatpush1.bf16.msra.mxu0 %v559
        %574 = vmatprep.subr.bf16.mxu0 0
        %575 = vmatpush1.bf16.msra.mxu0 %v560
        %576 = vmatprep.subr.bf16.mxu0 0
        %577 = vmatpush1.bf16.msra.mxu0 0
        %578 = vmatprep.subr.bf16.mxu0 0
        %579 = vmatpush1.bf16.msra.mxu0 0
        %580 = vmatprep.subr.bf16.mxu0 0
        %581 = vmatpush1.bf16.msra.mxu0 0
        %582 = vmatprep.subr.bf16.mxu0 0
        %583 = vmatpush1.bf16.msra.mxu0 0
        %584 = vmatprep.subr.bf16.mxu0 0
        %585 = vmatpush1.bf16.msra.mxu0 0
        %586 = vmatprep.subr.bf16.mxu0 0
        %587 = vmatpush1.bf16.msra.mxu0 0
        %588 = vmatprep.subr.bf16.mxu0 0
        %589 = vmatpush1.bf16.msra.mxu0 0
        %590 = vmatprep.subr.bf16.mxu0 0
        %591 = vmatpush1.bf16.msra.mxu0 0
        %592 = vmatprep.subr.bf16.mxu0 0
        %593 = vmatpush1.bf16.msra.mxu0 0
        %594 = vmatprep.subr.bf16.mxu0 0
        %595 = vmatpush1.bf16.msra.mxu0 0
        %596 = vmatprep.subr.bf16.mxu0 0
        %597 = vmatpush1.bf16.msra.mxu0 0
        %598 = vmatprep.subr.bf16.mxu0 0
        %599 = vmatpush1.bf16.msra.mxu0 0
        %600 = vmatprep.subr.bf16.mxu0 0
        %601 = vmatpush1.bf16.msra.mxu0 0
        %602 = vmatprep.subr.bf16.mxu0 0
        %603 = vmatpush1.bf16.msra.mxu0 0
        %604 = vmatprep.mubr.bf16.mxu0 0
        %605 = vmatmul.mubr.bf16.gmra.mrb[0].mxu0 %v564
        %v606 = vpop.f32.mrb[0].mxu0
        %v607 = vadd.f32 %v549, %v606
        %v608 = vpop.f32.mrb[0].mxu0
        %v609 = vpop.f32.mrb[0].mxu0
        %v610 = vadd.f32 %v549, %v609
        %v611 = vpop.f32.mrb[0].mxu0
        %612 = vmatprep.mubr.bf16.mxu0 0
        %613 = vmatmul.mubr.bf16.gmra.mrb[0].mxu0 %v566
        %v614 = vpop.f32.mrb[0].mxu0
        %v615 = vadd.f32 %v549, %v614
        %v616 = vpop.f32.mrb[0].mxu0
        %v617 = vpop.f32.mrb[0].mxu0
        %v618 = vadd.f32 %v549, %v617
        %v619 = vpop.f32.mrb[0].mxu0
        %620 = vmatprep.mubr.bf16.mxu0 0
        %621 = vmatmul.mubr.bf16.gmra.mrb[0].mxu0 %v568
        %v622 = vpop.f32.mrb[0].mxu0
        %v623 = vadd.f32 %v549, %v622
        %v624 = vpop.f32.mrb[0].mxu0
        %v625 = vpop.f32.mrb[0].mxu0
        %v626 = vadd.f32 %v549, %v625
        %v627 = vpop.f32.mrb[0].mxu0
        %628 = vmatprep.mubr.bf16.mxu0 0
        %629 = vmatmul.mubr.bf16.gmra.mrb[0].mxu0 %v570
        %v630 = vpop.f32.mrb[0].mxu0
        %v631 = vadd.f32 %v549, %v630
        %v632 = vpop.f32.mrb[0].mxu0
        %v633 = vpop.f32.mrb[0].mxu0
        %v634 = vadd.f32 %v549, %v633
        %v635 = vpop.f32.mrb[0].mxu0
        %636 = vdwg.mxu0
        %v637 = vmul.f32 %v607, 0.5
        %v638 = vmul.f32 %v610, 0.5
        %v639 = vmul.f32 %v615, 0.5
        %v640 = vmul.f32 %v618, 0.5
        %v641 = vmul.f32 %v623, 0.5
        %v642 = vmul.f32 %v626, 0.5
        %v643 = vmul.f32 %v631, 0.5
        %v644 = vmul.f32 %v634, 0.5
        %v645 = vmul.f32 %v607, 0.044715
        %v646 = vmul.f32 %v610, 0.044715
        %v647 = vmul.f32 %v615, 0.044715
        %v648 = vmul.f32 %v618, 0.044715
        %v649 = vmul.f32 %v623, 0.044715
        %v650 = vmul.f32 %v626, 0.044715
        %v651 = vmul.f32 %v631, 0.044715
        %v652 = vmul.f32 %v634, 0.044715
        %v653 = vmul.f32 %v645, %v607
        %v654 = vmul.f32 %v646, %v610
        %v655 = vmul.f32 %v647, %v615
        %v656 = vmul.f32 %v648, %v618
        %v657 = vmul.f32 %v649, %v623
        %v658 = vmul.f32 %v650, %v626
        %v659 = vmul.f32 %v651, %v631
        %v660 = vmul.f32 %v652, %v634
        %v661 = vmul.f32 %v653, %v607
        %v662 = vmul.f32 %v654, %v610
        %v663 = vmul.f32 %v655, %v615
        %v664 = vmul.f32 %v656, %v618
        %v665 = vmul.f32 %v657, %v623
        %v666 = vmul.f32 %v658, %v626
        %v667 = vmul.f32 %v659, %v631
        %v668 = vmul.f32 %v660, %v634
        %v669 = vadd.f32 %v607, %v661
        %v670 = vadd.f32 %v610, %v662
        %v671 = vadd.f32 %v615, %v663
        %v672 = vadd.f32 %v618, %v664
        %v673 = vadd.f32 %v623, %v665
        %v674 = vadd.f32 %v626, %v666
        %v675 = vadd.f32 %v631, %v667
        %v676 = vadd.f32 %v634, %v668
        %v677 = vmul.f32 %v669, 0.7978846
        %v678 = vmul.f32 %v670, 0.7978846
        %v679 = vmul.f32 %v671, 0.7978846
        %v680 = vmul.f32 %v672, 0.7978846
        %v681 = vmul.f32 %v673, 0.7978846
        %v682 = vmul.f32 %v674, 0.7978846
        %v683 = vmul.f32 %v675, 0.7978846
        %v684 = vmul.f32 %v676, 0.7978846
        %v685 = vtanh.pop %v677
        %v686 = vtanh.pop %v678
        %v687 = vtanh.pop %v679
        %v688 = vtanh.pop %v680
        %v689 = vtanh.pop %v681
        %v690 = vtanh.pop %v682
        %v691 = vtanh.pop %v683
        %v692 = vtanh.pop %v684
        %v693 = vadd.f32 %v685, 1.0
        %v694 = vadd.f32 %v686, 1.0
        %v695 = vadd.f32 %v687, 1.0
        %v696 = vadd.f32 %v688, 1.0
        %v697 = vadd.f32 %v689, 1.0
        %v698 = vadd.f32 %v690, 1.0
        %v699 = vadd.f32 %v691, 1.0
        %v700 = vadd.f32 %v692, 1.0
        %v701 = vmul.f32 %v637, %v693
        %v702 = vmul.f32 %v638, %v694
        %v703 = vmul.f32 %v639, %v695
        %v704 = vmul.f32 %v640, %v696
        %v705 = vmul.f32 %v641, %v697
        %v706 = vmul.f32 %v642, %v698
        %v707 = vmul.f32 %v643, %v699
        %v708 = vmul.f32 %v644, %v700
        %v709 = vpack.c.bf16 %v702, %v701
        %v710 = vpack.c.bf16 %v704, %v703
        %v711 = vpack.c.bf16 %v706, %v705
        %v712 = vpack.c.bf16 %v708, %v707
        %v713 = vld [vmem:[%s3] sm:$0xf]
        %v714 = vld [vmem:[%s3 + $0x4] sm:$0xf]
        %v715 = vld [vmem:[%s3 + $0x8] sm:$0xf]
        %v716 = vld [vmem:[%s3 + $0xc] sm:$0xf]
        %v717 = vld [vmem:[%s3 + $0x10] sm:$0xf]
        %v718 = vld [vmem:[%s3 + $0x14] sm:$0xf]
        %v719 = vld [vmem:[%s3 + $0x18] sm:$0xf]
        %v720 = vld [vmem:[%s3 + $0x1c] sm:$0xf]
        %v721 = vld [vmem:[#allocation4] sm:$0x1]
        %v723 = vlaneseq
        %v724 = vshrl.u32 %v723, 7
        %v725 = vsub.s32 0, %v724
        %v726 = vrot.slane %v721, %v725
        %v736 = vunpack.c.l.b16 %v713
        %v737 = vunpack.c.l.b16 %v714
        %v738 = vunpack.c.l.b16 %v715
        %v739 = vunpack.c.l.b16 %v716
        %v740 = vunpack.c.l.b16 %v717
        %v741 = vunpack.c.l.b16 %v718
        %v742 = vunpack.c.l.b16 %v719
        %v743 = vunpack.c.l.b16 %v720
        %v744 = vpack.c.b16 %v737, %v736
        %v745 = vpack.c.b16 %v739, %v738
        %v746 = vpack.c.b16 %v741, %v740
        %v747 = vpack.c.b16 %v743, %v742
        %vm752 = vcmask 523264
        %v754 = vsel %vm752, %v709, 0
        %v757 = vsel %vm752, %v710, 0
        %v760 = vsel %vm752, %v711, 0
        %v763 = vsel %vm752, %v712, 0
        %765 = vmatprep.subr.bf16.mxu0 0
        %766 = vmatpush1.bf16.msra.mxu0 %v744
        %767 = vmatprep.subr.bf16.mxu0 0
        %768 = vmatpush1.bf16.msra.mxu0 %v745
        %769 = vmatprep.subr.bf16.mxu0 0
        %770 = vmatpush1.bf16.msra.mxu0 %v746
        %771 = vmatprep.subr.bf16.mxu0 0
        %772 = vmatpush1.bf16.msra.mxu0 %v747
        %773 = vmatprep.subr.bf16.mxu0 0
        %774 = vmatpush1.bf16.msra.mxu0 0
        %775 = vmatprep.subr.bf16.mxu0 0
        %776 = vmatpush1.bf16.msra.mxu0 0
        %777 = vmatprep.subr.bf16.mxu0 0
        %778 = vmatpush1.bf16.msra.mxu0 0
        %779 = vmatprep.subr.bf16.mxu0 0
        %780 = vmatpush1.bf16.msra.mxu0 0
        %781 = vmatprep.subr.bf16.mxu0 0
        %782 = vmatpush1.bf16.msra.mxu0 0
        %783 = vmatprep.subr.bf16.mxu0 0
        %784 = vmatpush1.bf16.msra.mxu0 0
        %785 = vmatprep.subr.bf16.mxu0 0
        %786 = vmatpush1.bf16.msra.mxu0 0
        %787 = vmatprep.subr.bf16.mxu0 0
        %788 = vmatpush1.bf16.msra.mxu0 0
        %789 = vmatprep.subr.bf16.mxu0 0
        %790 = vmatpush1.bf16.msra.mxu0 0
        %791 = vmatprep.subr.bf16.mxu0 0
        %792 = vmatpush1.bf16.msra.mxu0 0
        %793 = vmatprep.subr.bf16.mxu0 0
        %794 = vmatpush1.bf16.msra.mxu0 0
        %795 = vmatprep.subr.bf16.mxu0 0
        %796 = vmatpush1.bf16.msra.mxu0 0
        %797 = vmatprep.mubr.bf16.mxu0 0
        %798 = vmatmul.mubr.bf16.gmra.mrb[0].mxu0 %v754
        %v799 = vpop.f32.mrb[0].mxu0
        %v800 = vadd.f32 %v726, %v799
        %v801 = vpop.f32.mrb[0].mxu0
        %v802 = vpop.f32.mrb[0].mxu0
        %v803 = vadd.f32 %v726, %v802
        %v804 = vpop.f32.mrb[0].mxu0
        %805 = vmatprep.mubr.bf16.mxu0 0
        %806 = vmatmul.mubr.bf16.gmra.mrb[0].mxu0 %v757
        %v807 = vpop.f32.mrb[0].mxu0
        %v808 = vadd.f32 %v726, %v807
        %v809 = vpop.f32.mrb[0].mxu0
        %v810 = vpop.f32.mrb[0].mxu0
        %v811 = vadd.f32 %v726, %v810
        %v812 = vpop.f32.mrb[0].mxu0
        %813 = vmatprep.mubr.bf16.mxu0 0
        %814 = vmatmul.mubr.bf16.gmra.mrb[0].mxu0 %v760
        %v815 = vpop.f32.mrb[0].mxu0
        %v816 = vadd.f32 %v726, %v815
        %v817 = vpop.f32.mrb[0].mxu0
        %v818 = vpop.f32.mrb[0].mxu0
        %v819 = vadd.f32 %v726, %v818
        %v820 = vpop.f32.mrb[0].mxu0
        %821 = vmatprep.mubr.bf16.mxu0 0
        %822 = vmatmul.mubr.bf16.gmra.mrb[0].mxu0 %v763
        %v823 = vpop.f32.mrb[0].mxu0
        %v824 = vadd.f32 %v726, %v823
        %v825 = vpop.f32.mrb[0].mxu0
        %v826 = vpop.f32.mrb[0].mxu0
        %v827 = vadd.f32 %v726, %v826
        %v828 = vpop.f32.mrb[0].mxu0
        %829 = vdwg.mxu0
        %v830 = vadd.f32 %v800, %v263
        %v831 = vadd.f32 %v803, %v264
        %v832 = vadd.f32 %v808, %v265
        %v833 = vadd.f32 %v811, %v266
        %v834 = vadd.f32 %v816, %v267
        %v835 = vadd.f32 %v819, %v268
        %v836 = vadd.f32 %v824, %v269
        %v837 = vadd.f32 %v827, %v270
        %v838 = vpack.c.bf16 %v831, %v830
        %v839 = vpack.c.bf16 %v833, %v832
        %v840 = vpack.c.bf16 %v835, %v834
        %v841 = vpack.c.bf16 %v837, %v836
        %v846 = vunpack.c.l.b16 %v838
        %v847 = vunpack.c.h.b16 %v838
        %v848 = vunpack.c.l.b16 %v839
        %v849 = vunpack.c.h.b16 %v839
        %v850 = vunpack.c.l.b16 %v840
        %v851 = vunpack.c.h.b16 %v840
        %v852 = vunpack.c.l.b16 %v841
        %v853 = vunpack.c.h.b16 %v841
        %v854 = vpack.c.b16 %v846, %v846
        %v855 = vpack.c.b16 %v847, %v847
        %v856 = vpack.c.b16 %v848, %v848
        %v857 = vpack.c.b16 %v849, %v849
        %v858 = vpack.c.b16 %v850, %v850
        %v859 = vpack.c.b16 %v851, %v851
        %v860 = vpack.c.b16 %v852, %v852
        %v861 = vpack.c.b16 %v853, %v853
        %vm870 = vcmask 257024
        %871 = vst.msk [vmem:[%s252] sm:$0xf] %vm870, %v854
        %872 = vst.msk [vmem:[%s252 + $0x4] sm:$0xf] %vm870, %v855
        %873 = vst.msk [vmem:[%s252 + $0x8] sm:$0xf] %vm870, %v856
        %874 = vst.msk [vmem:[%s252 + $0xc] sm:$0xf] %vm870, %v857
        %875 = vst.msk [vmem:[%s252 + $0x10] sm:$0xf] %vm870, %v858
        %876 = vst.msk [vmem:[%s252 + $0x14] sm:$0xf] %vm870, %v859
        %877 = vst.msk [vmem:[%s252 + $0x18] sm:$0xf] %vm870, %v860
        %878 = vst.msk [vmem:[%s252 + $0x1c] sm:$0xf] %vm870, %v861
        %s879 = smul.u32 8, %s18
        %p880 = scmp.lt.s32.totalorder %s879, 15
        %s881 = scalar_select %p880, %s879, 15
        %s882 = smul.addr %s881, 4
        %s883 = scalar_lea.vmem %s5, %s882
        // Predicated region
        $region49: #{_lambda_.31} parent=39 // pred_check
          %p884 = pneg %p146
        $region50: #{_lambda_.31} parent=39 // pred_check_branch
          %886 = sbr.rel (%p884) target = $region52
        $region51: #{_lambda_.31} parent=39 // pred_region
          %s887 = smul.u32 8, %s18
        $region52: #{_lambda_.31} parent=39 // pred_fallthru
          _
      $region40: #{_lambda_.31} parent=5 // pred_fallthru
        _
      %p888 = scmp.le.s32.totalorder 2, %s13
      // Predicated region
      $region53: #{_lambda_.31} parent=5 // pred_check
        %p889 = pneg %p888
      $region54: #{_lambda_.31} parent=5 // pred_check_branch
        %891 = sbr.rel (%p889) target = $region56
      $region55: #{_lambda_.31} parent=5 // pred_region
        %s892 = ssub.s32 %s13, 2
        // Predicated region
        $region57: #{_lambda_.31} parent=55 // pred_check
          %p893 = pneg %p152
        $region58: #{_lambda_.31} parent=55 // pred_check_branch
          %895 = sbr.rel (%p893) target = $region60
        $region59: #{_lambda_.31} parent=55 // pred_region
          %s896 = smul.u32 8, %s19
          %p897 = scmp.lt.s32.totalorder %s896, 15
          %s898 = scalar_select %p897, %s896, 15
          %s899 = smul.addr %s898, 4
          %s900 = scalar_lea.vmem %s5, %s899
        $region60: #{_lambda_.31} parent=55 // pred_fallthru
          _
      $region56: #{_lambda_.31} parent=5 // pred_fallthru
        _
    $region6: #{_lambda_.31} parent=1 // loop_footer
      %s17 = sadd.s32 1, %s13
    $region7: #{_lambda_.31} parent=1 // loop_footer_branch
      %12 = sbr.rel target = $region3
    $region8: #{_lambda_.31} parent=1 // loop_exit
      _
    %901 = vsyncpa [#allocation3], 1
    %s902 = scalar_lea.sflag [#allocation3], 1
    %903 = vsyncpa %s902, 1
    %904 = vsyncpa [#allocation5], 1

// kernel: _lambda_.36
$region0: #{_lambda_.36}
  #allocation0 [shape = 'u32[]', space=smem, size = 0x4, offset = 0x4, fixed_abs, tag = 'smem constant byte address 0x4 - core index']
  #allocation1 [shape = 'u32[144,128]{1,0:T(1,128)}', space=vmem, size = 0x12000, scoped, tag = 'internal scratch']
  %s0 = inlined_call_operand.vmem [shape: bf16[128,32], index: 0, kind: input, shape index: {}]
  %s1 = inlined_call_operand.vmem [shape: bf16[32,64], index: 1, kind: input, shape index: {}]
  %s2 = inlined_call_operand.vmem [shape: f32[1,64], index: 2, kind: input, shape index: {}]
  %s3 = inlined_call_operand.vmem [shape: bf16[64,32], index: 3, kind: input, shape index: {}]
  %s4 = inlined_call_operand.vmem [shape: f32[1,32], index: 4, kind: input, shape index: {}]
  %s5 = inlined_call_operand.vmem [shape: bf16[128,32], index: 5, kind: input, shape index: {}]
  %s6 = inlined_call_operand.vmem [shape: bf16[128,32], index: 6, kind: output, shape index: {}]
  %s7 = sld [smem:[#allocation0]]
  $region57: #{_lambda_.36} parent=0
    _
  %s9 = ssub.s32 1, %s7
  %s10 = scalar_select 0, %s9, %s7
  loop: start=0, step=1, limit=4
  $region2: #{_lambda_.36} parent=0 // loop_pre_header
    _
  $region3: #{_lambda_.36} parent=0 // loop_header
    %s12 = sphi 0, %s16
    %p13 = scmp.ge.s32.totalorder %s12, 4
    %s22 = sphi 0, %s24
    %s25 = sphi 0, %s22
    %s26 = sphi 0, %s25
    %s42 = sphi 0, %s26
    %s46 = sphi 0, %s46
    %s48 = sphi 0, %s46
    %s49 = sphi 0, %s48
    %s63 = sphi 0, %s49
    %s67 = sphi 0, %s67
    %s69 = sphi 0, %s67
    %s70 = sphi 0, %s69
    %s84 = sphi 0, %s70
    %s88 = sphi 0, %s88
    %s90 = sphi 0, %s88
    %s91 = sphi 0, %s90
    %s105 = sphi 0, %s91
    %s109 = sphi 0, %s109
    %s111 = sphi 0, %s109
    %s112 = sphi 0, %s111
    %s126 = sphi 0, %s112
    %s132 = sphi 0, %s134
    %s135 = sphi 0, %s132
    %s136 = sphi 0, %s135
    %s152 = sphi 0, %s136
    %s158 = sphi 0, %s160
    %s161 = sphi 0, %s158
    %s162 = sphi 0, %s161
    %s178 = sphi 0, %s162
  $region4: #{_lambda_.36} parent=0 // loop_header_branch
    %15 = sbr.rel (%p13) target = $region8
  $region5: #{_lambda_.36} parent=0 // loop_body
    %s17 = ssub.s32 %s12, 1
    %s18 = ssub.s32 %s12, 2
    %s19 = sadd.s32 %s12, 1
    %s20 = ssub.s32 %s12, %s19
    %p21 = scmp.eq.s32.totalorder %s20, 0
    %s23 = sadd.s32 %s22, 1
    %s24 = scalar_select %p21, %s22, %s23
    %p27 = pneg %p21
    %p28 = scmp.eq.s32.totalorder %s12, 1
    %p29 = por %p27, %p28
    %p30 = scmp.ne.s32.totalorder %s22, %s25
    %p31 = scmp.eq.s32.totalorder %s12, 0
    %p32 = por %p30, %p31
    %p33 = scmp.ne.s32.totalorder %s22, %s25
    %p34 = scmp.eq.s32.totalorder %s17, 1
    %p35 = por %p33, %p34
    %p36 = scmp.ne.s32.totalorder %s25, %s26
    %p37 = scmp.eq.s32.totalorder %s17, 0
    %p38 = por %p36, %p37
    %p39 = scmp.ne.s32.totalorder %s25, %s26
    %p40 = scmp.eq.s32.totalorder %s18, 1
    %p41 = por %p39, %p40
    %p43 = scmp.ne.s32.totalorder %s26, %s42
    %p44 = scmp.eq.s32.totalorder %s18, 0
    %p45 = por %p43, %p44
    %s47 = sadd.s32 %s46, 1
    %p50 = scmp.eq.s32.totalorder %s12, 1
    %p51 = scmp.ne.s32.totalorder %s46, %s48
    %p52 = scmp.eq.s32.totalorder %s12, 0
    %p53 = por %p51, %p52
    %p54 = scmp.ne.s32.totalorder %s46, %s48
    %p55 = scmp.eq.s32.totalorder %s17, 1
    %p56 = por %p54, %p55
    %p57 = scmp.ne.s32.totalorder %s48, %s49
    %p58 = scmp.eq.s32.totalorder %s17, 0
    %p59 = por %p57, %p58
    %p60 = scmp.ne.s32.totalorder %s48, %s49
    %p61 = scmp.eq.s32.totalorder %s18, 1
    %p62 = por %p60, %p61
    %p64 = scmp.ne.s32.totalorder %s49, %s63
    %p65 = scmp.eq.s32.totalorder %s18, 0
    %p66 = por %p64, %p65
    %s68 = sadd.s32 %s67, 1
    %p71 = scmp.eq.s32.totalorder %s12, 1
    %p72 = scmp.ne.s32.totalorder %s67, %s69
    %p73 = scmp.eq.s32.totalorder %s12, 0
    %p74 = por %p72, %p73
    %p75 = scmp.ne.s32.totalorder %s67, %s69
    %p76 = scmp.eq.s32.totalorder %s17, 1
    %p77 = por %p75, %p76
    %p78 = scmp.ne.s32.totalorder %s69, %s70
    %p79 = scmp.eq.s32.totalorder %s17, 0
    %p80 = por %p78, %p79
    %p81 = scmp.ne.s32.totalorder %s69, %s70
    %p82 = scmp.eq.s32.totalorder %s18, 1
    %p83 = por %p81, %p82
    %p85 = scmp.ne.s32.totalorder %s70, %s84
    %p86 = scmp.eq.s32.totalorder %s18, 0
    %p87 = por %p85, %p86
    %s89 = sadd.s32 %s88, 1
    %p92 = scmp.eq.s32.totalorder %s12, 1
    %p93 = scmp.ne.s32.totalorder %s88, %s90
    %p94 = scmp.eq.s32.totalorder %s12, 0
    %p95 = por %p93, %p94
    %p96 = scmp.ne.s32.totalorder %s88, %s90
    %p97 = scmp.eq.s32.totalorder %s17, 1
    %p98 = por %p96, %p97
    %p99 = scmp.ne.s32.totalorder %s90, %s91
    %p100 = scmp.eq.s32.totalorder %s17, 0
    %p101 = por %p99, %p100
    %p102 = scmp.ne.s32.totalorder %s90, %s91
    %p103 = scmp.eq.s32.totalorder %s18, 1
    %p104 = por %p102, %p103
    %p106 = scmp.ne.s32.totalorder %s91, %s105
    %p107 = scmp.eq.s32.totalorder %s18, 0
    %p108 = por %p106, %p107
    %s110 = sadd.s32 %s109, 1
    %p113 = scmp.eq.s32.totalorder %s12, 1
    %p114 = scmp.ne.s32.totalorder %s109, %s111
    %p115 = scmp.eq.s32.totalorder %s12, 0
    %p116 = por %p114, %p115
    %p117 = scmp.ne.s32.totalorder %s109, %s111
    %p118 = scmp.eq.s32.totalorder %s17, 1
    %p119 = por %p117, %p118
    %p120 = scmp.ne.s32.totalorder %s111, %s112
    %p121 = scmp.eq.s32.totalorder %s17, 0
    %p122 = por %p120, %p121
    %p123 = scmp.ne.s32.totalorder %s111, %s112
    %p124 = scmp.eq.s32.totalorder %s18, 1
    %p125 = por %p123, %p124
    %p127 = scmp.ne.s32.totalorder %s112, %s126
    %p128 = scmp.eq.s32.totalorder %s18, 0
    %p129 = por %p127, %p128
    %s130 = ssub.s32 %s12, %s19
    %p131 = scmp.eq.s32.totalorder %s130, 0
    %s133 = sadd.s32 %s132, 1
    %s134 = scalar_select %p131, %s132, %s133
    %p137 = pneg %p131
    %p138 = scmp.eq.s32.totalorder %s12, 1
    %p139 = por %p137, %p138
    %p140 = scmp.ne.s32.totalorder %s132, %s135
    %p141 = scmp.eq.s32.totalorder %s12, 0
    %p142 = por %p140, %p141
    %p143 = scmp.ne.s32.totalorder %s132, %s135
    %p144 = scmp.eq.s32.totalorder %s17, 1
    %p145 = por %p143, %p144
    %p146 = scmp.ne.s32.totalorder %s135, %s136
    %p147 = scmp.eq.s32.totalorder %s17, 0
    %p148 = por %p146, %p147
    %p149 = scmp.ne.s32.totalorder %s135, %s136
    %p150 = scmp.eq.s32.totalorder %s18, 1
    %p151 = por %p149, %p150
    %p153 = scmp.ne.s32.totalorder %s136, %s152
    %p154 = scmp.eq.s32.totalorder %s18, 0
    %p155 = por %p153, %p154
    %s156 = ssub.s32 %s12, %s19
    %p157 = scmp.eq.s32.totalorder %s156, 0
    %s159 = sadd.s32 %s158, 1
    %s160 = scalar_select %p157, %s158, %s159
    %p163 = pneg %p157
    %p164 = scmp.eq.s32.totalorder %s12, 1
    %p165 = por %p163, %p164
    %p166 = scmp.ne.s32.totalorder %s158, %s161
    %p167 = scmp.eq.s32.totalorder %s12, 0
    %p168 = por %p166, %p167
    %p169 = scmp.ne.s32.totalorder %s158, %s161
    %p170 = scmp.eq.s32.totalorder %s17, 1
    %p171 = por %p169, %p170
    %p172 = scmp.ne.s32.totalorder %s161, %s162
    %p173 = scmp.eq.s32.totalorder %s17, 0
    %p174 = por %p172, %p173
    %p175 = scmp.ne.s32.totalorder %s161, %s162
    %p176 = scmp.eq.s32.totalorder %s18, 1
    %p177 = por %p175, %p176
    %p179 = scmp.ne.s32.totalorder %s162, %s178
    %p180 = scmp.eq.s32.totalorder %s18, 0
    %p181 = por %p179, %p180
    %p182 = scmp.le.s32.totalorder 1, %s12
    %p183 = scmp.lt.s32.totalorder %s12, 3
    %p184 = pnand %p182, %p183
    %p185 = pneg %p184
    // Predicated region
    $region9: #{_lambda_.36} parent=5 // pred_check
      _
    $region10: #{_lambda_.36} parent=5 // pred_check_branch
      %187 = sbr.rel (%p184) target = $region12
    $region11: #{_lambda_.36} parent=5 // pred_region
      %s188 = ssub.s32 %s12, 1
      // Predicated region
      $region13: #{_lambda_.36} parent=11 // pred_check
        %p189 = pneg %p59
      $region14: #{_lambda_.36} parent=11 // pred_check_branch
        %191 = sbr.rel (%p189) target = $region16
      $region15: #{_lambda_.36} parent=11 // pred_region
        _
      $region16: #{_lambda_.36} parent=11 // pred_fallthru
        _
      // Predicated region
      $region17: #{_lambda_.36} parent=11 // pred_check
        %p192 = pneg %p80
      $region18: #{_lambda_.36} parent=11 // pred_check_branch
        %194 = sbr.rel (%p192) target = $region20
      $region19: #{_lambda_.36} parent=11 // pred_region
        _
      $region20: #{_lambda_.36} parent=11 // pred_fallthru
        _
      // Predicated region
      $region21: #{_lambda_.36} parent=11 // pred_check
        %p195 = pneg %p101
      $region22: #{_lambda_.36} parent=11 // pred_check_branch
        %197 = sbr.rel (%p195) target = $region24
      $region23: #{_lambda_.36} parent=11 // pred_region
        _
      $region24: #{_lambda_.36} parent=11 // pred_fallthru
        _
      // Predicated region
      $region25: #{_lambda_.36} parent=11 // pred_check
        %p198 = pneg %p122
      $region26: #{_lambda_.36} parent=11 // pred_check_branch
        %200 = sbr.rel (%p198) target = $region28
      $region27: #{_lambda_.36} parent=11 // pred_region
        _
      $region28: #{_lambda_.36} parent=11 // pred_fallthru
        _
    $region12: #{_lambda_.36} parent=5 // pred_fallthru
      _
    %p201 = scmp.lt.s32.totalorder %s12, 2
    // Predicated region
    $region29: #{_lambda_.36} parent=5 // pred_check
      %p202 = pneg %p201
    $region30: #{_lambda_.36} parent=5 // pred_check_branch
      %204 = sbr.rel (%p202) target = $region32
    $region31: #{_lambda_.36} parent=5 // pred_region
      // Predicated region
      $region33: #{_lambda_.36} parent=31 // pred_check
        %p205 = pneg %p32
      $region34: #{_lambda_.36} parent=31 // pred_check_branch
        %207 = sbr.rel (%p205) target = $region36
      $region35: #{_lambda_.36} parent=31 // pred_region
        %s208 = smul.u32 8, %s12
        %p209 = scmp.lt.s32.totalorder %s208, 15
        %s210 = scalar_select %p209, %s208, 15
        %s211 = smul.addr %s210, 4
        %s212 = scalar_lea.vmem %s0, %s211
        %s213 = smul.u32 8, %s12
      $region36: #{_lambda_.36} parent=31 // pred_fallthru
        _
      // Predicated region
      $region37: #{_lambda_.36} parent=31 // pred_check
        %p214 = pneg %p142
      $region38: #{_lambda_.36} parent=31 // pred_check_branch
        %216 = sbr.rel (%p214) target = $region40
      $region39: #{_lambda_.36} parent=31 // pred_region
        %s217 = smul.u32 8, %s12
        %p218 = scmp.lt.s32.totalorder %s217, 15
        %s219 = scalar_select %p218, %s217, 15
        %s220 = smul.addr %s219, 4
        %s221 = scalar_lea.vmem %s5, %s220
        %s222 = smul.u32 8, %s12
      $region40: #{_lambda_.36} parent=31 // pred_fallthru
        _
    $region32: #{_lambda_.36} parent=5 // pred_fallthru
      _
    %p223 = scmp.le.s32.totalorder 1, %s12
    %p224 = scmp.lt.s32.totalorder %s12, 3
    %p225 = pnand %p223, %p224
    %p226 = pneg %p225
    // Predicated region
    $region41: #{_lambda_.36} parent=5 // pred_check
      _
    $region42: #{_lambda_.36} parent=5 // pred_check_branch
      %228 = sbr.rel (%p225) target = $region44
    $region43: #{_lambda_.36} parent=5 // pred_region
      %s229 = ssub.s32 %s12, 1
      %s230 = smul.u32 8, %s17
      %p231 = scmp.lt.s32.totalorder %s230, 15
      %s232 = scalar_select %p231, %s230, 15
      %s233 = smul.addr %s232, 4
      %s234 = scalar_lea.vmem %s0, %s233
      %p235 = pneg %p38
      %p236 = pneg %p35
      %p237 = pneg %p59
      %p238 = pneg %p56
      %p239 = pneg %p80
      %p240 = pneg %p77
      %p241 = pneg %p101
      %p242 = pneg %p98
      %p243 = pneg %p122
      %p244 = pneg %p119
      %s245 = smul.u32 8, %s17
      %p246 = scmp.lt.s32.totalorder %s245, 15
      %s247 = scalar_select %p246, %s245, 15
      %s248 = smul.addr %s247, 4
      %s249 = scalar_lea.vmem %s5, %s248
      %p250 = pneg %p148
      %p251 = pneg %p145
      %p252 = pneg %p174
      %p253 = pneg %p171
      %s254 = smul.u32 8, %s17
      %p255 = scmp.lt.s32.totalorder %s254, 15
      %s256 = scalar_select %p255, %s254, 15
      %s257 = smul.addr %s256, 4
      %s258 = scalar_lea.vmem %s6, %s257
      %s259 = smul.u32 8, %s17
      %p260 = scmp.lt.s32.totalorder %s259, 15
      %s261 = scalar_select %p260, %s259, 15
      %s262 = smul.addr %s261, 4
      %s263 = scalar_lea.vmem %s0, %s262
      %s264 = smul.u32 8, %s17
      %s265 = smul.u32 8, %s17
      %p266 = scmp.lt.s32.totalorder %s265, 15
      %s267 = scalar_select %p266, %s265, 15
      %s268 = smul.addr %s267, 4
      %s269 = scalar_lea.vmem %s5, %s268
      %s270 = smul.u32 8, %s17
      %s271 = smul.u32 8, %s17
      %p272 = scmp.lt.s32.totalorder %s271, 15
      %s273 = scalar_select %p272, %s271, 15
      %s274 = smul.addr %s273, 4
      %s275 = scalar_lea.vmem %s6, %s274
      %s276 = smul.u32 8, %s17
      %v278 = vld [vmem:[%s263] sm:$0xf]
      %v279 = vld [vmem:[%s263 + $0x4] sm:$0xf]
      %v280 = vld [vmem:[%s263 + $0x8] sm:$0xf]
      %v281 = vld [vmem:[%s263 + $0xc] sm:$0xf]
      %v282 = vld [vmem:[%s263 + $0x10] sm:$0xf]
      %v283 = vld [vmem:[%s263 + $0x14] sm:$0xf]
      %v284 = vld [vmem:[%s263 + $0x18] sm:$0xf]
      %v285 = vld [vmem:[%s263 + $0x1c] sm:$0xf]
      %v286 = vunpack.c.l.bf16 %v278
      %v287 = vunpack.c.l.bf16 %v279
      %v288 = vunpack.c.l.bf16 %v280
      %v289 = vunpack.c.l.bf16 %v281
      %v290 = vunpack.c.l.bf16 %v282
      %v291 = vunpack.c.l.bf16 %v283
      %v292 = vunpack.c.l.bf16 %v284
      %v293 = vunpack.c.l.bf16 %v285
      %v294 = vlaneseq
      %v295 = vshrl.u32 %v294, 7
      %v296 = vadd.s32 %v295, 8
      %v297 = vadd.s32 %v295, 16
      %v298 = vadd.s32 %v295, 24
      %v299 = vadd.s32 %v295, 32
      %v300 = vadd.s32 %v295, 40
      %v301 = vadd.s32 %v295, 48
      %v302 = vadd.s32 %v295, 56
      %v303 = vlaneseq
      %v304 = vand.u32 %v303, 127
      %vm305 = vcmp.lt.s32.totalorder %v295, 8
      %vm306 = vcmp.lt.s32.totalorder %v296, 8
      %vm307 = vcmp.lt.s32.totalorder %v297, 8
      %vm308 = vcmp.lt.s32.totalorder %v298, 8
      %vm309 = vcmp.lt.s32.totalorder %v299, 8
      %vm310 = vcmp.lt.s32.totalorder %v300, 8
      %vm311 = vcmp.lt.s32.totalorder %v301, 8
      %vm312 = vcmp.lt.s32.totalorder %v302, 8
      %v313 = vsel %vm305, 0.0, %v293
      %v314 = vsel %vm306, 0.0, %v286
      %v315 = vsel %vm307, 0.0, %v287
      %v316 = vsel %vm308, 0.0, %v288
      %v317 = vsel %vm309, 0.0, %v289
      %v318 = vsel %vm310, 0.0, %v290
      %v319 = vsel %vm311, 0.0, %v291
      %v320 = vsel %vm312, 0.0, %v292
      %vm321 = vcmp.ge.s32.totalorder %v295, 56
      %vm322 = vcmp.ge.s32.totalorder %v296, 56
      %vm323 = vcmp.ge.s32.totalorder %v297, 56
      %vm324 = vcmp.ge.s32.totalorder %v298, 56
      %vm325 = vcmp.ge.s32.totalorder %v299, 56
      %vm326 = vcmp.ge.s32.totalorder %v300, 56
      %vm327 = vcmp.ge.s32.totalorder %v301, 56
      %vm328 = vcmp.ge.s32.totalorder %v302, 56
      %v329 = vsel %vm321, 0.0, %v287
      %v330 = vsel %vm322, 0.0, %v288
      %v331 = vsel %vm323, 0.0, %v289
      %v332 = vsel %vm324, 0.0, %v290
      %v333 = vsel %vm325, 0.0, %v291
      %v334 = vsel %vm326, 0.0, %v292
      %v335 = vsel %vm327, 0.0, %v293
      %v336 = vsel %vm328, 0.0, %v286
      %vm337 = vcmp.lt.s32.totalorder %v295, 0
      %v338 = vsub.s32 0, %v295
      %v339 = vsel %vm337, %v338, %v295
      %v340 = vshrl.u32 %v339, 3
      %v341 = vand.u32 %v339, 7
      %v342 = vsub.s32 0, %v341
      %v343 = vsel %vm337, %v342, %v341
      %vm344 = vcmp.lt.s32.totalorder %v296, 0
      %v345 = vsub.s32 0, %v296
      %v346 = vsel %vm344, %v345, %v296
      %v347 = vshrl.u32 %v346, 3
      %v348 = vand.u32 %v346, 7
      %v349 = vsub.s32 0, %v348
      %v350 = vsel %vm344, %v349, %v348
      %vm351 = vcmp.lt.s32.totalorder %v297, 0
      %v352 = vsub.s32 0, %v297
      %v353 = vsel %vm351, %v352, %v297
      %v354 = vshrl.u32 %v353, 3
      %v355 = vand.u32 %v353, 7
      %v356 = vsub.s32 0, %v355
      %v357 = vsel %vm351, %v356, %v355
      %vm358 = vcmp.lt.s32.totalorder %v298, 0
      %v359 = vsub.s32 0, %v298
      %v360 = vsel %vm358, %v359, %v298
      %v361 = vshrl.u32 %v360, 3
      %v362 = vand.u32 %v360, 7
      %v363 = vsub.s32 0, %v362
      %v364 = vsel %vm358, %v363, %v362
      %vm365 = vcmp.lt.s32.totalorder %v299, 0
      %v366 = vsub.s32 0, %v299
      %v367 = vsel %vm365, %v366, %v299
      %v368 = vshrl.u32 %v367, 3
      %v369 = vand.u32 %v367, 7
      %v370 = vsub.s32 0, %v369
      %v371 = vsel %vm365, %v370, %v369
      %vm372 = vcmp.lt.s32.totalorder %v300, 0
      %v373 = vsub.s32 0, %v300
      %v374 = vsel %vm372, %v373, %v300
      %v375 = vshrl.u32 %v374, 3
      %v376 = vand.u32 %v374, 7
      %v377 = vsub.s32 0, %v376
      %v378 = vsel %vm372, %v377, %v376
      %vm379 = vcmp.lt.s32.totalorder %v301, 0
      %v380 = vsub.s32 0, %v301
      %v381 = vsel %vm379, %v380, %v301
      %v382 = vshrl.u32 %v381, 3
      %v383 = vand.u32 %v381, 7
      %v384 = vsub.s32 0, %v383
      %v385 = vsel %vm379, %v384, %v383
      %vm386 = vcmp.lt.s32.totalorder %v302, 0
      %v387 = vsub.s32 0, %v302
      %v388 = vsel %vm386, %v387, %v302
      %v389 = vshrl.u32 %v388, 3
      %v390 = vand.u32 %v388, 7
      %v391 = vsub.s32 0, %v390
      %v392 = vsel %vm386, %v391, %v390
      %vm393 = vcmp.ne.s32.totalorder %v343, 0
      %vm394 = vcmp.ne.s32.totalorder %v350, 0
      %vm395 = vcmp.ne.s32.totalorder %v357, 0
      %vm396 = vcmp.ne.s32.totalorder %v364, 0
      %vm397 = vcmp.ne.s32.totalorder %v371, 0
      %vm398 = vcmp.ne.s32.totalorder %v378, 0
      %vm399 = vcmp.ne.s32.totalorder %v385, 0
      %vm400 = vcmp.ne.s32.totalorder %v392, 0
      %vm401 = vcmp.lt.s32.totalorder %v343, 0
      %vm402 = vcmp.lt.s32.totalorder %v350, 0
      %vm403 = vcmp.lt.s32.totalorder %v357, 0
      %vm404 = vcmp.lt.s32.totalorder %v364, 0
      %vm405 = vcmp.lt.s32.totalorder %v371, 0
      %vm406 = vcmp.lt.s32.totalorder %v378, 0
      %vm407 = vcmp.lt.s32.totalorder %v385, 0
      %vm408 = vcmp.lt.s32.totalorder %v392, 0
      %vm409 = vmand %vm401, %vm393
      %vm410 = vmand %vm402, %vm394
      %vm411 = vmand %vm403, %vm395
      %vm412 = vmand %vm404, %vm396
      %vm413 = vmand %vm405, %vm397
      %vm414 = vmand %vm406, %vm398
      %vm415 = vmand %vm407, %vm399
      %vm416 = vmand %vm408, %vm400
      %v417 = vadd.s32 %v343, 8
      %v418 = vadd.s32 %v350, 8
      %v419 = vadd.s32 %v357, 8
      %v420 = vadd.s32 %v364, 8
      %v421 = vadd.s32 %v371, 8
      %v422 = vadd.s32 %v378, 8
      %v423 = vadd.s32 %v385, 8
      %v424 = vadd.s32 %v392, 8
      %v425 = vsel %vm409, %v417, %v343
      %v426 = vsel %vm410, %v418, %v350
      %v427 = vsel %vm411, %v419, %v357
      %v428 = vsel %vm412, %v420, %v364
      %v429 = vsel %vm413, %v421, %v371
      %v430 = vsel %vm414, %v422, %v378
      %v431 = vsel %vm415, %v423, %v385
      %v432 = vsel %vm416, %v424, %v392
      %vm433 = vcmp.eq.s32.totalorder %v425, 0
      %vm434 = vcmp.eq.s32.totalorder %v426, 0
      %vm435 = vcmp.eq.s32.totalorder %v427, 0
      %vm436 = vcmp.eq.s32.totalorder %v428, 0
      %vm437 = vcmp.eq.s32.totalorder %v429, 0
      %vm438 = vcmp.eq.s32.totalorder %v430, 0
      %vm439 = vcmp.eq.s32.totalorder %v431, 0
      %vm440 = vcmp.eq.s32.totalorder %v432, 0
      %v441 = vrot.slane %v286, 7
      %v442 = vrot.slane %v287, 7
      %v443 = vrot.slane %v288, 7
      %v444 = vrot.slane %v289, 7
      %v445 = vrot.slane %v290, 7
      %v446 = vrot.slane %v291, 7
      %v447 = vrot.slane %v292, 7
      %v448 = vrot.slane %v293, 7
      %vm449 = vcmp.lt.s32.totalorder %v295, 1
      %v450 = vsel %vm449, %v447, %v448
      %v451 = vsel %vm449, %v446, %v447
      %v452 = vsel %vm449, %v445, %v446
      %v453 = vsel %vm449, %v444, %v445
      %v454 = vsel %vm449, %v443, %v444
      %v455 = vsel %vm449, %v442, %v443
      %v456 = vsel %vm449, %v441, %v442
      %v457 = vsel %vm449, %v448, %v441
      %v458 = vsel %vm433, 0.0, %v457
      %v459 = vsel %vm434, 0.0, %v456
      %v460 = vsel %vm435, 0.0, %v455
      %v461 = vsel %vm436, 0.0, %v454
      %v462 = vsel %vm437, 0.0, %v453
      %v463 = vsel %vm438, 0.0, %v452
      %v464 = vsel %vm439, 0.0, %v451
      %v465 = vsel %vm440, 0.0, %v450
      %vm466 = vcmp.eq.s32.totalorder %v425, 7
      %vm467 = vcmp.eq.s32.totalorder %v426, 7
      %vm468 = vcmp.eq.s32.totalorder %v427, 7
      %vm469 = vcmp.eq.s32.totalorder %v428, 7
      %vm470 = vcmp.eq.s32.totalorder %v429, 7
      %vm471 = vcmp.eq.s32.totalorder %v430, 7
      %vm472 = vcmp.eq.s32.totalorder %v431, 7
      %vm473 = vcmp.eq.s32.totalorder %v432, 7
      %v474 = vrot.slane %v286, 1
      %v475 = vrot.slane %v287, 1
      %v476 = vrot.slane %v288, 1
      %v477 = vrot.slane %v289, 1
      %v478 = vrot.slane %v290, 1
      %v479 = vrot.slane %v291, 1
      %v480 = vrot.slane %v292, 1
      %v481 = vrot.slane %v293, 1
      %vm482 = vcmp.lt.s32.totalorder %v295, 7
      %v483 = vsel %vm482, %v480, %v481
      %v484 = vsel %vm482, %v479, %v480
      %v485 = vsel %vm482, %v478, %v479
      %v486 = vsel %vm482, %v477, %v478
      %v487 = vsel %vm482, %v476, %v477
      %v488 = vsel %vm482, %v475, %v476
      %v489 = vsel %vm482, %v474, %v475
      %v490 = vsel %vm482, %v481, %v474
      %v491 = vsel %vm466, 0.0, %v489
      %v492 = vsel %vm467, 0.0, %v488
      %v493 = vsel %vm468, 0.0, %v487
      %v494 = vsel %vm469, 0.0, %v486
      %v495 = vsel %vm470, 0.0, %v485
      %v496 = vsel %vm471, 0.0, %v484
      %v497 = vsel %vm472, 0.0, %v483
      %v498 = vsel %vm473, 0.0, %v490
      %vm499 = vcmp.lt.s32.totalorder %v304, 2
      %vm500 = vcmp.lt.s32.totalorder %v304, 4
      %vm501 = vcmp.lt.s32.totalorder %v304, 6
      %v502 = vsel %vm501, %v458, %v491
      %v503 = vsel %vm501, %v459, %v492
      %v504 = vsel %vm501, %v460, %v493
      %v505 = vsel %vm501, %v461, %v494
      %v506 = vsel %vm501, %v462, %v495
      %v507 = vsel %vm501, %v463, %v496
      %v508 = vsel %vm501, %v464, %v497
      %v509 = vsel %vm501, %v465, %v498
      %v510 = vsel %vm500, %v329, %v502
      %v511 = vsel %vm500, %v330, %v503
      %v512 = vsel %vm500, %v331, %v504
      %v513 = vsel %vm500, %v332, %v505
      %v514 = vsel %vm500, %v333, %v506
      %v515 = vsel %vm500, %v334, %v507
      %v516 = vsel %vm500, %v335, %v508
      %v517 = vsel %vm500, %v336, %v509
      %v518 = vsel %vm499, %v313, %v510
      %v519 = vsel %vm499, %v314, %v511
      %v520 = vsel %vm499, %v315, %v512
      %v521 = vsel %vm499, %v316, %v513
      %v522 = vsel %vm499, %v317, %v514
      %v523 = vsel %vm499, %v318, %v515
      %v524 = vsel %vm499, %v319, %v516
      %v525 = vsel %vm499, %v320, %v517
      %v526 = vpack.c.bf16 %v519, %v518
      %v527 = vpack.c.bf16 %v521, %v520
      %v528 = vpack.c.bf16 %v523, %v522
      %v529 = vpack.c.bf16 %v525, %v524
      %v538 = vunpack.c.l.b16 %v278
      %v539 = vunpack.c.l.b16 %v279
      %v540 = vunpack.c.l.b16 %v280
      %v541 = vunpack.c.l.b16 %v281
      %v542 = vunpack.c.l.b16 %v282
      %v543 = vunpack.c.l.b16 %v283
      %v544 = vunpack.c.l.b16 %v284
      %v545 = vunpack.c.l.b16 %v285
      %v546 = vpack.c.b16 %v539, %v538
      %v547 = vpack.c.b16 %v541, %v540
      %v548 = vpack.c.b16 %v543, %v542
      %v549 = vpack.c.b16 %v545, %v544
      %vm550 = vcmask 64512
      %v553 = vsel %vm550, %v526, %v546
      %v556 = vsel %vm550, %v527, %v547
      %v559 = vsel %vm550, %v528, %v548
      %v562 = vsel %vm550, %v529, %v549
      %v563 = vld [vmem:[%s1] sm:$0xf]
      %v564 = vld [vmem:[%s1 + $0x4] sm:$0xf]
      %v565 = vld [vmem:[%s1 + $0x8] sm:$0xf]
      %v566 = vld [vmem:[%s1 + $0xc] sm:$0xf]
      %v567 = vld [vmem:[%s2] sm:$0x1]
      %v569 = vlaneseq
      %v570 = vshrl.u32 %v569, 7
      %v571 = vsub.s32 0, %v570
      %v572 = vrot.slane %v567, %v571
      %v578 = vunpack.c.l.b16 %v563
      %v579 = vunpack.c.l.b16 %v564
      %v580 = vunpack.c.l.b16 %v565
      %v581 = vunpack.c.l.b16 %v566
      %v582 = vpack.c.b16 %v579, %v578
      %v583 = vpack.c.b16 %v581, %v580
      %vm586 = vcmask 261120
      %v587 = vsel %vm586, %v553, 0
      %v589 = vsel %vm586, %v556, 0
      %v591 = vsel %vm586, %v559, 0
      %v593 = vsel %vm586, %v562, 0
      %595 = vmatprep.subr.bf16.mxu0 0
      %596 = vmatpush1.bf16.msra.mxu0 %v582
      %597 = vmatprep.subr.bf16.mxu0 0
      %598 = vmatpush1.bf16.msra.mxu0 %v583
      %599 = vmatprep.subr.bf16.mxu0 0
      %600 = vmatpush1.bf16.msra.mxu0 0
      %601 = vmatprep.subr.bf16.mxu0 0
      %602 = vmatpush1.bf16.msra.mxu0 0
      %603 = vmatprep.subr.bf16.mxu0 0
      %604 = vmatpush1.bf16.msra.mxu0 0
      %605 = vmatprep.subr.bf16.mxu0 0
      %606 = vmatpush1.bf16.msra.mxu0 0
      %607 = vmatprep.subr.bf16.mxu0 0
      %608 = vmatpush1.bf16.msra.mxu0 0
      %609 = vmatprep.subr.bf16.mxu0 0
      %610 = vmatpush1.bf16.msra.mxu0 0
      %611 = vmatprep.subr.bf16.mxu0 0
      %612 = vmatpush1.bf16.msra.mxu0 0
      %613 = vmatprep.subr.bf16.mxu0 0
      %614 = vmatpush1.bf16.msra.mxu0 0
      %615 = vmatprep.subr.bf16.mxu0 0
      %616 = vmatpush1.bf16.msra.mxu0 0
      %617 = vmatprep.subr.bf16.mxu0 0
      %618 = vmatpush1.bf16.msra.mxu0 0
      %619 = vmatprep.subr.bf16.mxu0 0
      %620 = vmatpush1.bf16.msra.mxu0 0
      %621 = vmatprep.subr.bf16.mxu0 0
      %622 = vmatpush1.bf16.msra.mxu0 0
      %623 = vmatprep.subr.bf16.mxu0 0
      %624 = vmatpush1.bf16.msra.mxu0 0
      %625 = vmatprep.subr.bf16.mxu0 0
      %626 = vmatpush1.bf16.msra.mxu0 0
      %627 = vmatprep.mubr.bf16.mxu0 0
      %628 = vmatmul.mubr.bf16.gmra.mrb[0].mxu0 %v587
      %v629 = vpop.f32.mrb[0].mxu0
      %v630 = vadd.f32 %v572, %v629
      %v631 = vpop.f32.mrb[0].mxu0
      %v632 = vpop.f32.mrb[0].mxu0
      %v633 = vadd.f32 %v572, %v632
      %v634 = vpop.f32.mrb[0].mxu0
      %635 = vmatprep.mubr.bf16.mxu0 0
      %636 = vmatmul.mubr.bf16.gmra.mrb[0].mxu0 %v589
      %v637 = vpop.f32.mrb[0].mxu0
      %v638 = vadd.f32 %v572, %v637
      %v639 = vpop.f32.mrb[0].mxu0
      %v640 = vpop.f32.mrb[0].mxu0
      %v641 = vadd.f32 %v572, %v640
      %v642 = vpop.f32.mrb[0].mxu0
      %643 = vmatprep.mubr.bf16.mxu0 0
      %644 = vmatmul.mubr.bf16.gmra.mrb[0].mxu0 %v591
      %v645 = vpop.f32.mrb[0].mxu0
      %v646 = vadd.f32 %v572, %v645
      %v647 = vpop.f32.mrb[0].mxu0
      %v648 = vpop.f32.mrb[0].mxu0
      %v649 = vadd.f32 %v572, %v648
      %v650 = vpop.f32.mrb[0].mxu0
      %651 = vmatprep.mubr.bf16.mxu0 0
      %652 = vmatmul.mubr.bf16.gmra.mrb[0].mxu0 %v593
      %v653 = vpop.f32.mrb[0].mxu0
      %v654 = vadd.f32 %v572, %v653
      %v655 = vpop.f32.mrb[0].mxu0
      %v656 = vpop.f32.mrb[0].mxu0
      %v657 = vadd.f32 %v572, %v656
      %v658 = vpop.f32.mrb[0].mxu0
      %659 = vdwg.mxu0
      %v660 = vmul.f32 %v630, 0.5
      %v661 = vmul.f32 %v633, 0.5
      %v662 = vmul.f32 %v638, 0.5
      %v663 = vmul.f32 %v641, 0.5
      %v664 = vmul.f32 %v646, 0.5
      %v665 = vmul.f32 %v649, 0.5
      %v666 = vmul.f32 %v654, 0.5
      %v667 = vmul.f32 %v657, 0.5
      %v668 = vmul.f32 %v630, 0.044715
      %v669 = vmul.f32 %v633, 0.044715
      %v670 = vmul.f32 %v638, 0.044715
      %v671 = vmul.f32 %v641, 0.044715
      %v672 = vmul.f32 %v646, 0.044715
      %v673 = vmul.f32 %v649, 0.044715
      %v674 = vmul.f32 %v654, 0.044715
      %v675 = vmul.f32 %v657, 0.044715
      %v676 = vmul.f32 %v668, %v630
      %v677 = vmul.f32 %v669, %v633
      %v678 = vmul.f32 %v670, %v638
      %v679 = vmul.f32 %v671, %v641
      %v680 = vmul.f32 %v672, %v646
      %v681 = vmul.f32 %v673, %v649
      %v682 = vmul.f32 %v674, %v654
      %v683 = vmul.f32 %v675, %v657
      %v684 = vmul.f32 %v676, %v630
      %v685 = vmul.f32 %v677, %v633
      %v686 = vmul.f32 %v678, %v638
      %v687 = vmul.f32 %v679, %v641
      %v688 = vmul.f32 %v680, %v646
      %v689 = vmul.f32 %v681, %v649
      %v690 = vmul.f32 %v682, %v654
      %v691 = vmul.f32 %v683, %v657
      %v692 = vadd.f32 %v630, %v684
      %v693 = vadd.f32 %v633, %v685
      %v694 = vadd.f32 %v638, %v686
      %v695 = vadd.f32 %v641, %v687
      %v696 = vadd.f32 %v646, %v688
      %v697 = vadd.f32 %v649, %v689
      %v698 = vadd.f32 %v654, %v690
      %v699 = vadd.f32 %v657, %v691
      %v700 = vmul.f32 %v692, 0.7978846
      %v701 = vmul.f32 %v693, 0.7978846
      %v702 = vmul.f32 %v694, 0.7978846
      %v703 = vmul.f32 %v695, 0.7978846
      %v704 = vmul.f32 %v696, 0.7978846
      %v705 = vmul.f32 %v697, 0.7978846
      %v706 = vmul.f32 %v698, 0.7978846
      %v707 = vmul.f32 %v699, 0.7978846
      %v708 = vtanh.pop %v700
      %v709 = vtanh.pop %v701
      %v710 = vtanh.pop %v702
      %v711 = vtanh.pop %v703
      %v712 = vtanh.pop %v704
      %v713 = vtanh.pop %v705
      %v714 = vtanh.pop %v706
      %v715 = vtanh.pop %v707
      %v716 = vadd.f32 %v708, 1.0
      %v717 = vadd.f32 %v709, 1.0
      %v718 = vadd.f32 %v710, 1.0
      %v719 = vadd.f32 %v711, 1.0
      %v720 = vadd.f32 %v712, 1.0
      %v721 = vadd.f32 %v713, 1.0
      %v722 = vadd.f32 %v714, 1.0
      %v723 = vadd.f32 %v715, 1.0
      %v724 = vmul.f32 %v660, %v716
      %v725 = vmul.f32 %v661, %v717
      %v726 = vmul.f32 %v662, %v718
      %v727 = vmul.f32 %v663, %v719
      %v728 = vmul.f32 %v664, %v720
      %v729 = vmul.f32 %v665, %v721
      %v730 = vmul.f32 %v666, %v722
      %v731 = vmul.f32 %v667, %v723
      %v732 = vpack.c.bf16 %v725, %v724
      %v733 = vpack.c.bf16 %v727, %v726
      %v734 = vpack.c.bf16 %v729, %v728
      %v735 = vpack.c.bf16 %v731, %v730
      %v736 = vld [vmem:[%s3] sm:$0xf]
      %v737 = vld [vmem:[%s3 + $0x4] sm:$0xf]
      %v738 = vld [vmem:[%s3 + $0x8] sm:$0xf]
      %v739 = vld [vmem:[%s3 + $0xc] sm:$0xf]
      %v740 = vld [vmem:[%s3 + $0x10] sm:$0xf]
      %v741 = vld [vmem:[%s3 + $0x14] sm:$0xf]
      %v742 = vld [vmem:[%s3 + $0x18] sm:$0xf]
      %v743 = vld [vmem:[%s3 + $0x1c] sm:$0xf]
      %v744 = vld [vmem:[%s4] sm:$0x1]
      %v746 = vlaneseq
      %v747 = vshrl.u32 %v746, 7
      %v748 = vsub.s32 0, %v747
      %v749 = vrot.slane %v744, %v748
      %v759 = vunpack.c.l.b16 %v736
      %v760 = vunpack.c.l.b16 %v737
      %v761 = vunpack.c.l.b16 %v738
      %v762 = vunpack.c.l.b16 %v739
      %v763 = vunpack.c.l.b16 %v740
      %v764 = vunpack.c.l.b16 %v741
      %v765 = vunpack.c.l.b16 %v742
      %v766 = vunpack.c.l.b16 %v743
      %v767 = vpack.c.b16 %v760, %v759
      %v768 = vpack.c.b16 %v762, %v761
      %v769 = vpack.c.b16 %v764, %v763
      %v770 = vpack.c.b16 %v766, %v765
      %vm775 = vcmask 523264
      %v777 = vsel %vm775, %v732, 0
      %v780 = vsel %vm775, %v733, 0
      %v783 = vsel %vm775, %v734, 0
      %v786 = vsel %vm775, %v735, 0
      %788 = vmatprep.subr.bf16.mxu0 0
      %789 = vmatpush1.bf16.msra.mxu0 %v767
      %790 = vmatprep.subr.bf16.mxu0 0
      %791 = vmatpush1.bf16.msra.mxu0 %v768
      %792 = vmatprep.subr.bf16.mxu0 0
      %793 = vmatpush1.bf16.msra.mxu0 %v769
      %794 = vmatprep.subr.bf16.mxu0 0
      %795 = vmatpush1.bf16.msra.mxu0 %v770
      %796 = vmatprep.subr.bf16.mxu0 0
      %797 = vmatpush1.bf16.msra.mxu0 0
      %798 = vmatprep.subr.bf16.mxu0 0
      %799 = vmatpush1.bf16.msra.mxu0 0
      %800 = vmatprep.subr.bf16.mxu0 0
      %801 = vmatpush1.bf16.msra.mxu0 0
      %802 = vmatprep.subr.bf16.mxu0 0
      %803 = vmatpush1.bf16.msra.mxu0 0
      %804 = vmatprep.subr.bf16.mxu0 0
      %805 = vmatpush1.bf16.msra.mxu0 0
      %806 = vmatprep.subr.bf16.mxu0 0
      %807 = vmatpush1.bf16.msra.mxu0 0
      %808 = vmatprep.subr.bf16.mxu0 0
      %809 = vmatpush1.bf16.msra.mxu0 0
      %810 = vmatprep.subr.bf16.mxu0 0
      %811 = vmatpush1.bf16.msra.mxu0 0
      %812 = vmatprep.subr.bf16.mxu0 0
      %813 = vmatpush1.bf16.msra.mxu0 0
      %814 = vmatprep.subr.bf16.mxu0 0
      %815 = vmatpush1.bf16.msra.mxu0 0
      %816 = vmatprep.subr.bf16.mxu0 0
      %817 = vmatpush1.bf16.msra.mxu0 0
      %818 = vmatprep.subr.bf16.mxu0 0
      %819 = vmatpush1.bf16.msra.mxu0 0
      %820 = vmatprep.mubr.bf16.mxu0 0
      %821 = vmatmul.mubr.bf16.gmra.mrb[0].mxu0 %v777
      %v822 = vpop.f32.mrb[0].mxu0
      %v823 = vadd.f32 %v749, %v822
      %v824 = vpop.f32.mrb[0].mxu0
      %v825 = vpop.f32.mrb[0].mxu0
      %v826 = vadd.f32 %v749, %v825
      %v827 = vpop.f32.mrb[0].mxu0
      %828 = vmatprep.mubr.bf16.mxu0 0
      %829 = vmatmul.mubr.bf16.gmra.mrb[0].mxu0 %v780
      %v830 = vpop.f32.mrb[0].mxu0
      %v831 = vadd.f32 %v749, %v830
      %v832 = vpop.f32.mrb[0].mxu0
      %v833 = vpop.f32.mrb[0].mxu0
      %v834 = vadd.f32 %v749, %v833
      %v835 = vpop.f32.mrb[0].mxu0
      %836 = vmatprep.mubr.bf16.mxu0 0
      %837 = vmatmul.mubr.bf16.gmra.mrb[0].mxu0 %v783
      %v838 = vpop.f32.mrb[0].mxu0
      %v839 = vadd.f32 %v749, %v838
      %v840 = vpop.f32.mrb[0].mxu0
      %v841 = vpop.f32.mrb[0].mxu0
      %v842 = vadd.f32 %v749, %v841
      %v843 = vpop.f32.mrb[0].mxu0
      %844 = vmatprep.mubr.bf16.mxu0 0
      %845 = vmatmul.mubr.bf16.gmra.mrb[0].mxu0 %v786
      %v846 = vpop.f32.mrb[0].mxu0
      %v847 = vadd.f32 %v749, %v846
      %v848 = vpop.f32.mrb[0].mxu0
      %v849 = vpop.f32.mrb[0].mxu0
      %v850 = vadd.f32 %v749, %v849
      %v851 = vpop.f32.mrb[0].mxu0
      %852 = vdwg.mxu0
      %v853 = vadd.f32 %v823, %v286
      %v854 = vadd.f32 %v826, %v287
      %v855 = vadd.f32 %v831, %v288
      %v856 = vadd.f32 %v834, %v289
      %v857 = vadd.f32 %v839, %v290
      %v858 = vadd.f32 %v842, %v291
      %v859 = vadd.f32 %v847, %v292
      %v860 = vadd.f32 %v850, %v293
      %v861 = vld [vmem:[%s269] sm:$0xf]
      %v862 = vld [vmem:[%s269 + $0x4] sm:$0xf]
      %v863 = vld [vmem:[%s269 + $0x8] sm:$0xf]
      %v864 = vld [vmem:[%s269 + $0xc] sm:$0xf]
      %v865 = vld [vmem:[%s269 + $0x10] sm:$0xf]
      %v866 = vld [vmem:[%s269 + $0x14] sm:$0xf]
      %v867 = vld [vmem:[%s269 + $0x18] sm:$0xf]
      %v868 = vld [vmem:[%s269 + $0x1c] sm:$0xf]
      %v869 = vunpack.c.l.bf16 %v861
      %v870 = vunpack.c.l.bf16 %v862
      %v871 = vunpack.c.l.bf16 %v863
      %v872 = vunpack.c.l.bf16 %v864
      %v873 = vunpack.c.l.bf16 %v865
      %v874 = vunpack.c.l.bf16 %v866
      %v875 = vunpack.c.l.bf16 %v867
      %v876 = vunpack.c.l.bf16 %v868
      %v877 = vadd.f32 %v853, %v869
      %v878 = vadd.f32 %v854, %v870
      %v879 = vadd.f32 %v855, %v871
      %v880 = vadd.f32 %v856, %v872
      %v881 = vadd.f32 %v857, %v873
      %v882 = vadd.f32 %v858, %v874
      %v883 = vadd.f32 %v859, %v875
      %v884 = vadd.f32 %v860, %v876
      %v885 = vpack.c.bf16 %v878, %v877
      %v886 = vpack.c.bf16 %v880, %v879
      %v887 = vpack.c.bf16 %v882, %v881
      %v888 = vpack.c.bf16 %v884, %v883
      %v893 = vunpack.c.l.b16 %v885
      %v894 = vunpack.c.h.b16 %v885
      %v895 = vunpack.c.l.b16 %v886
      %v896 = vunpack.c.h.b16 %v886
      %v897 = vunpack.c.l.b16 %v887
      %v898 = vunpack.c.h.b16 %v887
      %v899 = vunpack.c.l.b16 %v888
      %v900 = vunpack.c.h.b16 %v888
      %v901 = vpack.c.b16 %v893, %v893
      %v902 = vpack.c.b16 %v894, %v894
      %v903 = vpack.c.b16 %v895, %v895
      %v904 = vpack.c.b16 %v896, %v896
      %v905 = vpack.c.b16 %v897, %v897
      %v906 = vpack.c.b16 %v898, %v898
      %v907 = vpack.c.b16 %v899, %v899
      %v908 = vpack.c.b16 %v900, %v900
      %vm917 = vcmask 257024
      %918 = vst.msk [vmem:[%s275] sm:$0xf] %vm917, %v901
      %919 = vst.msk [vmem:[%s275 + $0x4] sm:$0xf] %vm917, %v902
      %920 = vst.msk [vmem:[%s275 + $0x8] sm:$0xf] %vm917, %v903
      %921 = vst.msk [vmem:[%s275 + $0xc] sm:$0xf] %vm917, %v904
      %922 = vst.msk [vmem:[%s275 + $0x10] sm:$0xf] %vm917, %v905
      %923 = vst.msk [vmem:[%s275 + $0x14] sm:$0xf] %vm917, %v906
      %924 = vst.msk [vmem:[%s275 + $0x18] sm:$0xf] %vm917, %v907
      %925 = vst.msk [vmem:[%s275 + $0x1c] sm:$0xf] %vm917, %v908
      %s926 = smul.u32 8, %s17
      %p927 = scmp.lt.s32.totalorder %s926, 15
      %s928 = scalar_select %p927, %s926, 15
      %s929 = smul.addr %s928, 4
      %s930 = scalar_lea.vmem %s6, %s929
      // Predicated region
      $region45: #{_lambda_.36} parent=43 // pred_check
        %p931 = pneg %p171
      $region46: #{_lambda_.36} parent=43 // pred_check_branch
        %933 = sbr.rel (%p931) target = $region48
      $region47: #{_lambda_.36} parent=43 // pred_region
        %s934 = smul.u32 8, %s17
      $region48: #{_lambda_.36} parent=43 // pred_fallthru
        _
    $region44: #{_lambda_.36} parent=5 // pred_fallthru
      _
    %p935 = scmp.le.s32.totalorder 2, %s12
    // Predicated region
    $region49: #{_lambda_.36} parent=5 // pred_check
      %p936 = pneg %p935
    $region50: #{_lambda_.36} parent=5 // pred_check_branch
      %938 = sbr.rel (%p936) target = $region52
    $region51: #{_lambda_.36} parent=5 // pred_region
      %s939 = ssub.s32 %s12, 2
      // Predicated region
      $region53: #{_lambda_.36} parent=51 // pred_check
        %p940 = pneg %p177
      $region54: #{_lambda_.36} parent=51 // pred_check_branch
        %942 = sbr.rel (%p940) target = $region56
      $region55: #{_lambda_.36} parent=51 // pred_region
        %s943 = smul.u32 8, %s18
        %p944 = scmp.lt.s32.totalorder %s943, 15
        %s945 = scalar_select %p944, %s943, 15
        %s946 = smul.addr %s945, 4
        %s947 = scalar_lea.vmem %s6, %s946
      $region56: #{_lambda_.36} parent=51 // pred_fallthru
        _
    $region52: #{_lambda_.36} parent=5 // pred_fallthru
      _
  $region6: #{_lambda_.36} parent=0 // loop_footer
    %s16 = sadd.s32 1, %s12
  $region7: #{_lambda_.36} parent=0 // loop_footer_branch
    %11 = sbr.rel target = $region3
  $region8: #{_lambda_.36} parent=0 // loop_exit
    _

// kernel: _lambda_.21
$region0: #{_lambda_.21}
  #allocation0 [shape = 'u32[]', space=smem, size = 0x4, offset = 0x4, fixed_abs, tag = 'smem constant byte address 0x4 - core index']
  #allocation1 [shape = 'u32[144,128]{1,0:T(1,128)}', space=vmem, size = 0x12000, scoped, tag = 'internal scratch']
  %s0 = inlined_call_operand.vmem [shape: bf16[8,64], index: 0, kind: input, shape index: {}]
  %s1 = inlined_call_operand.vmem [shape: bf16[64,16], index: 1, kind: input, shape index: {}]
  %s2 = inlined_call_operand.hbm [shape: f32[1,16], index: 2, kind: input, shape index: {}]
  %s3 = inlined_call_operand.vmem [shape: bf16[16,64], index: 3, kind: input, shape index: {}]
  %s4 = inlined_call_operand.hbm [shape: f32[1,64], index: 4, kind: input, shape index: {}]
  %s5 = inlined_call_operand.vmem [shape: bf16[8,64], index: 5, kind: output, shape index: {}]
  %s6 = sld [smem:[#allocation0]]
  $region38: #{_lambda_.21} parent=0
    _
  %s8 = ssub.s32 1, %s6
  %s9 = scalar_select 0, %s8, %s6
  $region1: #{_lambda_.21} parent=0
    #allocation2 [shape = 'u8[512]{0}', space=vmem, size = 0x400, scoped, tag = 'input window, operand 2, single buffered']
    #allocation3 [shape = 's32[1]{0}', space=sflag, size = 0x4, scoped, tag = 'scoped memory for _lambda_.21']
    #allocation4 [shape = 'u8[512]{0}', space=vmem, size = 0x400, scoped, tag = 'input window, operand 4, single buffered']
    #allocation5 [shape = 's32[1]{0}', space=sflag, size = 0x4, scoped, tag = 'scoped memory for _lambda_.21']
    %10 = vsyncpa [#allocation3], 0
    %11 = vsyncpa [#allocation5], 0
    // Predicated region
    $region2: #{_lambda_.21} parent=1 // pred_check
      _
    $region3: #{_lambda_.21} parent=1 // pred_check_branch
      %13 = sbr.rel (0) target = $region5
    $region4: #{_lambda_.21} parent=1 // pred_region
      _
    $region5: #{_lambda_.21} parent=1 // pred_fallthru
      _
    // Predicated region
    $region6: #{_lambda_.21} parent=1 // pred_check
      _
    $region7: #{_lambda_.21} parent=1 // pred_check_branch
      %15 = sbr.rel (0) target = $region9
    $region8: #{_lambda_.21} parent=1 // pred_region
      _
    $region9: #{_lambda_.21} parent=1 // pred_fallthru
      _
    // Predicated region
    $region10: #{_lambda_.21} parent=1 // pred_check
      _
    $region11: #{_lambda_.21} parent=1 // pred_check_branch
      %17 = sbr.rel (0) target = $region13
    $region12: #{_lambda_.21} parent=1 // pred_region
      %s19 = ssub.s32 16, 16
      %20 = vsyncadd [#allocation3], %s19
      %s22 = sshll.u32 [#allocation2], 4
      %s23 = int_to_ptr.vmem [resolvable:$true] %s22
      %25 = dma.hbm_to_vmem [thread:$0]  %s2, 16, %s23, [#allocation3]
    $region13: #{_lambda_.21} parent=1 // pred_fallthru
      _
    // Predicated region
    $region14: #{_lambda_.21} parent=1 // pred_check
      _
    $region15: #{_lambda_.21} parent=1 // pred_check_branch
      %27 = sbr.rel (0) target = $region17
    $region16: #{_lambda_.21} parent=1 // pred_region
      _
    $region17: #{_lambda_.21} parent=1 // pred_fallthru
      _
    // Predicated region
    $region18: #{_lambda_.21} parent=1 // pred_check
      _
    $region19: #{_lambda_.21} parent=1 // pred_check_branch
      %29 = sbr.rel (0) target = $region21
    $region20: #{_lambda_.21} parent=1 // pred_region
      %s31 = ssub.s32 16, 16
      %32 = vsyncadd [#allocation5], %s31
      %s34 = sshll.u32 [#allocation4], 4
      %s35 = int_to_ptr.vmem [resolvable:$true] %s34
      %37 = dma.hbm_to_vmem [thread:$0]  %s4, 16, %s35, [#allocation5]
    $region21: #{_lambda_.21} parent=1 // pred_fallthru
      _
    // Predicated region
    $region22: #{_lambda_.21} parent=1 // pred_check
      _
    $region23: #{_lambda_.21} parent=1 // pred_check_branch
      %39 = sbr.rel (0) target = $region25
    $region24: #{_lambda_.21} parent=1 // pred_region
      %40 = dma.done [#allocation3], 16
    $region25: #{_lambda_.21} parent=1 // pred_fallthru
      _
    // Predicated region
    $region26: #{_lambda_.21} parent=1 // pred_check
      _
    $region27: #{_lambda_.21} parent=1 // pred_check_branch
      %42 = sbr.rel (0) target = $region29
    $region28: #{_lambda_.21} parent=1 // pred_region
      %43 = dma.done [#allocation5], 16
    $region29: #{_lambda_.21} parent=1 // pred_fallthru
      _
    %v45 = vld [vmem:[%s0] sm:$0xf]
    %v46 = vld [vmem:[%s1] sm:$0xf]
    %v47 = vld [vmem:[%s1 + $0x4] sm:$0xf]
    %v48 = vld [vmem:[%s1 + $0x8] sm:$0xf]
    %v49 = vld [vmem:[%s1 + $0xc] sm:$0xf]
    %v50 = vld [vmem:[%s1 + $0x10] sm:$0xf]
    %v51 = vld [vmem:[%s1 + $0x14] sm:$0xf]
    %v52 = vld [vmem:[%s1 + $0x18] sm:$0xf]
    %v53 = vld [vmem:[%s1 + $0x1c] sm:$0xf]
    %v54 = vld [vmem:[#allocation2] sm:$0x1]
    %v56 = vlaneseq
    %v57 = vshrl.u32 %v56, 7
    %v58 = vsub.s32 0, %v57
    %v59 = vrot.slane %v54, %v58
    %v69 = vunpack.c.l.b16 %v46
    %v70 = vunpack.c.l.b16 %v47
    %v71 = vunpack.c.l.b16 %v48
    %v72 = vunpack.c.l.b16 %v49
    %v73 = vunpack.c.l.b16 %v50
    %v74 = vunpack.c.l.b16 %v51
    %v75 = vunpack.c.l.b16 %v52
    %v76 = vunpack.c.l.b16 %v53
    %v77 = vpack.c.b16 %v70, %v69
    %v78 = vpack.c.b16 %v72, %v71
    %v79 = vpack.c.b16 %v74, %v73
    %v80 = vpack.c.b16 %v76, %v75
    %vm85 = vcmask 523264
    %v87 = vsel %vm85, %v45, 0
    %89 = vmatprep.subr.bf16.mxu0 0
    %90 = vmatpush1.bf16.msra.mxu0 %v77
    %91 = vmatprep.subr.bf16.mxu0 0
    %92 = vmatpush1.bf16.msra.mxu0 %v78
    %93 = vmatprep.subr.bf16.mxu0 0
    %94 = vmatpush1.bf16.msra.mxu0 %v79
    %95 = vmatprep.subr.bf16.mxu0 0
    %96 = vmatpush1.bf16.msra.mxu0 %v80
    %97 = vmatprep.subr.bf16.mxu0 0
    %98 = vmatpush1.bf16.msra.mxu0 0
    %99 = vmatprep.subr.bf16.mxu0 0
    %100 = vmatpush1.bf16.msra.mxu0 0
    %101 = vmatprep.subr.bf16.mxu0 0
    %102 = vmatpush1.bf16.msra.mxu0 0
    %103 = vmatprep.subr.bf16.mxu0 0
    %104 = vmatpush1.bf16.msra.mxu0 0
    %105 = vmatprep.subr.bf16.mxu0 0
    %106 = vmatpush1.bf16.msra.mxu0 0
    %107 = vmatprep.subr.bf16.mxu0 0
    %108 = vmatpush1.bf16.msra.mxu0 0
    %109 = vmatprep.subr.bf16.mxu0 0
    %110 = vmatpush1.bf16.msra.mxu0 0
    %111 = vmatprep.subr.bf16.mxu0 0
    %112 = vmatpush1.bf16.msra.mxu0 0
    %113 = vmatprep.subr.bf16.mxu0 0
    %114 = vmatpush1.bf16.msra.mxu0 0
    %115 = vmatprep.subr.bf16.mxu0 0
    %116 = vmatpush1.bf16.msra.mxu0 0
    %117 = vmatprep.subr.bf16.mxu0 0
    %118 = vmatpush1.bf16.msra.mxu0 0
    %119 = vmatprep.subr.bf16.mxu0 0
    %120 = vmatpush1.bf16.msra.mxu0 0
    %121 = vmatprep.mubr.bf16.mxu0 0
    %122 = vmatmul.mubr.bf16.gmra.mrb[0].mxu0 %v87
    %v123 = vpop.f32.mrb[0].mxu0
    %v124 = vadd.f32 %v59, %v123
    %v125 = vpop.f32.mrb[0].mxu0
    %v126 = vpop.f32.mrb[0].mxu0
    %v127 = vpop.f32.mrb[0].mxu0
    %128 = vdwg.mxu0
    %v129 = vmul.f32 %v124, 0.5
    %v130 = vmul.f32 %v124, 0.044715
    %v131 = vmul.f32 %v130, %v124
    %v132 = vmul.f32 %v131, %v124
    %v133 = vadd.f32 %v124, %v132
    %v134 = vmul.f32 %v133, 0.7978846
    %v135 = vtanh.pop %v134
    %v136 = vadd.f32 %v135, 1.0
    %v137 = vmul.f32 %v129, %v136
    %v138 = vpack.c.bf16 %v137, %v137
    %v139 = vld [vmem:[%s3] sm:$0xf]
    %v140 = vld [vmem:[%s3 + $0x4] sm:$0xf]
    %v141 = vld [vmem:[#allocation4] sm:$0x1]
    %v143 = vlaneseq
    %v144 = vshrl.u32 %v143, 7
    %v145 = vsub.s32 0, %v144
    %v146 = vrot.slane %v141, %v145
    %v150 = vunpack.c.l.b16 %v139
    %v151 = vunpack.c.l.b16 %v140
    %v152 = vpack.c.b16 %v151, %v150
    %vm154 = vcmask 130048
    %v156 = vsel %vm154, %v138, 0
    %158 = vmatprep.subr.bf16.mxu0 0
    %159 = vmatpush1.bf16.msra.mxu0 %v152
    %160 = vmatprep.subr.bf16.mxu0 0
    %161 = vmatpush1.bf16.msra.mxu0 0
    %162 = vmatprep.subr.bf16.mxu0 0
    %163 = vmatpush1.bf16.msra.mxu0 0
    %164 = vmatprep.subr.bf16.mxu0 0
    %165 = vmatpush1.bf16.msra.mxu0 0
    %166 = vmatprep.subr.bf16.mxu0 0
    %167 = vmatpush1.bf16.msra.mxu0 0
    %168 = vmatprep.subr.bf16.mxu0 0
    %169 = vmatpush1.bf16.msra.mxu0 0
    %170 = vmatprep.subr.bf16.mxu0 0
    %171 = vmatpush1.bf16.msra.mxu0 0
    %172 = vmatprep.subr.bf16.mxu0 0
    %173 = vmatpush1.bf16.msra.mxu0 0
    %174 = vmatprep.subr.bf16.mxu0 0
    %175 = vmatpush1.bf16.msra.mxu0 0
    %176 = vmatprep.subr.bf16.mxu0 0
    %177 = vmatpush1.bf16.msra.mxu0 0
    %178 = vmatprep.subr.bf16.mxu0 0
    %179 = vmatpush1.bf16.msra.mxu0 0
    %180 = vmatprep.subr.bf16.mxu0 0
    %181 = vmatpush1.bf16.msra.mxu0 0
    %182 = vmatprep.subr.bf16.mxu0 0
    %183 = vmatpush1.bf16.msra.mxu0 0
    %184 = vmatprep.subr.bf16.mxu0 0
    %185 = vmatpush1.bf16.msra.mxu0 0
    %186 = vmatprep.subr.bf16.mxu0 0
    %187 = vmatpush1.bf16.msra.mxu0 0
    %188 = vmatprep.subr.bf16.mxu0 0
    %189 = vmatpush1.bf16.msra.mxu0 0
    %190 = vmatprep.mubr.bf16.mxu0 0
    %191 = vmatmul.mubr.bf16.gmra.mrb[0].mxu0 %v156
    %v192 = vpop.f32.mrb[0].mxu0
    %v193 = vadd.f32 %v146, %v192
    %v194 = vpop.f32.mrb[0].mxu0
    %v195 = vpop.f32.mrb[0].mxu0
    %v196 = vpop.f32.mrb[0].mxu0
    %197 = vdwg.mxu0
    %v198 = vunpack.c.l.bf16 %v45
    %v199 = vadd.f32 %v193, %v198
    %v200 = vpack.c.bf16 %v199, %v199
    %vm201 = vcmask 519168
    %202 = vst.msk [vmem:[%s5] sm:$0xf] %vm201, %v200
    // Predicated region
    $region30: #{_lambda_.21} parent=1 // pred_check
      _
    $region31: #{_lambda_.21} parent=1 // pred_check_branch
      %204 = sbr.rel (0) target = $region33
    $region32: #{_lambda_.21} parent=1 // pred_region
      _
    $region33: #{_lambda_.21} parent=1 // pred_fallthru
      _
    // Predicated region
    $region34: #{_lambda_.21} parent=1 // pred_check
      _
    $region35: #{_lambda_.21} parent=1 // pred_check_branch
      %206 = sbr.rel (0) target = $region37
    $region36: #{_lambda_.21} parent=1 // pred_region
      _
    $region37: #{_lambda_.21} parent=1 // pred_fallthru
      _
    %207 = vsyncpa [#allocation3], 1
    %208 = vsyncpa [#allocation5], 1

// kernel: _lambda_.22
$region0: #{_lambda_.22}
  #allocation0 [shape = 'u32[]', space=smem, size = 0x4, offset = 0x4, fixed_abs, tag = 'smem constant byte address 0x4 - core index']
  #allocation1 [shape = 'u32[144,128]{1,0:T(1,128)}', space=vmem, size = 0x12000, scoped, tag = 'internal scratch']
  %s0 = inlined_call_operand.vmem [shape: bf16[8,64], index: 0, kind: input, shape index: {}]
  %s1 = inlined_call_operand.vmem [shape: bf16[64,32], index: 1, kind: input, shape index: {}]
  %s2 = inlined_call_operand.vmem [shape: f32[1,32], index: 2, kind: input, shape index: {}]
  %s3 = inlined_call_operand.vmem [shape: bf16[8,32], index: 3, kind: output, shape index: {}]
  %s4 = sld [smem:[#allocation0]]
  $region22: #{_lambda_.22} parent=0
    _
  %s6 = ssub.s32 1, %s4
  %s7 = scalar_select 0, %s6, %s4
  // Predicated region
  $region2: #{_lambda_.22} parent=0 // pred_check
    _
  $region3: #{_lambda_.22} parent=0 // pred_check_branch
    %9 = sbr.rel (0) target = $region5
  $region4: #{_lambda_.22} parent=0 // pred_region
    _
  $region5: #{_lambda_.22} parent=0 // pred_fallthru
    _
  // Predicated region
  $region6: #{_lambda_.22} parent=0 // pred_check
    _
  $region7: #{_lambda_.22} parent=0 // pred_check_branch
    %11 = sbr.rel (0) target = $region9
  $region8: #{_lambda_.22} parent=0 // pred_region
    _
  $region9: #{_lambda_.22} parent=0 // pred_fallthru
    _
  // Predicated region
  $region10: #{_lambda_.22} parent=0 // pred_check
    _
  $region11: #{_lambda_.22} parent=0 // pred_check_branch
    %13 = sbr.rel (0) target = $region13
  $region12: #{_lambda_.22} parent=0 // pred_region
    _
  $region13: #{_lambda_.22} parent=0 // pred_fallthru
    _
  %v15 = vld [vmem:[%s0] sm:$0xf]
  %v16 = vld [vmem:[%s1] sm:$0xf]
  %v17 = vld [vmem:[%s1 + $0x4] sm:$0xf]
  %v18 = vld [vmem:[%s1 + $0x8] sm:$0xf]
  %v19 = vld [vmem:[%s1 + $0xc] sm:$0xf]
  %v20 = vld [vmem:[%s1 + $0x10] sm:$0xf]
  %v21 = vld [vmem:[%s1 + $0x14] sm:$0xf]
  %v22 = vld [vmem:[%s1 + $0x18] sm:$0xf]
  %v23 = vld [vmem:[%s1 + $0x1c] sm:$0xf]
  %v24 = vld [vmem:[%s2] sm:$0x1]
  %v26 = vlaneseq
  %v27 = vshrl.u32 %v26, 7
  %v28 = vsub.s32 0, %v27
  %v29 = vrot.slane %v24, %v28
  %v39 = vunpack.c.l.b16 %v16
  %v40 = vunpack.c.l.b16 %v17
  %v41 = vunpack.c.l.b16 %v18
  %v42 = vunpack.c.l.b16 %v19
  %v43 = vunpack.c.l.b16 %v20
  %v44 = vunpack.c.l.b16 %v21
  %v45 = vunpack.c.l.b16 %v22
  %v46 = vunpack.c.l.b16 %v23
  %v47 = vpack.c.b16 %v40, %v39
  %v48 = vpack.c.b16 %v42, %v41
  %v49 = vpack.c.b16 %v44, %v43
  %v50 = vpack.c.b16 %v46, %v45
  %vm55 = vcmask 523264
  %v57 = vsel %vm55, %v15, 0
  %59 = vmatprep.subr.bf16.mxu0 0
  %60 = vmatpush1.bf16.msra.mxu0 %v47
  %61 = vmatprep.subr.bf16.mxu0 0
  %62 = vmatpush1.bf16.msra.mxu0 %v48
  %63 = vmatprep.subr.bf16.mxu0 0
  %64 = vmatpush1.bf16.msra.mxu0 %v49
  %65 = vmatprep.subr.bf16.mxu0 0
  %66 = vmatpush1.bf16.msra.mxu0 %v50
  %67 = vmatprep.subr.bf16.mxu0 0
  %68 = vmatpush1.bf16.msra.mxu0 0
  %69 = vmatprep.subr.bf16.mxu0 0
  %70 = vmatpush1.bf16.msra.mxu0 0
  %71 = vmatprep.subr.bf16.mxu0 0
  %72 = vmatpush1.bf16.msra.mxu0 0
  %73 = vmatprep.subr.bf16.mxu0 0
  %74 = vmatpush1.bf16.msra.mxu0 0
  %75 = vmatprep.subr.bf16.mxu0 0
  %76 = vmatpush1.bf16.msra.mxu0 0
  %77 = vmatprep.subr.bf16.mxu0 0
  %78 = vmatpush1.bf16.msra.mxu0 0
  %79 = vmatprep.subr.bf16.mxu0 0
  %80 = vmatpush1.bf16.msra.mxu0 0
  %81 = vmatprep.subr.bf16.mxu0 0
  %82 = vmatpush1.bf16.msra.mxu0 0
  %83 = vmatprep.subr.bf16.mxu0 0
  %84 = vmatpush1.bf16.msra.mxu0 0
  %85 = vmatprep.subr.bf16.mxu0 0
  %86 = vmatpush1.bf16.msra.mxu0 0
  %87 = vmatprep.subr.bf16.mxu0 0
  %88 = vmatpush1.bf16.msra.mxu0 0
  %89 = vmatprep.subr.bf16.mxu0 0
  %90 = vmatpush1.bf16.msra.mxu0 0
  %91 = vmatprep.mubr.bf16.mxu0 0
  %92 = vmatmul.mubr.bf16.gmra.mrb[0].mxu0 %v57
  %v93 = vpop.f32.mrb[0].mxu0
  %v94 = vadd.f32 %v29, %v93
  %v95 = vpop.f32.mrb[0].mxu0
  %v96 = vpop.f32.mrb[0].mxu0
  %v97 = vpop.f32.mrb[0].mxu0
  %98 = vdwg.mxu0
  %v99 = vpack.c.bf16 %v94, %v94
  %vm100 = vcmask 257024
  %101 = vst.msk [vmem:[%s3] sm:$0xf] %vm100, %v99
  // Predicated region
  $region14: #{_lambda_.22} parent=0 // pred_check
    _
  $region15: #{_lambda_.22} parent=0 // pred_check_branch
    %103 = sbr.rel (0) target = $region17
  $region16: #{_lambda_.22} parent=0 // pred_region
    _
  $region17: #{_lambda_.22} parent=0 // pred_fallthru
    _
  // Predicated region
  $region18: #{_lambda_.22} parent=0 // pred_check
    _
  $region19: #{_lambda_.22} parent=0 // pred_check_branch
    %105 = sbr.rel (0) target = $region21
  $region20: #{_lambda_.22} parent=0 // pred_region
    _
  $region21: #{_lambda_.22} parent=0 // pred_fallthru
    _

// kernel: _lambda_.23
$region0: #{_lambda_.23}
  #allocation0 [shape = 'u32[]', space=smem, size = 0x4, offset = 0x4, fixed_abs, tag = 'smem constant byte address 0x4 - core index']
  #allocation1 [shape = 'u32[144,128]{1,0:T(1,128)}', space=vmem, size = 0x12000, scoped, tag = 'internal scratch']
  %s0 = inlined_call_operand.vmem [shape: bf16[8,32], index: 0, kind: input, shape index: {}]
  %s1 = inlined_call_operand.vmem [shape: bf16[32,8], index: 1, kind: input, shape index: {}]
  %s2 = inlined_call_operand.hbm [shape: f32[1,8], index: 2, kind: input, shape index: {}]
  %s3 = inlined_call_operand.vmem [shape: bf16[8,32], index: 3, kind: input, shape index: {}]
  %s4 = inlined_call_operand.hbm [shape: f32[1,32], index: 4, kind: input, shape index: {}]
  %s5 = inlined_call_operand.vmem [shape: bf16[8,32], index: 5, kind: output, shape index: {}]
  %s6 = sld [smem:[#allocation0]]
  $region38: #{_lambda_.23} parent=0
    _
  %s8 = ssub.s32 1, %s6
  %s9 = scalar_select 0, %s8, %s6
  $region1: #{_lambda_.23} parent=0
    #allocation2 [shape = 'u8[512]{0}', space=vmem, size = 0x400, scoped, tag = 'input window, operand 2, single buffered']
    #allocation3 [shape = 's32[1]{0}', space=sflag, size = 0x4, scoped, tag = 'scoped memory for _lambda_.23']
    #allocation4 [shape = 'u8[512]{0}', space=vmem, size = 0x400, scoped, tag = 'input window, operand 4, single buffered']
    #allocation5 [shape = 's32[1]{0}', space=sflag, size = 0x4, scoped, tag = 'scoped memory for _lambda_.23']
    %10 = vsyncpa [#allocation3], 0
    %11 = vsyncpa [#allocation5], 0
    // Predicated region
    $region2: #{_lambda_.23} parent=1 // pred_check
      _
    $region3: #{_lambda_.23} parent=1 // pred_check_branch
      %13 = sbr.rel (0) target = $region5
    $region4: #{_lambda_.23} parent=1 // pred_region
      _
    $region5: #{_lambda_.23} parent=1 // pred_fallthru
      _
    // Predicated region
    $region6: #{_lambda_.23} parent=1 // pred_check
      _
    $region7: #{_lambda_.23} parent=1 // pred_check_branch
      %15 = sbr.rel (0) target = $region9
    $region8: #{_lambda_.23} parent=1 // pred_region
      _
    $region9: #{_lambda_.23} parent=1 // pred_fallthru
      _
    // Predicated region
    $region10: #{_lambda_.23} parent=1 // pred_check
      _
    $region11: #{_lambda_.23} parent=1 // pred_check_branch
      %17 = sbr.rel (0) target = $region13
    $region12: #{_lambda_.23} parent=1 // pred_region
      %s19 = ssub.s32 16, 16
      %20 = vsyncadd [#allocation3], %s19
      %s22 = sshll.u32 [#allocation2], 4
      %s23 = int_to_ptr.vmem [resolvable:$true] %s22
      %25 = dma.hbm_to_vmem [thread:$0]  %s2, 16, %s23, [#allocation3]
    $region13: #{_lambda_.23} parent=1 // pred_fallthru
      _
    // Predicated region
    $region14: #{_lambda_.23} parent=1 // pred_check
      _
    $region15: #{_lambda_.23} parent=1 // pred_check_branch
      %27 = sbr.rel (0) target = $region17
    $region16: #{_lambda_.23} parent=1 // pred_region
      _
    $region17: #{_lambda_.23} parent=1 // pred_fallthru
      _
    // Predicated region
    $region18: #{_lambda_.23} parent=1 // pred_check
      _
    $region19: #{_lambda_.23} parent=1 // pred_check_branch
      %29 = sbr.rel (0) target = $region21
    $region20: #{_lambda_.23} parent=1 // pred_region
      %s31 = ssub.s32 16, 16
      %32 = vsyncadd [#allocation5], %s31
      %s34 = sshll.u32 [#allocation4], 4
      %s35 = int_to_ptr.vmem [resolvable:$true] %s34
      %37 = dma.hbm_to_vmem [thread:$0]  %s4, 16, %s35, [#allocation5]
    $region21: #{_lambda_.23} parent=1 // pred_fallthru
      _
    // Predicated region
    $region22: #{_lambda_.23} parent=1 // pred_check
      _
    $region23: #{_lambda_.23} parent=1 // pred_check_branch
      %39 = sbr.rel (0) target = $region25
    $region24: #{_lambda_.23} parent=1 // pred_region
      %40 = dma.done [#allocation3], 16
    $region25: #{_lambda_.23} parent=1 // pred_fallthru
      _
    // Predicated region
    $region26: #{_lambda_.23} parent=1 // pred_check
      _
    $region27: #{_lambda_.23} parent=1 // pred_check_branch
      %42 = sbr.rel (0) target = $region29
    $region28: #{_lambda_.23} parent=1 // pred_region
      %43 = dma.done [#allocation5], 16
    $region29: #{_lambda_.23} parent=1 // pred_fallthru
      _
    %v45 = vld [vmem:[%s0] sm:$0xf]
    %v46 = vld [vmem:[%s1] sm:$0xf]
    %v47 = vld [vmem:[%s1 + $0x4] sm:$0xf]
    %v48 = vld [vmem:[%s1 + $0x8] sm:$0xf]
    %v49 = vld [vmem:[%s1 + $0xc] sm:$0xf]
    %v50 = vld [vmem:[#allocation2] sm:$0x1]
    %v52 = vlaneseq
    %v53 = vshrl.u32 %v52, 7
    %v54 = vsub.s32 0, %v53
    %v55 = vrot.slane %v50, %v54
    %v61 = vunpack.c.l.b16 %v46
    %v62 = vunpack.c.l.b16 %v47
    %v63 = vunpack.c.l.b16 %v48
    %v64 = vunpack.c.l.b16 %v49
    %v65 = vpack.c.b16 %v62, %v61
    %v66 = vpack.c.b16 %v64, %v63
    %vm69 = vcmask 261120
    %v71 = vsel %vm69, %v45, 0
    %73 = vmatprep.subr.bf16.mxu0 0
    %74 = vmatpush1.bf16.msra.mxu0 %v65
    %75 = vmatprep.subr.bf16.mxu0 0
    %76 = vmatpush1.bf16.msra.mxu0 %v66
    %77 = vmatprep.subr.bf16.mxu0 0
    %78 = vmatpush1.bf16.msra.mxu0 0
    %79 = vmatprep.subr.bf16.mxu0 0
    %80 = vmatpush1.bf16.msra.mxu0 0
    %81 = vmatprep.subr.bf16.mxu0 0
    %82 = vmatpush1.bf16.msra.mxu0 0
    %83 = vmatprep.subr.bf16.mxu0 0
    %84 = vmatpush1.bf16.msra.mxu0 0
    %85 = vmatprep.subr.bf16.mxu0 0
    %86 = vmatpush1.bf16.msra.mxu0 0
    %87 = vmatprep.subr.bf16.mxu0 0
    %88 = vmatpush1.bf16.msra.mxu0 0
    %89 = vmatprep.subr.bf16.mxu0 0
    %90 = vmatpush1.bf16.msra.mxu0 0
    %91 = vmatprep.subr.bf16.mxu0 0
    %92 = vmatpush1.bf16.msra.mxu0 0
    %93 = vmatprep.subr.bf16.mxu0 0
    %94 = vmatpush1.bf16.msra.mxu0 0
    %95 = vmatprep.subr.bf16.mxu0 0
    %96 = vmatpush1.bf16.msra.mxu0 0
    %97 = vmatprep.subr.bf16.mxu0 0
    %98 = vmatpush1.bf16.msra.mxu0 0
    %99 = vmatprep.subr.bf16.mxu0 0
    %100 = vmatpush1.bf16.msra.mxu0 0
    %101 = vmatprep.subr.bf16.mxu0 0
    %102 = vmatpush1.bf16.msra.mxu0 0
    %103 = vmatprep.subr.bf16.mxu0 0
    %104 = vmatpush1.bf16.msra.mxu0 0
    %105 = vmatprep.mubr.bf16.mxu0 0
    %106 = vmatmul.mubr.bf16.gmra.mrb[0].mxu0 %v71
    %v107 = vpop.f32.mrb[0].mxu0
    %v108 = vadd.f32 %v55, %v107
    %v109 = vpop.f32.mrb[0].mxu0
    %v110 = vpop.f32.mrb[0].mxu0
    %v111 = vpop.f32.mrb[0].mxu0
    %112 = vdwg.mxu0
    %v113 = vmul.f32 %v108, 0.5
    %v114 = vmul.f32 %v108, 0.044715
    %v115 = vmul.f32 %v114, %v108
    %v116 = vmul.f32 %v115, %v108
    %v117 = vadd.f32 %v108, %v116
    %v118 = vmul.f32 %v117, 0.7978846
    %v119 = vtanh.pop %v118
    %v120 = vadd.f32 %v119, 1.0
    %v121 = vmul.f32 %v113, %v120
    %v122 = vpack.c.bf16 %v121, %v121
    %v123 = vld [vmem:[%s3] sm:$0xf]
    %v124 = vld [vmem:[#allocation4] sm:$0x1]
    %v126 = vlaneseq
    %v127 = vshrl.u32 %v126, 7
    %v128 = vsub.s32 0, %v127
    %v129 = vrot.slane %v124, %v128
    %vm131 = vcmask 64512
    %v133 = vsel %vm131, %v122, 0
    %vm135 = vcmask 1043456
    %v137 = vsel %vm135, %v123, 0
    %139 = vmatprep.subr.bf16.mxu0 0
    %140 = vmatpush1.bf16.msra.mxu0 %v137
    %141 = vmatprep.subr.bf16.mxu0 0
    %142 = vmatpush1.bf16.msra.mxu0 0
    %143 = vmatprep.subr.bf16.mxu0 0
    %144 = vmatpush1.bf16.msra.mxu0 0
    %145 = vmatprep.subr.bf16.mxu0 0
    %146 = vmatpush1.bf16.msra.mxu0 0
    %147 = vmatprep.subr.bf16.mxu0 0
    %148 = vmatpush1.bf16.msra.mxu0 0
    %149 = vmatprep.subr.bf16.mxu0 0
    %150 = vmatpush1.bf16.msra.mxu0 0
    %151 = vmatprep.subr.bf16.mxu0 0
    %152 = vmatpush1.bf16.msra.mxu0 0
    %153 = vmatprep.subr.bf16.mxu0 0
    %154 = vmatpush1.bf16.msra.mxu0 0
    %155 = vmatprep.subr.bf16.mxu0 0
    %156 = vmatpush1.bf16.msra.mxu0 0
    %157 = vmatprep.subr.bf16.mxu0 0
    %158 = vmatpush1.bf16.msra.mxu0 0
    %159 = vmatprep.subr.bf16.mxu0 0
    %160 = vmatpush1.bf16.msra.mxu0 0
    %161 = vmatprep.subr.bf16.mxu0 0
    %162 = vmatpush1.bf16.msra.mxu0 0
    %163 = vmatprep.subr.bf16.mxu0 0
    %164 = vmatpush1.bf16.msra.mxu0 0
    %165 = vmatprep.subr.bf16.mxu0 0
    %166 = vmatpush1.bf16.msra.mxu0 0
    %167 = vmatprep.subr.bf16.mxu0 0
    %168 = vmatpush1.bf16.msra.mxu0 0
    %169 = vmatprep.subr.bf16.mxu0 0
    %170 = vmatpush1.bf16.msra.mxu0 0
    %171 = vmatprep.mubr.bf16.mxu0 0
    %172 = vmatmul.mubr.bf16.gmra.mrb[0].mxu0 %v133
    %v173 = vpop.f32.mrb[0].mxu0
    %v174 = vadd.f32 %v129, %v173
    %v175 = vpop.f32.mrb[0].mxu0
    %v176 = vpop.f32.mrb[0].mxu0
    %v177 = vpop.f32.mrb[0].mxu0
    %178 = vdwg.mxu0
    %v179 = vunpack.c.l.bf16 %v45
    %v180 = vadd.f32 %v174, %v179
    %v181 = vpack.c.bf16 %v180, %v180
    %vm182 = vcmask 257024
    %183 = vst.msk [vmem:[%s5] sm:$0xf] %vm182, %v181
    // Predicated region
    $region30: #{_lambda_.23} parent=1 // pred_check
      _
    $region31: #{_lambda_.23} parent=1 // pred_check_branch
      %185 = sbr.rel (0) target = $region33
    $region32: #{_lambda_.23} parent=1 // pred_region
      _
    $region33: #{_lambda_.23} parent=1 // pred_fallthru
      _
    // Predicated region
    $region34: #{_lambda_.23} parent=1 // pred_check
      _
    $region35: #{_lambda_.23} parent=1 // pred_check_branch
      %187 = sbr.rel (0) target = $region37
    $region36: #{_lambda_.23} parent=1 // pred_region
      _
    $region37: #{_lambda_.23} parent=1 // pred_fallthru
      _
    %188 = vsyncpa [#allocation3], 1
    %189 = vsyncpa [#allocation5], 1

// kernel: _lambda_.37
$region0: #{_lambda_.37}
  #allocation0 [shape = 'u32[]', space=smem, size = 0x4, offset = 0x4, fixed_abs, tag = 'smem constant byte address 0x4 - core index']
  #allocation1 [shape = 'u32[144,128]{1,0:T(1,128)}', space=vmem, size = 0x12000, scoped, tag = 'internal scratch']
  #allocation2 [shape = 'f32[1,1]{1,0:T(1,128)S(1)}', space=vmem, size = 0x200, scoped, tag = 'scoped memory for _lambda_.37']
  %s0 = inlined_call_operand.vmem [shape: bf16[128,32], index: 0, kind: input, shape index: {}]
  %s1 = inlined_call_operand.vmem [shape: bf16[128,32], index: 1, kind: input, shape index: {}]
  %s2 = inlined_call_operand.vmem [shape: bf16[32,32], index: 2, kind: input, shape index: {}]
  %s3 = inlined_call_operand.vmem [shape: bf16[32,32], index: 3, kind: input, shape index: {}]
  %s4 = inlined_call_operand.vmem [shape: f32[1,32], index: 4, kind: input, shape index: {}]
  %s5 = inlined_call_operand.vmem [shape: bf16[32,16], index: 5, kind: input, shape index: {}]
  %s6 = inlined_call_operand.vmem [shape: f32[1,16], index: 6, kind: input, shape index: {}]
  %s7 = inlined_call_operand.vmem [shape: bf16[1,16], index: 7, kind: input, shape index: {}]
  %s8 = inlined_call_operand.<no memory space> [shape: f32[1,1], index: 8, kind: input, shape index: {}]
  %s9 = inlined_call_operand.vmem [shape: f32[2,1,64], index: 9, kind: output, shape index: {}]
  %s10 = sld [smem:[#allocation0]]
  $region69: #{_lambda_.37} parent=0
    _
  %s12 = ssub.s32 1, %s10
  %s13 = scalar_select 0, %s12, %s10
  %v14 = vstv %s8
  %15 = vst [vmem:[#allocation2] sm:$0x1] %v14
  loop: start=0, step=1, limit=4
  $region2: #{_lambda_.37} parent=0 // loop_pre_header
    _
  $region3: #{_lambda_.37} parent=0 // loop_header
    %s17 = sphi 0, %s21
    %p18 = scmp.ge.s32.totalorder %s17, 4
    %s27 = sphi 0, %s29
    %s30 = sphi 0, %s27
    %s31 = sphi 0, %s30
    %s47 = sphi 0, %s31
    %s53 = sphi 0, %s55
    %s56 = sphi 0, %s53
    %s57 = sphi 0, %s56
    %s73 = sphi 0, %s57
    %s77 = sphi 0, %s77
    %s79 = sphi 0, %s77
    %s80 = sphi 0, %s79
    %s94 = sphi 0, %s80
    %s98 = sphi 0, %s98
    %s100 = sphi 0, %s98
    %s101 = sphi 0, %s100
    %s115 = sphi 0, %s101
    %s119 = sphi 0, %s119
    %s121 = sphi 0, %s119
    %s122 = sphi 0, %s121
    %s136 = sphi 0, %s122
    %s140 = sphi 0, %s140
    %s142 = sphi 0, %s140
    %s143 = sphi 0, %s142
    %s157 = sphi 0, %s143
    %s161 = sphi 0, %s161
    %s163 = sphi 0, %s161
    %s164 = sphi 0, %s163
    %s178 = sphi 0, %s164
    %s182 = sphi 0, %s182
    %s184 = sphi 0, %s182
    %s185 = sphi 0, %s184
    %s199 = sphi 0, %s185
    %s203 = sphi 0, %s203
    %s205 = sphi 0, %s203
    %s206 = sphi 0, %s205
    %s220 = sphi 0, %s206
    %s226 = sphi 0, %s228
    %s229 = sphi 0, %s226
    %s230 = sphi 0, %s229
    %s246 = sphi 0, %s230
  $region4: #{_lambda_.37} parent=0 // loop_header_branch
    %20 = sbr.rel (%p18) target = $region8
  $region5: #{_lambda_.37} parent=0 // loop_body
    %s22 = ssub.s32 %s17, 1
    %s23 = ssub.s32 %s17, 2
    %s24 = sadd.s32 %s17, 1
    %s25 = ssub.s32 %s17, %s24
    %p26 = scmp.eq.s32.totalorder %s25, 0
    %s28 = sadd.s32 %s27, 1
    %s29 = scalar_select %p26, %s27, %s28
    %p32 = pneg %p26
    %p33 = scmp.eq.s32.totalorder %s17, 1
    %p34 = por %p32, %p33
    %p35 = scmp.ne.s32.totalorder %s27, %s30
    %p36 = scmp.eq.s32.totalorder %s17, 0
    %p37 = por %p35, %p36
    %p38 = scmp.ne.s32.totalorder %s27, %s30
    %p39 = scmp.eq.s32.totalorder %s22, 1
    %p40 = por %p38, %p39
    %p41 = scmp.ne.s32.totalorder %s30, %s31
    %p42 = scmp.eq.s32.totalorder %s22, 0
    %p43 = por %p41, %p42
    %p44 = scmp.ne.s32.totalorder %s30, %s31
    %p45 = scmp.eq.s32.totalorder %s23, 1
    %p46 = por %p44, %p45
    %p48 = scmp.ne.s32.totalorder %s31, %s47
    %p49 = scmp.eq.s32.totalorder %s23, 0
    %p50 = por %p48, %p49
    %s51 = ssub.s32 %s17, %s24
    %p52 = scmp.eq.s32.totalorder %s51, 0
    %s54 = sadd.s32 %s53, 1
    %s55 = scalar_select %p52, %s53, %s54
    %p58 = pneg %p52
    %p59 = scmp.eq.s32.totalorder %s17, 1
    %p60 = por %p58, %p59
    %p61 = scmp.ne.s32.totalorder %s53, %s56
    %p62 = scmp.eq.s32.totalorder %s17, 0
    %p63 = por %p61, %p62
    %p64 = scmp.ne.s32.totalorder %s53, %s56
    %p65 = scmp.eq.s32.totalorder %s22, 1
    %p66 = por %p64, %p65
    %p67 = scmp.ne.s32.totalorder %s56, %s57
    %p68 = scmp.eq.s32.totalorder %s22, 0
    %p69 = por %p67, %p68
    %p70 = scmp.ne.s32.totalorder %s56, %s57
    %p71 = scmp.eq.s32.totalorder %s23, 1
    %p72 = por %p70, %p71
    %p74 = scmp.ne.s32.totalorder %s57, %s73
    %p75 = scmp.eq.s32.totalorder %s23, 0
    %p76 = por %p74, %p75
    %s78 = sadd.s32 %s77, 1
    %p81 = scmp.eq.s32.totalorder %s17, 1
    %p82 = scmp.ne.s32.totalorder %s77, %s79
    %p83 = scmp.eq.s32.totalorder %s17, 0
    %p84 = por %p82, %p83
    %p85 = scmp.ne.s32.totalorder %s77, %s79
    %p86 = scmp.eq.s32.totalorder %s22, 1
    %p87 = por %p85, %p86
    %p88 = scmp.ne.s32.totalorder %s79, %s80
    %p89 = scmp.eq.s32.totalorder %s22, 0
    %p90 = por %p88, %p89
    %p91 = scmp.ne.s32.totalorder %s79, %s80
    %p92 = scmp.eq.s32.totalorder %s23, 1
    %p93 = por %p91, %p92
    %p95 = scmp.ne.s32.totalorder %s80, %s94
    %p96 = scmp.eq.s32.totalorder %s23, 0
    %p97 = por %p95, %p96
    %s99 = sadd.s32 %s98, 1
    %p102 = scmp.eq.s32.totalorder %s17, 1
    %p103 = scmp.ne.s32.totalorder %s98, %s100
    %p104 = scmp.eq.s32.totalorder %s17, 0
    %p105 = por %p103, %p104
    %p106 = scmp.ne.s32.totalorder %s98, %s100
    %p107 = scmp.eq.s32.totalorder %s22, 1
    %p108 = por %p106, %p107
    %p109 = scmp.ne.s32.totalorder %s100, %s101
    %p110 = scmp.eq.s32.totalorder %s22, 0
    %p111 = por %p109, %p110
    %p112 = scmp.ne.s32.totalorder %s100, %s101
    %p113 = scmp.eq.s32.totalorder %s23, 1
    %p114 = por %p112, %p113
    %p116 = scmp.ne.s32.totalorder %s101, %s115
    %p117 = scmp.eq.s32.totalorder %s23, 0
    %p118 = por %p116, %p117
    %s120 = sadd.s32 %s119, 1
    %p123 = scmp.eq.s32.totalorder %s17, 1
    %p124 = scmp.ne.s32.totalorder %s119, %s121
    %p125 = scmp.eq.s32.totalorder %s17, 0
    %p126 = por %p124, %p125
    %p127 = scmp.ne.s32.totalorder %s119, %s121
    %p128 = scmp.eq.s32.totalorder %s22, 1
    %p129 = por %p127, %p128
    %p130 = scmp.ne.s32.totalorder %s121, %s122
    %p131 = scmp.eq.s32.totalorder %s22, 0
    %p132 = por %p130, %p131
    %p133 = scmp.ne.s32.totalorder %s121, %s122
    %p134 = scmp.eq.s32.totalorder %s23, 1
    %p135 = por %p133, %p134
    %p137 = scmp.ne.s32.totalorder %s122, %s136
    %p138 = scmp.eq.s32.totalorder %s23, 0
    %p139 = por %p137, %p138
    %s141 = sadd.s32 %s140, 1
    %p144 = scmp.eq.s32.totalorder %s17, 1
    %p145 = scmp.ne.s32.totalorder %s140, %s142
    %p146 = scmp.eq.s32.totalorder %s17, 0
    %p147 = por %p145, %p146
    %p148 = scmp.ne.s32.totalorder %s140, %s142
    %p149 = scmp.eq.s32.totalorder %s22, 1
    %p150 = por %p148, %p149
    %p151 = scmp.ne.s32.totalorder %s142, %s143
    %p152 = scmp.eq.s32.totalorder %s22, 0
    %p153 = por %p151, %p152
    %p154 = scmp.ne.s32.totalorder %s142, %s143
    %p155 = scmp.eq.s32.totalorder %s23, 1
    %p156 = por %p154, %p155
    %p158 = scmp.ne.s32.totalorder %s143, %s157
    %p159 = scmp.eq.s32.totalorder %s23, 0
    %p160 = por %p158, %p159
    %s162 = sadd.s32 %s161, 1
    %p165 = scmp.eq.s32.totalorder %s17, 1
    %p166 = scmp.ne.s32.totalorder %s161, %s163
    %p167 = scmp.eq.s32.totalorder %s17, 0
    %p168 = por %p166, %p167
    %p169 = scmp.ne.s32.totalorder %s161, %s163
    %p170 = scmp.eq.s32.totalorder %s22, 1
    %p171 = por %p169, %p170
    %p172 = scmp.ne.s32.totalorder %s163, %s164
    %p173 = scmp.eq.s32.totalorder %s22, 0
    %p174 = por %p172, %p173
    %p175 = scmp.ne.s32.totalorder %s163, %s164
    %p176 = scmp.eq.s32.totalorder %s23, 1
    %p177 = por %p175, %p176
    %p179 = scmp.ne.s32.totalorder %s164, %s178
    %p180 = scmp.eq.s32.totalorder %s23, 0
    %p181 = por %p179, %p180
    %s183 = sadd.s32 %s182, 1
    %p186 = scmp.eq.s32.totalorder %s17, 1
    %p187 = scmp.ne.s32.totalorder %s182, %s184
    %p188 = scmp.eq.s32.totalorder %s17, 0
    %p189 = por %p187, %p188
    %p190 = scmp.ne.s32.totalorder %s182, %s184
    %p191 = scmp.eq.s32.totalorder %s22, 1
    %p192 = por %p190, %p191
    %p193 = scmp.ne.s32.totalorder %s184, %s185
    %p194 = scmp.eq.s32.totalorder %s22, 0
    %p195 = por %p193, %p194
    %p196 = scmp.ne.s32.totalorder %s184, %s185
    %p197 = scmp.eq.s32.totalorder %s23, 1
    %p198 = por %p196, %p197
    %p200 = scmp.ne.s32.totalorder %s185, %s199
    %p201 = scmp.eq.s32.totalorder %s23, 0
    %p202 = por %p200, %p201
    %s204 = sadd.s32 %s203, 1
    %p207 = scmp.eq.s32.totalorder %s17, 1
    %p208 = scmp.ne.s32.totalorder %s203, %s205
    %p209 = scmp.eq.s32.totalorder %s17, 0
    %p210 = por %p208, %p209
    %p211 = scmp.ne.s32.totalorder %s203, %s205
    %p212 = scmp.eq.s32.totalorder %s22, 1
    %p213 = por %p211, %p212
    %p214 = scmp.ne.s32.totalorder %s205, %s206
    %p215 = scmp.eq.s32.totalorder %s22, 0
    %p216 = por %p214, %p215
    %p217 = scmp.ne.s32.totalorder %s205, %s206
    %p218 = scmp.eq.s32.totalorder %s23, 1
    %p219 = por %p217, %p218
    %p221 = scmp.ne.s32.totalorder %s206, %s220
    %p222 = scmp.eq.s32.totalorder %s23, 0
    %p223 = por %p221, %p222
    %s224 = ssub.s32 %s17, %s24
    %p225 = scmp.eq.s32.totalorder %s224, 0
    %s227 = sadd.s32 %s226, 1
    %s228 = scalar_select %p225, %s226, %s227
    %p231 = pneg %p225
    %p232 = scmp.eq.s32.totalorder %s17, 1
    %p233 = por %p231, %p232
    %p234 = scmp.ne.s32.totalorder %s226, %s229
    %p235 = scmp.eq.s32.totalorder %s17, 0
    %p236 = por %p234, %p235
    %p237 = scmp.ne.s32.totalorder %s226, %s229
    %p238 = scmp.eq.s32.totalorder %s22, 1
    %p239 = por %p237, %p238
    %p240 = scmp.ne.s32.totalorder %s229, %s230
    %p241 = scmp.eq.s32.totalorder %s22, 0
    %p242 = por %p240, %p241
    %p243 = scmp.ne.s32.totalorder %s229, %s230
    %p244 = scmp.eq.s32.totalorder %s23, 1
    %p245 = por %p243, %p244
    %p247 = scmp.ne.s32.totalorder %s230, %s246
    %p248 = scmp.eq.s32.totalorder %s23, 0
    %p249 = por %p247, %p248
    %p250 = scmp.le.s32.totalorder 1, %s17
    %p251 = scmp.lt.s32.totalorder %s17, 3
    %p252 = pnand %p250, %p251
    %p253 = pneg %p252
    // Predicated region
    $region9: #{_lambda_.37} parent=5 // pred_check
      _
    $region10: #{_lambda_.37} parent=5 // pred_check_branch
      %255 = sbr.rel (%p252) target = $region12
    $region11: #{_lambda_.37} parent=5 // pred_region
      %s256 = ssub.s32 %s17, 1
      // Predicated region
      $region13: #{_lambda_.37} parent=11 // pred_check
        %p257 = pneg %p90
      $region14: #{_lambda_.37} parent=11 // pred_check_branch
        %259 = sbr.rel (%p257) target = $region16
      $region15: #{_lambda_.37} parent=11 // pred_region
        _
      $region16: #{_lambda_.37} parent=11 // pred_fallthru
        _
      // Predicated region
      $region17: #{_lambda_.37} parent=11 // pred_check
        %p260 = pneg %p111
      $region18: #{_lambda_.37} parent=11 // pred_check_branch
        %262 = sbr.rel (%p260) target = $region20
      $region19: #{_lambda_.37} parent=11 // pred_region
        _
      $region20: #{_lambda_.37} parent=11 // pred_fallthru
        _
      // Predicated region
      $region21: #{_lambda_.37} parent=11 // pred_check
        %p263 = pneg %p132
      $region22: #{_lambda_.37} parent=11 // pred_check_branch
        %265 = sbr.rel (%p263) target = $region24
      $region23: #{_lambda_.37} parent=11 // pred_region
        _
      $region24: #{_lambda_.37} parent=11 // pred_fallthru
        _
      // Predicated region
      $region25: #{_lambda_.37} parent=11 // pred_check
        %p266 = pneg %p153
      $region26: #{_lambda_.37} parent=11 // pred_check_branch
        %268 = sbr.rel (%p266) target = $region28
      $region27: #{_lambda_.37} parent=11 // pred_region
        _
      $region28: #{_lambda_.37} parent=11 // pred_fallthru
        _
      // Predicated region
      $region29: #{_lambda_.37} parent=11 // pred_check
        %p269 = pneg %p174
      $region30: #{_lambda_.37} parent=11 // pred_check_branch
        %271 = sbr.rel (%p269) target = $region32
      $region31: #{_lambda_.37} parent=11 // pred_region
        _
      $region32: #{_lambda_.37} parent=11 // pred_fallthru
        _
      // Predicated region
      $region33: #{_lambda_.37} parent=11 // pred_check
        %p272 = pneg %p195
      $region34: #{_lambda_.37} parent=11 // pred_check_branch
        %274 = sbr.rel (%p272) target = $region36
      $region35: #{_lambda_.37} parent=11 // pred_region
        _
      $region36: #{_lambda_.37} parent=11 // pred_fallthru
        _
      // Predicated region
      $region37: #{_lambda_.37} parent=11 // pred_check
        %p275 = pneg %p216
      $region38: #{_lambda_.37} parent=11 // pred_check_branch
        %277 = sbr.rel (%p275) target = $region40
      $region39: #{_lambda_.37} parent=11 // pred_region
        _
      $region40: #{_lambda_.37} parent=11 // pred_fallthru
        _
    $region12: #{_lambda_.37} parent=5 // pred_fallthru
      _
    %p278 = scmp.lt.s32.totalorder %s17, 2
    // Predicated region
    $region41: #{_lambda_.37} parent=5 // pred_check
      %p279 = pneg %p278
    $region42: #{_lambda_.37} parent=5 // pred_check_branch
      %281 = sbr.rel (%p279) target = $region44
    $region43: #{_lambda_.37} parent=5 // pred_region
      // Predicated region
      $region45: #{_lambda_.37} parent=43 // pred_check
        %p282 = pneg %p37
      $region46: #{_lambda_.37} parent=43 // pred_check_branch
        %284 = sbr.rel (%p282) target = $region48
      $region47: #{_lambda_.37} parent=43 // pred_region
        %s285 = smul.u32 8, %s17
        %p286 = scmp.lt.s32.totalorder %s285, 15
        %s287 = scalar_select %p286, %s285, 15
        %s288 = smul.addr %s287, 4
        %s289 = scalar_lea.vmem %s0, %s288
        %s290 = smul.u32 8, %s17
      $region48: #{_lambda_.37} parent=43 // pred_fallthru
        _
      // Predicated region
      $region49: #{_lambda_.37} parent=43 // pred_check
        %p291 = pneg %p63
      $region50: #{_lambda_.37} parent=43 // pred_check_branch
        %293 = sbr.rel (%p291) target = $region52
      $region51: #{_lambda_.37} parent=43 // pred_region
        %s294 = smul.u32 8, %s17
        %p295 = scmp.lt.s32.totalorder %s294, 15
        %s296 = scalar_select %p295, %s294, 15
        %s297 = smul.addr %s296, 4
        %s298 = scalar_lea.vmem %s1, %s297
        %s299 = smul.u32 8, %s17
      $region52: #{_lambda_.37} parent=43 // pred_fallthru
        _
    $region44: #{_lambda_.37} parent=5 // pred_fallthru
      _
    %p300 = scmp.le.s32.totalorder 1, %s17
    %p301 = scmp.lt.s32.totalorder %s17, 3
    %p302 = pnand %p300, %p301
    %p303 = pneg %p302
    // Predicated region
    $region53: #{_lambda_.37} parent=5 // pred_check
      _
    $region54: #{_lambda_.37} parent=5 // pred_check_branch
      %305 = sbr.rel (%p302) target = $region56
    $region55: #{_lambda_.37} parent=5 // pred_region
      %s306 = ssub.s32 %s17, 1
      %s307 = smul.u32 8, %s22
      %p308 = scmp.lt.s32.totalorder %s307, 15
      %s309 = scalar_select %p308, %s307, 15
      %s310 = smul.addr %s309, 4
      %s311 = scalar_lea.vmem %s0, %s310
      %p312 = pneg %p43
      %p313 = pneg %p40
      %s314 = smul.u32 8, %s22
      %p315 = scmp.lt.s32.totalorder %s314, 15
      %s316 = scalar_select %p315, %s314, 15
      %s317 = smul.addr %s316, 4
      %s318 = scalar_lea.vmem %s1, %s317
      %p319 = pneg %p69
      %p320 = pneg %p66
      %p321 = pneg %p90
      %p322 = pneg %p87
      %p323 = pneg %p111
      %p324 = pneg %p108
      %p325 = pneg %p132
      %p326 = pneg %p129
      %p327 = pneg %p153
      %p328 = pneg %p150
      %p329 = pneg %p174
      %p330 = pneg %p171
      %p331 = pneg %p195
      %p332 = pneg %p192
      %p333 = pneg %p216
      %p334 = pneg %p213
      %p335 = pneg %p242
      %p336 = pneg %p239
      %p337 = scmp.lt.s32.totalorder %s22, 1
      %s338 = scalar_select %p337, %s22, 1
      %s339 = scalar_lea.vmem %s9, %s338
      %s340 = smul.u32 8, %s22
      %p341 = scmp.lt.s32.totalorder %s340, 15
      %s342 = scalar_select %p341, %s340, 15
      %s343 = smul.addr %s342, 4
      %s344 = scalar_lea.vmem %s0, %s343
      %s345 = smul.u32 8, %s22
      %s346 = smul.u32 8, %s22
      %p347 = scmp.lt.s32.totalorder %s346, 15
      %s348 = scalar_select %p347, %s346, 15
      %s349 = smul.addr %s348, 4
      %s350 = scalar_lea.vmem %s1, %s349
      %s351 = smul.u32 8, %s22
      %p352 = scmp.lt.s32.totalorder %s22, 1
      %s353 = scalar_select %p352, %s22, 1
      %s354 = scalar_lea.vmem %s9, %s353
      %v356 = vld [vmem:[%s344] sm:$0xf]
      %v357 = vld [vmem:[%s344 + $0x4] sm:$0xf]
      %v358 = vld [vmem:[%s344 + $0x8] sm:$0xf]
      %v359 = vld [vmem:[%s344 + $0xc] sm:$0xf]
      %v360 = vld [vmem:[%s344 + $0x10] sm:$0xf]
      %v361 = vld [vmem:[%s344 + $0x14] sm:$0xf]
      %v362 = vld [vmem:[%s344 + $0x18] sm:$0xf]
      %v363 = vld [vmem:[%s344 + $0x1c] sm:$0xf]
      %v364 = vld [vmem:[%s2] sm:$0xf]
      %v365 = vld [vmem:[%s2 + $0x4] sm:$0xf]
      %v366 = vld [vmem:[%s2 + $0x8] sm:$0xf]
      %v367 = vld [vmem:[%s2 + $0xc] sm:$0xf]
      %v368 = vld [vmem:[%s350] sm:$0xf]
      %v369 = vld [vmem:[%s350 + $0x4] sm:$0xf]
      %v370 = vld [vmem:[%s350 + $0x8] sm:$0xf]
      %v371 = vld [vmem:[%s350 + $0xc] sm:$0xf]
      %v372 = vld [vmem:[%s350 + $0x10] sm:$0xf]
      %v373 = vld [vmem:[%s350 + $0x14] sm:$0xf]
      %v374 = vld [vmem:[%s350 + $0x18] sm:$0xf]
      %v375 = vld [vmem:[%s350 + $0x1c] sm:$0xf]
      %v376 = vld [vmem:[%s3] sm:$0xf]
      %v377 = vld [vmem:[%s3 + $0x4] sm:$0xf]
      %v378 = vld [vmem:[%s3 + $0x8] sm:$0xf]
      %v379 = vld [vmem:[%s3 + $0xc] sm:$0xf]
      %v388 = vunpack.c.l.b16 %v368
      %v389 = vunpack.c.l.b16 %v369
      %v390 = vunpack.c.l.b16 %v370
      %v391 = vunpack.c.l.b16 %v371
      %v392 = vunpack.c.l.b16 %v372
      %v393 = vunpack.c.l.b16 %v373
      %v394 = vunpack.c.l.b16 %v374
      %v395 = vunpack.c.l.b16 %v375
      %v396 = vpack.c.b16 %v389, %v388
      %v397 = vpack.c.b16 %v391, %v390
      %v398 = vpack.c.b16 %v393, %v392
      %v399 = vpack.c.b16 %v395, %v394
      %v404 = vunpack.c.l.b16 %v376
      %v405 = vunpack.c.l.b16 %v377
      %v406 = vunpack.c.l.b16 %v378
      %v407 = vunpack.c.l.b16 %v379
      %v408 = vpack.c.b16 %v405, %v404
      %v409 = vpack.c.b16 %v407, %v406
      %vm412 = vcmask 261120
      %v414 = vsel %vm412, %v396, 0
      %v417 = vsel %vm412, %v397, 0
      %v420 = vsel %vm412, %v398, 0
      %v423 = vsel %vm412, %v399, 0
      %425 = vmatprep.subr.bf16.mxu0 0
      %426 = vmatpush1.bf16.msra.mxu0 %v408
      %427 = vmatprep.subr.bf16.mxu0 0
      %428 = vmatpush1.bf16.msra.mxu0 %v409
      %429 = vmatprep.subr.bf16.mxu0 0
      %430 = vmatpush1.bf16.msra.mxu0 0
      %431 = vmatprep.subr.bf16.mxu0 0
      %432 = vmatpush1.bf16.msra.mxu0 0
      %433 = vmatprep.subr.bf16.mxu0 0
      %434 = vmatpush1.bf16.msra.mxu0 0
      %435 = vmatprep.subr.bf16.mxu0 0
      %436 = vmatpush1.bf16.msra.mxu0 0
      %437 = vmatprep.subr.bf16.mxu0 0
      %438 = vmatpush1.bf16.msra.mxu0 0
      %439 = vmatprep.subr.bf16.mxu0 0
      %440 = vmatpush1.bf16.msra.mxu0 0
      %441 = vmatprep.subr.bf16.mxu0 0
      %442 = vmatpush1.bf16.msra.mxu0 0
      %443 = vmatprep.subr.bf16.mxu0 0
      %444 = vmatpush1.bf16.msra.mxu0 0
      %445 = vmatprep.subr.bf16.mxu0 0
      %446 = vmatpush1.bf16.msra.mxu0 0
      %447 = vmatprep.subr.bf16.mxu0 0
      %448 = vmatpush1.bf16.msra.mxu0 0
      %449 = vmatprep.subr.bf16.mxu0 0
      %450 = vmatpush1.bf16.msra.mxu0 0
      %451 = vmatprep.subr.bf16.mxu0 0
      %452 = vmatpush1.bf16.msra.mxu0 0
      %453 = vmatprep.subr.bf16.mxu0 0
      %454 = vmatpush1.bf16.msra.mxu0 0
      %455 = vmatprep.subr.bf16.mxu0 0
      %456 = vmatpush1.bf16.msra.mxu0 0
      %457 = vmatprep.mubr.bf16.mxu0 0
      %458 = vmatmul.mubr.bf16.gmra.mrb[0].mxu0 %v414
      %v459 = vpop.f32.mrb[0].mxu0
      %v460 = vadd.f32 0.0, %v459
      %v461 = vpop.f32.mrb[0].mxu0
      %v462 = vpop.f32.mrb[0].mxu0
      %v463 = vadd.f32 0.0, %v462
      %v464 = vpop.f32.mrb[0].mxu0
      %465 = vmatprep.mubr.bf16.mxu0 0
      %466 = vmatmul.mubr.bf16.gmra.mrb[0].mxu0 %v417
      %v467 = vpop.f32.mrb[0].mxu0
      %v468 = vadd.f32 0.0, %v467
      %v469 = vpop.f32.mrb[0].mxu0
      %v470 = vpop.f32.mrb[0].mxu0
      %v471 = vadd.f32 0.0, %v470
      %v472 = vpop.f32.mrb[0].mxu0
      %473 = vmatprep.mubr.bf16.mxu0 0
      %474 = vmatmul.mubr.bf16.gmra.mrb[0].mxu0 %v420
      %v475 = vpop.f32.mrb[0].mxu0
      %v476 = vadd.f32 0.0, %v475
      %v477 = vpop.f32.mrb[0].mxu0
      %v478 = vpop.f32.mrb[0].mxu0
      %v479 = vadd.f32 0.0, %v478
      %v480 = vpop.f32.mrb[0].mxu0
      %481 = vmatprep.mubr.bf16.mxu0 0
      %482 = vmatmul.mubr.bf16.gmra.mrb[0].mxu0 %v423
      %v483 = vpop.f32.mrb[0].mxu0
      %v484 = vadd.f32 0.0, %v483
      %v485 = vpop.f32.mrb[0].mxu0
      %v486 = vpop.f32.mrb[0].mxu0
      %v487 = vadd.f32 0.0, %v486
      %v488 = vpop.f32.mrb[0].mxu0
      %489 = vdwg.mxu0
      %v498 = vunpack.c.l.b16 %v356
      %v499 = vunpack.c.l.b16 %v357
      %v500 = vunpack.c.l.b16 %v358
      %v501 = vunpack.c.l.b16 %v359
      %v502 = vunpack.c.l.b16 %v360
      %v503 = vunpack.c.l.b16 %v361
      %v504 = vunpack.c.l.b16 %v362
      %v505 = vunpack.c.l.b16 %v363
      %v506 = vpack.c.b16 %v499, %v498
      %v507 = vpack.c.b16 %v501, %v500
      %v508 = vpack.c.b16 %v503, %v502
      %v509 = vpack.c.b16 %v505, %v504
      %v514 = vunpack.c.l.b16 %v364
      %v515 = vunpack.c.l.b16 %v365
      %v516 = vunpack.c.l.b16 %v366
      %v517 = vunpack.c.l.b16 %v367
      %v518 = vpack.c.b16 %v515, %v514
      %v519 = vpack.c.b16 %v517, %v516
      %v523 = vsel %vm412, %v506, 0
      %v526 = vsel %vm412, %v507, 0
      %v529 = vsel %vm412, %v508, 0
      %v532 = vsel %vm412, %v509, 0
      %534 = vmatprep.subr.bf16.mxu0 0
      %535 = vmatpush1.bf16.msra.mxu0 %v518
      %536 = vmatprep.subr.bf16.mxu0 0
      %537 = vmatpush1.bf16.msra.mxu0 %v519
      %538 = vmatprep.subr.bf16.mxu0 0
      %539 = vmatpush1.bf16.msra.mxu0 0
      %540 = vmatprep.subr.bf16.mxu0 0
      %541 = vmatpush1.bf16.msra.mxu0 0
      %542 = vmatprep.subr.bf16.mxu0 0
      %543 = vmatpush1.bf16.msra.mxu0 0
      %544 = vmatprep.subr.bf16.mxu0 0
      %545 = vmatpush1.bf16.msra.mxu0 0
      %546 = vmatprep.subr.bf16.mxu0 0
      %547 = vmatpush1.bf16.msra.mxu0 0
      %548 = vmatprep.subr.bf16.mxu0 0
      %549 = vmatpush1.bf16.msra.mxu0 0
      %550 = vmatprep.subr.bf16.mxu0 0
      %551 = vmatpush1.bf16.msra.mxu0 0
      %552 = vmatprep.subr.bf16.mxu0 0
      %553 = vmatpush1.bf16.msra.mxu0 0
      %554 = vmatprep.subr.bf16.mxu0 0
      %555 = vmatpush1.bf16.msra.mxu0 0
      %556 = vmatprep.subr.bf16.mxu0 0
      %557 = vmatpush1.bf16.msra.mxu0 0
      %558 = vmatprep.subr.bf16.mxu0 0
      %559 = vmatpush1.bf16.msra.mxu0 0
      %560 = vmatprep.subr.bf16.mxu0 0
      %561 = vmatpush1.bf16.msra.mxu0 0
      %562 = vmatprep.subr.bf16.mxu0 0
      %563 = vmatpush1.bf16.msra.mxu0 0
      %564 = vmatprep.subr.bf16.mxu0 0
      %565 = vmatpush1.bf16.msra.mxu0 0
      %566 = vmatprep.mubr.bf16.mxu0 0
      %567 = vmatmul.mubr.bf16.gmra.mrb[0].mxu0 %v523
      %v568 = vpop.f32.mrb[0].mxu0
      %v569 = vadd.f32 %v460, %v568
      %v570 = vpop.f32.mrb[0].mxu0
      %v571 = vpop.f32.mrb[0].mxu0
      %v572 = vadd.f32 %v463, %v571
      %v573 = vpop.f32.mrb[0].mxu0
      %574 = vmatprep.mubr.bf16.mxu0 0
      %575 = vmatmul.mubr.bf16.gmra.mrb[0].mxu0 %v526
      %v576 = vpop.f32.mrb[0].mxu0
      %v577 = vadd.f32 %v468, %v576
      %v578 = vpop.f32.mrb[0].mxu0
      %v579 = vpop.f32.mrb[0].mxu0
      %v580 = vadd.f32 %v471, %v579
      %v581 = vpop.f32.mrb[0].mxu0
      %582 = vmatprep.mubr.bf16.mxu0 0
      %583 = vmatmul.mubr.bf16.gmra.mrb[0].mxu0 %v529
      %v584 = vpop.f32.mrb[0].mxu0
      %v585 = vadd.f32 %v476, %v584
      %v586 = vpop.f32.mrb[0].mxu0
      %v587 = vpop.f32.mrb[0].mxu0
      %v588 = vadd.f32 %v479, %v587
      %v589 = vpop.f32.mrb[0].mxu0
      %590 = vmatprep.mubr.bf16.mxu0 0
      %591 = vmatmul.mubr.bf16.gmra.mrb[0].mxu0 %v532
      %v592 = vpop.f32.mrb[0].mxu0
      %v593 = vadd.f32 %v484, %v592
      %v594 = vpop.f32.mrb[0].mxu0
      %v595 = vpop.f32.mrb[0].mxu0
      %v596 = vadd.f32 %v487, %v595
      %v597 = vpop.f32.mrb[0].mxu0
      %598 = vdwg.mxu0
      %v599 = vld [vmem:[%s4] sm:$0x1]
      %v601 = vlaneseq
      %v602 = vshrl.u32 %v601, 7
      %v603 = vsub.s32 0, %v602
      %v604 = vrot.slane %v599, %v603
      %v606 = vadd.f32 %v569, %v604
      %v607 = vadd.f32 %v572, %v604
      %v608 = vadd.f32 %v577, %v604
      %v609 = vadd.f32 %v580, %v604
      %v610 = vadd.f32 %v585, %v604
      %v611 = vadd.f32 %v588, %v604
      %v612 = vadd.f32 %v593, %v604
      %v613 = vadd.f32 %v596, %v604
      %v614 = vmul.f32 %v606, 0.5
      %v615 = vmul.f32 %v607, 0.5
      %v616 = vmul.f32 %v608, 0.5
      %v617 = vmul.f32 %v609, 0.5
      %v618 = vmul.f32 %v610, 0.5
      %v619 = vmul.f32 %v611, 0.5
      %v620 = vmul.f32 %v612, 0.5
      %v621 = vmul.f32 %v613, 0.5
      %v622 = vmul.f32 %v606, 0.044715
      %v623 = vmul.f32 %v607, 0.044715
      %v624 = vmul.f32 %v608, 0.044715
      %v625 = vmul.f32 %v609, 0.044715
      %v626 = vmul.f32 %v610, 0.044715
      %v627 = vmul.f32 %v611, 0.044715
      %v628 = vmul.f32 %v612, 0.044715
      %v629 = vmul.f32 %v613, 0.044715
      %v630 = vmul.f32 %v622, %v606
      %v631 = vmul.f32 %v623, %v607
      %v632 = vmul.f32 %v624, %v608
      %v633 = vmul.f32 %v625, %v609
      %v634 = vmul.f32 %v626, %v610
      %v635 = vmul.f32 %v627, %v611
      %v636 = vmul.f32 %v628, %v612
      %v637 = vmul.f32 %v629, %v613
      %v638 = vmul.f32 %v630, %v606
      %v639 = vmul.f32 %v631, %v607
      %v640 = vmul.f32 %v632, %v608
      %v641 = vmul.f32 %v633, %v609
      %v642 = vmul.f32 %v634, %v610
      %v643 = vmul.f32 %v635, %v611
      %v644 = vmul.f32 %v636, %v612
      %v645 = vmul.f32 %v637, %v613
      %v646 = vadd.f32 %v606, %v638
      %v647 = vadd.f32 %v607, %v639
      %v648 = vadd.f32 %v608, %v640
      %v649 = vadd.f32 %v609, %v641
      %v650 = vadd.f32 %v610, %v642
      %v651 = vadd.f32 %v611, %v643
      %v652 = vadd.f32 %v612, %v644
      %v653 = vadd.f32 %v613, %v645
      %v654 = vmul.f32 %v646, 0.7978846
      %v655 = vmul.f32 %v647, 0.7978846
      %v656 = vmul.f32 %v648, 0.7978846
      %v657 = vmul.f32 %v649, 0.7978846
      %v658 = vmul.f32 %v650, 0.7978846
      %v659 = vmul.f32 %v651, 0.7978846
      %v660 = vmul.f32 %v652, 0.7978846
      %v661 = vmul.f32 %v653, 0.7978846
      %v662 = vtanh.pop %v654
      %v663 = vtanh.pop %v655
      %v664 = vtanh.pop %v656
      %v665 = vtanh.pop %v657
      %v666 = vtanh.pop %v658
      %v667 = vtanh.pop %v659
      %v668 = vtanh.pop %v660
      %v669 = vtanh.pop %v661
      %v670 = vadd.f32 %v662, 1.0
      %v671 = vadd.f32 %v663, 1.0
      %v672 = vadd.f32 %v664, 1.0
      %v673 = vadd.f32 %v665, 1.0
      %v674 = vadd.f32 %v666, 1.0
      %v675 = vadd.f32 %v667, 1.0
      %v676 = vadd.f32 %v668, 1.0
      %v677 = vadd.f32 %v669, 1.0
      %v678 = vmul.f32 %v614, %v670
      %v679 = vmul.f32 %v615, %v671
      %v680 = vmul.f32 %v616, %v672
      %v681 = vmul.f32 %v617, %v673
      %v682 = vmul.f32 %v618, %v674
      %v683 = vmul.f32 %v619, %v675
      %v684 = vmul.f32 %v620, %v676
      %v685 = vmul.f32 %v621, %v677
      %v686 = vpack.c.bf16 %v679, %v678
      %v687 = vpack.c.bf16 %v681, %v680
      %v688 = vpack.c.bf16 %v683, %v682
      %v689 = vpack.c.bf16 %v685, %v684
      %v690 = vld [vmem:[%s5] sm:$0xf]
      %v691 = vld [vmem:[%s5 + $0x4] sm:$0xf]
      %v692 = vld [vmem:[%s5 + $0x8] sm:$0xf]
      %v693 = vld [vmem:[%s5 + $0xc] sm:$0xf]
      %v694 = vld [vmem:[%s6] sm:$0x1]
      %v696 = vlaneseq
      %v697 = vshrl.u32 %v696, 7
      %v698 = vsub.s32 0, %v697
      %v699 = vrot.slane %v694, %v698
      %v705 = vunpack.c.l.b16 %v690
      %v706 = vunpack.c.l.b16 %v691
      %v707 = vunpack.c.l.b16 %v692
      %v708 = vunpack.c.l.b16 %v693
      %v709 = vpack.c.b16 %v706, %v705
      %v710 = vpack.c.b16 %v708, %v707
      %v714 = vsel %vm412, %v686, 0
      %v717 = vsel %vm412, %v687, 0
      %v720 = vsel %vm412, %v688, 0
      %v723 = vsel %vm412, %v689, 0
      %725 = vmatprep.subr.bf16.mxu0 0
      %726 = vmatpush1.bf16.msra.mxu0 %v709
      %727 = vmatprep.subr.bf16.mxu0 0
      %728 = vmatpush1.bf16.msra.mxu0 %v710
      %729 = vmatprep.subr.bf16.mxu0 0
      %730 = vmatpush1.bf16.msra.mxu0 0
      %731 = vmatprep.subr.bf16.mxu0 0
      %732 = vmatpush1.bf16.msra.mxu0 0
      %733 = vmatprep.subr.bf16.mxu0 0
      %734 = vmatpush1.bf16.msra.mxu0 0
      %735 = vmatprep.subr.bf16.mxu0 0
      %736 = vmatpush1.bf16.msra.mxu0 0
      %737 = vmatprep.subr.bf16.mxu0 0
      %738 = vmatpush1.bf16.msra.mxu0 0
      %739 = vmatprep.subr.bf16.mxu0 0
      %740 = vmatpush1.bf16.msra.mxu0 0
      %741 = vmatprep.subr.bf16.mxu0 0
      %742 = vmatpush1.bf16.msra.mxu0 0
      %743 = vmatprep.subr.bf16.mxu0 0
      %744 = vmatpush1.bf16.msra.mxu0 0
      %745 = vmatprep.subr.bf16.mxu0 0
      %746 = vmatpush1.bf16.msra.mxu0 0
      %747 = vmatprep.subr.bf16.mxu0 0
      %748 = vmatpush1.bf16.msra.mxu0 0
      %749 = vmatprep.subr.bf16.mxu0 0
      %750 = vmatpush1.bf16.msra.mxu0 0
      %751 = vmatprep.subr.bf16.mxu0 0
      %752 = vmatpush1.bf16.msra.mxu0 0
      %753 = vmatprep.subr.bf16.mxu0 0
      %754 = vmatpush1.bf16.msra.mxu0 0
      %755 = vmatprep.subr.bf16.mxu0 0
      %756 = vmatpush1.bf16.msra.mxu0 0
      %757 = vmatprep.mubr.bf16.mxu0 0
      %758 = vmatmul.mubr.bf16.gmra.mrb[0].mxu0 %v714
      %v759 = vpop.f32.mrb[0].mxu0
      %v760 = vadd.f32 %v699, %v759
      %v761 = vpop.f32.mrb[0].mxu0
      %v762 = vpop.f32.mrb[0].mxu0
      %v763 = vadd.f32 %v699, %v762
      %v764 = vpop.f32.mrb[0].mxu0
      %765 = vmatprep.mubr.bf16.mxu0 0
      %766 = vmatmul.mubr.bf16.gmra.mrb[0].mxu0 %v717
      %v767 = vpop.f32.mrb[0].mxu0
      %v768 = vadd.f32 %v699, %v767
      %v769 = vpop.f32.mrb[0].mxu0
      %v770 = vpop.f32.mrb[0].mxu0
      %v771 = vadd.f32 %v699, %v770
      %v772 = vpop.f32.mrb[0].mxu0
      %773 = vmatprep.mubr.bf16.mxu0 0
      %774 = vmatmul.mubr.bf16.gmra.mrb[0].mxu0 %v720
      %v775 = vpop.f32.mrb[0].mxu0
      %v776 = vadd.f32 %v699, %v775
      %v777 = vpop.f32.mrb[0].mxu0
      %v778 = vpop.f32.mrb[0].mxu0
      %v779 = vadd.f32 %v699, %v778
      %v780 = vpop.f32.mrb[0].mxu0
      %781 = vmatprep.mubr.bf16.mxu0 0
      %782 = vmatmul.mubr.bf16.gmra.mrb[0].mxu0 %v723
      %v783 = vpop.f32.mrb[0].mxu0
      %v784 = vadd.f32 %v699, %v783
      %v785 = vpop.f32.mrb[0].mxu0
      %v786 = vpop.f32.mrb[0].mxu0
      %v787 = vadd.f32 %v699, %v786
      %v788 = vpop.f32.mrb[0].mxu0
      %789 = vdwg.mxu0
      %v790 = vmul.f32 %v760, 0.5
      %v791 = vmul.f32 %v763, 0.5
      %v792 = vmul.f32 %v768, 0.5
      %v793 = vmul.f32 %v771, 0.5
      %v794 = vmul.f32 %v776, 0.5
      %v795 = vmul.f32 %v779, 0.5
      %v796 = vmul.f32 %v784, 0.5
      %v797 = vmul.f32 %v787, 0.5
      %v798 = vmul.f32 %v760, 0.044715
      %v799 = vmul.f32 %v763, 0.044715
      %v800 = vmul.f32 %v768, 0.044715
      %v801 = vmul.f32 %v771, 0.044715
      %v802 = vmul.f32 %v776, 0.044715
      %v803 = vmul.f32 %v779, 0.044715
      %v804 = vmul.f32 %v784, 0.044715
      %v805 = vmul.f32 %v787, 0.044715
      %v806 = vmul.f32 %v798, %v760
      %v807 = vmul.f32 %v799, %v763
      %v808 = vmul.f32 %v800, %v768
      %v809 = vmul.f32 %v801, %v771
      %v810 = vmul.f32 %v802, %v776
      %v811 = vmul.f32 %v803, %v779
      %v812 = vmul.f32 %v804, %v784
      %v813 = vmul.f32 %v805, %v787
      %v814 = vmul.f32 %v806, %v760
      %v815 = vmul.f32 %v807, %v763
      %v816 = vmul.f32 %v808, %v768
      %v817 = vmul.f32 %v809, %v771
      %v818 = vmul.f32 %v810, %v776
      %v819 = vmul.f32 %v811, %v779
      %v820 = vmul.f32 %v812, %v784
      %v821 = vmul.f32 %v813, %v787
      %v822 = vadd.f32 %v760, %v814
      %v823 = vadd.f32 %v763, %v815
      %v824 = vadd.f32 %v768, %v816
      %v825 = vadd.f32 %v771, %v817
      %v826 = vadd.f32 %v776, %v818
      %v827 = vadd.f32 %v779, %v819
      %v828 = vadd.f32 %v784, %v820
      %v829 = vadd.f32 %v787, %v821
      %v830 = vmul.f32 %v822, 0.7978846
      %v831 = vmul.f32 %v823, 0.7978846
      %v832 = vmul.f32 %v824, 0.7978846
      %v833 = vmul.f32 %v825, 0.7978846
      %v834 = vmul.f32 %v826, 0.7978846
      %v835 = vmul.f32 %v827, 0.7978846
      %v836 = vmul.f32 %v828, 0.7978846
      %v837 = vmul.f32 %v829, 0.7978846
      %v838 = vtanh.pop %v830
      %v839 = vtanh.pop %v831
      %v840 = vtanh.pop %v832
      %v841 = vtanh.pop %v833
      %v842 = vtanh.pop %v834
      %v843 = vtanh.pop %v835
      %v844 = vtanh.pop %v836
      %v845 = vtanh.pop %v837
      %v846 = vadd.f32 %v838, 1.0
      %v847 = vadd.f32 %v839, 1.0
      %v848 = vadd.f32 %v840, 1.0
      %v849 = vadd.f32 %v841, 1.0
      %v850 = vadd.f32 %v842, 1.0
      %v851 = vadd.f32 %v843, 1.0
      %v852 = vadd.f32 %v844, 1.0
      %v853 = vadd.f32 %v845, 1.0
      %v854 = vmul.f32 %v790, %v846
      %v855 = vmul.f32 %v791, %v847
      %v856 = vmul.f32 %v792, %v848
      %v857 = vmul.f32 %v793, %v849
      %v858 = vmul.f32 %v794, %v850
      %v859 = vmul.f32 %v795, %v851
      %v860 = vmul.f32 %v796, %v852
      %v861 = vmul.f32 %v797, %v853
      %v862 = vpack.c.bf16 %v855, %v854
      %v863 = vpack.c.bf16 %v857, %v856
      %v864 = vpack.c.bf16 %v859, %v858
      %v865 = vpack.c.bf16 %v861, %v860
      %v866 = vld [vmem:[%s7] sm:$0x1]
      %v867 = vld [vmem:[#allocation2] sm:$0x1]
      %869 = vset.pattern.permute.xlu0 0
      %870 = vperm.xlu0 %869, %v867
      %v871 = vpop.permute.xlu0 %870
      %v873 = vlaneseq
      %v874 = vshrl.u32 %v873, 7
      %v875 = vsub.s32 0, %v874
      %v876 = vrot.slane %v871, %v875
      %vm877 = vcmask 130048
      %v879 = vsel %vm877, %v866, 0
      %v882 = vsel %vm877, %v862, 0
      %v885 = vsel %vm877, %v863, 0
      %v888 = vsel %vm877, %v864, 0
      %v891 = vsel %vm877, %v865, 0
      %893 = vmatprep.subr.bf16.mxu0 0
      %894 = vmatpush1.bf16.xpose.msra.mxu0 %v882
      %895 = vmatprep.subr.bf16.mxu0 0
      %896 = vmatpush1.bf16.xpose.msra.mxu0 %v885
      %897 = vmatprep.subr.bf16.mxu0 0
      %898 = vmatpush1.bf16.xpose.msra.mxu0 %v888
      %899 = vmatprep.subr.bf16.mxu0 0
      %900 = vmatpush1.bf16.xpose.msra.mxu0 %v891
      %901 = vmatprep.subr.bf16.mxu0 0
      %902 = vmatpush1.bf16.xpose.msra.mxu0 0
      %903 = vmatprep.subr.bf16.mxu0 0
      %904 = vmatpush1.bf16.xpose.msra.mxu0 0
      %905 = vmatprep.subr.bf16.mxu0 0
      %906 = vmatpush1.bf16.xpose.msra.mxu0 0
      %907 = vmatprep.subr.bf16.mxu0 0
      %908 = vmatpush1.bf16.xpose.msra.mxu0 0
      %909 = vmatprep.subr.bf16.mxu0 0
      %910 = vmatpush1.bf16.xpose.msra.mxu0 0
      %911 = vmatprep.subr.bf16.mxu0 0
      %912 = vmatpush1.bf16.xpose.msra.mxu0 0
      %913 = vmatprep.subr.bf16.mxu0 0
      %914 = vmatpush1.bf16.xpose.msra.mxu0 0
      %915 = vmatprep.subr.bf16.mxu0 0
      %916 = vmatpush1.bf16.xpose.msra.mxu0 0
      %917 = vmatprep.subr.bf16.mxu0 0
      %918 = vmatpush1.bf16.xpose.msra.mxu0 0
      %919 = vmatprep.subr.bf16.mxu0 0
      %920 = vmatpush1.bf16.xpose.msra.mxu0 0
      %921 = vmatprep.subr.bf16.mxu0 0
      %922 = vmatpush1.bf16.xpose.msra.mxu0 0
      %923 = vmatprep.subr.bf16.mxu0 0
      %924 = vmatpush1.bf16.xpose.msra.mxu0 0
      %925 = vmatprep.mubr.bf16.mxu0 0
      %926 = vmatmul.mubr.bf16.gmra.mrb[0].mxu0 %v879
      %v927 = vpop.f32.mrb[0].mxu0
      %v928 = vadd.f32 %v876, %v927
      %v929 = vpop.f32.mrb[0].mxu0
      %v930 = vpop.f32.mrb[0].mxu0
      %v931 = vpop.f32.mrb[0].mxu0
      %932 = vdwg.mxu0
      %vm933 = vcmask 516096
      %934 = vst.msk [vmem:[%s354] sm:$0x1] %vm933, %v928
      %p935 = scmp.lt.s32.totalorder %s22, 1
      %s936 = scalar_select %p935, %s22, 1
      %s937 = scalar_lea.vmem %s9, %s936
      // Predicated region
      $region57: #{_lambda_.37} parent=55 // pred_check
        %p938 = pneg %p239
      $region58: #{_lambda_.37} parent=55 // pred_check_branch
        %940 = sbr.rel (%p938) target = $region60
      $region59: #{_lambda_.37} parent=55 // pred_region
        _
      $region60: #{_lambda_.37} parent=55 // pred_fallthru
        _
    $region56: #{_lambda_.37} parent=5 // pred_fallthru
      _
    %p941 = scmp.le.s32.totalorder 2, %s17
    // Predicated region
    $region61: #{_lambda_.37} parent=5 // pred_check
      %p942 = pneg %p941
    $region62: #{_lambda_.37} parent=5 // pred_check_branch
      %944 = sbr.rel (%p942) target = $region64
    $region63: #{_lambda_.37} parent=5 // pred_region
      %s945 = ssub.s32 %s17, 2
      // Predicated region
      $region65: #{_lambda_.37} parent=63 // pred_check
        %p946 = pneg %p245
      $region66: #{_lambda_.37} parent=63 // pred_check_branch
        %948 = sbr.rel (%p946) target = $region68
      $region67: #{_lambda_.37} parent=63 // pred_region
        %p949 = scmp.lt.s32.totalorder %s23, 1
        %s950 = scalar_select %p949, %s23, 1
        %s951 = scalar_lea.vmem %s9, %s950
      $region68: #{_lambda_.37} parent=63 // pred_fallthru
        _
    $region64: #{_lambda_.37} parent=5 // pred_fallthru
      _
  $region6: #{_lambda_.37} parent=0 // loop_footer
    %s21 = sadd.s32 1, %s17
  $region7: #{_lambda_.37} parent=0 // loop_footer_branch
    %16 = sbr.rel target = $region3
  $region8: #{_lambda_.37} parent=0 // loop_exit
    _

</llo_original>
